<compile_context>
chip_gen: v6e
topology: v6e:2x2x1
jax: 0.10.0
libtpu: 0.0.40
codegen_flags: <defaults>
</compile_context>

<pallas_src>
import jax
import jax.numpy as jnp
import numpy as np
from jax.experimental import pallas as pl
from jax.experimental.pallas import tpu as pltpu

NEG_SLOPE = 0.01  # torch.nn.LeakyReLU default negative_slope


def _leaky_relu(x):
    return jnp.where(x >= 0, x, NEG_SLOPE * x)


def _fused_down_kernel(ph_ref, w1_ref, b1_ref, w2_ref, b2_ref, o_ref, yp_ref):
    """Fused (conv3x3 s2 + LeakyReLU + conv3x3 s1 + LeakyReLU) for one image.

    ph_ref: (4, Ho+1, Wo+1, Cin)  -- 4 stride-2 phases of the padded input
    w1_ref: (9, Cin, Cin)         -- per-tap weights of conv1 (kh*3+kw major)
    b1_ref: (1, 1, Cin)
    w2_ref: (9, Cin, Cout)        -- per-tap weights of conv2
    b2_ref: (1, 1, Cout)
    o_ref : (1, Ho, Wo, Cout)
    yp_ref: VMEM scratch (Ho+2, Wo+2, Cin) -- zero-padded intermediate
    """
    _, Hp1, Wp1, Cin = ph_ref.shape
    Ho, Wo = Hp1 - 1, Wp1 - 1
    Cout = o_ref.shape[-1]

    # ---- conv1 (3x3, stride 2): 9 accumulated batched matmuls over phase slices.
    acc1 = jnp.zeros((Ho, Wo, Cin), jnp.float32)
    for kh in range(3):
        for kw in range(3):
            p = (kh % 2) * 2 + (kw % 2)
            dh, dw = kh // 2, kw // 2
            tap = ph_ref[p, dh:dh + Ho, dw:dw + Wo, :]            # (Ho, Wo, Cin)
            w_t = jnp.broadcast_to(w1_ref[kh * 3 + kw], (Ho, Cin, Cin))
            acc1 = acc1 + jnp.einsum('hwc,hcd->hwd', tap, w_t,
                                     preferred_element_type=jnp.float32)
    y = _leaky_relu(acc1 + b1_ref[...])

    # Stage into zero-padded VMEM scratch; the zero border is conv2's pad=1.
    yp_ref[...] = jnp.zeros_like(yp_ref)
    yp_ref[1:Ho + 1, 1:Wo + 1, :] = y

    # ---- conv2 (3x3, stride 1) on the resident intermediate; fused bias + LeakyReLU.
    acc2 = jnp.zeros((Ho, Wo, Cout), jnp.float32)
    for kh in range(3):
        for kw in range(3):
            tap = yp_ref[kh:kh + Ho, kw:kw + Wo, :]               # (Ho, Wo, Cin)
            w_t = jnp.broadcast_to(w2_ref[kh * 3 + kw], (Ho, Cin, Cout))
            acc2 = acc2 + jnp.einsum('hwc,hcd->hwd', tap, w_t,
                                     preferred_element_type=jnp.float32)
    o_ref[0] = _leaky_relu(acc2 + b2_ref[...]).astype(o_ref.dtype)


def downsampling_forward(x_nchw, params):
    """Pallas implementation of the PyTorch `downsampling` forward (NCHW in/out)."""
    w1, b1, w2, b2 = params
    x = jnp.transpose(x_nchw, (0, 2, 3, 1)).astype(jnp.float32)   # NCHW -> NHWC
    N, H, W, Cin = x.shape
    Cout = w2.shape[0]

    Ho = (H + 2 - 3) // 2 + 1
    Wo = (W + 2 - 3) // 2 + 1
    Hp1, Wp1 = Ho + 1, Wo + 1

    # Cheap space-to-depth (glue, ~1x activation bytes): pad=1 (plus at most one
    # extra row/col to make the dims 2*(Ho+1), 2*(Wo+1)), then split the 4
    # stride-2 phases so the in-kernel taps are plain offset-0/1 slices.
    xp = jnp.pad(x, ((0, 0),
                     (1, 2 * Hp1 - (H + 1)),
                     (1, 2 * Wp1 - (W + 1)),
                     (0, 0)))
    phases = xp.reshape(N, Hp1, 2, Wp1, 2, Cin)
    phases = jnp.transpose(phases, (0, 2, 4, 1, 3, 5)).reshape(N * 4, Hp1, Wp1, Cin)

    # PyTorch OIHW weights -> per-tap (kh,kw)-major (Cin_in, C_out) slices.
    w1t = jnp.transpose(w1, (2, 3, 1, 0)).reshape(9, Cin, Cin).astype(jnp.float32)
    w2t = jnp.transpose(w2, (2, 3, 1, 0)).reshape(9, Cin, Cout).astype(jnp.float32)
    b1m = b1.reshape(1, 1, Cin).astype(jnp.float32)
    b2m = b2.reshape(1, 1, Cout).astype(jnp.float32)

    flops = 2 * N * Ho * Wo * 9 * (Cin * Cin + Cin * Cout)
    bytes_accessed = 4 * (phases.size + N * Ho * Wo * Cout + w1t.size + w2t.size)

    out = pl.pallas_call(
        _fused_down_kernel,
        out_shape=jax.ShapeDtypeStruct((N, Ho, Wo, Cout), jnp.float32),
        grid_spec=pltpu.PrefetchScalarGridSpec(
            num_scalar_prefetch=0,
            grid=(N,),
            in_specs=[
                pl.BlockSpec((4, Hp1, Wp1, Cin), lambda n: (n, 0, 0, 0)),  # phases
                pl.BlockSpec((9, Cin, Cin), lambda n: (0, 0, 0)),          # w1 (resident)
                pl.BlockSpec((1, 1, Cin), lambda n: (0, 0, 0)),            # b1 (resident)
                pl.BlockSpec((9, Cin, Cout), lambda n: (0, 0, 0)),         # w2 (resident)
                pl.BlockSpec((1, 1, Cout), lambda n: (0, 0, 0)),           # b2 (resident)
            ],
            out_specs=pl.BlockSpec((1, Ho, Wo, Cout), lambda n: (n, 0, 0, 0)),
            scratch_shapes=[pltpu.VMEM((Ho + 2, Wo + 2, Cin), jnp.float32)],
        ),
        compiler_params=pltpu.CompilerParams(
            dimension_semantics=("parallel",),
        ),
        cost_estimate=pl.CostEstimate(
            flops=flops, transcendentals=0, bytes_accessed=bytes_accessed),
    )(phases, w1t, b1m, w2t, b2m)

    return jnp.transpose(out, (0, 3, 1, 2))                        # NHWC -> NCHW


def _reference_forward(x_nchw, params):
    """Pure-JAX reference (lax.conv) for correctness checking."""
    w1, b1, w2, b2 = params

    def conv(x, w, b, s):
        y = jax.lax.conv_general_dilated(
            x, w, window_strides=(s, s), padding=((1, 1), (1, 1)),
            dimension_numbers=("NCHW", "OIHW", "NCHW"))
        y = y + b[None, :, None, None]
        return jnp.where(y >= 0, y, NEG_SLOPE * y)

    return conv(conv(x_nchw, w1, b1, 2), w2, b2, 1)


def init_params(key, in_c, out_c):
    k1, k2, k3, k4 = jax.random.split(key, 4)
    w1 = 0.1 * jax.random.normal(k1, (in_c, in_c, 3, 3), jnp.float32)   # OIHW
    b1 = 0.01 * jax.random.normal(k2, (in_c,), jnp.float32)
    w2 = 0.1 * jax.random.normal(k3, (out_c, in_c, 3, 3), jnp.float32)  # OIHW
    b2 = 0.01 * jax.random.normal(k4, (out_c,), jnp.float32)
    return (w1, b1, w2, b2)


if __name__ == "__main__":
    in_c, out_c = 4, 8
    key = jax.random.PRNGKey(0)
    kx, kp = jax.random.split(key)

    x = jax.random.normal(kx, (2, in_c, 16, 16), jnp.float32)  # NCHW like PyTorch
    params = init_params(kp, in_c, out_c)

    out = jax.block_until_ready(jax.jit(downsampling_forward)(x, params))
    ref = jax.block_until_ready(_reference_forward(x, params))

    assert out.shape == (2, out_c, 8, 8), out.shape
    np.testing.assert_allclose(np.asarray(out), np.asarray(ref), rtol=1e-4, atol=1e-4)
    print("KERNEL_OK")
</pallas_src>

<mosaic_0001>
module attributes {stable_mosaic.version = 11 : i64} {
  func.func @_fused_down_kernel(%arg0: i32, %arg1: memref<4x9x9x4xf32, #tpu.memory_space<vmem>>, %arg2: memref<9x4x4xf32, #tpu.memory_space<vmem>>, %arg3: memref<1x1x4xf32, #tpu.memory_space<vmem>>, %arg4: memref<9x4x8xf32, #tpu.memory_space<vmem>>, %arg5: memref<1x1x8xf32, #tpu.memory_space<vmem>>, %arg6: memref<1x8x8x8xf32, #tpu.memory_space<vmem>>, %arg7: memref<10x10x4xf32, #tpu.memory_space<vmem>>) attributes {dimension_semantics = [#tpu.dimension_semantics<parallel>], iteration_bounds = array<i64: 2>, scalar_prefetch = 0 : i64, scratch_operands = 1 : i64, tpu.core_type = #tpu.core_type<tc>, window_params = [{transform_indices = @transform_0, window_bounds = array<i64: 4, 9, 9, 4>}, {pipeline_mode = #tpu.pipeline_mode<synchronous>, transform_indices = @transform_1, window_bounds = array<i64: 9, 4, 4>}, {pipeline_mode = #tpu.pipeline_mode<synchronous>, transform_indices = @transform_2, window_bounds = array<i64: 1, 1, 4>}, {pipeline_mode = #tpu.pipeline_mode<synchronous>, transform_indices = @transform_3, window_bounds = array<i64: 9, 4, 8>}, {pipeline_mode = #tpu.pipeline_mode<synchronous>, transform_indices = @transform_4, window_bounds = array<i64: 1, 1, 8>}, {transform_indices = @transform_5, window_bounds = array<i64: 1, 8, 8, 8>}]} {
    %cst = arith.constant 0.000000e+00 : f32
    %0 = vector.broadcast %cst : f32 to vector<8x8x4xf32>
    %c0 = arith.constant 0 : index
    %c0_0 = arith.constant 0 : index
    %c0_1 = arith.constant 0 : index
    %c0_2 = arith.constant 0 : index
    %1 = vector.load %arg1[%c0, %c0_0, %c0_1, %c0_2] : memref<4x9x9x4xf32, #tpu.memory_space<vmem>>, vector<1x8x8x4xf32>
    %2 = vector.shape_cast %1 : vector<1x8x8x4xf32> to vector<8x8x4xf32>
    %c0_3 = arith.constant 0 : index
    %c0_4 = arith.constant 0 : index
    %c0_5 = arith.constant 0 : index
    %3 = vector.load %arg2[%c0_3, %c0_4, %c0_5] : memref<9x4x4xf32, #tpu.memory_space<vmem>>, vector<1x4x4xf32>
    %4 = vector.shape_cast %3 : vector<1x4x4xf32> to vector<4x4xf32>
    %5 = vector.shape_cast %4 : vector<4x4xf32> to vector<1x4x4xf32>
    %6 = vector.broadcast %5 : vector<1x4x4xf32> to vector<8x4x4xf32>
    "tpu.trace_start"() <{level = 10 : i32, message = "hwc,hcd->hwd"}> : () -> ()
    %cst_6 = arith.constant dense<0.000000e+00> : vector<8x8x4xf32>
    %7 = tpu.matmul %2, %6, %cst_6 {dimension_numbers = #tpu.dot_dimension_numbers<[2], [1], [1], [2], [0, 0, 0, 1, 1, 2], [0], [0]>} : vector<8x8x4xf32>, vector<8x4x4xf32>, vector<8x8x4xf32> -> vector<8x8x4xf32>
    "tpu.trace_stop"() : () -> ()
    %8 = arith.addf %0, %7 : vector<8x8x4xf32>
    %c1 = arith.constant 1 : index
    %c0_7 = arith.constant 0 : index
    %c0_8 = arith.constant 0 : index
    %c0_9 = arith.constant 0 : index
    %9 = vector.load %arg1[%c1, %c0_7, %c0_8, %c0_9] : memref<4x9x9x4xf32, #tpu.memory_space<vmem>>, vector<1x8x8x4xf32>
    %10 = vector.shape_cast %9 : vector<1x8x8x4xf32> to vector<8x8x4xf32>
    %c1_10 = arith.constant 1 : index
    %c0_11 = arith.constant 0 : index
    %c0_12 = arith.constant 0 : index
    %11 = vector.load %arg2[%c1_10, %c0_11, %c0_12] : memref<9x4x4xf32, #tpu.memory_space<vmem>>, vector<1x4x4xf32>
    %12 = vector.shape_cast %11 : vector<1x4x4xf32> to vector<4x4xf32>
    %13 = vector.shape_cast %12 : vector<4x4xf32> to vector<1x4x4xf32>
    %14 = vector.broadcast %13 : vector<1x4x4xf32> to vector<8x4x4xf32>
    "tpu.trace_start"() <{level = 10 : i32, message = "hwc,hcd->hwd"}> : () -> ()
    %cst_13 = arith.constant dense<0.000000e+00> : vector<8x8x4xf32>
    %15 = tpu.matmul %10, %14, %cst_13 {dimension_numbers = #tpu.dot_dimension_numbers<[2], [1], [1], [2], [0, 0, 0, 1, 1, 2], [0], [0]>} : vector<8x8x4xf32>, vector<8x4x4xf32>, vector<8x8x4xf32> -> vector<8x8x4xf32>
    "tpu.trace_stop"() : () -> ()
    %16 = arith.addf %8, %15 : vector<8x8x4xf32>
    %c0_14 = arith.constant 0 : index
    %c0_15 = arith.constant 0 : index
    %c1_16 = arith.constant 1 : index
    %c0_17 = arith.constant 0 : index
    %17 = vector.load %arg1[%c0_14, %c0_15, %c1_16, %c0_17] : memref<4x9x9x4xf32, #tpu.memory_space<vmem>>, vector<1x8x8x4xf32>
    %18 = vector.shape_cast %17 : vector<1x8x8x4xf32> to vector<8x8x4xf32>
    %c2 = arith.constant 2 : index
    %c0_18 = arith.constant 0 : index
    %c0_19 = arith.constant 0 : index
    %19 = vector.load %arg2[%c2, %c0_18, %c0_19] : memref<9x4x4xf32, #tpu.memory_space<vmem>>, vector<1x4x4xf32>
    %20 = vector.shape_cast %19 : vector<1x4x4xf32> to vector<4x4xf32>
    %21 = vector.shape_cast %20 : vector<4x4xf32> to vector<1x4x4xf32>
    %22 = vector.broadcast %21 : vector<1x4x4xf32> to vector<8x4x4xf32>
    "tpu.trace_start"() <{level = 10 : i32, message = "hwc,hcd->hwd"}> : () -> ()
    %cst_20 = arith.constant dense<0.000000e+00> : vector<8x8x4xf32>
    %23 = tpu.matmul %18, %22, %cst_20 {dimension_numbers = #tpu.dot_dimension_numbers<[2], [1], [1], [2], [0, 0, 0, 1, 1, 2], [0], [0]>} : vector<8x8x4xf32>, vector<8x4x4xf32>, vector<8x8x4xf32> -> vector<8x8x4xf32>
    "tpu.trace_stop"() : () -> ()
    %24 = arith.addf %16, %23 : vector<8x8x4xf32>
    %c2_21 = arith.constant 2 : index
    %c0_22 = arith.constant 0 : index
    %c0_23 = arith.constant 0 : index
    %c0_24 = arith.constant 0 : index
    %25 = vector.load %arg1[%c2_21, %c0_22, %c0_23, %c0_24] : memref<4x9x9x4xf32, #tpu.memory_space<vmem>>, vector<1x8x8x4xf32>
    %26 = vector.shape_cast %25 : vector<1x8x8x4xf32> to vector<8x8x4xf32>
    %c3 = arith.constant 3 : index
    %c0_25 = arith.constant 0 : index
    %c0_26 = arith.constant 0 : index
    %27 = vector.load %arg2[%c3, %c0_25, %c0_26] : memref<9x4x4xf32, #tpu.memory_space<vmem>>, vector<1x4x4xf32>
    %28 = vector.shape_cast %27 : vector<1x4x4xf32> to vector<4x4xf32>
    %29 = vector.shape_cast %28 : vector<4x4xf32> to vector<1x4x4xf32>
    %30 = vector.broadcast %29 : vector<1x4x4xf32> to vector<8x4x4xf32>
    "tpu.trace_start"() <{level = 10 : i32, message = "hwc,hcd->hwd"}> : () -> ()
    %cst_27 = arith.constant dense<0.000000e+00> : vector<8x8x4xf32>
    %31 = tpu.matmul %26, %30, %cst_27 {dimension_numbers = #tpu.dot_dimension_numbers<[2], [1], [1], [2], [0, 0, 0, 1, 1, 2], [0], [0]>} : vector<8x8x4xf32>, vector<8x4x4xf32>, vector<8x8x4xf32> -> vector<8x8x4xf32>
    "tpu.trace_stop"() : () -> ()
    %32 = arith.addf %24, %31 : vector<8x8x4xf32>
    %c3_28 = arith.constant 3 : index
    %c0_29 = arith.constant 0 : index
    %c0_30 = arith.constant 0 : index
    %c0_31 = arith.constant 0 : index
    %33 = vector.load %arg1[%c3_28, %c0_29, %c0_30, %c0_31] : memref<4x9x9x4xf32, #tpu.memory_space<vmem>>, vector<1x8x8x4xf32>
    %34 = vector.shape_cast %33 : vector<1x8x8x4xf32> to vector<8x8x4xf32>
    %c4 = arith.constant 4 : index
    %c0_32 = arith.constant 0 : index
    %c0_33 = arith.constant 0 : index
    %35 = vector.load %arg2[%c4, %c0_32, %c0_33] : memref<9x4x4xf32, #tpu.memory_space<vmem>>, vector<1x4x4xf32>
    %36 = vector.shape_cast %35 : vector<1x4x4xf32> to vector<4x4xf32>
    %37 = vector.shape_cast %36 : vector<4x4xf32> to vector<1x4x4xf32>
    %38 = vector.broadcast %37 : vector<1x4x4xf32> to vector<8x4x4xf32>
    "tpu.trace_start"() <{level = 10 : i32, message = "hwc,hcd->hwd"}> : () -> ()
    %cst_34 = arith.constant dense<0.000000e+00> : vector<8x8x4xf32>
    %39 = tpu.matmul %34, %38, %cst_34 {dimension_numbers = #tpu.dot_dimension_numbers<[2], [1], [1], [2], [0, 0, 0, 1, 1, 2], [0], [0]>} : vector<8x8x4xf32>, vector<8x4x4xf32>, vector<8x8x4xf32> -> vector<8x8x4xf32>
    "tpu.trace_stop"() : () -> ()
    %40 = arith.addf %32, %39 : vector<8x8x4xf32>
    %c2_35 = arith.constant 2 : index
    %c0_36 = arith.constant 0 : index
    %c1_37 = arith.constant 1 : index
    %c0_38 = arith.constant 0 : index
    %41 = vector.load %arg1[%c2_35, %c0_36, %c1_37, %c0_38] : memref<4x9x9x4xf32, #tpu.memory_space<vmem>>, vector<1x8x8x4xf32>
    %42 = vector.shape_cast %41 : vector<1x8x8x4xf32> to vector<8x8x4xf32>
    %c5 = arith.constant 5 : index
    %c0_39 = arith.constant 0 : index
    %c0_40 = arith.constant 0 : index
    %43 = vector.load %arg2[%c5, %c0_39, %c0_40] : memref<9x4x4xf32, #tpu.memory_space<vmem>>, vector<1x4x4xf32>
    %44 = vector.shape_cast %43 : vector<1x4x4xf32> to vector<4x4xf32>
    %45 = vector.shape_cast %44 : vector<4x4xf32> to vector<1x4x4xf32>
    %46 = vector.broadcast %45 : vector<1x4x4xf32> to vector<8x4x4xf32>
    "tpu.trace_start"() <{level = 10 : i32, message = "hwc,hcd->hwd"}> : () -> ()
    %cst_41 = arith.constant dense<0.000000e+00> : vector<8x8x4xf32>
    %47 = tpu.matmul %42, %46, %cst_41 {dimension_numbers = #tpu.dot_dimension_numbers<[2], [1], [1], [2], [0, 0, 0, 1, 1, 2], [0], [0]>} : vector<8x8x4xf32>, vector<8x4x4xf32>, vector<8x8x4xf32> -> vector<8x8x4xf32>
    "tpu.trace_stop"() : () -> ()
    %48 = arith.addf %40, %47 : vector<8x8x4xf32>
    %c0_42 = arith.constant 0 : index
    %c1_43 = arith.constant 1 : index
    %c0_44 = arith.constant 0 : index
    %c0_45 = arith.constant 0 : index
    %49 = vector.load %arg1[%c0_42, %c1_43, %c0_44, %c0_45] : memref<4x9x9x4xf32, #tpu.memory_space<vmem>>, vector<1x8x8x4xf32>
    %50 = vector.shape_cast %49 : vector<1x8x8x4xf32> to vector<8x8x4xf32>
    %c6 = arith.constant 6 : index
    %c0_46 = arith.constant 0 : index
    %c0_47 = arith.constant 0 : index
    %51 = vector.load %arg2[%c6, %c0_46, %c0_47] : memref<9x4x4xf32, #tpu.memory_space<vmem>>, vector<1x4x4xf32>
    %52 = vector.shape_cast %51 : vector<1x4x4xf32> to vector<4x4xf32>
    %53 = vector.shape_cast %52 : vector<4x4xf32> to vector<1x4x4xf32>
    %54 = vector.broadcast %53 : vector<1x4x4xf32> to vector<8x4x4xf32>
    "tpu.trace_start"() <{level = 10 : i32, message = "hwc,hcd->hwd"}> : () -> ()
    %cst_48 = arith.constant dense<0.000000e+00> : vector<8x8x4xf32>
    %55 = tpu.matmul %50, %54, %cst_48 {dimension_numbers = #tpu.dot_dimension_numbers<[2], [1], [1], [2], [0, 0, 0, 1, 1, 2], [0], [0]>} : vector<8x8x4xf32>, vector<8x4x4xf32>, vector<8x8x4xf32> -> vector<8x8x4xf32>
    "tpu.trace_stop"() : () -> ()
    %56 = arith.addf %48, %55 : vector<8x8x4xf32>
    %c1_49 = arith.constant 1 : index
    %c1_50 = arith.constant 1 : index
    %c0_51 = arith.constant 0 : index
    %c0_52 = arith.constant 0 : index
    %57 = vector.load %arg1[%c1_49, %c1_50, %c0_51, %c0_52] : memref<4x9x9x4xf32, #tpu.memory_space<vmem>>, vector<1x8x8x4xf32>
    %58 = vector.shape_cast %57 : vector<1x8x8x4xf32> to vector<8x8x4xf32>
    %c7 = arith.constant 7 : index
    %c0_53 = arith.constant 0 : index
    %c0_54 = arith.constant 0 : index
    %59 = vector.load %arg2[%c7, %c0_53, %c0_54] : memref<9x4x4xf32, #tpu.memory_space<vmem>>, vector<1x4x4xf32>
    %60 = vector.shape_cast %59 : vector<1x4x4xf32> to vector<4x4xf32>
    %61 = vector.shape_cast %60 : vector<4x4xf32> to vector<1x4x4xf32>
    %62 = vector.broadcast %61 : vector<1x4x4xf32> to vector<8x4x4xf32>
    "tpu.trace_start"() <{level = 10 : i32, message = "hwc,hcd->hwd"}> : () -> ()
    %cst_55 = arith.constant dense<0.000000e+00> : vector<8x8x4xf32>
    %63 = tpu.matmul %58, %62, %cst_55 {dimension_numbers = #tpu.dot_dimension_numbers<[2], [1], [1], [2], [0, 0, 0, 1, 1, 2], [0], [0]>} : vector<8x8x4xf32>, vector<8x4x4xf32>, vector<8x8x4xf32> -> vector<8x8x4xf32>
    "tpu.trace_stop"() : () -> ()
    %64 = arith.addf %56, %63 : vector<8x8x4xf32>
    %c0_56 = arith.constant 0 : index
    %c1_57 = arith.constant 1 : index
    %c1_58 = arith.constant 1 : index
    %c0_59 = arith.constant 0 : index
    %65 = vector.load %arg1[%c0_56, %c1_57, %c1_58, %c0_59] : memref<4x9x9x4xf32, #tpu.memory_space<vmem>>, vector<1x8x8x4xf32>
    %66 = vector.shape_cast %65 : vector<1x8x8x4xf32> to vector<8x8x4xf32>
    %c8 = arith.constant 8 : index
    %c0_60 = arith.constant 0 : index
    %c0_61 = arith.constant 0 : index
    %67 = vector.load %arg2[%c8, %c0_60, %c0_61] : memref<9x4x4xf32, #tpu.memory_space<vmem>>, vector<1x4x4xf32>
    %68 = vector.shape_cast %67 : vector<1x4x4xf32> to vector<4x4xf32>
    %69 = vector.shape_cast %68 : vector<4x4xf32> to vector<1x4x4xf32>
    %70 = vector.broadcast %69 : vector<1x4x4xf32> to vector<8x4x4xf32>
    "tpu.trace_start"() <{level = 10 : i32, message = "hwc,hcd->hwd"}> : () -> ()
    %cst_62 = arith.constant dense<0.000000e+00> : vector<8x8x4xf32>
    %71 = tpu.matmul %66, %70, %cst_62 {dimension_numbers = #tpu.dot_dimension_numbers<[2], [1], [1], [2], [0, 0, 0, 1, 1, 2], [0], [0]>} : vector<8x8x4xf32>, vector<8x4x4xf32>, vector<8x8x4xf32> -> vector<8x8x4xf32>
    "tpu.trace_stop"() : () -> ()
    %72 = arith.addf %64, %71 : vector<8x8x4xf32>
    %c0_63 = arith.constant 0 : index
    %c0_64 = arith.constant 0 : index
    %c0_65 = arith.constant 0 : index
    %73 = vector.load %arg3[%c0_63, %c0_64, %c0_65] : memref<1x1x4xf32, #tpu.memory_space<vmem>>, vector<1x1x4xf32>
    %74 = vector.broadcast %73 : vector<1x1x4xf32> to vector<8x8x4xf32>
    %75 = arith.addf %72, %74 : vector<8x8x4xf32>
    %cst_66 = arith.constant 0.000000e+00 : f32
    %76 = vector.broadcast %cst_66 : f32 to vector<8x8x4xf32>
    %77 = arith.cmpf oge, %75, %76 : vector<8x8x4xf32>
    %cst_67 = arith.constant 0.00999999977 : f32
    %78 = vector.broadcast %cst_67 : f32 to vector<8x8x4xf32>
    %79 = arith.mulf %78, %75 : vector<8x8x4xf32>
    %80 = arith.select %77, %75, %79 : vector<8x8x4xi1>, vector<8x8x4xf32>
    %cst_68 = arith.constant 0.000000e+00 : f32
    %81 = vector.broadcast %cst_68 : f32 to vector<10x10x4xf32>
    %c0_69 = arith.constant 0 : index
    %c0_70 = arith.constant 0 : index
    %c0_71 = arith.constant 0 : index
    %82 = vector.load %arg7[%c0_69, %c0_70, %c0_71] : memref<10x10x4xf32, #tpu.memory_space<vmem>>, vector<10x10x4xf32>
    tpu.vector_store %arg7[%c0_69, %c0_70, %c0_71], %81 {strides = array<i32>} : memref<10x10x4xf32, #tpu.memory_space<vmem>>, vector<10x10x4xf32>,
    %c1_72 = arith.constant 1 : index
    %c1_73 = arith.constant 1 : index
    %c0_74 = arith.constant 0 : index
    %83 = vector.load %arg7[%c1_72, %c1_73, %c0_74] : memref<10x10x4xf32, #tpu.memory_space<vmem>>, vector<8x8x4xf32>
    tpu.vector_store %arg7[%c1_72, %c1_73, %c0_74], %80 {strides = array<i32>} : memref<10x10x4xf32, #tpu.memory_space<vmem>>, vector<8x8x4xf32>,
    %cst_75 = arith.constant 0.000000e+00 : f32
    %84 = vector.broadcast %cst_75 : f32 to vector<8x8x8xf32>
    %c0_76 = arith.constant 0 : index
    %c0_77 = arith.constant 0 : index
    %c0_78 = arith.constant 0 : index
    %85 = vector.load %arg7[%c0_76, %c0_77, %c0_78] : memref<10x10x4xf32, #tpu.memory_space<vmem>>, vector<8x8x4xf32>
    %c0_79 = arith.constant 0 : index
    %c0_80 = arith.constant 0 : index
    %c0_81 = arith.constant 0 : index
    %86 = vector.load %arg4[%c0_79, %c0_80, %c0_81] : memref<9x4x8xf32, #tpu.memory_space<vmem>>, vector<1x4x8xf32>
    %87 = vector.shape_cast %86 : vector<1x4x8xf32> to vector<4x8xf32>
    %88 = vector.shape_cast %87 : vector<4x8xf32> to vector<1x4x8xf32>
    %89 = vector.broadcast %88 : vector<1x4x8xf32> to vector<8x4x8xf32>
    "tpu.trace_start"() <{level = 10 : i32, message = "hwc,hcd->hwd"}> : () -> ()
    %cst_82 = arith.constant dense<0.000000e+00> : vector<8x8x8xf32>
    %90 = tpu.matmul %85, %89, %cst_82 {dimension_numbers = #tpu.dot_dimension_numbers<[2], [1], [1], [2], [0, 0, 0, 1, 1, 2], [0], [0]>} : vector<8x8x4xf32>, vector<8x4x8xf32>, vector<8x8x8xf32> -> vector<8x8x8xf32>
    "tpu.trace_stop"() : () -> ()
    %91 = arith.addf %84, %90 : vector<8x8x8xf32>
    %c0_83 = arith.constant 0 : index
    %c1_84 = arith.constant 1 : index
    %c0_85 = arith.constant 0 : index
    %92 = vector.load %arg7[%c0_83, %c1_84, %c0_85] : memref<10x10x4xf32, #tpu.memory_space<vmem>>, vector<8x8x4xf32>
    %c1_86 = arith.constant 1 : index
    %c0_87 = arith.constant 0 : index
    %c0_88 = arith.constant 0 : index
    %93 = vector.load %arg4[%c1_86, %c0_87, %c0_88] : memref<9x4x8xf32, #tpu.memory_space<vmem>>, vector<1x4x8xf32>
    %94 = vector.shape_cast %93 : vector<1x4x8xf32> to vector<4x8xf32>
    %95 = vector.shape_cast %94 : vector<4x8xf32> to vector<1x4x8xf32>
    %96 = vector.broadcast %95 : vector<1x4x8xf32> to vector<8x4x8xf32>
    "tpu.trace_start"() <{level = 10 : i32, message = "hwc,hcd->hwd"}> : () -> ()
    %cst_89 = arith.constant dense<0.000000e+00> : vector<8x8x8xf32>
    %97 = tpu.matmul %92, %96, %cst_89 {dimension_numbers = #tpu.dot_dimension_numbers<[2], [1], [1], [2], [0, 0, 0, 1, 1, 2], [0], [0]>} : vector<8x8x4xf32>, vector<8x4x8xf32>, vector<8x8x8xf32> -> vector<8x8x8xf32>
    "tpu.trace_stop"() : () -> ()
    %98 = arith.addf %91, %97 : vector<8x8x8xf32>
    %c0_90 = arith.constant 0 : index
    %c2_91 = arith.constant 2 : index
    %c0_92 = arith.constant 0 : index
    %99 = vector.load %arg7[%c0_90, %c2_91, %c0_92] : memref<10x10x4xf32, #tpu.memory_space<vmem>>, vector<8x8x4xf32>
    %c2_93 = arith.constant 2 : index
    %c0_94 = arith.constant 0 : index
    %c0_95 = arith.constant 0 : index
    %100 = vector.load %arg4[%c2_93, %c0_94, %c0_95] : memref<9x4x8xf32, #tpu.memory_space<vmem>>, vector<1x4x8xf32>
    %101 = vector.shape_cast %100 : vector<1x4x8xf32> to vector<4x8xf32>
    %102 = vector.shape_cast %101 : vector<4x8xf32> to vector<1x4x8xf32>
    %103 = vector.broadcast %102 : vector<1x4x8xf32> to vector<8x4x8xf32>
    "tpu.trace_start"() <{level = 10 : i32, message = "hwc,hcd->hwd"}> : () -> ()
    %cst_96 = arith.constant dense<0.000000e+00> : vector<8x8x8xf32>
    %104 = tpu.matmul %99, %103, %cst_96 {dimension_numbers = #tpu.dot_dimension_numbers<[2], [1], [1], [2], [0, 0, 0, 1, 1, 2], [0], [0]>} : vector<8x8x4xf32>, vector<8x4x8xf32>, vector<8x8x8xf32> -> vector<8x8x8xf32>
    "tpu.trace_stop"() : () -> ()
    %105 = arith.addf %98, %104 : vector<8x8x8xf32>
    %c1_97 = arith.constant 1 : index
    %c0_98 = arith.constant 0 : index
    %c0_99 = arith.constant 0 : index
    %106 = vector.load %arg7[%c1_97, %c0_98, %c0_99] : memref<10x10x4xf32, #tpu.memory_space<vmem>>, vector<8x8x4xf32>
    %c3_100 = arith.constant 3 : index
    %c0_101 = arith.constant 0 : index
    %c0_102 = arith.constant 0 : index
    %107 = vector.load %arg4[%c3_100, %c0_101, %c0_102] : memref<9x4x8xf32, #tpu.memory_space<vmem>>, vector<1x4x8xf32>
    %108 = vector.shape_cast %107 : vector<1x4x8xf32> to vector<4x8xf32>
    %109 = vector.shape_cast %108 : vector<4x8xf32> to vector<1x4x8xf32>
    %110 = vector.broadcast %109 : vector<1x4x8xf32> to vector<8x4x8xf32>
    "tpu.trace_start"() <{level = 10 : i32, message = "hwc,hcd->hwd"}> : () -> ()
    %cst_103 = arith.constant dense<0.000000e+00> : vector<8x8x8xf32>
    %111 = tpu.matmul %106, %110, %cst_103 {dimension_numbers = #tpu.dot_dimension_numbers<[2], [1], [1], [2], [0, 0, 0, 1, 1, 2], [0], [0]>} : vector<8x8x4xf32>, vector<8x4x8xf32>, vector<8x8x8xf32> -> vector<8x8x8xf32>
    "tpu.trace_stop"() : () -> ()
    %112 = arith.addf %105, %111 : vector<8x8x8xf32>
    %c1_104 = arith.constant 1 : index
    %c1_105 = arith.constant 1 : index
    %c0_106 = arith.constant 0 : index
    %113 = vector.load %arg7[%c1_104, %c1_105, %c0_106] : memref<10x10x4xf32, #tpu.memory_space<vmem>>, vector<8x8x4xf32>
    %c4_107 = arith.constant 4 : index
    %c0_108 = arith.constant 0 : index
    %c0_109 = arith.constant 0 : index
    %114 = vector.load %arg4[%c4_107, %c0_108, %c0_109] : memref<9x4x8xf32, #tpu.memory_space<vmem>>, vector<1x4x8xf32>
    %115 = vector.shape_cast %114 : vector<1x4x8xf32> to vector<4x8xf32>
    %116 = vector.shape_cast %115 : vector<4x8xf32> to vector<1x4x8xf32>
    %117 = vector.broadcast %116 : vector<1x4x8xf32> to vector<8x4x8xf32>
    "tpu.trace_start"() <{level = 10 : i32, message = "hwc,hcd->hwd"}> : () -> ()
    %cst_110 = arith.constant dense<0.000000e+00> : vector<8x8x8xf32>
    %118 = tpu.matmul %113, %117, %cst_110 {dimension_numbers = #tpu.dot_dimension_numbers<[2], [1], [1], [2], [0, 0, 0, 1, 1, 2], [0], [0]>} : vector<8x8x4xf32>, vector<8x4x8xf32>, vector<8x8x8xf32> -> vector<8x8x8xf32>
    "tpu.trace_stop"() : () -> ()
    %119 = arith.addf %112, %118 : vector<8x8x8xf32>
    %c1_111 = arith.constant 1 : index
    %c2_112 = arith.constant 2 : index
    %c0_113 = arith.constant 0 : index
    %120 = vector.load %arg7[%c1_111, %c2_112, %c0_113] : memref<10x10x4xf32, #tpu.memory_space<vmem>>, vector<8x8x4xf32>
    %c5_114 = arith.constant 5 : index
    %c0_115 = arith.constant 0 : index
    %c0_116 = arith.constant 0 : index
    %121 = vector.load %arg4[%c5_114, %c0_115, %c0_116] : memref<9x4x8xf32, #tpu.memory_space<vmem>>, vector<1x4x8xf32>
    %122 = vector.shape_cast %121 : vector<1x4x8xf32> to vector<4x8xf32>
    %123 = vector.shape_cast %122 : vector<4x8xf32> to vector<1x4x8xf32>
    %124 = vector.broadcast %123 : vector<1x4x8xf32> to vector<8x4x8xf32>
    "tpu.trace_start"() <{level = 10 : i32, message = "hwc,hcd->hwd"}> : () -> ()
    %cst_117 = arith.constant dense<0.000000e+00> : vector<8x8x8xf32>
    %125 = tpu.matmul %120, %124, %cst_117 {dimension_numbers = #tpu.dot_dimension_numbers<[2], [1], [1], [2], [0, 0, 0, 1, 1, 2], [0], [0]>} : vector<8x8x4xf32>, vector<8x4x8xf32>, vector<8x8x8xf32> -> vector<8x8x8xf32>
    "tpu.trace_stop"() : () -> ()
    %126 = arith.addf %119, %125 : vector<8x8x8xf32>
    %c2_118 = arith.constant 2 : index
    %c0_119 = arith.constant 0 : index
    %c0_120 = arith.constant 0 : index
    %127 = vector.load %arg7[%c2_118, %c0_119, %c0_120] : memref<10x10x4xf32, #tpu.memory_space<vmem>>, vector<8x8x4xf32>
    %c6_121 = arith.constant 6 : index
    %c0_122 = arith.constant 0 : index
    %c0_123 = arith.constant 0 : index
    %128 = vector.load %arg4[%c6_121, %c0_122, %c0_123] : memref<9x4x8xf32, #tpu.memory_space<vmem>>, vector<1x4x8xf32>
    %129 = vector.shape_cast %128 : vector<1x4x8xf32> to vector<4x8xf32>
    %130 = vector.shape_cast %129 : vector<4x8xf32> to vector<1x4x8xf32>
    %131 = vector.broadcast %130 : vector<1x4x8xf32> to vector<8x4x8xf32>
    "tpu.trace_start"() <{level = 10 : i32, message = "hwc,hcd->hwd"}> : () -> ()
    %cst_124 = arith.constant dense<0.000000e+00> : vector<8x8x8xf32>
    %132 = tpu.matmul %127, %131, %cst_124 {dimension_numbers = #tpu.dot_dimension_numbers<[2], [1], [1], [2], [0, 0, 0, 1, 1, 2], [0], [0]>} : vector<8x8x4xf32>, vector<8x4x8xf32>, vector<8x8x8xf32> -> vector<8x8x8xf32>
    "tpu.trace_stop"() : () -> ()
    %133 = arith.addf %126, %132 : vector<8x8x8xf32>
    %c2_125 = arith.constant 2 : index
    %c1_126 = arith.constant 1 : index
    %c0_127 = arith.constant 0 : index
    %134 = vector.load %arg7[%c2_125, %c1_126, %c0_127] : memref<10x10x4xf32, #tpu.memory_space<vmem>>, vector<8x8x4xf32>
    %c7_128 = arith.constant 7 : index
    %c0_129 = arith.constant 0 : index
    %c0_130 = arith.constant 0 : index
    %135 = vector.load %arg4[%c7_128, %c0_129, %c0_130] : memref<9x4x8xf32, #tpu.memory_space<vmem>>, vector<1x4x8xf32>
    %136 = vector.shape_cast %135 : vector<1x4x8xf32> to vector<4x8xf32>
    %137 = vector.shape_cast %136 : vector<4x8xf32> to vector<1x4x8xf32>
    %138 = vector.broadcast %137 : vector<1x4x8xf32> to vector<8x4x8xf32>
    "tpu.trace_start"() <{level = 10 : i32, message = "hwc,hcd->hwd"}> : () -> ()
    %cst_131 = arith.constant dense<0.000000e+00> : vector<8x8x8xf32>
    %139 = tpu.matmul %134, %138, %cst_131 {dimension_numbers = #tpu.dot_dimension_numbers<[2], [1], [1], [2], [0, 0, 0, 1, 1, 2], [0], [0]>} : vector<8x8x4xf32>, vector<8x4x8xf32>, vector<8x8x8xf32> -> vector<8x8x8xf32>
    "tpu.trace_stop"() : () -> ()
    %140 = arith.addf %133, %139 : vector<8x8x8xf32>
    %c2_132 = arith.constant 2 : index
    %c2_133 = arith.constant 2 : index
    %c0_134 = arith.constant 0 : index
    %141 = vector.load %arg7[%c2_132, %c2_133, %c0_134] : memref<10x10x4xf32, #tpu.memory_space<vmem>>, vector<8x8x4xf32>
    %c8_135 = arith.constant 8 : index
    %c0_136 = arith.constant 0 : index
    %c0_137 = arith.constant 0 : index
    %142 = vector.load %arg4[%c8_135, %c0_136, %c0_137] : memref<9x4x8xf32, #tpu.memory_space<vmem>>, vector<1x4x8xf32>
    %143 = vector.shape_cast %142 : vector<1x4x8xf32> to vector<4x8xf32>
    %144 = vector.shape_cast %143 : vector<4x8xf32> to vector<1x4x8xf32>
    %145 = vector.broadcast %144 : vector<1x4x8xf32> to vector<8x4x8xf32>
    "tpu.trace_start"() <{level = 10 : i32, message = "hwc,hcd->hwd"}> : () -> ()
    %cst_138 = arith.constant dense<0.000000e+00> : vector<8x8x8xf32>
    %146 = tpu.matmul %141, %145, %cst_138 {dimension_numbers = #tpu.dot_dimension_numbers<[2], [1], [1], [2], [0, 0, 0, 1, 1, 2], [0], [0]>} : vector<8x8x4xf32>, vector<8x4x8xf32>, vector<8x8x8xf32> -> vector<8x8x8xf32>
    "tpu.trace_stop"() : () -> ()
    %147 = arith.addf %140, %146 : vector<8x8x8xf32>
    %c0_139 = arith.constant 0 : index
    %c0_140 = arith.constant 0 : index
    %c0_141 = arith.constant 0 : index
    %148 = vector.load %arg5[%c0_139, %c0_140, %c0_141] : memref<1x1x8xf32, #tpu.memory_space<vmem>>, vector<1x1x8xf32>
    %149 = vector.broadcast %148 : vector<1x1x8xf32> to vector<8x8x8xf32>
    %150 = arith.addf %147, %149 : vector<8x8x8xf32>
    %cst_142 = arith.constant 0.000000e+00 : f32
    %151 = vector.broadcast %cst_142 : f32 to vector<8x8x8xf32>
    %152 = arith.cmpf oge, %150, %151 : vector<8x8x8xf32>
    %cst_143 = arith.constant 0.00999999977 : f32
    %153 = vector.broadcast %cst_143 : f32 to vector<8x8x8xf32>
    %154 = arith.mulf %153, %150 : vector<8x8x8xf32>
    %155 = arith.select %152, %150, %154 : vector<8x8x8xi1>, vector<8x8x8xf32>
    %c0_144 = arith.constant 0 : index
    %c0_145 = arith.constant 0 : index
    %c0_146 = arith.constant 0 : index
    %c0_147 = arith.constant 0 : index
    %156 = vector.load %arg6[%c0_144, %c0_145, %c0_146, %c0_147] : memref<1x8x8x8xf32, #tpu.memory_space<vmem>>, vector<1x8x8x8xf32>
    %157 = vector.shape_cast %156 : vector<1x8x8x8xf32> to vector<8x8x8xf32>
    %158 = vector.shape_cast %155 : vector<8x8x8xf32> to vector<1x8x8x8xf32>
    tpu.vector_store %arg6[%c0_144, %c0_145, %c0_146, %c0_147], %158 {strides = array<i32>} : memref<1x8x8x8xf32, #tpu.memory_space<vmem>>, vector<1x8x8x8xf32>,
    return
  }
  func.func @transform_0(%arg0: i32) -> (i32, i32, i32, i32) {
    %c0_i32 = arith.constant 0 : i32
    %c0_i32_0 = arith.constant 0 : i32
    %c0_i32_1 = arith.constant 0 : i32
    %c0_i32_2 = arith.constant 0 : i32
    return %arg0, %c0_i32, %c0_i32_0, %c0_i32_1 : i32, i32, i32, i32
  }
  func.func @transform_1(%arg0: i32) -> (i32, i32, i32) {
    %c0_i32 = arith.constant 0 : i32
    %c0_i32_0 = arith.constant 0 : i32
    %c0_i32_1 = arith.constant 0 : i32
    %c0_i32_2 = arith.constant 0 : i32
    return %c0_i32, %c0_i32_0, %c0_i32_1 : i32, i32, i32
  }
  func.func @transform_2(%arg0: i32) -> (i32, i32, i32) {
    %c0_i32 = arith.constant 0 : i32
    %c0_i32_0 = arith.constant 0 : i32
    %c0_i32_1 = arith.constant 0 : i32
    %c0_i32_2 = arith.constant 0 : i32
    return %c0_i32, %c0_i32_0, %c0_i32_1 : i32, i32, i32
  }
  func.func @transform_3(%arg0: i32) -> (i32, i32, i32) {
    %c0_i32 = arith.constant 0 : i32
    %c0_i32_0 = arith.constant 0 : i32
    %c0_i32_1 = arith.constant 0 : i32
    %c0_i32_2 = arith.constant 0 : i32
    return %c0_i32, %c0_i32_0, %c0_i32_1 : i32, i32, i32
  }
  func.func @transform_4(%arg0: i32) -> (i32, i32, i32) {
    %c0_i32 = arith.constant 0 : i32
    %c0_i32_0 = arith.constant 0 : i32
    %c0_i32_1 = arith.constant 0 : i32
    %c0_i32_2 = arith.constant 0 : i32
    return %c0_i32, %c0_i32_0, %c0_i32_1 : i32, i32, i32
  }
  func.func @transform_5(%arg0: i32) -> (i32, i32, i32, i32) {
    %c0_i32 = arith.constant 0 : i32
    %c0_i32_0 = arith.constant 0 : i32
    %c0_i32_1 = arith.constant 0 : i32
    %c0_i32_2 = arith.constant 0 : i32
    return %arg0, %c0_i32, %c0_i32_0, %c0_i32_1 : i32, i32, i32, i32
  }
}

</mosaic_0001>

<llo_original>
// kernel: downsampling_forward.1
$region0: #{downsampling_forward.1}
  #allocation0 [shape = 'u32[]', space=smem, size = 0x4, offset = 0x4, fixed_abs, tag = 'smem constant byte address 0x4 - core index']
  #allocation1 [shape = 'u32[144,128]{1,0:T(1,128)}', space=vmem, size = 0x12000, scoped, tag = 'internal scratch']
  #allocation2 [shape = 'f32[10,10,4]{2,1,0:T(8,128)}', space=vmem, size = 0x14000, scoped, tag = 'scratch operand']
  %s0 = inlined_call_operand.vmem [shape: f32[8,9,9,4], index: 0, kind: input, shape index: {}]
  %s1 = inlined_call_operand.vmem [shape: f32[9,4,4], index: 1, kind: input, shape index: {}]
  %s2 = inlined_call_operand.vmem [shape: f32[1,1,4], index: 2, kind: input, shape index: {}]
  %s3 = inlined_call_operand.vmem [shape: f32[9,4,8], index: 3, kind: input, shape index: {}]
  %s4 = inlined_call_operand.vmem [shape: f32[1,1,8], index: 4, kind: input, shape index: {}]
  %s5 = inlined_call_operand.vmem [shape: f32[2,8,8,8], index: 5, kind: output, shape index: {}]
  %s6 = sld [smem:[#allocation0]]
  $region53: #{downsampling_forward.1} parent=0
    _
  %s8 = ssub.s32 1, %s6
  %s9 = scalar_select 0, %s8, %s6
  loop: start=0, step=1, limit=4
  $region2: #{downsampling_forward.1} parent=0 // loop_pre_header
    _
  $region3: #{downsampling_forward.1} parent=0 // loop_header
    %s11 = sphi 0, %s15
    %p12 = scmp.ge.s32.totalorder %s11, 4
    %s21 = sphi 0, %s23
    %s24 = sphi 0, %s21
    %s25 = sphi 0, %s24
    %s41 = sphi 0, %s25
    %s45 = sphi 0, %s45
    %s47 = sphi 0, %s45
    %s48 = sphi 0, %s47
    %s62 = sphi 0, %s48
    %s66 = sphi 0, %s66
    %s68 = sphi 0, %s66
    %s69 = sphi 0, %s68
    %s83 = sphi 0, %s69
    %s87 = sphi 0, %s87
    %s89 = sphi 0, %s87
    %s90 = sphi 0, %s89
    %s104 = sphi 0, %s90
    %s108 = sphi 0, %s108
    %s110 = sphi 0, %s108
    %s111 = sphi 0, %s110
    %s125 = sphi 0, %s111
    %s131 = sphi 0, %s133
    %s134 = sphi 0, %s131
    %s135 = sphi 0, %s134
    %s151 = sphi 0, %s135
  $region4: #{downsampling_forward.1} parent=0 // loop_header_branch
    %14 = sbr.rel (%p12) target = $region8
  $region5: #{downsampling_forward.1} parent=0 // loop_body
    %s16 = ssub.s32 %s11, 1
    %s17 = ssub.s32 %s11, 2
    %s18 = sadd.s32 %s11, 1
    %s19 = ssub.s32 %s11, %s18
    %p20 = scmp.eq.s32.totalorder %s19, 0
    %s22 = sadd.s32 %s21, 1
    %s23 = scalar_select %p20, %s21, %s22
    %p26 = pneg %p20
    %p27 = scmp.eq.s32.totalorder %s11, 1
    %p28 = por %p26, %p27
    %p29 = scmp.ne.s32.totalorder %s21, %s24
    %p30 = scmp.eq.s32.totalorder %s11, 0
    %p31 = por %p29, %p30
    %p32 = scmp.ne.s32.totalorder %s21, %s24
    %p33 = scmp.eq.s32.totalorder %s16, 1
    %p34 = por %p32, %p33
    %p35 = scmp.ne.s32.totalorder %s24, %s25
    %p36 = scmp.eq.s32.totalorder %s16, 0
    %p37 = por %p35, %p36
    %p38 = scmp.ne.s32.totalorder %s24, %s25
    %p39 = scmp.eq.s32.totalorder %s17, 1
    %p40 = por %p38, %p39
    %p42 = scmp.ne.s32.totalorder %s25, %s41
    %p43 = scmp.eq.s32.totalorder %s17, 0
    %p44 = por %p42, %p43
    %s46 = sadd.s32 %s45, 1
    %p49 = scmp.eq.s32.totalorder %s11, 1
    %p50 = scmp.ne.s32.totalorder %s45, %s47
    %p51 = scmp.eq.s32.totalorder %s11, 0
    %p52 = por %p50, %p51
    %p53 = scmp.ne.s32.totalorder %s45, %s47
    %p54 = scmp.eq.s32.totalorder %s16, 1
    %p55 = por %p53, %p54
    %p56 = scmp.ne.s32.totalorder %s47, %s48
    %p57 = scmp.eq.s32.totalorder %s16, 0
    %p58 = por %p56, %p57
    %p59 = scmp.ne.s32.totalorder %s47, %s48
    %p60 = scmp.eq.s32.totalorder %s17, 1
    %p61 = por %p59, %p60
    %p63 = scmp.ne.s32.totalorder %s48, %s62
    %p64 = scmp.eq.s32.totalorder %s17, 0
    %p65 = por %p63, %p64
    %s67 = sadd.s32 %s66, 1
    %p70 = scmp.eq.s32.totalorder %s11, 1
    %p71 = scmp.ne.s32.totalorder %s66, %s68
    %p72 = scmp.eq.s32.totalorder %s11, 0
    %p73 = por %p71, %p72
    %p74 = scmp.ne.s32.totalorder %s66, %s68
    %p75 = scmp.eq.s32.totalorder %s16, 1
    %p76 = por %p74, %p75
    %p77 = scmp.ne.s32.totalorder %s68, %s69
    %p78 = scmp.eq.s32.totalorder %s16, 0
    %p79 = por %p77, %p78
    %p80 = scmp.ne.s32.totalorder %s68, %s69
    %p81 = scmp.eq.s32.totalorder %s17, 1
    %p82 = por %p80, %p81
    %p84 = scmp.ne.s32.totalorder %s69, %s83
    %p85 = scmp.eq.s32.totalorder %s17, 0
    %p86 = por %p84, %p85
    %s88 = sadd.s32 %s87, 1
    %p91 = scmp.eq.s32.totalorder %s11, 1
    %p92 = scmp.ne.s32.totalorder %s87, %s89
    %p93 = scmp.eq.s32.totalorder %s11, 0
    %p94 = por %p92, %p93
    %p95 = scmp.ne.s32.totalorder %s87, %s89
    %p96 = scmp.eq.s32.totalorder %s16, 1
    %p97 = por %p95, %p96
    %p98 = scmp.ne.s32.totalorder %s89, %s90
    %p99 = scmp.eq.s32.totalorder %s16, 0
    %p100 = por %p98, %p99
    %p101 = scmp.ne.s32.totalorder %s89, %s90
    %p102 = scmp.eq.s32.totalorder %s17, 1
    %p103 = por %p101, %p102
    %p105 = scmp.ne.s32.totalorder %s90, %s104
    %p106 = scmp.eq.s32.totalorder %s17, 0
    %p107 = por %p105, %p106
    %s109 = sadd.s32 %s108, 1
    %p112 = scmp.eq.s32.totalorder %s11, 1
    %p113 = scmp.ne.s32.totalorder %s108, %s110
    %p114 = scmp.eq.s32.totalorder %s11, 0
    %p115 = por %p113, %p114
    %p116 = scmp.ne.s32.totalorder %s108, %s110
    %p117 = scmp.eq.s32.totalorder %s16, 1
    %p118 = por %p116, %p117
    %p119 = scmp.ne.s32.totalorder %s110, %s111
    %p120 = scmp.eq.s32.totalorder %s16, 0
    %p121 = por %p119, %p120
    %p122 = scmp.ne.s32.totalorder %s110, %s111
    %p123 = scmp.eq.s32.totalorder %s17, 1
    %p124 = por %p122, %p123
    %p126 = scmp.ne.s32.totalorder %s111, %s125
    %p127 = scmp.eq.s32.totalorder %s17, 0
    %p128 = por %p126, %p127
    %s129 = ssub.s32 %s11, %s18
    %p130 = scmp.eq.s32.totalorder %s129, 0
    %s132 = sadd.s32 %s131, 1
    %s133 = scalar_select %p130, %s131, %s132
    %p136 = pneg %p130
    %p137 = scmp.eq.s32.totalorder %s11, 1
    %p138 = por %p136, %p137
    %p139 = scmp.ne.s32.totalorder %s131, %s134
    %p140 = scmp.eq.s32.totalorder %s11, 0
    %p141 = por %p139, %p140
    %p142 = scmp.ne.s32.totalorder %s131, %s134
    %p143 = scmp.eq.s32.totalorder %s16, 1
    %p144 = por %p142, %p143
    %p145 = scmp.ne.s32.totalorder %s134, %s135
    %p146 = scmp.eq.s32.totalorder %s16, 0
    %p147 = por %p145, %p146
    %p148 = scmp.ne.s32.totalorder %s134, %s135
    %p149 = scmp.eq.s32.totalorder %s17, 1
    %p150 = por %p148, %p149
    %p152 = scmp.ne.s32.totalorder %s135, %s151
    %p153 = scmp.eq.s32.totalorder %s17, 0
    %p154 = por %p152, %p153
    %p155 = scmp.le.s32.totalorder 1, %s11
    %p156 = scmp.lt.s32.totalorder %s11, 3
    %p157 = pnand %p155, %p156
    %p158 = pneg %p157
    // Predicated region
    $region9: #{downsampling_forward.1} parent=5 // pred_check
      _
    $region10: #{downsampling_forward.1} parent=5 // pred_check_branch
      %160 = sbr.rel (%p157) target = $region12
    $region11: #{downsampling_forward.1} parent=5 // pred_region
      %s161 = ssub.s32 %s11, 1
      // Predicated region
      $region13: #{downsampling_forward.1} parent=11 // pred_check
        %p162 = pneg %p58
      $region14: #{downsampling_forward.1} parent=11 // pred_check_branch
        %164 = sbr.rel (%p162) target = $region16
      $region15: #{downsampling_forward.1} parent=11 // pred_region
        _
      $region16: #{downsampling_forward.1} parent=11 // pred_fallthru
        _
      // Predicated region
      $region17: #{downsampling_forward.1} parent=11 // pred_check
        %p165 = pneg %p79
      $region18: #{downsampling_forward.1} parent=11 // pred_check_branch
        %167 = sbr.rel (%p165) target = $region20
      $region19: #{downsampling_forward.1} parent=11 // pred_region
        _
      $region20: #{downsampling_forward.1} parent=11 // pred_fallthru
        _
      // Predicated region
      $region21: #{downsampling_forward.1} parent=11 // pred_check
        %p168 = pneg %p100
      $region22: #{downsampling_forward.1} parent=11 // pred_check_branch
        %170 = sbr.rel (%p168) target = $region24
      $region23: #{downsampling_forward.1} parent=11 // pred_region
        _
      $region24: #{downsampling_forward.1} parent=11 // pred_fallthru
        _
      // Predicated region
      $region25: #{downsampling_forward.1} parent=11 // pred_check
        %p171 = pneg %p121
      $region26: #{downsampling_forward.1} parent=11 // pred_check_branch
        %173 = sbr.rel (%p171) target = $region28
      $region27: #{downsampling_forward.1} parent=11 // pred_region
        _
      $region28: #{downsampling_forward.1} parent=11 // pred_fallthru
        _
    $region12: #{downsampling_forward.1} parent=5 // pred_fallthru
      _
    %p174 = scmp.lt.s32.totalorder %s11, 2
    // Predicated region
    $region29: #{downsampling_forward.1} parent=5 // pred_check
      %p175 = pneg %p174
    $region30: #{downsampling_forward.1} parent=5 // pred_check_branch
      %177 = sbr.rel (%p175) target = $region32
    $region31: #{downsampling_forward.1} parent=5 // pred_region
      // Predicated region
      $region33: #{downsampling_forward.1} parent=31 // pred_check
        %p178 = pneg %p31
      $region34: #{downsampling_forward.1} parent=31 // pred_check_branch
        %180 = sbr.rel (%p178) target = $region36
      $region35: #{downsampling_forward.1} parent=31 // pred_region
        %s181 = smul.u32 4, %s11
        %p182 = scmp.lt.s32.totalorder %s181, 7
        %s183 = scalar_select %p182, %s181, 7
        %s184 = smul.addr %s183, 18
        %s185 = smul.addr %s184, 8
        %s186 = scalar_lea.vmem %s0, %s185
        %s187 = smul.u32 4, %s11
      $region36: #{downsampling_forward.1} parent=31 // pred_fallthru
        _
    $region32: #{downsampling_forward.1} parent=5 // pred_fallthru
      _
    %p188 = scmp.le.s32.totalorder 1, %s11
    %p189 = scmp.lt.s32.totalorder %s11, 3
    %p190 = pnand %p188, %p189
    %p191 = pneg %p190
    // Predicated region
    $region37: #{downsampling_forward.1} parent=5 // pred_check
      _
    $region38: #{downsampling_forward.1} parent=5 // pred_check_branch
      %193 = sbr.rel (%p190) target = $region40
    $region39: #{downsampling_forward.1} parent=5 // pred_region
      %s194 = ssub.s32 %s11, 1
      %s195 = smul.u32 4, %s16
      %p196 = scmp.lt.s32.totalorder %s195, 7
      %s197 = scalar_select %p196, %s195, 7
      %s198 = smul.addr %s197, 18
      %s199 = smul.addr %s198, 8
      %s200 = scalar_lea.vmem %s0, %s199
      %p201 = pneg %p37
      %p202 = pneg %p34
      %p203 = pneg %p58
      %p204 = pneg %p55
      %p205 = pneg %p79
      %p206 = pneg %p76
      %p207 = pneg %p100
      %p208 = pneg %p97
      %p209 = pneg %p121
      %p210 = pneg %p118
      %p211 = pneg %p147
      %p212 = pneg %p144
      %p213 = scmp.lt.s32.totalorder %s16, 1
      %s214 = scalar_select %p213, %s16, 1
      %s215 = smul.addr %s214, 8
      %s216 = smul.addr %s215, 8
      %s217 = scalar_lea.vmem %s5, %s216
      %s218 = smul.u32 4, %s16
      %p219 = scmp.lt.s32.totalorder %s218, 7
      %s220 = scalar_select %p219, %s218, 7
      %s221 = smul.addr %s220, 18
      %s222 = smul.addr %s221, 8
      %s223 = scalar_lea.vmem %s0, %s222
      %s224 = smul.u32 4, %s16
      %p225 = scmp.lt.s32.totalorder %s16, 1
      %s226 = scalar_select %p225, %s16, 1
      %s227 = smul.addr %s226, 8
      %s228 = smul.addr %s227, 8
      %s229 = scalar_lea.vmem %s5, %s228
      %v230 = vld [vmem:[%s223] sm:$0xff]
      %v231 = vld [vmem:[%s223 + $0x10] sm:$0xff]
      %v232 = vld [vmem:[%s223 + $0x20] sm:$0xff]
      %v233 = vld [vmem:[%s223 + $0x30] sm:$0xff]
      %v234 = vld [vmem:[%s223 + $0x40] sm:$0xff]
      %v235 = vld [vmem:[%s223 + $0x50] sm:$0xff]
      %v236 = vld [vmem:[%s223 + $0x60] sm:$0xff]
      %v237 = vld [vmem:[%s223 + $0x70] sm:$0xff]
      %v238 = vld [vmem:[%s1] sm:$0xf]
      %s239 = scalar_lea.vmem %s223, 144
      %v240 = vld [vmem:[%s239] sm:$0xff]
      %v241 = vld [vmem:[%s239 + $0x10] sm:$0xff]
      %v242 = vld [vmem:[%s239 + $0x20] sm:$0xff]
      %v243 = vld [vmem:[%s239 + $0x30] sm:$0xff]
      %v244 = vld [vmem:[%s239 + $0x40] sm:$0xff]
      %v245 = vld [vmem:[%s239 + $0x50] sm:$0xff]
      %v246 = vld [vmem:[%s239 + $0x60] sm:$0xff]
      %v247 = vld [vmem:[%s239 + $0x70] sm:$0xff]
      %s248 = scalar_lea.vmem %s1, 4
      %v249 = vld [vmem:[%s248] sm:$0xf]
      %vm250 = vcmask 31744
      %v252 = vsel %vm250, %v240, 0
      %vm254 = vcmask 1043456
      %v256 = vsel %vm254, %v249, 0
      %258 = vmatprep.subr.mxu0 0.0
      %259 = vmatpush1.msra.mxu0 0.0
      %260 = vmatprep.subr.mxu0 0.0
      %261 = vmatpush1.msra.mxu0 0.0
      %262 = vmatprep.subr.mxu0 0.0
      %263 = vmatpush1.msra.mxu0 0.0
      %264 = vmatprep.subr.mxu0 0.0
      %265 = vmatpush1.msra.mxu0 0.0
      %266 = vmatprep.subr.mxu0 0.0
      %267 = vmatpush1.msra.mxu0 0.0
      %268 = vmatprep.subr.mxu0 0.0
      %269 = vmatpush1.msra.mxu0 0.0
      %270 = vmatprep.subr.mxu0 0.0
      %271 = vmatpush1.msra.mxu0 0.0
      %272 = vmatprep.subr.mxu0 0.0
      %273 = vmatpush1.msra.mxu0 0.0
      %274 = vmatprep.subr.mxu0 0.0
      %275 = vmatpush1.msra.mxu0 0.0
      %276 = vmatprep.subr.mxu0 0.0
      %277 = vmatpush1.msra.mxu0 0.0
      %278 = vmatprep.subr.mxu0 0.0
      %279 = vmatpush1.msra.mxu0 0.0
      %280 = vmatprep.subr.mxu0 0.0
      %281 = vmatpush1.msra.mxu0 0.0
      %282 = vmatprep.subr.mxu0 0.0
      %283 = vmatpush1.msra.mxu0 0.0
      %284 = vmatprep.subr.mxu0 0.0
      %285 = vmatpush1.msra.mxu0 0.0
      %286 = vmatprep.subr.mxu0 0.0
      %287 = vmatpush1.msra.mxu0 0.0
      %288 = vmatprep.subr.mxu0 0.0
      %289 = vmatpush1.msra.mxu0 %v256
      %290 = vmatprep.subr.mxu0 0.0
      %291 = vmatpush2.msra.mxu0 0.0
      %292 = vmatprep.subr.mxu0 0.0
      %293 = vmatpush2.msra.mxu0 0.0
      %294 = vmatprep.subr.mxu0 0.0
      %295 = vmatpush2.msra.mxu0 0.0
      %296 = vmatprep.subr.mxu0 0.0
      %297 = vmatpush2.msra.mxu0 0.0
      %298 = vmatprep.subr.mxu0 0.0
      %299 = vmatpush2.msra.mxu0 0.0
      %300 = vmatprep.subr.mxu0 0.0
      %301 = vmatpush2.msra.mxu0 0.0
      %302 = vmatprep.subr.mxu0 0.0
      %303 = vmatpush2.msra.mxu0 0.0
      %304 = vmatprep.subr.mxu0 0.0
      %305 = vmatpush2.msra.mxu0 0.0
      %306 = vmatprep.subr.mxu0 0.0
      %307 = vmatpush2.msra.mxu0 0.0
      %308 = vmatprep.subr.mxu0 0.0
      %309 = vmatpush2.msra.mxu0 0.0
      %310 = vmatprep.subr.mxu0 0.0
      %311 = vmatpush2.msra.mxu0 0.0
      %312 = vmatprep.subr.mxu0 0.0
      %313 = vmatpush2.msra.mxu0 0.0
      %314 = vmatprep.subr.mxu0 0.0
      %315 = vmatpush2.msra.mxu0 0.0
      %316 = vmatprep.subr.mxu0 0.0
      %317 = vmatpush2.msra.mxu0 0.0
      %318 = vmatprep.subr.mxu0 0.0
      %319 = vmatpush2.msra.mxu0 0.0
      %320 = vmatprep.subr.mxu0 0.0
      %321 = vmatpush2.msra.mxu0 0.0
      %322 = vmatprep.mubr.f32.mxu0 0.0
      %323 = vmatmul.mubr.f32.gmra.mxu0 %v252
      %v324 = vpop.f32.mrf.mxu0
      %v325 = vadd.f32 0.0, %v324
      %v326 = vpop.f32.mrf.mxu0
      %327 = vdwg.mxu0
      %v329 = vsel %vm250, %v241, 0
      %331 = vmatprep.subr.mxu0 0.0
      %332 = vmatpush1.msra.mxu0 0.0
      %333 = vmatprep.subr.mxu0 0.0
      %334 = vmatpush1.msra.mxu0 0.0
      %335 = vmatprep.subr.mxu0 0.0
      %336 = vmatpush1.msra.mxu0 0.0
      %337 = vmatprep.subr.mxu0 0.0
      %338 = vmatpush1.msra.mxu0 0.0
      %339 = vmatprep.subr.mxu0 0.0
      %340 = vmatpush1.msra.mxu0 0.0
      %341 = vmatprep.subr.mxu0 0.0
      %342 = vmatpush1.msra.mxu0 0.0
      %343 = vmatprep.subr.mxu0 0.0
      %344 = vmatpush1.msra.mxu0 0.0
      %345 = vmatprep.subr.mxu0 0.0
      %346 = vmatpush1.msra.mxu0 0.0
      %347 = vmatprep.subr.mxu0 0.0
      %348 = vmatpush1.msra.mxu0 0.0
      %349 = vmatprep.subr.mxu0 0.0
      %350 = vmatpush1.msra.mxu0 0.0
      %351 = vmatprep.subr.mxu0 0.0
      %352 = vmatpush1.msra.mxu0 0.0
      %353 = vmatprep.subr.mxu0 0.0
      %354 = vmatpush1.msra.mxu0 0.0
      %355 = vmatprep.subr.mxu0 0.0
      %356 = vmatpush1.msra.mxu0 0.0
      %357 = vmatprep.subr.mxu0 0.0
      %358 = vmatpush1.msra.mxu0 0.0
      %359 = vmatprep.subr.mxu0 0.0
      %360 = vmatpush1.msra.mxu0 0.0
      %361 = vmatprep.subr.mxu0 0.0
      %362 = vmatpush1.msra.mxu0 %v256
      %363 = vmatprep.subr.mxu0 0.0
      %364 = vmatpush2.msra.mxu0 0.0
      %365 = vmatprep.subr.mxu0 0.0
      %366 = vmatpush2.msra.mxu0 0.0
      %367 = vmatprep.subr.mxu0 0.0
      %368 = vmatpush2.msra.mxu0 0.0
      %369 = vmatprep.subr.mxu0 0.0
      %370 = vmatpush2.msra.mxu0 0.0
      %371 = vmatprep.subr.mxu0 0.0
      %372 = vmatpush2.msra.mxu0 0.0
      %373 = vmatprep.subr.mxu0 0.0
      %374 = vmatpush2.msra.mxu0 0.0
      %375 = vmatprep.subr.mxu0 0.0
      %376 = vmatpush2.msra.mxu0 0.0
      %377 = vmatprep.subr.mxu0 0.0
      %378 = vmatpush2.msra.mxu0 0.0
      %379 = vmatprep.subr.mxu0 0.0
      %380 = vmatpush2.msra.mxu0 0.0
      %381 = vmatprep.subr.mxu0 0.0
      %382 = vmatpush2.msra.mxu0 0.0
      %383 = vmatprep.subr.mxu0 0.0
      %384 = vmatpush2.msra.mxu0 0.0
      %385 = vmatprep.subr.mxu0 0.0
      %386 = vmatpush2.msra.mxu0 0.0
      %387 = vmatprep.subr.mxu0 0.0
      %388 = vmatpush2.msra.mxu0 0.0
      %389 = vmatprep.subr.mxu0 0.0
      %390 = vmatpush2.msra.mxu0 0.0
      %391 = vmatprep.subr.mxu0 0.0
      %392 = vmatpush2.msra.mxu0 0.0
      %393 = vmatprep.subr.mxu0 0.0
      %394 = vmatpush2.msra.mxu0 0.0
      %395 = vmatprep.mubr.f32.mxu0 0.0
      %396 = vmatmul.mubr.f32.gmra.mxu0 %v329
      %v397 = vpop.f32.mrf.mxu0
      %v398 = vadd.f32 0.0, %v397
      %v399 = vpop.f32.mrf.mxu0
      %400 = vdwg.mxu0
      %v402 = vsel %vm250, %v242, 0
      %404 = vmatprep.subr.mxu0 0.0
      %405 = vmatpush1.msra.mxu0 0.0
      %406 = vmatprep.subr.mxu0 0.0
      %407 = vmatpush1.msra.mxu0 0.0
      %408 = vmatprep.subr.mxu0 0.0
      %409 = vmatpush1.msra.mxu0 0.0
      %410 = vmatprep.subr.mxu0 0.0
      %411 = vmatpush1.msra.mxu0 0.0
      %412 = vmatprep.subr.mxu0 0.0
      %413 = vmatpush1.msra.mxu0 0.0
      %414 = vmatprep.subr.mxu0 0.0
      %415 = vmatpush1.msra.mxu0 0.0
      %416 = vmatprep.subr.mxu0 0.0
      %417 = vmatpush1.msra.mxu0 0.0
      %418 = vmatprep.subr.mxu0 0.0
      %419 = vmatpush1.msra.mxu0 0.0
      %420 = vmatprep.subr.mxu0 0.0
      %421 = vmatpush1.msra.mxu0 0.0
      %422 = vmatprep.subr.mxu0 0.0
      %423 = vmatpush1.msra.mxu0 0.0
      %424 = vmatprep.subr.mxu0 0.0
      %425 = vmatpush1.msra.mxu0 0.0
      %426 = vmatprep.subr.mxu0 0.0
      %427 = vmatpush1.msra.mxu0 0.0
      %428 = vmatprep.subr.mxu0 0.0
      %429 = vmatpush1.msra.mxu0 0.0
      %430 = vmatprep.subr.mxu0 0.0
      %431 = vmatpush1.msra.mxu0 0.0
      %432 = vmatprep.subr.mxu0 0.0
      %433 = vmatpush1.msra.mxu0 0.0
      %434 = vmatprep.subr.mxu0 0.0
      %435 = vmatpush1.msra.mxu0 %v256
      %436 = vmatprep.subr.mxu0 0.0
      %437 = vmatpush2.msra.mxu0 0.0
      %438 = vmatprep.subr.mxu0 0.0
      %439 = vmatpush2.msra.mxu0 0.0
      %440 = vmatprep.subr.mxu0 0.0
      %441 = vmatpush2.msra.mxu0 0.0
      %442 = vmatprep.subr.mxu0 0.0
      %443 = vmatpush2.msra.mxu0 0.0
      %444 = vmatprep.subr.mxu0 0.0
      %445 = vmatpush2.msra.mxu0 0.0
      %446 = vmatprep.subr.mxu0 0.0
      %447 = vmatpush2.msra.mxu0 0.0
      %448 = vmatprep.subr.mxu0 0.0
      %449 = vmatpush2.msra.mxu0 0.0
      %450 = vmatprep.subr.mxu0 0.0
      %451 = vmatpush2.msra.mxu0 0.0
      %452 = vmatprep.subr.mxu0 0.0
      %453 = vmatpush2.msra.mxu0 0.0
      %454 = vmatprep.subr.mxu0 0.0
      %455 = vmatpush2.msra.mxu0 0.0
      %456 = vmatprep.subr.mxu0 0.0
      %457 = vmatpush2.msra.mxu0 0.0
      %458 = vmatprep.subr.mxu0 0.0
      %459 = vmatpush2.msra.mxu0 0.0
      %460 = vmatprep.subr.mxu0 0.0
      %461 = vmatpush2.msra.mxu0 0.0
      %462 = vmatprep.subr.mxu0 0.0
      %463 = vmatpush2.msra.mxu0 0.0
      %464 = vmatprep.subr.mxu0 0.0
      %465 = vmatpush2.msra.mxu0 0.0
      %466 = vmatprep.subr.mxu0 0.0
      %467 = vmatpush2.msra.mxu0 0.0
      %468 = vmatprep.mubr.f32.mxu0 0.0
      %469 = vmatmul.mubr.f32.gmra.mxu0 %v402
      %v470 = vpop.f32.mrf.mxu0
      %v471 = vadd.f32 0.0, %v470
      %v472 = vpop.f32.mrf.mxu0
      %473 = vdwg.mxu0
      %v475 = vsel %vm250, %v243, 0
      %477 = vmatprep.subr.mxu0 0.0
      %478 = vmatpush1.msra.mxu0 0.0
      %479 = vmatprep.subr.mxu0 0.0
      %480 = vmatpush1.msra.mxu0 0.0
      %481 = vmatprep.subr.mxu0 0.0
      %482 = vmatpush1.msra.mxu0 0.0
      %483 = vmatprep.subr.mxu0 0.0
      %484 = vmatpush1.msra.mxu0 0.0
      %485 = vmatprep.subr.mxu0 0.0
      %486 = vmatpush1.msra.mxu0 0.0
      %487 = vmatprep.subr.mxu0 0.0
      %488 = vmatpush1.msra.mxu0 0.0
      %489 = vmatprep.subr.mxu0 0.0
      %490 = vmatpush1.msra.mxu0 0.0
      %491 = vmatprep.subr.mxu0 0.0
      %492 = vmatpush1.msra.mxu0 0.0
      %493 = vmatprep.subr.mxu0 0.0
      %494 = vmatpush1.msra.mxu0 0.0
      %495 = vmatprep.subr.mxu0 0.0
      %496 = vmatpush1.msra.mxu0 0.0
      %497 = vmatprep.subr.mxu0 0.0
      %498 = vmatpush1.msra.mxu0 0.0
      %499 = vmatprep.subr.mxu0 0.0
      %500 = vmatpush1.msra.mxu0 0.0
      %501 = vmatprep.subr.mxu0 0.0
      %502 = vmatpush1.msra.mxu0 0.0
      %503 = vmatprep.subr.mxu0 0.0
      %504 = vmatpush1.msra.mxu0 0.0
      %505 = vmatprep.subr.mxu0 0.0
      %506 = vmatpush1.msra.mxu0 0.0
      %507 = vmatprep.subr.mxu0 0.0
      %508 = vmatpush1.msra.mxu0 %v256
      %509 = vmatprep.subr.mxu0 0.0
      %510 = vmatpush2.msra.mxu0 0.0
      %511 = vmatprep.subr.mxu0 0.0
      %512 = vmatpush2.msra.mxu0 0.0
      %513 = vmatprep.subr.mxu0 0.0
      %514 = vmatpush2.msra.mxu0 0.0
      %515 = vmatprep.subr.mxu0 0.0
      %516 = vmatpush2.msra.mxu0 0.0
      %517 = vmatprep.subr.mxu0 0.0
      %518 = vmatpush2.msra.mxu0 0.0
      %519 = vmatprep.subr.mxu0 0.0
      %520 = vmatpush2.msra.mxu0 0.0
      %521 = vmatprep.subr.mxu0 0.0
      %522 = vmatpush2.msra.mxu0 0.0
      %523 = vmatprep.subr.mxu0 0.0
      %524 = vmatpush2.msra.mxu0 0.0
      %525 = vmatprep.subr.mxu0 0.0
      %526 = vmatpush2.msra.mxu0 0.0
      %527 = vmatprep.subr.mxu0 0.0
      %528 = vmatpush2.msra.mxu0 0.0
      %529 = vmatprep.subr.mxu0 0.0
      %530 = vmatpush2.msra.mxu0 0.0
      %531 = vmatprep.subr.mxu0 0.0
      %532 = vmatpush2.msra.mxu0 0.0
      %533 = vmatprep.subr.mxu0 0.0
      %534 = vmatpush2.msra.mxu0 0.0
      %535 = vmatprep.subr.mxu0 0.0
      %536 = vmatpush2.msra.mxu0 0.0
      %537 = vmatprep.subr.mxu0 0.0
      %538 = vmatpush2.msra.mxu0 0.0
      %539 = vmatprep.subr.mxu0 0.0
      %540 = vmatpush2.msra.mxu0 0.0
      %541 = vmatprep.mubr.f32.mxu0 0.0
      %542 = vmatmul.mubr.f32.gmra.mxu0 %v475
      %v543 = vpop.f32.mrf.mxu0
      %v544 = vadd.f32 0.0, %v543
      %v545 = vpop.f32.mrf.mxu0
      %546 = vdwg.mxu0
      %v548 = vsel %vm250, %v244, 0
      %550 = vmatprep.subr.mxu0 0.0
      %551 = vmatpush1.msra.mxu0 0.0
      %552 = vmatprep.subr.mxu0 0.0
      %553 = vmatpush1.msra.mxu0 0.0
      %554 = vmatprep.subr.mxu0 0.0
      %555 = vmatpush1.msra.mxu0 0.0
      %556 = vmatprep.subr.mxu0 0.0
      %557 = vmatpush1.msra.mxu0 0.0
      %558 = vmatprep.subr.mxu0 0.0
      %559 = vmatpush1.msra.mxu0 0.0
      %560 = vmatprep.subr.mxu0 0.0
      %561 = vmatpush1.msra.mxu0 0.0
      %562 = vmatprep.subr.mxu0 0.0
      %563 = vmatpush1.msra.mxu0 0.0
      %564 = vmatprep.subr.mxu0 0.0
      %565 = vmatpush1.msra.mxu0 0.0
      %566 = vmatprep.subr.mxu0 0.0
      %567 = vmatpush1.msra.mxu0 0.0
      %568 = vmatprep.subr.mxu0 0.0
      %569 = vmatpush1.msra.mxu0 0.0
      %570 = vmatprep.subr.mxu0 0.0
      %571 = vmatpush1.msra.mxu0 0.0
      %572 = vmatprep.subr.mxu0 0.0
      %573 = vmatpush1.msra.mxu0 0.0
      %574 = vmatprep.subr.mxu0 0.0
      %575 = vmatpush1.msra.mxu0 0.0
      %576 = vmatprep.subr.mxu0 0.0
      %577 = vmatpush1.msra.mxu0 0.0
      %578 = vmatprep.subr.mxu0 0.0
      %579 = vmatpush1.msra.mxu0 0.0
      %580 = vmatprep.subr.mxu0 0.0
      %581 = vmatpush1.msra.mxu0 %v256
      %582 = vmatprep.subr.mxu0 0.0
      %583 = vmatpush2.msra.mxu0 0.0
      %584 = vmatprep.subr.mxu0 0.0
      %585 = vmatpush2.msra.mxu0 0.0
      %586 = vmatprep.subr.mxu0 0.0
      %587 = vmatpush2.msra.mxu0 0.0
      %588 = vmatprep.subr.mxu0 0.0
      %589 = vmatpush2.msra.mxu0 0.0
      %590 = vmatprep.subr.mxu0 0.0
      %591 = vmatpush2.msra.mxu0 0.0
      %592 = vmatprep.subr.mxu0 0.0
      %593 = vmatpush2.msra.mxu0 0.0
      %594 = vmatprep.subr.mxu0 0.0
      %595 = vmatpush2.msra.mxu0 0.0
      %596 = vmatprep.subr.mxu0 0.0
      %597 = vmatpush2.msra.mxu0 0.0
      %598 = vmatprep.subr.mxu0 0.0
      %599 = vmatpush2.msra.mxu0 0.0
      %600 = vmatprep.subr.mxu0 0.0
      %601 = vmatpush2.msra.mxu0 0.0
      %602 = vmatprep.subr.mxu0 0.0
      %603 = vmatpush2.msra.mxu0 0.0
      %604 = vmatprep.subr.mxu0 0.0
      %605 = vmatpush2.msra.mxu0 0.0
      %606 = vmatprep.subr.mxu0 0.0
      %607 = vmatpush2.msra.mxu0 0.0
      %608 = vmatprep.subr.mxu0 0.0
      %609 = vmatpush2.msra.mxu0 0.0
      %610 = vmatprep.subr.mxu0 0.0
      %611 = vmatpush2.msra.mxu0 0.0
      %612 = vmatprep.subr.mxu0 0.0
      %613 = vmatpush2.msra.mxu0 0.0
      %614 = vmatprep.mubr.f32.mxu0 0.0
      %615 = vmatmul.mubr.f32.gmra.mxu0 %v548
      %v616 = vpop.f32.mrf.mxu0
      %v617 = vadd.f32 0.0, %v616
      %v618 = vpop.f32.mrf.mxu0
      %619 = vdwg.mxu0
      %v621 = vsel %vm250, %v245, 0
      %623 = vmatprep.subr.mxu0 0.0
      %624 = vmatpush1.msra.mxu0 0.0
      %625 = vmatprep.subr.mxu0 0.0
      %626 = vmatpush1.msra.mxu0 0.0
      %627 = vmatprep.subr.mxu0 0.0
      %628 = vmatpush1.msra.mxu0 0.0
      %629 = vmatprep.subr.mxu0 0.0
      %630 = vmatpush1.msra.mxu0 0.0
      %631 = vmatprep.subr.mxu0 0.0
      %632 = vmatpush1.msra.mxu0 0.0
      %633 = vmatprep.subr.mxu0 0.0
      %634 = vmatpush1.msra.mxu0 0.0
      %635 = vmatprep.subr.mxu0 0.0
      %636 = vmatpush1.msra.mxu0 0.0
      %637 = vmatprep.subr.mxu0 0.0
      %638 = vmatpush1.msra.mxu0 0.0
      %639 = vmatprep.subr.mxu0 0.0
      %640 = vmatpush1.msra.mxu0 0.0
      %641 = vmatprep.subr.mxu0 0.0
      %642 = vmatpush1.msra.mxu0 0.0
      %643 = vmatprep.subr.mxu0 0.0
      %644 = vmatpush1.msra.mxu0 0.0
      %645 = vmatprep.subr.mxu0 0.0
      %646 = vmatpush1.msra.mxu0 0.0
      %647 = vmatprep.subr.mxu0 0.0
      %648 = vmatpush1.msra.mxu0 0.0
      %649 = vmatprep.subr.mxu0 0.0
      %650 = vmatpush1.msra.mxu0 0.0
      %651 = vmatprep.subr.mxu0 0.0
      %652 = vmatpush1.msra.mxu0 0.0
      %653 = vmatprep.subr.mxu0 0.0
      %654 = vmatpush1.msra.mxu0 %v256
      %655 = vmatprep.subr.mxu0 0.0
      %656 = vmatpush2.msra.mxu0 0.0
      %657 = vmatprep.subr.mxu0 0.0
      %658 = vmatpush2.msra.mxu0 0.0
      %659 = vmatprep.subr.mxu0 0.0
      %660 = vmatpush2.msra.mxu0 0.0
      %661 = vmatprep.subr.mxu0 0.0
      %662 = vmatpush2.msra.mxu0 0.0
      %663 = vmatprep.subr.mxu0 0.0
      %664 = vmatpush2.msra.mxu0 0.0
      %665 = vmatprep.subr.mxu0 0.0
      %666 = vmatpush2.msra.mxu0 0.0
      %667 = vmatprep.subr.mxu0 0.0
      %668 = vmatpush2.msra.mxu0 0.0
      %669 = vmatprep.subr.mxu0 0.0
      %670 = vmatpush2.msra.mxu0 0.0
      %671 = vmatprep.subr.mxu0 0.0
      %672 = vmatpush2.msra.mxu0 0.0
      %673 = vmatprep.subr.mxu0 0.0
      %674 = vmatpush2.msra.mxu0 0.0
      %675 = vmatprep.subr.mxu0 0.0
      %676 = vmatpush2.msra.mxu0 0.0
      %677 = vmatprep.subr.mxu0 0.0
      %678 = vmatpush2.msra.mxu0 0.0
      %679 = vmatprep.subr.mxu0 0.0
      %680 = vmatpush2.msra.mxu0 0.0
      %681 = vmatprep.subr.mxu0 0.0
      %682 = vmatpush2.msra.mxu0 0.0
      %683 = vmatprep.subr.mxu0 0.0
      %684 = vmatpush2.msra.mxu0 0.0
      %685 = vmatprep.subr.mxu0 0.0
      %686 = vmatpush2.msra.mxu0 0.0
      %687 = vmatprep.mubr.f32.mxu0 0.0
      %688 = vmatmul.mubr.f32.gmra.mxu0 %v621
      %v689 = vpop.f32.mrf.mxu0
      %v690 = vadd.f32 0.0, %v689
      %v691 = vpop.f32.mrf.mxu0
      %692 = vdwg.mxu0
      %v694 = vsel %vm250, %v246, 0
      %696 = vmatprep.subr.mxu0 0.0
      %697 = vmatpush1.msra.mxu0 0.0
      %698 = vmatprep.subr.mxu0 0.0
      %699 = vmatpush1.msra.mxu0 0.0
      %700 = vmatprep.subr.mxu0 0.0
      %701 = vmatpush1.msra.mxu0 0.0
      %702 = vmatprep.subr.mxu0 0.0
      %703 = vmatpush1.msra.mxu0 0.0
      %704 = vmatprep.subr.mxu0 0.0
      %705 = vmatpush1.msra.mxu0 0.0
      %706 = vmatprep.subr.mxu0 0.0
      %707 = vmatpush1.msra.mxu0 0.0
      %708 = vmatprep.subr.mxu0 0.0
      %709 = vmatpush1.msra.mxu0 0.0
      %710 = vmatprep.subr.mxu0 0.0
      %711 = vmatpush1.msra.mxu0 0.0
      %712 = vmatprep.subr.mxu0 0.0
      %713 = vmatpush1.msra.mxu0 0.0
      %714 = vmatprep.subr.mxu0 0.0
      %715 = vmatpush1.msra.mxu0 0.0
      %716 = vmatprep.subr.mxu0 0.0
      %717 = vmatpush1.msra.mxu0 0.0
      %718 = vmatprep.subr.mxu0 0.0
      %719 = vmatpush1.msra.mxu0 0.0
      %720 = vmatprep.subr.mxu0 0.0
      %721 = vmatpush1.msra.mxu0 0.0
      %722 = vmatprep.subr.mxu0 0.0
      %723 = vmatpush1.msra.mxu0 0.0
      %724 = vmatprep.subr.mxu0 0.0
      %725 = vmatpush1.msra.mxu0 0.0
      %726 = vmatprep.subr.mxu0 0.0
      %727 = vmatpush1.msra.mxu0 %v256
      %728 = vmatprep.subr.mxu0 0.0
      %729 = vmatpush2.msra.mxu0 0.0
      %730 = vmatprep.subr.mxu0 0.0
      %731 = vmatpush2.msra.mxu0 0.0
      %732 = vmatprep.subr.mxu0 0.0
      %733 = vmatpush2.msra.mxu0 0.0
      %734 = vmatprep.subr.mxu0 0.0
      %735 = vmatpush2.msra.mxu0 0.0
      %736 = vmatprep.subr.mxu0 0.0
      %737 = vmatpush2.msra.mxu0 0.0
      %738 = vmatprep.subr.mxu0 0.0
      %739 = vmatpush2.msra.mxu0 0.0
      %740 = vmatprep.subr.mxu0 0.0
      %741 = vmatpush2.msra.mxu0 0.0
      %742 = vmatprep.subr.mxu0 0.0
      %743 = vmatpush2.msra.mxu0 0.0
      %744 = vmatprep.subr.mxu0 0.0
      %745 = vmatpush2.msra.mxu0 0.0
      %746 = vmatprep.subr.mxu0 0.0
      %747 = vmatpush2.msra.mxu0 0.0
      %748 = vmatprep.subr.mxu0 0.0
      %749 = vmatpush2.msra.mxu0 0.0
      %750 = vmatprep.subr.mxu0 0.0
      %751 = vmatpush2.msra.mxu0 0.0
      %752 = vmatprep.subr.mxu0 0.0
      %753 = vmatpush2.msra.mxu0 0.0
      %754 = vmatprep.subr.mxu0 0.0
      %755 = vmatpush2.msra.mxu0 0.0
      %756 = vmatprep.subr.mxu0 0.0
      %757 = vmatpush2.msra.mxu0 0.0
      %758 = vmatprep.subr.mxu0 0.0
      %759 = vmatpush2.msra.mxu0 0.0
      %760 = vmatprep.mubr.f32.mxu0 0.0
      %761 = vmatmul.mubr.f32.gmra.mxu0 %v694
      %v762 = vpop.f32.mrf.mxu0
      %v763 = vadd.f32 0.0, %v762
      %v764 = vpop.f32.mrf.mxu0
      %765 = vdwg.mxu0
      %v767 = vsel %vm250, %v247, 0
      %769 = vmatprep.subr.mxu0 0.0
      %770 = vmatpush1.msra.mxu0 0.0
      %771 = vmatprep.subr.mxu0 0.0
      %772 = vmatpush1.msra.mxu0 0.0
      %773 = vmatprep.subr.mxu0 0.0
      %774 = vmatpush1.msra.mxu0 0.0
      %775 = vmatprep.subr.mxu0 0.0
      %776 = vmatpush1.msra.mxu0 0.0
      %777 = vmatprep.subr.mxu0 0.0
      %778 = vmatpush1.msra.mxu0 0.0
      %779 = vmatprep.subr.mxu0 0.0
      %780 = vmatpush1.msra.mxu0 0.0
      %781 = vmatprep.subr.mxu0 0.0
      %782 = vmatpush1.msra.mxu0 0.0
      %783 = vmatprep.subr.mxu0 0.0
      %784 = vmatpush1.msra.mxu0 0.0
      %785 = vmatprep.subr.mxu0 0.0
      %786 = vmatpush1.msra.mxu0 0.0
      %787 = vmatprep.subr.mxu0 0.0
      %788 = vmatpush1.msra.mxu0 0.0
      %789 = vmatprep.subr.mxu0 0.0
      %790 = vmatpush1.msra.mxu0 0.0
      %791 = vmatprep.subr.mxu0 0.0
      %792 = vmatpush1.msra.mxu0 0.0
      %793 = vmatprep.subr.mxu0 0.0
      %794 = vmatpush1.msra.mxu0 0.0
      %795 = vmatprep.subr.mxu0 0.0
      %796 = vmatpush1.msra.mxu0 0.0
      %797 = vmatprep.subr.mxu0 0.0
      %798 = vmatpush1.msra.mxu0 0.0
      %799 = vmatprep.subr.mxu0 0.0
      %800 = vmatpush1.msra.mxu0 %v256
      %801 = vmatprep.subr.mxu0 0.0
      %802 = vmatpush2.msra.mxu0 0.0
      %803 = vmatprep.subr.mxu0 0.0
      %804 = vmatpush2.msra.mxu0 0.0
      %805 = vmatprep.subr.mxu0 0.0
      %806 = vmatpush2.msra.mxu0 0.0
      %807 = vmatprep.subr.mxu0 0.0
      %808 = vmatpush2.msra.mxu0 0.0
      %809 = vmatprep.subr.mxu0 0.0
      %810 = vmatpush2.msra.mxu0 0.0
      %811 = vmatprep.subr.mxu0 0.0
      %812 = vmatpush2.msra.mxu0 0.0
      %813 = vmatprep.subr.mxu0 0.0
      %814 = vmatpush2.msra.mxu0 0.0
      %815 = vmatprep.subr.mxu0 0.0
      %816 = vmatpush2.msra.mxu0 0.0
      %817 = vmatprep.subr.mxu0 0.0
      %818 = vmatpush2.msra.mxu0 0.0
      %819 = vmatprep.subr.mxu0 0.0
      %820 = vmatpush2.msra.mxu0 0.0
      %821 = vmatprep.subr.mxu0 0.0
      %822 = vmatpush2.msra.mxu0 0.0
      %823 = vmatprep.subr.mxu0 0.0
      %824 = vmatpush2.msra.mxu0 0.0
      %825 = vmatprep.subr.mxu0 0.0
      %826 = vmatpush2.msra.mxu0 0.0
      %827 = vmatprep.subr.mxu0 0.0
      %828 = vmatpush2.msra.mxu0 0.0
      %829 = vmatprep.subr.mxu0 0.0
      %830 = vmatpush2.msra.mxu0 0.0
      %831 = vmatprep.subr.mxu0 0.0
      %832 = vmatpush2.msra.mxu0 0.0
      %833 = vmatprep.mubr.f32.mxu0 0.0
      %834 = vmatmul.mubr.f32.gmra.mxu0 %v767
      %v835 = vpop.f32.mrf.mxu0
      %v836 = vadd.f32 0.0, %v835
      %v837 = vpop.f32.mrf.mxu0
      %838 = vdwg.mxu0
      %v840 = vsel %vm250, %v230, 0
      %v843 = vsel %vm254, %v238, 0
      %845 = vmatprep.subr.mxu0 0.0
      %846 = vmatpush1.msra.mxu0 0.0
      %847 = vmatprep.subr.mxu0 0.0
      %848 = vmatpush1.msra.mxu0 0.0
      %849 = vmatprep.subr.mxu0 0.0
      %850 = vmatpush1.msra.mxu0 0.0
      %851 = vmatprep.subr.mxu0 0.0
      %852 = vmatpush1.msra.mxu0 0.0
      %853 = vmatprep.subr.mxu0 0.0
      %854 = vmatpush1.msra.mxu0 0.0
      %855 = vmatprep.subr.mxu0 0.0
      %856 = vmatpush1.msra.mxu0 0.0
      %857 = vmatprep.subr.mxu0 0.0
      %858 = vmatpush1.msra.mxu0 0.0
      %859 = vmatprep.subr.mxu0 0.0
      %860 = vmatpush1.msra.mxu0 0.0
      %861 = vmatprep.subr.mxu0 0.0
      %862 = vmatpush1.msra.mxu0 0.0
      %863 = vmatprep.subr.mxu0 0.0
      %864 = vmatpush1.msra.mxu0 0.0
      %865 = vmatprep.subr.mxu0 0.0
      %866 = vmatpush1.msra.mxu0 0.0
      %867 = vmatprep.subr.mxu0 0.0
      %868 = vmatpush1.msra.mxu0 0.0
      %869 = vmatprep.subr.mxu0 0.0
      %870 = vmatpush1.msra.mxu0 0.0
      %871 = vmatprep.subr.mxu0 0.0
      %872 = vmatpush1.msra.mxu0 0.0
      %873 = vmatprep.subr.mxu0 0.0
      %874 = vmatpush1.msra.mxu0 0.0
      %875 = vmatprep.subr.mxu0 0.0
      %876 = vmatpush1.msra.mxu0 %v843
      %877 = vmatprep.subr.mxu0 0.0
      %878 = vmatpush2.msra.mxu0 0.0
      %879 = vmatprep.subr.mxu0 0.0
      %880 = vmatpush2.msra.mxu0 0.0
      %881 = vmatprep.subr.mxu0 0.0
      %882 = vmatpush2.msra.mxu0 0.0
      %883 = vmatprep.subr.mxu0 0.0
      %884 = vmatpush2.msra.mxu0 0.0
      %885 = vmatprep.subr.mxu0 0.0
      %886 = vmatpush2.msra.mxu0 0.0
      %887 = vmatprep.subr.mxu0 0.0
      %888 = vmatpush2.msra.mxu0 0.0
      %889 = vmatprep.subr.mxu0 0.0
      %890 = vmatpush2.msra.mxu0 0.0
      %891 = vmatprep.subr.mxu0 0.0
      %892 = vmatpush2.msra.mxu0 0.0
      %893 = vmatprep.subr.mxu0 0.0
      %894 = vmatpush2.msra.mxu0 0.0
      %895 = vmatprep.subr.mxu0 0.0
      %896 = vmatpush2.msra.mxu0 0.0
      %897 = vmatprep.subr.mxu0 0.0
      %898 = vmatpush2.msra.mxu0 0.0
      %899 = vmatprep.subr.mxu0 0.0
      %900 = vmatpush2.msra.mxu0 0.0
      %901 = vmatprep.subr.mxu0 0.0
      %902 = vmatpush2.msra.mxu0 0.0
      %903 = vmatprep.subr.mxu0 0.0
      %904 = vmatpush2.msra.mxu0 0.0
      %905 = vmatprep.subr.mxu0 0.0
      %906 = vmatpush2.msra.mxu0 0.0
      %907 = vmatprep.subr.mxu0 0.0
      %908 = vmatpush2.msra.mxu0 0.0
      %909 = vmatprep.mubr.f32.mxu0 0.0
      %910 = vmatmul.mubr.f32.gmra.mxu0 %v840
      %v911 = vpop.f32.mrf.mxu0
      %v912 = vadd.f32 %v325, %v911
      %v913 = vpop.f32.mrf.mxu0
      %914 = vdwg.mxu0
      %v916 = vsel %vm250, %v231, 0
      %918 = vmatprep.subr.mxu0 0.0
      %919 = vmatpush1.msra.mxu0 0.0
      %920 = vmatprep.subr.mxu0 0.0
      %921 = vmatpush1.msra.mxu0 0.0
      %922 = vmatprep.subr.mxu0 0.0
      %923 = vmatpush1.msra.mxu0 0.0
      %924 = vmatprep.subr.mxu0 0.0
      %925 = vmatpush1.msra.mxu0 0.0
      %926 = vmatprep.subr.mxu0 0.0
      %927 = vmatpush1.msra.mxu0 0.0
      %928 = vmatprep.subr.mxu0 0.0
      %929 = vmatpush1.msra.mxu0 0.0
      %930 = vmatprep.subr.mxu0 0.0
      %931 = vmatpush1.msra.mxu0 0.0
      %932 = vmatprep.subr.mxu0 0.0
      %933 = vmatpush1.msra.mxu0 0.0
      %934 = vmatprep.subr.mxu0 0.0
      %935 = vmatpush1.msra.mxu0 0.0
      %936 = vmatprep.subr.mxu0 0.0
      %937 = vmatpush1.msra.mxu0 0.0
      %938 = vmatprep.subr.mxu0 0.0
      %939 = vmatpush1.msra.mxu0 0.0
      %940 = vmatprep.subr.mxu0 0.0
      %941 = vmatpush1.msra.mxu0 0.0
      %942 = vmatprep.subr.mxu0 0.0
      %943 = vmatpush1.msra.mxu0 0.0
      %944 = vmatprep.subr.mxu0 0.0
      %945 = vmatpush1.msra.mxu0 0.0
      %946 = vmatprep.subr.mxu0 0.0
      %947 = vmatpush1.msra.mxu0 0.0
      %948 = vmatprep.subr.mxu0 0.0
      %949 = vmatpush1.msra.mxu0 %v843
      %950 = vmatprep.subr.mxu0 0.0
      %951 = vmatpush2.msra.mxu0 0.0
      %952 = vmatprep.subr.mxu0 0.0
      %953 = vmatpush2.msra.mxu0 0.0
      %954 = vmatprep.subr.mxu0 0.0
      %955 = vmatpush2.msra.mxu0 0.0
      %956 = vmatprep.subr.mxu0 0.0
      %957 = vmatpush2.msra.mxu0 0.0
      %958 = vmatprep.subr.mxu0 0.0
      %959 = vmatpush2.msra.mxu0 0.0
      %960 = vmatprep.subr.mxu0 0.0
      %961 = vmatpush2.msra.mxu0 0.0
      %962 = vmatprep.subr.mxu0 0.0
      %963 = vmatpush2.msra.mxu0 0.0
      %964 = vmatprep.subr.mxu0 0.0
      %965 = vmatpush2.msra.mxu0 0.0
      %966 = vmatprep.subr.mxu0 0.0
      %967 = vmatpush2.msra.mxu0 0.0
      %968 = vmatprep.subr.mxu0 0.0
      %969 = vmatpush2.msra.mxu0 0.0
      %970 = vmatprep.subr.mxu0 0.0
      %971 = vmatpush2.msra.mxu0 0.0
      %972 = vmatprep.subr.mxu0 0.0
      %973 = vmatpush2.msra.mxu0 0.0
      %974 = vmatprep.subr.mxu0 0.0
      %975 = vmatpush2.msra.mxu0 0.0
      %976 = vmatprep.subr.mxu0 0.0
      %977 = vmatpush2.msra.mxu0 0.0
      %978 = vmatprep.subr.mxu0 0.0
      %979 = vmatpush2.msra.mxu0 0.0
      %980 = vmatprep.subr.mxu0 0.0
      %981 = vmatpush2.msra.mxu0 0.0
      %982 = vmatprep.mubr.f32.mxu0 0.0
      %983 = vmatmul.mubr.f32.gmra.mxu0 %v916
      %v984 = vpop.f32.mrf.mxu0
      %v985 = vadd.f32 %v398, %v984
      %v986 = vpop.f32.mrf.mxu0
      %987 = vdwg.mxu0
      %v989 = vsel %vm250, %v232, 0
      %991 = vmatprep.subr.mxu0 0.0
      %992 = vmatpush1.msra.mxu0 0.0
      %993 = vmatprep.subr.mxu0 0.0
      %994 = vmatpush1.msra.mxu0 0.0
      %995 = vmatprep.subr.mxu0 0.0
      %996 = vmatpush1.msra.mxu0 0.0
      %997 = vmatprep.subr.mxu0 0.0
      %998 = vmatpush1.msra.mxu0 0.0
      %999 = vmatprep.subr.mxu0 0.0
      %1000 = vmatpush1.msra.mxu0 0.0
      %1001 = vmatprep.subr.mxu0 0.0
      %1002 = vmatpush1.msra.mxu0 0.0
      %1003 = vmatprep.subr.mxu0 0.0
      %1004 = vmatpush1.msra.mxu0 0.0
      %1005 = vmatprep.subr.mxu0 0.0
      %1006 = vmatpush1.msra.mxu0 0.0
      %1007 = vmatprep.subr.mxu0 0.0
      %1008 = vmatpush1.msra.mxu0 0.0
      %1009 = vmatprep.subr.mxu0 0.0
      %1010 = vmatpush1.msra.mxu0 0.0
      %1011 = vmatprep.subr.mxu0 0.0
      %1012 = vmatpush1.msra.mxu0 0.0
      %1013 = vmatprep.subr.mxu0 0.0
      %1014 = vmatpush1.msra.mxu0 0.0
      %1015 = vmatprep.subr.mxu0 0.0
      %1016 = vmatpush1.msra.mxu0 0.0
      %1017 = vmatprep.subr.mxu0 0.0
      %1018 = vmatpush1.msra.mxu0 0.0
      %1019 = vmatprep.subr.mxu0 0.0
      %1020 = vmatpush1.msra.mxu0 0.0
      %1021 = vmatprep.subr.mxu0 0.0
      %1022 = vmatpush1.msra.mxu0 %v843
      %1023 = vmatprep.subr.mxu0 0.0
      %1024 = vmatpush2.msra.mxu0 0.0
      %1025 = vmatprep.subr.mxu0 0.0
      %1026 = vmatpush2.msra.mxu0 0.0
      %1027 = vmatprep.subr.mxu0 0.0
      %1028 = vmatpush2.msra.mxu0 0.0
      %1029 = vmatprep.subr.mxu0 0.0
      %1030 = vmatpush2.msra.mxu0 0.0
      %1031 = vmatprep.subr.mxu0 0.0
      %1032 = vmatpush2.msra.mxu0 0.0
      %1033 = vmatprep.subr.mxu0 0.0
      %1034 = vmatpush2.msra.mxu0 0.0
      %1035 = vmatprep.subr.mxu0 0.0
      %1036 = vmatpush2.msra.mxu0 0.0
      %1037 = vmatprep.subr.mxu0 0.0
      %1038 = vmatpush2.msra.mxu0 0.0
      %1039 = vmatprep.subr.mxu0 0.0
      %1040 = vmatpush2.msra.mxu0 0.0
      %1041 = vmatprep.subr.mxu0 0.0
      %1042 = vmatpush2.msra.mxu0 0.0
      %1043 = vmatprep.subr.mxu0 0.0
      %1044 = vmatpush2.msra.mxu0 0.0
      %1045 = vmatprep.subr.mxu0 0.0
      %1046 = vmatpush2.msra.mxu0 0.0
      %1047 = vmatprep.subr.mxu0 0.0
      %1048 = vmatpush2.msra.mxu0 0.0
      %1049 = vmatprep.subr.mxu0 0.0
      %1050 = vmatpush2.msra.mxu0 0.0
      %1051 = vmatprep.subr.mxu0 0.0
      %1052 = vmatpush2.msra.mxu0 0.0
      %1053 = vmatprep.subr.mxu0 0.0
      %1054 = vmatpush2.msra.mxu0 0.0
      %1055 = vmatprep.mubr.f32.mxu0 0.0
      %1056 = vmatmul.mubr.f32.gmra.mxu0 %v989
      %v1057 = vpop.f32.mrf.mxu0
      %v1058 = vadd.f32 %v471, %v1057
      %v1059 = vpop.f32.mrf.mxu0
      %1060 = vdwg.mxu0
      %v1062 = vsel %vm250, %v233, 0
      %1064 = vmatprep.subr.mxu0 0.0
      %1065 = vmatpush1.msra.mxu0 0.0
      %1066 = vmatprep.subr.mxu0 0.0
      %1067 = vmatpush1.msra.mxu0 0.0
      %1068 = vmatprep.subr.mxu0 0.0
      %1069 = vmatpush1.msra.mxu0 0.0
      %1070 = vmatprep.subr.mxu0 0.0
      %1071 = vmatpush1.msra.mxu0 0.0
      %1072 = vmatprep.subr.mxu0 0.0
      %1073 = vmatpush1.msra.mxu0 0.0
      %1074 = vmatprep.subr.mxu0 0.0
      %1075 = vmatpush1.msra.mxu0 0.0
      %1076 = vmatprep.subr.mxu0 0.0
      %1077 = vmatpush1.msra.mxu0 0.0
      %1078 = vmatprep.subr.mxu0 0.0
      %1079 = vmatpush1.msra.mxu0 0.0
      %1080 = vmatprep.subr.mxu0 0.0
      %1081 = vmatpush1.msra.mxu0 0.0
      %1082 = vmatprep.subr.mxu0 0.0
      %1083 = vmatpush1.msra.mxu0 0.0
      %1084 = vmatprep.subr.mxu0 0.0
      %1085 = vmatpush1.msra.mxu0 0.0
      %1086 = vmatprep.subr.mxu0 0.0
      %1087 = vmatpush1.msra.mxu0 0.0
      %1088 = vmatprep.subr.mxu0 0.0
      %1089 = vmatpush1.msra.mxu0 0.0
      %1090 = vmatprep.subr.mxu0 0.0
      %1091 = vmatpush1.msra.mxu0 0.0
      %1092 = vmatprep.subr.mxu0 0.0
      %1093 = vmatpush1.msra.mxu0 0.0
      %1094 = vmatprep.subr.mxu0 0.0
      %1095 = vmatpush1.msra.mxu0 %v843
      %1096 = vmatprep.subr.mxu0 0.0
      %1097 = vmatpush2.msra.mxu0 0.0
      %1098 = vmatprep.subr.mxu0 0.0
      %1099 = vmatpush2.msra.mxu0 0.0
      %1100 = vmatprep.subr.mxu0 0.0
      %1101 = vmatpush2.msra.mxu0 0.0
      %1102 = vmatprep.subr.mxu0 0.0
      %1103 = vmatpush2.msra.mxu0 0.0
      %1104 = vmatprep.subr.mxu0 0.0
      %1105 = vmatpush2.msra.mxu0 0.0
      %1106 = vmatprep.subr.mxu0 0.0
      %1107 = vmatpush2.msra.mxu0 0.0
      %1108 = vmatprep.subr.mxu0 0.0
      %1109 = vmatpush2.msra.mxu0 0.0
      %1110 = vmatprep.subr.mxu0 0.0
      %1111 = vmatpush2.msra.mxu0 0.0
      %1112 = vmatprep.subr.mxu0 0.0
      %1113 = vmatpush2.msra.mxu0 0.0
      %1114 = vmatprep.subr.mxu0 0.0
      %1115 = vmatpush2.msra.mxu0 0.0
      %1116 = vmatprep.subr.mxu0 0.0
      %1117 = vmatpush2.msra.mxu0 0.0
      %1118 = vmatprep.subr.mxu0 0.0
      %1119 = vmatpush2.msra.mxu0 0.0
      %1120 = vmatprep.subr.mxu0 0.0
      %1121 = vmatpush2.msra.mxu0 0.0
      %1122 = vmatprep.subr.mxu0 0.0
      %1123 = vmatpush2.msra.mxu0 0.0
      %1124 = vmatprep.subr.mxu0 0.0
      %1125 = vmatpush2.msra.mxu0 0.0
      %1126 = vmatprep.subr.mxu0 0.0
      %1127 = vmatpush2.msra.mxu0 0.0
      %1128 = vmatprep.mubr.f32.mxu0 0.0
      %1129 = vmatmul.mubr.f32.gmra.mxu0 %v1062
      %v1130 = vpop.f32.mrf.mxu0
      %v1131 = vadd.f32 %v544, %v1130
      %v1132 = vpop.f32.mrf.mxu0
      %1133 = vdwg.mxu0
      %v1135 = vsel %vm250, %v234, 0
      %1137 = vmatprep.subr.mxu0 0.0
      %1138 = vmatpush1.msra.mxu0 0.0
      %1139 = vmatprep.subr.mxu0 0.0
      %1140 = vmatpush1.msra.mxu0 0.0
      %1141 = vmatprep.subr.mxu0 0.0
      %1142 = vmatpush1.msra.mxu0 0.0
      %1143 = vmatprep.subr.mxu0 0.0
      %1144 = vmatpush1.msra.mxu0 0.0
      %1145 = vmatprep.subr.mxu0 0.0
      %1146 = vmatpush1.msra.mxu0 0.0
      %1147 = vmatprep.subr.mxu0 0.0
      %1148 = vmatpush1.msra.mxu0 0.0
      %1149 = vmatprep.subr.mxu0 0.0
      %1150 = vmatpush1.msra.mxu0 0.0
      %1151 = vmatprep.subr.mxu0 0.0
      %1152 = vmatpush1.msra.mxu0 0.0
      %1153 = vmatprep.subr.mxu0 0.0
      %1154 = vmatpush1.msra.mxu0 0.0
      %1155 = vmatprep.subr.mxu0 0.0
      %1156 = vmatpush1.msra.mxu0 0.0
      %1157 = vmatprep.subr.mxu0 0.0
      %1158 = vmatpush1.msra.mxu0 0.0
      %1159 = vmatprep.subr.mxu0 0.0
      %1160 = vmatpush1.msra.mxu0 0.0
      %1161 = vmatprep.subr.mxu0 0.0
      %1162 = vmatpush1.msra.mxu0 0.0
      %1163 = vmatprep.subr.mxu0 0.0
      %1164 = vmatpush1.msra.mxu0 0.0
      %1165 = vmatprep.subr.mxu0 0.0
      %1166 = vmatpush1.msra.mxu0 0.0
      %1167 = vmatprep.subr.mxu0 0.0
      %1168 = vmatpush1.msra.mxu0 %v843
      %1169 = vmatprep.subr.mxu0 0.0
      %1170 = vmatpush2.msra.mxu0 0.0
      %1171 = vmatprep.subr.mxu0 0.0
      %1172 = vmatpush2.msra.mxu0 0.0
      %1173 = vmatprep.subr.mxu0 0.0
      %1174 = vmatpush2.msra.mxu0 0.0
      %1175 = vmatprep.subr.mxu0 0.0
      %1176 = vmatpush2.msra.mxu0 0.0
      %1177 = vmatprep.subr.mxu0 0.0
      %1178 = vmatpush2.msra.mxu0 0.0
      %1179 = vmatprep.subr.mxu0 0.0
      %1180 = vmatpush2.msra.mxu0 0.0
      %1181 = vmatprep.subr.mxu0 0.0
      %1182 = vmatpush2.msra.mxu0 0.0
      %1183 = vmatprep.subr.mxu0 0.0
      %1184 = vmatpush2.msra.mxu0 0.0
      %1185 = vmatprep.subr.mxu0 0.0
      %1186 = vmatpush2.msra.mxu0 0.0
      %1187 = vmatprep.subr.mxu0 0.0
      %1188 = vmatpush2.msra.mxu0 0.0
      %1189 = vmatprep.subr.mxu0 0.0
      %1190 = vmatpush2.msra.mxu0 0.0
      %1191 = vmatprep.subr.mxu0 0.0
      %1192 = vmatpush2.msra.mxu0 0.0
      %1193 = vmatprep.subr.mxu0 0.0
      %1194 = vmatpush2.msra.mxu0 0.0
      %1195 = vmatprep.subr.mxu0 0.0
      %1196 = vmatpush2.msra.mxu0 0.0
      %1197 = vmatprep.subr.mxu0 0.0
      %1198 = vmatpush2.msra.mxu0 0.0
      %1199 = vmatprep.subr.mxu0 0.0
      %1200 = vmatpush2.msra.mxu0 0.0
      %1201 = vmatprep.mubr.f32.mxu0 0.0
      %1202 = vmatmul.mubr.f32.gmra.mxu0 %v1135
      %v1203 = vpop.f32.mrf.mxu0
      %v1204 = vadd.f32 %v617, %v1203
      %v1205 = vpop.f32.mrf.mxu0
      %1206 = vdwg.mxu0
      %v1208 = vsel %vm250, %v235, 0
      %1210 = vmatprep.subr.mxu0 0.0
      %1211 = vmatpush1.msra.mxu0 0.0
      %1212 = vmatprep.subr.mxu0 0.0
      %1213 = vmatpush1.msra.mxu0 0.0
      %1214 = vmatprep.subr.mxu0 0.0
      %1215 = vmatpush1.msra.mxu0 0.0
      %1216 = vmatprep.subr.mxu0 0.0
      %1217 = vmatpush1.msra.mxu0 0.0
      %1218 = vmatprep.subr.mxu0 0.0
      %1219 = vmatpush1.msra.mxu0 0.0
      %1220 = vmatprep.subr.mxu0 0.0
      %1221 = vmatpush1.msra.mxu0 0.0
      %1222 = vmatprep.subr.mxu0 0.0
      %1223 = vmatpush1.msra.mxu0 0.0
      %1224 = vmatprep.subr.mxu0 0.0
      %1225 = vmatpush1.msra.mxu0 0.0
      %1226 = vmatprep.subr.mxu0 0.0
      %1227 = vmatpush1.msra.mxu0 0.0
      %1228 = vmatprep.subr.mxu0 0.0
      %1229 = vmatpush1.msra.mxu0 0.0
      %1230 = vmatprep.subr.mxu0 0.0
      %1231 = vmatpush1.msra.mxu0 0.0
      %1232 = vmatprep.subr.mxu0 0.0
      %1233 = vmatpush1.msra.mxu0 0.0
      %1234 = vmatprep.subr.mxu0 0.0
      %1235 = vmatpush1.msra.mxu0 0.0
      %1236 = vmatprep.subr.mxu0 0.0
      %1237 = vmatpush1.msra.mxu0 0.0
      %1238 = vmatprep.subr.mxu0 0.0
      %1239 = vmatpush1.msra.mxu0 0.0
      %1240 = vmatprep.subr.mxu0 0.0
      %1241 = vmatpush1.msra.mxu0 %v843
      %1242 = vmatprep.subr.mxu0 0.0
      %1243 = vmatpush2.msra.mxu0 0.0
      %1244 = vmatprep.subr.mxu0 0.0
      %1245 = vmatpush2.msra.mxu0 0.0
      %1246 = vmatprep.subr.mxu0 0.0
      %1247 = vmatpush2.msra.mxu0 0.0
      %1248 = vmatprep.subr.mxu0 0.0
      %1249 = vmatpush2.msra.mxu0 0.0
      %1250 = vmatprep.subr.mxu0 0.0
      %1251 = vmatpush2.msra.mxu0 0.0
      %1252 = vmatprep.subr.mxu0 0.0
      %1253 = vmatpush2.msra.mxu0 0.0
      %1254 = vmatprep.subr.mxu0 0.0
      %1255 = vmatpush2.msra.mxu0 0.0
      %1256 = vmatprep.subr.mxu0 0.0
      %1257 = vmatpush2.msra.mxu0 0.0
      %1258 = vmatprep.subr.mxu0 0.0
      %1259 = vmatpush2.msra.mxu0 0.0
      %1260 = vmatprep.subr.mxu0 0.0
      %1261 = vmatpush2.msra.mxu0 0.0
      %1262 = vmatprep.subr.mxu0 0.0
      %1263 = vmatpush2.msra.mxu0 0.0
      %1264 = vmatprep.subr.mxu0 0.0
      %1265 = vmatpush2.msra.mxu0 0.0
      %1266 = vmatprep.subr.mxu0 0.0
      %1267 = vmatpush2.msra.mxu0 0.0
      %1268 = vmatprep.subr.mxu0 0.0
      %1269 = vmatpush2.msra.mxu0 0.0
      %1270 = vmatprep.subr.mxu0 0.0
      %1271 = vmatpush2.msra.mxu0 0.0
      %1272 = vmatprep.subr.mxu0 0.0
      %1273 = vmatpush2.msra.mxu0 0.0
      %1274 = vmatprep.mubr.f32.mxu0 0.0
      %1275 = vmatmul.mubr.f32.gmra.mxu0 %v1208
      %v1276 = vpop.f32.mrf.mxu0
      %v1277 = vadd.f32 %v690, %v1276
      %v1278 = vpop.f32.mrf.mxu0
      %1279 = vdwg.mxu0
      %v1281 = vsel %vm250, %v236, 0
      %1283 = vmatprep.subr.mxu0 0.0
      %1284 = vmatpush1.msra.mxu0 0.0
      %1285 = vmatprep.subr.mxu0 0.0
      %1286 = vmatpush1.msra.mxu0 0.0
      %1287 = vmatprep.subr.mxu0 0.0
      %1288 = vmatpush1.msra.mxu0 0.0
      %1289 = vmatprep.subr.mxu0 0.0
      %1290 = vmatpush1.msra.mxu0 0.0
      %1291 = vmatprep.subr.mxu0 0.0
      %1292 = vmatpush1.msra.mxu0 0.0
      %1293 = vmatprep.subr.mxu0 0.0
      %1294 = vmatpush1.msra.mxu0 0.0
      %1295 = vmatprep.subr.mxu0 0.0
      %1296 = vmatpush1.msra.mxu0 0.0
      %1297 = vmatprep.subr.mxu0 0.0
      %1298 = vmatpush1.msra.mxu0 0.0
      %1299 = vmatprep.subr.mxu0 0.0
      %1300 = vmatpush1.msra.mxu0 0.0
      %1301 = vmatprep.subr.mxu0 0.0
      %1302 = vmatpush1.msra.mxu0 0.0
      %1303 = vmatprep.subr.mxu0 0.0
      %1304 = vmatpush1.msra.mxu0 0.0
      %1305 = vmatprep.subr.mxu0 0.0
      %1306 = vmatpush1.msra.mxu0 0.0
      %1307 = vmatprep.subr.mxu0 0.0
      %1308 = vmatpush1.msra.mxu0 0.0
      %1309 = vmatprep.subr.mxu0 0.0
      %1310 = vmatpush1.msra.mxu0 0.0
      %1311 = vmatprep.subr.mxu0 0.0
      %1312 = vmatpush1.msra.mxu0 0.0
      %1313 = vmatprep.subr.mxu0 0.0
      %1314 = vmatpush1.msra.mxu0 %v843
      %1315 = vmatprep.subr.mxu0 0.0
      %1316 = vmatpush2.msra.mxu0 0.0
      %1317 = vmatprep.subr.mxu0 0.0
      %1318 = vmatpush2.msra.mxu0 0.0
      %1319 = vmatprep.subr.mxu0 0.0
      %1320 = vmatpush2.msra.mxu0 0.0
      %1321 = vmatprep.subr.mxu0 0.0
      %1322 = vmatpush2.msra.mxu0 0.0
      %1323 = vmatprep.subr.mxu0 0.0
      %1324 = vmatpush2.msra.mxu0 0.0
      %1325 = vmatprep.subr.mxu0 0.0
      %1326 = vmatpush2.msra.mxu0 0.0
      %1327 = vmatprep.subr.mxu0 0.0
      %1328 = vmatpush2.msra.mxu0 0.0
      %1329 = vmatprep.subr.mxu0 0.0
      %1330 = vmatpush2.msra.mxu0 0.0
      %1331 = vmatprep.subr.mxu0 0.0
      %1332 = vmatpush2.msra.mxu0 0.0
      %1333 = vmatprep.subr.mxu0 0.0
      %1334 = vmatpush2.msra.mxu0 0.0
      %1335 = vmatprep.subr.mxu0 0.0
      %1336 = vmatpush2.msra.mxu0 0.0
      %1337 = vmatprep.subr.mxu0 0.0
      %1338 = vmatpush2.msra.mxu0 0.0
      %1339 = vmatprep.subr.mxu0 0.0
      %1340 = vmatpush2.msra.mxu0 0.0
      %1341 = vmatprep.subr.mxu0 0.0
      %1342 = vmatpush2.msra.mxu0 0.0
      %1343 = vmatprep.subr.mxu0 0.0
      %1344 = vmatpush2.msra.mxu0 0.0
      %1345 = vmatprep.subr.mxu0 0.0
      %1346 = vmatpush2.msra.mxu0 0.0
      %1347 = vmatprep.mubr.f32.mxu0 0.0
      %1348 = vmatmul.mubr.f32.gmra.mxu0 %v1281
      %v1349 = vpop.f32.mrf.mxu0
      %v1350 = vadd.f32 %v763, %v1349
      %v1351 = vpop.f32.mrf.mxu0
      %1352 = vdwg.mxu0
      %v1354 = vsel %vm250, %v237, 0
      %1356 = vmatprep.subr.mxu0 0.0
      %1357 = vmatpush1.msra.mxu0 0.0
      %1358 = vmatprep.subr.mxu0 0.0
      %1359 = vmatpush1.msra.mxu0 0.0
      %1360 = vmatprep.subr.mxu0 0.0
      %1361 = vmatpush1.msra.mxu0 0.0
      %1362 = vmatprep.subr.mxu0 0.0
      %1363 = vmatpush1.msra.mxu0 0.0
      %1364 = vmatprep.subr.mxu0 0.0
      %1365 = vmatpush1.msra.mxu0 0.0
      %1366 = vmatprep.subr.mxu0 0.0
      %1367 = vmatpush1.msra.mxu0 0.0
      %1368 = vmatprep.subr.mxu0 0.0
      %1369 = vmatpush1.msra.mxu0 0.0
      %1370 = vmatprep.subr.mxu0 0.0
      %1371 = vmatpush1.msra.mxu0 0.0
      %1372 = vmatprep.subr.mxu0 0.0
      %1373 = vmatpush1.msra.mxu0 0.0
      %1374 = vmatprep.subr.mxu0 0.0
      %1375 = vmatpush1.msra.mxu0 0.0
      %1376 = vmatprep.subr.mxu0 0.0
      %1377 = vmatpush1.msra.mxu0 0.0
      %1378 = vmatprep.subr.mxu0 0.0
      %1379 = vmatpush1.msra.mxu0 0.0
      %1380 = vmatprep.subr.mxu0 0.0
      %1381 = vmatpush1.msra.mxu0 0.0
      %1382 = vmatprep.subr.mxu0 0.0
      %1383 = vmatpush1.msra.mxu0 0.0
      %1384 = vmatprep.subr.mxu0 0.0
      %1385 = vmatpush1.msra.mxu0 0.0
      %1386 = vmatprep.subr.mxu0 0.0
      %1387 = vmatpush1.msra.mxu0 %v843
      %1388 = vmatprep.subr.mxu0 0.0
      %1389 = vmatpush2.msra.mxu0 0.0
      %1390 = vmatprep.subr.mxu0 0.0
      %1391 = vmatpush2.msra.mxu0 0.0
      %1392 = vmatprep.subr.mxu0 0.0
      %1393 = vmatpush2.msra.mxu0 0.0
      %1394 = vmatprep.subr.mxu0 0.0
      %1395 = vmatpush2.msra.mxu0 0.0
      %1396 = vmatprep.subr.mxu0 0.0
      %1397 = vmatpush2.msra.mxu0 0.0
      %1398 = vmatprep.subr.mxu0 0.0
      %1399 = vmatpush2.msra.mxu0 0.0
      %1400 = vmatprep.subr.mxu0 0.0
      %1401 = vmatpush2.msra.mxu0 0.0
      %1402 = vmatprep.subr.mxu0 0.0
      %1403 = vmatpush2.msra.mxu0 0.0
      %1404 = vmatprep.subr.mxu0 0.0
      %1405 = vmatpush2.msra.mxu0 0.0
      %1406 = vmatprep.subr.mxu0 0.0
      %1407 = vmatpush2.msra.mxu0 0.0
      %1408 = vmatprep.subr.mxu0 0.0
      %1409 = vmatpush2.msra.mxu0 0.0
      %1410 = vmatprep.subr.mxu0 0.0
      %1411 = vmatpush2.msra.mxu0 0.0
      %1412 = vmatprep.subr.mxu0 0.0
      %1413 = vmatpush2.msra.mxu0 0.0
      %1414 = vmatprep.subr.mxu0 0.0
      %1415 = vmatpush2.msra.mxu0 0.0
      %1416 = vmatprep.subr.mxu0 0.0
      %1417 = vmatpush2.msra.mxu0 0.0
      %1418 = vmatprep.subr.mxu0 0.0
      %1419 = vmatpush2.msra.mxu0 0.0
      %1420 = vmatprep.mubr.f32.mxu0 0.0
      %1421 = vmatmul.mubr.f32.gmra.mxu0 %v1354
      %v1422 = vpop.f32.mrf.mxu0
      %v1423 = vadd.f32 %v836, %v1422
      %v1424 = vpop.f32.mrf.mxu0
      %1425 = vdwg.mxu0
      %v1426 = vld [vmem:[%s223 + $0x1] sm:$0xff]
      %v1427 = vld [vmem:[%s223 + $0x11] sm:$0xff]
      %v1428 = vld [vmem:[%s223 + $0x21] sm:$0xff]
      %v1429 = vld [vmem:[%s223 + $0x31] sm:$0xff]
      %v1430 = vld [vmem:[%s223 + $0x41] sm:$0xff]
      %v1431 = vld [vmem:[%s223 + $0x51] sm:$0xff]
      %v1432 = vld [vmem:[%s223 + $0x61] sm:$0xff]
      %v1433 = vld [vmem:[%s223 + $0x71] sm:$0xff]
      %s1434 = scalar_lea.vmem %s1, 8
      %v1435 = vld [vmem:[%s1434] sm:$0xf]
      %v1437 = vsel %vm250, %v1426, 0
      %v1440 = vsel %vm254, %v1435, 0
      %1442 = vmatprep.subr.mxu0 0.0
      %1443 = vmatpush1.msra.mxu0 0.0
      %1444 = vmatprep.subr.mxu0 0.0
      %1445 = vmatpush1.msra.mxu0 0.0
      %1446 = vmatprep.subr.mxu0 0.0
      %1447 = vmatpush1.msra.mxu0 0.0
      %1448 = vmatprep.subr.mxu0 0.0
      %1449 = vmatpush1.msra.mxu0 0.0
      %1450 = vmatprep.subr.mxu0 0.0
      %1451 = vmatpush1.msra.mxu0 0.0
      %1452 = vmatprep.subr.mxu0 0.0
      %1453 = vmatpush1.msra.mxu0 0.0
      %1454 = vmatprep.subr.mxu0 0.0
      %1455 = vmatpush1.msra.mxu0 0.0
      %1456 = vmatprep.subr.mxu0 0.0
      %1457 = vmatpush1.msra.mxu0 0.0
      %1458 = vmatprep.subr.mxu0 0.0
      %1459 = vmatpush1.msra.mxu0 0.0
      %1460 = vmatprep.subr.mxu0 0.0
      %1461 = vmatpush1.msra.mxu0 0.0
      %1462 = vmatprep.subr.mxu0 0.0
      %1463 = vmatpush1.msra.mxu0 0.0
      %1464 = vmatprep.subr.mxu0 0.0
      %1465 = vmatpush1.msra.mxu0 0.0
      %1466 = vmatprep.subr.mxu0 0.0
      %1467 = vmatpush1.msra.mxu0 0.0
      %1468 = vmatprep.subr.mxu0 0.0
      %1469 = vmatpush1.msra.mxu0 0.0
      %1470 = vmatprep.subr.mxu0 0.0
      %1471 = vmatpush1.msra.mxu0 0.0
      %1472 = vmatprep.subr.mxu0 0.0
      %1473 = vmatpush1.msra.mxu0 %v1440
      %1474 = vmatprep.subr.mxu0 0.0
      %1475 = vmatpush2.msra.mxu0 0.0
      %1476 = vmatprep.subr.mxu0 0.0
      %1477 = vmatpush2.msra.mxu0 0.0
      %1478 = vmatprep.subr.mxu0 0.0
      %1479 = vmatpush2.msra.mxu0 0.0
      %1480 = vmatprep.subr.mxu0 0.0
      %1481 = vmatpush2.msra.mxu0 0.0
      %1482 = vmatprep.subr.mxu0 0.0
      %1483 = vmatpush2.msra.mxu0 0.0
      %1484 = vmatprep.subr.mxu0 0.0
      %1485 = vmatpush2.msra.mxu0 0.0
      %1486 = vmatprep.subr.mxu0 0.0
      %1487 = vmatpush2.msra.mxu0 0.0
      %1488 = vmatprep.subr.mxu0 0.0
      %1489 = vmatpush2.msra.mxu0 0.0
      %1490 = vmatprep.subr.mxu0 0.0
      %1491 = vmatpush2.msra.mxu0 0.0
      %1492 = vmatprep.subr.mxu0 0.0
      %1493 = vmatpush2.msra.mxu0 0.0
      %1494 = vmatprep.subr.mxu0 0.0
      %1495 = vmatpush2.msra.mxu0 0.0
      %1496 = vmatprep.subr.mxu0 0.0
      %1497 = vmatpush2.msra.mxu0 0.0
      %1498 = vmatprep.subr.mxu0 0.0
      %1499 = vmatpush2.msra.mxu0 0.0
      %1500 = vmatprep.subr.mxu0 0.0
      %1501 = vmatpush2.msra.mxu0 0.0
      %1502 = vmatprep.subr.mxu0 0.0
      %1503 = vmatpush2.msra.mxu0 0.0
      %1504 = vmatprep.subr.mxu0 0.0
      %1505 = vmatpush2.msra.mxu0 0.0
      %1506 = vmatprep.mubr.f32.mxu0 0.0
      %1507 = vmatmul.mubr.f32.gmra.mxu0 %v1437
      %v1508 = vpop.f32.mrf.mxu0
      %v1509 = vadd.f32 0.0, %v1508
      %v1510 = vpop.f32.mrf.mxu0
      %1511 = vdwg.mxu0
      %v1513 = vsel %vm250, %v1427, 0
      %1515 = vmatprep.subr.mxu0 0.0
      %1516 = vmatpush1.msra.mxu0 0.0
      %1517 = vmatprep.subr.mxu0 0.0
      %1518 = vmatpush1.msra.mxu0 0.0
      %1519 = vmatprep.subr.mxu0 0.0
      %1520 = vmatpush1.msra.mxu0 0.0
      %1521 = vmatprep.subr.mxu0 0.0
      %1522 = vmatpush1.msra.mxu0 0.0
      %1523 = vmatprep.subr.mxu0 0.0
      %1524 = vmatpush1.msra.mxu0 0.0
      %1525 = vmatprep.subr.mxu0 0.0
      %1526 = vmatpush1.msra.mxu0 0.0
      %1527 = vmatprep.subr.mxu0 0.0
      %1528 = vmatpush1.msra.mxu0 0.0
      %1529 = vmatprep.subr.mxu0 0.0
      %1530 = vmatpush1.msra.mxu0 0.0
      %1531 = vmatprep.subr.mxu0 0.0
      %1532 = vmatpush1.msra.mxu0 0.0
      %1533 = vmatprep.subr.mxu0 0.0
      %1534 = vmatpush1.msra.mxu0 0.0
      %1535 = vmatprep.subr.mxu0 0.0
      %1536 = vmatpush1.msra.mxu0 0.0
      %1537 = vmatprep.subr.mxu0 0.0
      %1538 = vmatpush1.msra.mxu0 0.0
      %1539 = vmatprep.subr.mxu0 0.0
      %1540 = vmatpush1.msra.mxu0 0.0
      %1541 = vmatprep.subr.mxu0 0.0
      %1542 = vmatpush1.msra.mxu0 0.0
      %1543 = vmatprep.subr.mxu0 0.0
      %1544 = vmatpush1.msra.mxu0 0.0
      %1545 = vmatprep.subr.mxu0 0.0
      %1546 = vmatpush1.msra.mxu0 %v1440
      %1547 = vmatprep.subr.mxu0 0.0
      %1548 = vmatpush2.msra.mxu0 0.0
      %1549 = vmatprep.subr.mxu0 0.0
      %1550 = vmatpush2.msra.mxu0 0.0
      %1551 = vmatprep.subr.mxu0 0.0
      %1552 = vmatpush2.msra.mxu0 0.0
      %1553 = vmatprep.subr.mxu0 0.0
      %1554 = vmatpush2.msra.mxu0 0.0
      %1555 = vmatprep.subr.mxu0 0.0
      %1556 = vmatpush2.msra.mxu0 0.0
      %1557 = vmatprep.subr.mxu0 0.0
      %1558 = vmatpush2.msra.mxu0 0.0
      %1559 = vmatprep.subr.mxu0 0.0
      %1560 = vmatpush2.msra.mxu0 0.0
      %1561 = vmatprep.subr.mxu0 0.0
      %1562 = vmatpush2.msra.mxu0 0.0
      %1563 = vmatprep.subr.mxu0 0.0
      %1564 = vmatpush2.msra.mxu0 0.0
      %1565 = vmatprep.subr.mxu0 0.0
      %1566 = vmatpush2.msra.mxu0 0.0
      %1567 = vmatprep.subr.mxu0 0.0
      %1568 = vmatpush2.msra.mxu0 0.0
      %1569 = vmatprep.subr.mxu0 0.0
      %1570 = vmatpush2.msra.mxu0 0.0
      %1571 = vmatprep.subr.mxu0 0.0
      %1572 = vmatpush2.msra.mxu0 0.0
      %1573 = vmatprep.subr.mxu0 0.0
      %1574 = vmatpush2.msra.mxu0 0.0
      %1575 = vmatprep.subr.mxu0 0.0
      %1576 = vmatpush2.msra.mxu0 0.0
      %1577 = vmatprep.subr.mxu0 0.0
      %1578 = vmatpush2.msra.mxu0 0.0
      %1579 = vmatprep.mubr.f32.mxu0 0.0
      %1580 = vmatmul.mubr.f32.gmra.mxu0 %v1513
      %v1581 = vpop.f32.mrf.mxu0
      %v1582 = vadd.f32 0.0, %v1581
      %v1583 = vpop.f32.mrf.mxu0
      %1584 = vdwg.mxu0
      %v1586 = vsel %vm250, %v1428, 0
      %1588 = vmatprep.subr.mxu0 0.0
      %1589 = vmatpush1.msra.mxu0 0.0
      %1590 = vmatprep.subr.mxu0 0.0
      %1591 = vmatpush1.msra.mxu0 0.0
      %1592 = vmatprep.subr.mxu0 0.0
      %1593 = vmatpush1.msra.mxu0 0.0
      %1594 = vmatprep.subr.mxu0 0.0
      %1595 = vmatpush1.msra.mxu0 0.0
      %1596 = vmatprep.subr.mxu0 0.0
      %1597 = vmatpush1.msra.mxu0 0.0
      %1598 = vmatprep.subr.mxu0 0.0
      %1599 = vmatpush1.msra.mxu0 0.0
      %1600 = vmatprep.subr.mxu0 0.0
      %1601 = vmatpush1.msra.mxu0 0.0
      %1602 = vmatprep.subr.mxu0 0.0
      %1603 = vmatpush1.msra.mxu0 0.0
      %1604 = vmatprep.subr.mxu0 0.0
      %1605 = vmatpush1.msra.mxu0 0.0
      %1606 = vmatprep.subr.mxu0 0.0
      %1607 = vmatpush1.msra.mxu0 0.0
      %1608 = vmatprep.subr.mxu0 0.0
      %1609 = vmatpush1.msra.mxu0 0.0
      %1610 = vmatprep.subr.mxu0 0.0
      %1611 = vmatpush1.msra.mxu0 0.0
      %1612 = vmatprep.subr.mxu0 0.0
      %1613 = vmatpush1.msra.mxu0 0.0
      %1614 = vmatprep.subr.mxu0 0.0
      %1615 = vmatpush1.msra.mxu0 0.0
      %1616 = vmatprep.subr.mxu0 0.0
      %1617 = vmatpush1.msra.mxu0 0.0
      %1618 = vmatprep.subr.mxu0 0.0
      %1619 = vmatpush1.msra.mxu0 %v1440
      %1620 = vmatprep.subr.mxu0 0.0
      %1621 = vmatpush2.msra.mxu0 0.0
      %1622 = vmatprep.subr.mxu0 0.0
      %1623 = vmatpush2.msra.mxu0 0.0
      %1624 = vmatprep.subr.mxu0 0.0
      %1625 = vmatpush2.msra.mxu0 0.0
      %1626 = vmatprep.subr.mxu0 0.0
      %1627 = vmatpush2.msra.mxu0 0.0
      %1628 = vmatprep.subr.mxu0 0.0
      %1629 = vmatpush2.msra.mxu0 0.0
      %1630 = vmatprep.subr.mxu0 0.0
      %1631 = vmatpush2.msra.mxu0 0.0
      %1632 = vmatprep.subr.mxu0 0.0
      %1633 = vmatpush2.msra.mxu0 0.0
      %1634 = vmatprep.subr.mxu0 0.0
      %1635 = vmatpush2.msra.mxu0 0.0
      %1636 = vmatprep.subr.mxu0 0.0
      %1637 = vmatpush2.msra.mxu0 0.0
      %1638 = vmatprep.subr.mxu0 0.0
      %1639 = vmatpush2.msra.mxu0 0.0
      %1640 = vmatprep.subr.mxu0 0.0
      %1641 = vmatpush2.msra.mxu0 0.0
      %1642 = vmatprep.subr.mxu0 0.0
      %1643 = vmatpush2.msra.mxu0 0.0
      %1644 = vmatprep.subr.mxu0 0.0
      %1645 = vmatpush2.msra.mxu0 0.0
      %1646 = vmatprep.subr.mxu0 0.0
      %1647 = vmatpush2.msra.mxu0 0.0
      %1648 = vmatprep.subr.mxu0 0.0
      %1649 = vmatpush2.msra.mxu0 0.0
      %1650 = vmatprep.subr.mxu0 0.0
      %1651 = vmatpush2.msra.mxu0 0.0
      %1652 = vmatprep.mubr.f32.mxu0 0.0
      %1653 = vmatmul.mubr.f32.gmra.mxu0 %v1586
      %v1654 = vpop.f32.mrf.mxu0
      %v1655 = vadd.f32 0.0, %v1654
      %v1656 = vpop.f32.mrf.mxu0
      %1657 = vdwg.mxu0
      %v1659 = vsel %vm250, %v1429, 0
      %1661 = vmatprep.subr.mxu0 0.0
      %1662 = vmatpush1.msra.mxu0 0.0
      %1663 = vmatprep.subr.mxu0 0.0
      %1664 = vmatpush1.msra.mxu0 0.0
      %1665 = vmatprep.subr.mxu0 0.0
      %1666 = vmatpush1.msra.mxu0 0.0
      %1667 = vmatprep.subr.mxu0 0.0
      %1668 = vmatpush1.msra.mxu0 0.0
      %1669 = vmatprep.subr.mxu0 0.0
      %1670 = vmatpush1.msra.mxu0 0.0
      %1671 = vmatprep.subr.mxu0 0.0
      %1672 = vmatpush1.msra.mxu0 0.0
      %1673 = vmatprep.subr.mxu0 0.0
      %1674 = vmatpush1.msra.mxu0 0.0
      %1675 = vmatprep.subr.mxu0 0.0
      %1676 = vmatpush1.msra.mxu0 0.0
      %1677 = vmatprep.subr.mxu0 0.0
      %1678 = vmatpush1.msra.mxu0 0.0
      %1679 = vmatprep.subr.mxu0 0.0
      %1680 = vmatpush1.msra.mxu0 0.0
      %1681 = vmatprep.subr.mxu0 0.0
      %1682 = vmatpush1.msra.mxu0 0.0
      %1683 = vmatprep.subr.mxu0 0.0
      %1684 = vmatpush1.msra.mxu0 0.0
      %1685 = vmatprep.subr.mxu0 0.0
      %1686 = vmatpush1.msra.mxu0 0.0
      %1687 = vmatprep.subr.mxu0 0.0
      %1688 = vmatpush1.msra.mxu0 0.0
      %1689 = vmatprep.subr.mxu0 0.0
      %1690 = vmatpush1.msra.mxu0 0.0
      %1691 = vmatprep.subr.mxu0 0.0
      %1692 = vmatpush1.msra.mxu0 %v1440
      %1693 = vmatprep.subr.mxu0 0.0
      %1694 = vmatpush2.msra.mxu0 0.0
      %1695 = vmatprep.subr.mxu0 0.0
      %1696 = vmatpush2.msra.mxu0 0.0
      %1697 = vmatprep.subr.mxu0 0.0
      %1698 = vmatpush2.msra.mxu0 0.0
      %1699 = vmatprep.subr.mxu0 0.0
      %1700 = vmatpush2.msra.mxu0 0.0
      %1701 = vmatprep.subr.mxu0 0.0
      %1702 = vmatpush2.msra.mxu0 0.0
      %1703 = vmatprep.subr.mxu0 0.0
      %1704 = vmatpush2.msra.mxu0 0.0
      %1705 = vmatprep.subr.mxu0 0.0
      %1706 = vmatpush2.msra.mxu0 0.0
      %1707 = vmatprep.subr.mxu0 0.0
      %1708 = vmatpush2.msra.mxu0 0.0
      %1709 = vmatprep.subr.mxu0 0.0
      %1710 = vmatpush2.msra.mxu0 0.0
      %1711 = vmatprep.subr.mxu0 0.0
      %1712 = vmatpush2.msra.mxu0 0.0
      %1713 = vmatprep.subr.mxu0 0.0
      %1714 = vmatpush2.msra.mxu0 0.0
      %1715 = vmatprep.subr.mxu0 0.0
      %1716 = vmatpush2.msra.mxu0 0.0
      %1717 = vmatprep.subr.mxu0 0.0
      %1718 = vmatpush2.msra.mxu0 0.0
      %1719 = vmatprep.subr.mxu0 0.0
      %1720 = vmatpush2.msra.mxu0 0.0
      %1721 = vmatprep.subr.mxu0 0.0
      %1722 = vmatpush2.msra.mxu0 0.0
      %1723 = vmatprep.subr.mxu0 0.0
      %1724 = vmatpush2.msra.mxu0 0.0
      %1725 = vmatprep.mubr.f32.mxu0 0.0
      %1726 = vmatmul.mubr.f32.gmra.mxu0 %v1659
      %v1727 = vpop.f32.mrf.mxu0
      %v1728 = vadd.f32 0.0, %v1727
      %v1729 = vpop.f32.mrf.mxu0
      %1730 = vdwg.mxu0
      %v1732 = vsel %vm250, %v1430, 0
      %1734 = vmatprep.subr.mxu0 0.0
      %1735 = vmatpush1.msra.mxu0 0.0
      %1736 = vmatprep.subr.mxu0 0.0
      %1737 = vmatpush1.msra.mxu0 0.0
      %1738 = vmatprep.subr.mxu0 0.0
      %1739 = vmatpush1.msra.mxu0 0.0
      %1740 = vmatprep.subr.mxu0 0.0
      %1741 = vmatpush1.msra.mxu0 0.0
      %1742 = vmatprep.subr.mxu0 0.0
      %1743 = vmatpush1.msra.mxu0 0.0
      %1744 = vmatprep.subr.mxu0 0.0
      %1745 = vmatpush1.msra.mxu0 0.0
      %1746 = vmatprep.subr.mxu0 0.0
      %1747 = vmatpush1.msra.mxu0 0.0
      %1748 = vmatprep.subr.mxu0 0.0
      %1749 = vmatpush1.msra.mxu0 0.0
      %1750 = vmatprep.subr.mxu0 0.0
      %1751 = vmatpush1.msra.mxu0 0.0
      %1752 = vmatprep.subr.mxu0 0.0
      %1753 = vmatpush1.msra.mxu0 0.0
      %1754 = vmatprep.subr.mxu0 0.0
      %1755 = vmatpush1.msra.mxu0 0.0
      %1756 = vmatprep.subr.mxu0 0.0
      %1757 = vmatpush1.msra.mxu0 0.0
      %1758 = vmatprep.subr.mxu0 0.0
      %1759 = vmatpush1.msra.mxu0 0.0
      %1760 = vmatprep.subr.mxu0 0.0
      %1761 = vmatpush1.msra.mxu0 0.0
      %1762 = vmatprep.subr.mxu0 0.0
      %1763 = vmatpush1.msra.mxu0 0.0
      %1764 = vmatprep.subr.mxu0 0.0
      %1765 = vmatpush1.msra.mxu0 %v1440
      %1766 = vmatprep.subr.mxu0 0.0
      %1767 = vmatpush2.msra.mxu0 0.0
      %1768 = vmatprep.subr.mxu0 0.0
      %1769 = vmatpush2.msra.mxu0 0.0
      %1770 = vmatprep.subr.mxu0 0.0
      %1771 = vmatpush2.msra.mxu0 0.0
      %1772 = vmatprep.subr.mxu0 0.0
      %1773 = vmatpush2.msra.mxu0 0.0
      %1774 = vmatprep.subr.mxu0 0.0
      %1775 = vmatpush2.msra.mxu0 0.0
      %1776 = vmatprep.subr.mxu0 0.0
      %1777 = vmatpush2.msra.mxu0 0.0
      %1778 = vmatprep.subr.mxu0 0.0
      %1779 = vmatpush2.msra.mxu0 0.0
      %1780 = vmatprep.subr.mxu0 0.0
      %1781 = vmatpush2.msra.mxu0 0.0
      %1782 = vmatprep.subr.mxu0 0.0
      %1783 = vmatpush2.msra.mxu0 0.0
      %1784 = vmatprep.subr.mxu0 0.0
      %1785 = vmatpush2.msra.mxu0 0.0
      %1786 = vmatprep.subr.mxu0 0.0
      %1787 = vmatpush2.msra.mxu0 0.0
      %1788 = vmatprep.subr.mxu0 0.0
      %1789 = vmatpush2.msra.mxu0 0.0
      %1790 = vmatprep.subr.mxu0 0.0
      %1791 = vmatpush2.msra.mxu0 0.0
      %1792 = vmatprep.subr.mxu0 0.0
      %1793 = vmatpush2.msra.mxu0 0.0
      %1794 = vmatprep.subr.mxu0 0.0
      %1795 = vmatpush2.msra.mxu0 0.0
      %1796 = vmatprep.subr.mxu0 0.0
      %1797 = vmatpush2.msra.mxu0 0.0
      %1798 = vmatprep.mubr.f32.mxu0 0.0
      %1799 = vmatmul.mubr.f32.gmra.mxu0 %v1732
      %v1800 = vpop.f32.mrf.mxu0
      %v1801 = vadd.f32 0.0, %v1800
      %v1802 = vpop.f32.mrf.mxu0
      %1803 = vdwg.mxu0
      %v1805 = vsel %vm250, %v1431, 0
      %1807 = vmatprep.subr.mxu0 0.0
      %1808 = vmatpush1.msra.mxu0 0.0
      %1809 = vmatprep.subr.mxu0 0.0
      %1810 = vmatpush1.msra.mxu0 0.0
      %1811 = vmatprep.subr.mxu0 0.0
      %1812 = vmatpush1.msra.mxu0 0.0
      %1813 = vmatprep.subr.mxu0 0.0
      %1814 = vmatpush1.msra.mxu0 0.0
      %1815 = vmatprep.subr.mxu0 0.0
      %1816 = vmatpush1.msra.mxu0 0.0
      %1817 = vmatprep.subr.mxu0 0.0
      %1818 = vmatpush1.msra.mxu0 0.0
      %1819 = vmatprep.subr.mxu0 0.0
      %1820 = vmatpush1.msra.mxu0 0.0
      %1821 = vmatprep.subr.mxu0 0.0
      %1822 = vmatpush1.msra.mxu0 0.0
      %1823 = vmatprep.subr.mxu0 0.0
      %1824 = vmatpush1.msra.mxu0 0.0
      %1825 = vmatprep.subr.mxu0 0.0
      %1826 = vmatpush1.msra.mxu0 0.0
      %1827 = vmatprep.subr.mxu0 0.0
      %1828 = vmatpush1.msra.mxu0 0.0
      %1829 = vmatprep.subr.mxu0 0.0
      %1830 = vmatpush1.msra.mxu0 0.0
      %1831 = vmatprep.subr.mxu0 0.0
      %1832 = vmatpush1.msra.mxu0 0.0
      %1833 = vmatprep.subr.mxu0 0.0
      %1834 = vmatpush1.msra.mxu0 0.0
      %1835 = vmatprep.subr.mxu0 0.0
      %1836 = vmatpush1.msra.mxu0 0.0
      %1837 = vmatprep.subr.mxu0 0.0
      %1838 = vmatpush1.msra.mxu0 %v1440
      %1839 = vmatprep.subr.mxu0 0.0
      %1840 = vmatpush2.msra.mxu0 0.0
      %1841 = vmatprep.subr.mxu0 0.0
      %1842 = vmatpush2.msra.mxu0 0.0
      %1843 = vmatprep.subr.mxu0 0.0
      %1844 = vmatpush2.msra.mxu0 0.0
      %1845 = vmatprep.subr.mxu0 0.0
      %1846 = vmatpush2.msra.mxu0 0.0
      %1847 = vmatprep.subr.mxu0 0.0
      %1848 = vmatpush2.msra.mxu0 0.0
      %1849 = vmatprep.subr.mxu0 0.0
      %1850 = vmatpush2.msra.mxu0 0.0
      %1851 = vmatprep.subr.mxu0 0.0
      %1852 = vmatpush2.msra.mxu0 0.0
      %1853 = vmatprep.subr.mxu0 0.0
      %1854 = vmatpush2.msra.mxu0 0.0
      %1855 = vmatprep.subr.mxu0 0.0
      %1856 = vmatpush2.msra.mxu0 0.0
      %1857 = vmatprep.subr.mxu0 0.0
      %1858 = vmatpush2.msra.mxu0 0.0
      %1859 = vmatprep.subr.mxu0 0.0
      %1860 = vmatpush2.msra.mxu0 0.0
      %1861 = vmatprep.subr.mxu0 0.0
      %1862 = vmatpush2.msra.mxu0 0.0
      %1863 = vmatprep.subr.mxu0 0.0
      %1864 = vmatpush2.msra.mxu0 0.0
      %1865 = vmatprep.subr.mxu0 0.0
      %1866 = vmatpush2.msra.mxu0 0.0
      %1867 = vmatprep.subr.mxu0 0.0
      %1868 = vmatpush2.msra.mxu0 0.0
      %1869 = vmatprep.subr.mxu0 0.0
      %1870 = vmatpush2.msra.mxu0 0.0
      %1871 = vmatprep.mubr.f32.mxu0 0.0
      %1872 = vmatmul.mubr.f32.gmra.mxu0 %v1805
      %v1873 = vpop.f32.mrf.mxu0
      %v1874 = vadd.f32 0.0, %v1873
      %v1875 = vpop.f32.mrf.mxu0
      %1876 = vdwg.mxu0
      %v1878 = vsel %vm250, %v1432, 0
      %1880 = vmatprep.subr.mxu0 0.0
      %1881 = vmatpush1.msra.mxu0 0.0
      %1882 = vmatprep.subr.mxu0 0.0
      %1883 = vmatpush1.msra.mxu0 0.0
      %1884 = vmatprep.subr.mxu0 0.0
      %1885 = vmatpush1.msra.mxu0 0.0
      %1886 = vmatprep.subr.mxu0 0.0
      %1887 = vmatpush1.msra.mxu0 0.0
      %1888 = vmatprep.subr.mxu0 0.0
      %1889 = vmatpush1.msra.mxu0 0.0
      %1890 = vmatprep.subr.mxu0 0.0
      %1891 = vmatpush1.msra.mxu0 0.0
      %1892 = vmatprep.subr.mxu0 0.0
      %1893 = vmatpush1.msra.mxu0 0.0
      %1894 = vmatprep.subr.mxu0 0.0
      %1895 = vmatpush1.msra.mxu0 0.0
      %1896 = vmatprep.subr.mxu0 0.0
      %1897 = vmatpush1.msra.mxu0 0.0
      %1898 = vmatprep.subr.mxu0 0.0
      %1899 = vmatpush1.msra.mxu0 0.0
      %1900 = vmatprep.subr.mxu0 0.0
      %1901 = vmatpush1.msra.mxu0 0.0
      %1902 = vmatprep.subr.mxu0 0.0
      %1903 = vmatpush1.msra.mxu0 0.0
      %1904 = vmatprep.subr.mxu0 0.0
      %1905 = vmatpush1.msra.mxu0 0.0
      %1906 = vmatprep.subr.mxu0 0.0
      %1907 = vmatpush1.msra.mxu0 0.0
      %1908 = vmatprep.subr.mxu0 0.0
      %1909 = vmatpush1.msra.mxu0 0.0
      %1910 = vmatprep.subr.mxu0 0.0
      %1911 = vmatpush1.msra.mxu0 %v1440
      %1912 = vmatprep.subr.mxu0 0.0
      %1913 = vmatpush2.msra.mxu0 0.0
      %1914 = vmatprep.subr.mxu0 0.0
      %1915 = vmatpush2.msra.mxu0 0.0
      %1916 = vmatprep.subr.mxu0 0.0
      %1917 = vmatpush2.msra.mxu0 0.0
      %1918 = vmatprep.subr.mxu0 0.0
      %1919 = vmatpush2.msra.mxu0 0.0
      %1920 = vmatprep.subr.mxu0 0.0
      %1921 = vmatpush2.msra.mxu0 0.0
      %1922 = vmatprep.subr.mxu0 0.0
      %1923 = vmatpush2.msra.mxu0 0.0
      %1924 = vmatprep.subr.mxu0 0.0
      %1925 = vmatpush2.msra.mxu0 0.0
      %1926 = vmatprep.subr.mxu0 0.0
      %1927 = vmatpush2.msra.mxu0 0.0
      %1928 = vmatprep.subr.mxu0 0.0
      %1929 = vmatpush2.msra.mxu0 0.0
      %1930 = vmatprep.subr.mxu0 0.0
      %1931 = vmatpush2.msra.mxu0 0.0
      %1932 = vmatprep.subr.mxu0 0.0
      %1933 = vmatpush2.msra.mxu0 0.0
      %1934 = vmatprep.subr.mxu0 0.0
      %1935 = vmatpush2.msra.mxu0 0.0
      %1936 = vmatprep.subr.mxu0 0.0
      %1937 = vmatpush2.msra.mxu0 0.0
      %1938 = vmatprep.subr.mxu0 0.0
      %1939 = vmatpush2.msra.mxu0 0.0
      %1940 = vmatprep.subr.mxu0 0.0
      %1941 = vmatpush2.msra.mxu0 0.0
      %1942 = vmatprep.subr.mxu0 0.0
      %1943 = vmatpush2.msra.mxu0 0.0
      %1944 = vmatprep.mubr.f32.mxu0 0.0
      %1945 = vmatmul.mubr.f32.gmra.mxu0 %v1878
      %v1946 = vpop.f32.mrf.mxu0
      %v1947 = vadd.f32 0.0, %v1946
      %v1948 = vpop.f32.mrf.mxu0
      %1949 = vdwg.mxu0
      %v1951 = vsel %vm250, %v1433, 0
      %1953 = vmatprep.subr.mxu0 0.0
      %1954 = vmatpush1.msra.mxu0 0.0
      %1955 = vmatprep.subr.mxu0 0.0
      %1956 = vmatpush1.msra.mxu0 0.0
      %1957 = vmatprep.subr.mxu0 0.0
      %1958 = vmatpush1.msra.mxu0 0.0
      %1959 = vmatprep.subr.mxu0 0.0
      %1960 = vmatpush1.msra.mxu0 0.0
      %1961 = vmatprep.subr.mxu0 0.0
      %1962 = vmatpush1.msra.mxu0 0.0
      %1963 = vmatprep.subr.mxu0 0.0
      %1964 = vmatpush1.msra.mxu0 0.0
      %1965 = vmatprep.subr.mxu0 0.0
      %1966 = vmatpush1.msra.mxu0 0.0
      %1967 = vmatprep.subr.mxu0 0.0
      %1968 = vmatpush1.msra.mxu0 0.0
      %1969 = vmatprep.subr.mxu0 0.0
      %1970 = vmatpush1.msra.mxu0 0.0
      %1971 = vmatprep.subr.mxu0 0.0
      %1972 = vmatpush1.msra.mxu0 0.0
      %1973 = vmatprep.subr.mxu0 0.0
      %1974 = vmatpush1.msra.mxu0 0.0
      %1975 = vmatprep.subr.mxu0 0.0
      %1976 = vmatpush1.msra.mxu0 0.0
      %1977 = vmatprep.subr.mxu0 0.0
      %1978 = vmatpush1.msra.mxu0 0.0
      %1979 = vmatprep.subr.mxu0 0.0
      %1980 = vmatpush1.msra.mxu0 0.0
      %1981 = vmatprep.subr.mxu0 0.0
      %1982 = vmatpush1.msra.mxu0 0.0
      %1983 = vmatprep.subr.mxu0 0.0
      %1984 = vmatpush1.msra.mxu0 %v1440
      %1985 = vmatprep.subr.mxu0 0.0
      %1986 = vmatpush2.msra.mxu0 0.0
      %1987 = vmatprep.subr.mxu0 0.0
      %1988 = vmatpush2.msra.mxu0 0.0
      %1989 = vmatprep.subr.mxu0 0.0
      %1990 = vmatpush2.msra.mxu0 0.0
      %1991 = vmatprep.subr.mxu0 0.0
      %1992 = vmatpush2.msra.mxu0 0.0
      %1993 = vmatprep.subr.mxu0 0.0
      %1994 = vmatpush2.msra.mxu0 0.0
      %1995 = vmatprep.subr.mxu0 0.0
      %1996 = vmatpush2.msra.mxu0 0.0
      %1997 = vmatprep.subr.mxu0 0.0
      %1998 = vmatpush2.msra.mxu0 0.0
      %1999 = vmatprep.subr.mxu0 0.0
      %2000 = vmatpush2.msra.mxu0 0.0
      %2001 = vmatprep.subr.mxu0 0.0
      %2002 = vmatpush2.msra.mxu0 0.0
      %2003 = vmatprep.subr.mxu0 0.0
      %2004 = vmatpush2.msra.mxu0 0.0
      %2005 = vmatprep.subr.mxu0 0.0
      %2006 = vmatpush2.msra.mxu0 0.0
      %2007 = vmatprep.subr.mxu0 0.0
      %2008 = vmatpush2.msra.mxu0 0.0
      %2009 = vmatprep.subr.mxu0 0.0
      %2010 = vmatpush2.msra.mxu0 0.0
      %2011 = vmatprep.subr.mxu0 0.0
      %2012 = vmatpush2.msra.mxu0 0.0
      %2013 = vmatprep.subr.mxu0 0.0
      %2014 = vmatpush2.msra.mxu0 0.0
      %2015 = vmatprep.subr.mxu0 0.0
      %2016 = vmatpush2.msra.mxu0 0.0
      %2017 = vmatprep.mubr.f32.mxu0 0.0
      %2018 = vmatmul.mubr.f32.gmra.mxu0 %v1951
      %v2019 = vpop.f32.mrf.mxu0
      %v2020 = vadd.f32 0.0, %v2019
      %v2021 = vpop.f32.mrf.mxu0
      %2022 = vdwg.mxu0
      %v2023 = vadd.f32 %v912, %v1509
      %v2024 = vadd.f32 %v985, %v1582
      %v2025 = vadd.f32 %v1058, %v1655
      %v2026 = vadd.f32 %v1131, %v1728
      %v2027 = vadd.f32 %v1204, %v1801
      %v2028 = vadd.f32 %v1277, %v1874
      %v2029 = vadd.f32 %v1350, %v1947
      %v2030 = vadd.f32 %v1423, %v2020
      %s2031 = scalar_lea.vmem %s223, 288
      %v2032 = vld [vmem:[%s2031] sm:$0xff]
      %v2033 = vld [vmem:[%s2031 + $0x10] sm:$0xff]
      %v2034 = vld [vmem:[%s2031 + $0x20] sm:$0xff]
      %v2035 = vld [vmem:[%s2031 + $0x30] sm:$0xff]
      %v2036 = vld [vmem:[%s2031 + $0x40] sm:$0xff]
      %v2037 = vld [vmem:[%s2031 + $0x50] sm:$0xff]
      %v2038 = vld [vmem:[%s2031 + $0x60] sm:$0xff]
      %v2039 = vld [vmem:[%s2031 + $0x70] sm:$0xff]
      %s2040 = scalar_lea.vmem %s1, 12
      %v2041 = vld [vmem:[%s2040] sm:$0xf]
      %v2043 = vsel %vm250, %v2032, 0
      %v2046 = vsel %vm254, %v2041, 0
      %2048 = vmatprep.subr.mxu0 0.0
      %2049 = vmatpush1.msra.mxu0 0.0
      %2050 = vmatprep.subr.mxu0 0.0
      %2051 = vmatpush1.msra.mxu0 0.0
      %2052 = vmatprep.subr.mxu0 0.0
      %2053 = vmatpush1.msra.mxu0 0.0
      %2054 = vmatprep.subr.mxu0 0.0
      %2055 = vmatpush1.msra.mxu0 0.0
      %2056 = vmatprep.subr.mxu0 0.0
      %2057 = vmatpush1.msra.mxu0 0.0
      %2058 = vmatprep.subr.mxu0 0.0
      %2059 = vmatpush1.msra.mxu0 0.0
      %2060 = vmatprep.subr.mxu0 0.0
      %2061 = vmatpush1.msra.mxu0 0.0
      %2062 = vmatprep.subr.mxu0 0.0
      %2063 = vmatpush1.msra.mxu0 0.0
      %2064 = vmatprep.subr.mxu0 0.0
      %2065 = vmatpush1.msra.mxu0 0.0
      %2066 = vmatprep.subr.mxu0 0.0
      %2067 = vmatpush1.msra.mxu0 0.0
      %2068 = vmatprep.subr.mxu0 0.0
      %2069 = vmatpush1.msra.mxu0 0.0
      %2070 = vmatprep.subr.mxu0 0.0
      %2071 = vmatpush1.msra.mxu0 0.0
      %2072 = vmatprep.subr.mxu0 0.0
      %2073 = vmatpush1.msra.mxu0 0.0
      %2074 = vmatprep.subr.mxu0 0.0
      %2075 = vmatpush1.msra.mxu0 0.0
      %2076 = vmatprep.subr.mxu0 0.0
      %2077 = vmatpush1.msra.mxu0 0.0
      %2078 = vmatprep.subr.mxu0 0.0
      %2079 = vmatpush1.msra.mxu0 %v2046
      %2080 = vmatprep.subr.mxu0 0.0
      %2081 = vmatpush2.msra.mxu0 0.0
      %2082 = vmatprep.subr.mxu0 0.0
      %2083 = vmatpush2.msra.mxu0 0.0
      %2084 = vmatprep.subr.mxu0 0.0
      %2085 = vmatpush2.msra.mxu0 0.0
      %2086 = vmatprep.subr.mxu0 0.0
      %2087 = vmatpush2.msra.mxu0 0.0
      %2088 = vmatprep.subr.mxu0 0.0
      %2089 = vmatpush2.msra.mxu0 0.0
      %2090 = vmatprep.subr.mxu0 0.0
      %2091 = vmatpush2.msra.mxu0 0.0
      %2092 = vmatprep.subr.mxu0 0.0
      %2093 = vmatpush2.msra.mxu0 0.0
      %2094 = vmatprep.subr.mxu0 0.0
      %2095 = vmatpush2.msra.mxu0 0.0
      %2096 = vmatprep.subr.mxu0 0.0
      %2097 = vmatpush2.msra.mxu0 0.0
      %2098 = vmatprep.subr.mxu0 0.0
      %2099 = vmatpush2.msra.mxu0 0.0
      %2100 = vmatprep.subr.mxu0 0.0
      %2101 = vmatpush2.msra.mxu0 0.0
      %2102 = vmatprep.subr.mxu0 0.0
      %2103 = vmatpush2.msra.mxu0 0.0
      %2104 = vmatprep.subr.mxu0 0.0
      %2105 = vmatpush2.msra.mxu0 0.0
      %2106 = vmatprep.subr.mxu0 0.0
      %2107 = vmatpush2.msra.mxu0 0.0
      %2108 = vmatprep.subr.mxu0 0.0
      %2109 = vmatpush2.msra.mxu0 0.0
      %2110 = vmatprep.subr.mxu0 0.0
      %2111 = vmatpush2.msra.mxu0 0.0
      %2112 = vmatprep.mubr.f32.mxu0 0.0
      %2113 = vmatmul.mubr.f32.gmra.mxu0 %v2043
      %v2114 = vpop.f32.mrf.mxu0
      %v2115 = vadd.f32 0.0, %v2114
      %v2116 = vpop.f32.mrf.mxu0
      %2117 = vdwg.mxu0
      %v2119 = vsel %vm250, %v2033, 0
      %2121 = vmatprep.subr.mxu0 0.0
      %2122 = vmatpush1.msra.mxu0 0.0
      %2123 = vmatprep.subr.mxu0 0.0
      %2124 = vmatpush1.msra.mxu0 0.0
      %2125 = vmatprep.subr.mxu0 0.0
      %2126 = vmatpush1.msra.mxu0 0.0
      %2127 = vmatprep.subr.mxu0 0.0
      %2128 = vmatpush1.msra.mxu0 0.0
      %2129 = vmatprep.subr.mxu0 0.0
      %2130 = vmatpush1.msra.mxu0 0.0
      %2131 = vmatprep.subr.mxu0 0.0
      %2132 = vmatpush1.msra.mxu0 0.0
      %2133 = vmatprep.subr.mxu0 0.0
      %2134 = vmatpush1.msra.mxu0 0.0
      %2135 = vmatprep.subr.mxu0 0.0
      %2136 = vmatpush1.msra.mxu0 0.0
      %2137 = vmatprep.subr.mxu0 0.0
      %2138 = vmatpush1.msra.mxu0 0.0
      %2139 = vmatprep.subr.mxu0 0.0
      %2140 = vmatpush1.msra.mxu0 0.0
      %2141 = vmatprep.subr.mxu0 0.0
      %2142 = vmatpush1.msra.mxu0 0.0
      %2143 = vmatprep.subr.mxu0 0.0
      %2144 = vmatpush1.msra.mxu0 0.0
      %2145 = vmatprep.subr.mxu0 0.0
      %2146 = vmatpush1.msra.mxu0 0.0
      %2147 = vmatprep.subr.mxu0 0.0
      %2148 = vmatpush1.msra.mxu0 0.0
      %2149 = vmatprep.subr.mxu0 0.0
      %2150 = vmatpush1.msra.mxu0 0.0
      %2151 = vmatprep.subr.mxu0 0.0
      %2152 = vmatpush1.msra.mxu0 %v2046
      %2153 = vmatprep.subr.mxu0 0.0
      %2154 = vmatpush2.msra.mxu0 0.0
      %2155 = vmatprep.subr.mxu0 0.0
      %2156 = vmatpush2.msra.mxu0 0.0
      %2157 = vmatprep.subr.mxu0 0.0
      %2158 = vmatpush2.msra.mxu0 0.0
      %2159 = vmatprep.subr.mxu0 0.0
      %2160 = vmatpush2.msra.mxu0 0.0
      %2161 = vmatprep.subr.mxu0 0.0
      %2162 = vmatpush2.msra.mxu0 0.0
      %2163 = vmatprep.subr.mxu0 0.0
      %2164 = vmatpush2.msra.mxu0 0.0
      %2165 = vmatprep.subr.mxu0 0.0
      %2166 = vmatpush2.msra.mxu0 0.0
      %2167 = vmatprep.subr.mxu0 0.0
      %2168 = vmatpush2.msra.mxu0 0.0
      %2169 = vmatprep.subr.mxu0 0.0
      %2170 = vmatpush2.msra.mxu0 0.0
      %2171 = vmatprep.subr.mxu0 0.0
      %2172 = vmatpush2.msra.mxu0 0.0
      %2173 = vmatprep.subr.mxu0 0.0
      %2174 = vmatpush2.msra.mxu0 0.0
      %2175 = vmatprep.subr.mxu0 0.0
      %2176 = vmatpush2.msra.mxu0 0.0
      %2177 = vmatprep.subr.mxu0 0.0
      %2178 = vmatpush2.msra.mxu0 0.0
      %2179 = vmatprep.subr.mxu0 0.0
      %2180 = vmatpush2.msra.mxu0 0.0
      %2181 = vmatprep.subr.mxu0 0.0
      %2182 = vmatpush2.msra.mxu0 0.0
      %2183 = vmatprep.subr.mxu0 0.0
      %2184 = vmatpush2.msra.mxu0 0.0
      %2185 = vmatprep.mubr.f32.mxu0 0.0
      %2186 = vmatmul.mubr.f32.gmra.mxu0 %v2119
      %v2187 = vpop.f32.mrf.mxu0
      %v2188 = vadd.f32 0.0, %v2187
      %v2189 = vpop.f32.mrf.mxu0
      %2190 = vdwg.mxu0
      %v2192 = vsel %vm250, %v2034, 0
      %2194 = vmatprep.subr.mxu0 0.0
      %2195 = vmatpush1.msra.mxu0 0.0
      %2196 = vmatprep.subr.mxu0 0.0
      %2197 = vmatpush1.msra.mxu0 0.0
      %2198 = vmatprep.subr.mxu0 0.0
      %2199 = vmatpush1.msra.mxu0 0.0
      %2200 = vmatprep.subr.mxu0 0.0
      %2201 = vmatpush1.msra.mxu0 0.0
      %2202 = vmatprep.subr.mxu0 0.0
      %2203 = vmatpush1.msra.mxu0 0.0
      %2204 = vmatprep.subr.mxu0 0.0
      %2205 = vmatpush1.msra.mxu0 0.0
      %2206 = vmatprep.subr.mxu0 0.0
      %2207 = vmatpush1.msra.mxu0 0.0
      %2208 = vmatprep.subr.mxu0 0.0
      %2209 = vmatpush1.msra.mxu0 0.0
      %2210 = vmatprep.subr.mxu0 0.0
      %2211 = vmatpush1.msra.mxu0 0.0
      %2212 = vmatprep.subr.mxu0 0.0
      %2213 = vmatpush1.msra.mxu0 0.0
      %2214 = vmatprep.subr.mxu0 0.0
      %2215 = vmatpush1.msra.mxu0 0.0
      %2216 = vmatprep.subr.mxu0 0.0
      %2217 = vmatpush1.msra.mxu0 0.0
      %2218 = vmatprep.subr.mxu0 0.0
      %2219 = vmatpush1.msra.mxu0 0.0
      %2220 = vmatprep.subr.mxu0 0.0
      %2221 = vmatpush1.msra.mxu0 0.0
      %2222 = vmatprep.subr.mxu0 0.0
      %2223 = vmatpush1.msra.mxu0 0.0
      %2224 = vmatprep.subr.mxu0 0.0
      %2225 = vmatpush1.msra.mxu0 %v2046
      %2226 = vmatprep.subr.mxu0 0.0
      %2227 = vmatpush2.msra.mxu0 0.0
      %2228 = vmatprep.subr.mxu0 0.0
      %2229 = vmatpush2.msra.mxu0 0.0
      %2230 = vmatprep.subr.mxu0 0.0
      %2231 = vmatpush2.msra.mxu0 0.0
      %2232 = vmatprep.subr.mxu0 0.0
      %2233 = vmatpush2.msra.mxu0 0.0
      %2234 = vmatprep.subr.mxu0 0.0
      %2235 = vmatpush2.msra.mxu0 0.0
      %2236 = vmatprep.subr.mxu0 0.0
      %2237 = vmatpush2.msra.mxu0 0.0
      %2238 = vmatprep.subr.mxu0 0.0
      %2239 = vmatpush2.msra.mxu0 0.0
      %2240 = vmatprep.subr.mxu0 0.0
      %2241 = vmatpush2.msra.mxu0 0.0
      %2242 = vmatprep.subr.mxu0 0.0
      %2243 = vmatpush2.msra.mxu0 0.0
      %2244 = vmatprep.subr.mxu0 0.0
      %2245 = vmatpush2.msra.mxu0 0.0
      %2246 = vmatprep.subr.mxu0 0.0
      %2247 = vmatpush2.msra.mxu0 0.0
      %2248 = vmatprep.subr.mxu0 0.0
      %2249 = vmatpush2.msra.mxu0 0.0
      %2250 = vmatprep.subr.mxu0 0.0
      %2251 = vmatpush2.msra.mxu0 0.0
      %2252 = vmatprep.subr.mxu0 0.0
      %2253 = vmatpush2.msra.mxu0 0.0
      %2254 = vmatprep.subr.mxu0 0.0
      %2255 = vmatpush2.msra.mxu0 0.0
      %2256 = vmatprep.subr.mxu0 0.0
      %2257 = vmatpush2.msra.mxu0 0.0
      %2258 = vmatprep.mubr.f32.mxu0 0.0
      %2259 = vmatmul.mubr.f32.gmra.mxu0 %v2192
      %v2260 = vpop.f32.mrf.mxu0
      %v2261 = vadd.f32 0.0, %v2260
      %v2262 = vpop.f32.mrf.mxu0
      %2263 = vdwg.mxu0
      %v2265 = vsel %vm250, %v2035, 0
      %2267 = vmatprep.subr.mxu0 0.0
      %2268 = vmatpush1.msra.mxu0 0.0
      %2269 = vmatprep.subr.mxu0 0.0
      %2270 = vmatpush1.msra.mxu0 0.0
      %2271 = vmatprep.subr.mxu0 0.0
      %2272 = vmatpush1.msra.mxu0 0.0
      %2273 = vmatprep.subr.mxu0 0.0
      %2274 = vmatpush1.msra.mxu0 0.0
      %2275 = vmatprep.subr.mxu0 0.0
      %2276 = vmatpush1.msra.mxu0 0.0
      %2277 = vmatprep.subr.mxu0 0.0
      %2278 = vmatpush1.msra.mxu0 0.0
      %2279 = vmatprep.subr.mxu0 0.0
      %2280 = vmatpush1.msra.mxu0 0.0
      %2281 = vmatprep.subr.mxu0 0.0
      %2282 = vmatpush1.msra.mxu0 0.0
      %2283 = vmatprep.subr.mxu0 0.0
      %2284 = vmatpush1.msra.mxu0 0.0
      %2285 = vmatprep.subr.mxu0 0.0
      %2286 = vmatpush1.msra.mxu0 0.0
      %2287 = vmatprep.subr.mxu0 0.0
      %2288 = vmatpush1.msra.mxu0 0.0
      %2289 = vmatprep.subr.mxu0 0.0
      %2290 = vmatpush1.msra.mxu0 0.0
      %2291 = vmatprep.subr.mxu0 0.0
      %2292 = vmatpush1.msra.mxu0 0.0
      %2293 = vmatprep.subr.mxu0 0.0
      %2294 = vmatpush1.msra.mxu0 0.0
      %2295 = vmatprep.subr.mxu0 0.0
      %2296 = vmatpush1.msra.mxu0 0.0
      %2297 = vmatprep.subr.mxu0 0.0
      %2298 = vmatpush1.msra.mxu0 %v2046
      %2299 = vmatprep.subr.mxu0 0.0
      %2300 = vmatpush2.msra.mxu0 0.0
      %2301 = vmatprep.subr.mxu0 0.0
      %2302 = vmatpush2.msra.mxu0 0.0
      %2303 = vmatprep.subr.mxu0 0.0
      %2304 = vmatpush2.msra.mxu0 0.0
      %2305 = vmatprep.subr.mxu0 0.0
      %2306 = vmatpush2.msra.mxu0 0.0
      %2307 = vmatprep.subr.mxu0 0.0
      %2308 = vmatpush2.msra.mxu0 0.0
      %2309 = vmatprep.subr.mxu0 0.0
      %2310 = vmatpush2.msra.mxu0 0.0
      %2311 = vmatprep.subr.mxu0 0.0
      %2312 = vmatpush2.msra.mxu0 0.0
      %2313 = vmatprep.subr.mxu0 0.0
      %2314 = vmatpush2.msra.mxu0 0.0
      %2315 = vmatprep.subr.mxu0 0.0
      %2316 = vmatpush2.msra.mxu0 0.0
      %2317 = vmatprep.subr.mxu0 0.0
      %2318 = vmatpush2.msra.mxu0 0.0
      %2319 = vmatprep.subr.mxu0 0.0
      %2320 = vmatpush2.msra.mxu0 0.0
      %2321 = vmatprep.subr.mxu0 0.0
      %2322 = vmatpush2.msra.mxu0 0.0
      %2323 = vmatprep.subr.mxu0 0.0
      %2324 = vmatpush2.msra.mxu0 0.0
      %2325 = vmatprep.subr.mxu0 0.0
      %2326 = vmatpush2.msra.mxu0 0.0
      %2327 = vmatprep.subr.mxu0 0.0
      %2328 = vmatpush2.msra.mxu0 0.0
      %2329 = vmatprep.subr.mxu0 0.0
      %2330 = vmatpush2.msra.mxu0 0.0
      %2331 = vmatprep.mubr.f32.mxu0 0.0
      %2332 = vmatmul.mubr.f32.gmra.mxu0 %v2265
      %v2333 = vpop.f32.mrf.mxu0
      %v2334 = vadd.f32 0.0, %v2333
      %v2335 = vpop.f32.mrf.mxu0
      %2336 = vdwg.mxu0
      %v2338 = vsel %vm250, %v2036, 0
      %2340 = vmatprep.subr.mxu0 0.0
      %2341 = vmatpush1.msra.mxu0 0.0
      %2342 = vmatprep.subr.mxu0 0.0
      %2343 = vmatpush1.msra.mxu0 0.0
      %2344 = vmatprep.subr.mxu0 0.0
      %2345 = vmatpush1.msra.mxu0 0.0
      %2346 = vmatprep.subr.mxu0 0.0
      %2347 = vmatpush1.msra.mxu0 0.0
      %2348 = vmatprep.subr.mxu0 0.0
      %2349 = vmatpush1.msra.mxu0 0.0
      %2350 = vmatprep.subr.mxu0 0.0
      %2351 = vmatpush1.msra.mxu0 0.0
      %2352 = vmatprep.subr.mxu0 0.0
      %2353 = vmatpush1.msra.mxu0 0.0
      %2354 = vmatprep.subr.mxu0 0.0
      %2355 = vmatpush1.msra.mxu0 0.0
      %2356 = vmatprep.subr.mxu0 0.0
      %2357 = vmatpush1.msra.mxu0 0.0
      %2358 = vmatprep.subr.mxu0 0.0
      %2359 = vmatpush1.msra.mxu0 0.0
      %2360 = vmatprep.subr.mxu0 0.0
      %2361 = vmatpush1.msra.mxu0 0.0
      %2362 = vmatprep.subr.mxu0 0.0
      %2363 = vmatpush1.msra.mxu0 0.0
      %2364 = vmatprep.subr.mxu0 0.0
      %2365 = vmatpush1.msra.mxu0 0.0
      %2366 = vmatprep.subr.mxu0 0.0
      %2367 = vmatpush1.msra.mxu0 0.0
      %2368 = vmatprep.subr.mxu0 0.0
      %2369 = vmatpush1.msra.mxu0 0.0
      %2370 = vmatprep.subr.mxu0 0.0
      %2371 = vmatpush1.msra.mxu0 %v2046
      %2372 = vmatprep.subr.mxu0 0.0
      %2373 = vmatpush2.msra.mxu0 0.0
      %2374 = vmatprep.subr.mxu0 0.0
      %2375 = vmatpush2.msra.mxu0 0.0
      %2376 = vmatprep.subr.mxu0 0.0
      %2377 = vmatpush2.msra.mxu0 0.0
      %2378 = vmatprep.subr.mxu0 0.0
      %2379 = vmatpush2.msra.mxu0 0.0
      %2380 = vmatprep.subr.mxu0 0.0
      %2381 = vmatpush2.msra.mxu0 0.0
      %2382 = vmatprep.subr.mxu0 0.0
      %2383 = vmatpush2.msra.mxu0 0.0
      %2384 = vmatprep.subr.mxu0 0.0
      %2385 = vmatpush2.msra.mxu0 0.0
      %2386 = vmatprep.subr.mxu0 0.0
      %2387 = vmatpush2.msra.mxu0 0.0
      %2388 = vmatprep.subr.mxu0 0.0
      %2389 = vmatpush2.msra.mxu0 0.0
      %2390 = vmatprep.subr.mxu0 0.0
      %2391 = vmatpush2.msra.mxu0 0.0
      %2392 = vmatprep.subr.mxu0 0.0
      %2393 = vmatpush2.msra.mxu0 0.0
      %2394 = vmatprep.subr.mxu0 0.0
      %2395 = vmatpush2.msra.mxu0 0.0
      %2396 = vmatprep.subr.mxu0 0.0
      %2397 = vmatpush2.msra.mxu0 0.0
      %2398 = vmatprep.subr.mxu0 0.0
      %2399 = vmatpush2.msra.mxu0 0.0
      %2400 = vmatprep.subr.mxu0 0.0
      %2401 = vmatpush2.msra.mxu0 0.0
      %2402 = vmatprep.subr.mxu0 0.0
      %2403 = vmatpush2.msra.mxu0 0.0
      %2404 = vmatprep.mubr.f32.mxu0 0.0
      %2405 = vmatmul.mubr.f32.gmra.mxu0 %v2338
      %v2406 = vpop.f32.mrf.mxu0
      %v2407 = vadd.f32 0.0, %v2406
      %v2408 = vpop.f32.mrf.mxu0
      %2409 = vdwg.mxu0
      %v2411 = vsel %vm250, %v2037, 0
      %2413 = vmatprep.subr.mxu0 0.0
      %2414 = vmatpush1.msra.mxu0 0.0
      %2415 = vmatprep.subr.mxu0 0.0
      %2416 = vmatpush1.msra.mxu0 0.0
      %2417 = vmatprep.subr.mxu0 0.0
      %2418 = vmatpush1.msra.mxu0 0.0
      %2419 = vmatprep.subr.mxu0 0.0
      %2420 = vmatpush1.msra.mxu0 0.0
      %2421 = vmatprep.subr.mxu0 0.0
      %2422 = vmatpush1.msra.mxu0 0.0
      %2423 = vmatprep.subr.mxu0 0.0
      %2424 = vmatpush1.msra.mxu0 0.0
      %2425 = vmatprep.subr.mxu0 0.0
      %2426 = vmatpush1.msra.mxu0 0.0
      %2427 = vmatprep.subr.mxu0 0.0
      %2428 = vmatpush1.msra.mxu0 0.0
      %2429 = vmatprep.subr.mxu0 0.0
      %2430 = vmatpush1.msra.mxu0 0.0
      %2431 = vmatprep.subr.mxu0 0.0
      %2432 = vmatpush1.msra.mxu0 0.0
      %2433 = vmatprep.subr.mxu0 0.0
      %2434 = vmatpush1.msra.mxu0 0.0
      %2435 = vmatprep.subr.mxu0 0.0
      %2436 = vmatpush1.msra.mxu0 0.0
      %2437 = vmatprep.subr.mxu0 0.0
      %2438 = vmatpush1.msra.mxu0 0.0
      %2439 = vmatprep.subr.mxu0 0.0
      %2440 = vmatpush1.msra.mxu0 0.0
      %2441 = vmatprep.subr.mxu0 0.0
      %2442 = vmatpush1.msra.mxu0 0.0
      %2443 = vmatprep.subr.mxu0 0.0
      %2444 = vmatpush1.msra.mxu0 %v2046
      %2445 = vmatprep.subr.mxu0 0.0
      %2446 = vmatpush2.msra.mxu0 0.0
      %2447 = vmatprep.subr.mxu0 0.0
      %2448 = vmatpush2.msra.mxu0 0.0
      %2449 = vmatprep.subr.mxu0 0.0
      %2450 = vmatpush2.msra.mxu0 0.0
      %2451 = vmatprep.subr.mxu0 0.0
      %2452 = vmatpush2.msra.mxu0 0.0
      %2453 = vmatprep.subr.mxu0 0.0
      %2454 = vmatpush2.msra.mxu0 0.0
      %2455 = vmatprep.subr.mxu0 0.0
      %2456 = vmatpush2.msra.mxu0 0.0
      %2457 = vmatprep.subr.mxu0 0.0
      %2458 = vmatpush2.msra.mxu0 0.0
      %2459 = vmatprep.subr.mxu0 0.0
      %2460 = vmatpush2.msra.mxu0 0.0
      %2461 = vmatprep.subr.mxu0 0.0
      %2462 = vmatpush2.msra.mxu0 0.0
      %2463 = vmatprep.subr.mxu0 0.0
      %2464 = vmatpush2.msra.mxu0 0.0
      %2465 = vmatprep.subr.mxu0 0.0
      %2466 = vmatpush2.msra.mxu0 0.0
      %2467 = vmatprep.subr.mxu0 0.0
      %2468 = vmatpush2.msra.mxu0 0.0
      %2469 = vmatprep.subr.mxu0 0.0
      %2470 = vmatpush2.msra.mxu0 0.0
      %2471 = vmatprep.subr.mxu0 0.0
      %2472 = vmatpush2.msra.mxu0 0.0
      %2473 = vmatprep.subr.mxu0 0.0
      %2474 = vmatpush2.msra.mxu0 0.0
      %2475 = vmatprep.subr.mxu0 0.0
      %2476 = vmatpush2.msra.mxu0 0.0
      %2477 = vmatprep.mubr.f32.mxu0 0.0
      %2478 = vmatmul.mubr.f32.gmra.mxu0 %v2411
      %v2479 = vpop.f32.mrf.mxu0
      %v2480 = vadd.f32 0.0, %v2479
      %v2481 = vpop.f32.mrf.mxu0
      %2482 = vdwg.mxu0
      %v2484 = vsel %vm250, %v2038, 0
      %2486 = vmatprep.subr.mxu0 0.0
      %2487 = vmatpush1.msra.mxu0 0.0
      %2488 = vmatprep.subr.mxu0 0.0
      %2489 = vmatpush1.msra.mxu0 0.0
      %2490 = vmatprep.subr.mxu0 0.0
      %2491 = vmatpush1.msra.mxu0 0.0
      %2492 = vmatprep.subr.mxu0 0.0
      %2493 = vmatpush1.msra.mxu0 0.0
      %2494 = vmatprep.subr.mxu0 0.0
      %2495 = vmatpush1.msra.mxu0 0.0
      %2496 = vmatprep.subr.mxu0 0.0
      %2497 = vmatpush1.msra.mxu0 0.0
      %2498 = vmatprep.subr.mxu0 0.0
      %2499 = vmatpush1.msra.mxu0 0.0
      %2500 = vmatprep.subr.mxu0 0.0
      %2501 = vmatpush1.msra.mxu0 0.0
      %2502 = vmatprep.subr.mxu0 0.0
      %2503 = vmatpush1.msra.mxu0 0.0
      %2504 = vmatprep.subr.mxu0 0.0
      %2505 = vmatpush1.msra.mxu0 0.0
      %2506 = vmatprep.subr.mxu0 0.0
      %2507 = vmatpush1.msra.mxu0 0.0
      %2508 = vmatprep.subr.mxu0 0.0
      %2509 = vmatpush1.msra.mxu0 0.0
      %2510 = vmatprep.subr.mxu0 0.0
      %2511 = vmatpush1.msra.mxu0 0.0
      %2512 = vmatprep.subr.mxu0 0.0
      %2513 = vmatpush1.msra.mxu0 0.0
      %2514 = vmatprep.subr.mxu0 0.0
      %2515 = vmatpush1.msra.mxu0 0.0
      %2516 = vmatprep.subr.mxu0 0.0
      %2517 = vmatpush1.msra.mxu0 %v2046
      %2518 = vmatprep.subr.mxu0 0.0
      %2519 = vmatpush2.msra.mxu0 0.0
      %2520 = vmatprep.subr.mxu0 0.0
      %2521 = vmatpush2.msra.mxu0 0.0
      %2522 = vmatprep.subr.mxu0 0.0
      %2523 = vmatpush2.msra.mxu0 0.0
      %2524 = vmatprep.subr.mxu0 0.0
      %2525 = vmatpush2.msra.mxu0 0.0
      %2526 = vmatprep.subr.mxu0 0.0
      %2527 = vmatpush2.msra.mxu0 0.0
      %2528 = vmatprep.subr.mxu0 0.0
      %2529 = vmatpush2.msra.mxu0 0.0
      %2530 = vmatprep.subr.mxu0 0.0
      %2531 = vmatpush2.msra.mxu0 0.0
      %2532 = vmatprep.subr.mxu0 0.0
      %2533 = vmatpush2.msra.mxu0 0.0
      %2534 = vmatprep.subr.mxu0 0.0
      %2535 = vmatpush2.msra.mxu0 0.0
      %2536 = vmatprep.subr.mxu0 0.0
      %2537 = vmatpush2.msra.mxu0 0.0
      %2538 = vmatprep.subr.mxu0 0.0
      %2539 = vmatpush2.msra.mxu0 0.0
      %2540 = vmatprep.subr.mxu0 0.0
      %2541 = vmatpush2.msra.mxu0 0.0
      %2542 = vmatprep.subr.mxu0 0.0
      %2543 = vmatpush2.msra.mxu0 0.0
      %2544 = vmatprep.subr.mxu0 0.0
      %2545 = vmatpush2.msra.mxu0 0.0
      %2546 = vmatprep.subr.mxu0 0.0
      %2547 = vmatpush2.msra.mxu0 0.0
      %2548 = vmatprep.subr.mxu0 0.0
      %2549 = vmatpush2.msra.mxu0 0.0
      %2550 = vmatprep.mubr.f32.mxu0 0.0
      %2551 = vmatmul.mubr.f32.gmra.mxu0 %v2484
      %v2552 = vpop.f32.mrf.mxu0
      %v2553 = vadd.f32 0.0, %v2552
      %v2554 = vpop.f32.mrf.mxu0
      %2555 = vdwg.mxu0
      %v2557 = vsel %vm250, %v2039, 0
      %2559 = vmatprep.subr.mxu0 0.0
      %2560 = vmatpush1.msra.mxu0 0.0
      %2561 = vmatprep.subr.mxu0 0.0
      %2562 = vmatpush1.msra.mxu0 0.0
      %2563 = vmatprep.subr.mxu0 0.0
      %2564 = vmatpush1.msra.mxu0 0.0
      %2565 = vmatprep.subr.mxu0 0.0
      %2566 = vmatpush1.msra.mxu0 0.0
      %2567 = vmatprep.subr.mxu0 0.0
      %2568 = vmatpush1.msra.mxu0 0.0
      %2569 = vmatprep.subr.mxu0 0.0
      %2570 = vmatpush1.msra.mxu0 0.0
      %2571 = vmatprep.subr.mxu0 0.0
      %2572 = vmatpush1.msra.mxu0 0.0
      %2573 = vmatprep.subr.mxu0 0.0
      %2574 = vmatpush1.msra.mxu0 0.0
      %2575 = vmatprep.subr.mxu0 0.0
      %2576 = vmatpush1.msra.mxu0 0.0
      %2577 = vmatprep.subr.mxu0 0.0
      %2578 = vmatpush1.msra.mxu0 0.0
      %2579 = vmatprep.subr.mxu0 0.0
      %2580 = vmatpush1.msra.mxu0 0.0
      %2581 = vmatprep.subr.mxu0 0.0
      %2582 = vmatpush1.msra.mxu0 0.0
      %2583 = vmatprep.subr.mxu0 0.0
      %2584 = vmatpush1.msra.mxu0 0.0
      %2585 = vmatprep.subr.mxu0 0.0
      %2586 = vmatpush1.msra.mxu0 0.0
      %2587 = vmatprep.subr.mxu0 0.0
      %2588 = vmatpush1.msra.mxu0 0.0
      %2589 = vmatprep.subr.mxu0 0.0
      %2590 = vmatpush1.msra.mxu0 %v2046
      %2591 = vmatprep.subr.mxu0 0.0
      %2592 = vmatpush2.msra.mxu0 0.0
      %2593 = vmatprep.subr.mxu0 0.0
      %2594 = vmatpush2.msra.mxu0 0.0
      %2595 = vmatprep.subr.mxu0 0.0
      %2596 = vmatpush2.msra.mxu0 0.0
      %2597 = vmatprep.subr.mxu0 0.0
      %2598 = vmatpush2.msra.mxu0 0.0
      %2599 = vmatprep.subr.mxu0 0.0
      %2600 = vmatpush2.msra.mxu0 0.0
      %2601 = vmatprep.subr.mxu0 0.0
      %2602 = vmatpush2.msra.mxu0 0.0
      %2603 = vmatprep.subr.mxu0 0.0
      %2604 = vmatpush2.msra.mxu0 0.0
      %2605 = vmatprep.subr.mxu0 0.0
      %2606 = vmatpush2.msra.mxu0 0.0
      %2607 = vmatprep.subr.mxu0 0.0
      %2608 = vmatpush2.msra.mxu0 0.0
      %2609 = vmatprep.subr.mxu0 0.0
      %2610 = vmatpush2.msra.mxu0 0.0
      %2611 = vmatprep.subr.mxu0 0.0
      %2612 = vmatpush2.msra.mxu0 0.0
      %2613 = vmatprep.subr.mxu0 0.0
      %2614 = vmatpush2.msra.mxu0 0.0
      %2615 = vmatprep.subr.mxu0 0.0
      %2616 = vmatpush2.msra.mxu0 0.0
      %2617 = vmatprep.subr.mxu0 0.0
      %2618 = vmatpush2.msra.mxu0 0.0
      %2619 = vmatprep.subr.mxu0 0.0
      %2620 = vmatpush2.msra.mxu0 0.0
      %2621 = vmatprep.subr.mxu0 0.0
      %2622 = vmatpush2.msra.mxu0 0.0
      %2623 = vmatprep.mubr.f32.mxu0 0.0
      %2624 = vmatmul.mubr.f32.gmra.mxu0 %v2557
      %v2625 = vpop.f32.mrf.mxu0
      %v2626 = vadd.f32 0.0, %v2625
      %v2627 = vpop.f32.mrf.mxu0
      %2628 = vdwg.mxu0
      %v2629 = vadd.f32 %v2023, %v2115
      %v2630 = vadd.f32 %v2024, %v2188
      %v2631 = vadd.f32 %v2025, %v2261
      %v2632 = vadd.f32 %v2026, %v2334
      %v2633 = vadd.f32 %v2027, %v2407
      %v2634 = vadd.f32 %v2028, %v2480
      %v2635 = vadd.f32 %v2029, %v2553
      %v2636 = vadd.f32 %v2030, %v2626
      %s2637 = scalar_lea.vmem %s223, 432
      %v2638 = vld [vmem:[%s2637] sm:$0xff]
      %v2639 = vld [vmem:[%s2637 + $0x10] sm:$0xff]
      %v2640 = vld [vmem:[%s2637 + $0x20] sm:$0xff]
      %v2641 = vld [vmem:[%s2637 + $0x30] sm:$0xff]
      %v2642 = vld [vmem:[%s2637 + $0x40] sm:$0xff]
      %v2643 = vld [vmem:[%s2637 + $0x50] sm:$0xff]
      %v2644 = vld [vmem:[%s2637 + $0x60] sm:$0xff]
      %v2645 = vld [vmem:[%s2637 + $0x70] sm:$0xff]
      %s2646 = scalar_lea.vmem %s1, 16
      %v2647 = vld [vmem:[%s2646] sm:$0xf]
      %v2649 = vsel %vm250, %v2638, 0
      %v2652 = vsel %vm254, %v2647, 0
      %2654 = vmatprep.subr.mxu0 0.0
      %2655 = vmatpush1.msra.mxu0 0.0
      %2656 = vmatprep.subr.mxu0 0.0
      %2657 = vmatpush1.msra.mxu0 0.0
      %2658 = vmatprep.subr.mxu0 0.0
      %2659 = vmatpush1.msra.mxu0 0.0
      %2660 = vmatprep.subr.mxu0 0.0
      %2661 = vmatpush1.msra.mxu0 0.0
      %2662 = vmatprep.subr.mxu0 0.0
      %2663 = vmatpush1.msra.mxu0 0.0
      %2664 = vmatprep.subr.mxu0 0.0
      %2665 = vmatpush1.msra.mxu0 0.0
      %2666 = vmatprep.subr.mxu0 0.0
      %2667 = vmatpush1.msra.mxu0 0.0
      %2668 = vmatprep.subr.mxu0 0.0
      %2669 = vmatpush1.msra.mxu0 0.0
      %2670 = vmatprep.subr.mxu0 0.0
      %2671 = vmatpush1.msra.mxu0 0.0
      %2672 = vmatprep.subr.mxu0 0.0
      %2673 = vmatpush1.msra.mxu0 0.0
      %2674 = vmatprep.subr.mxu0 0.0
      %2675 = vmatpush1.msra.mxu0 0.0
      %2676 = vmatprep.subr.mxu0 0.0
      %2677 = vmatpush1.msra.mxu0 0.0
      %2678 = vmatprep.subr.mxu0 0.0
      %2679 = vmatpush1.msra.mxu0 0.0
      %2680 = vmatprep.subr.mxu0 0.0
      %2681 = vmatpush1.msra.mxu0 0.0
      %2682 = vmatprep.subr.mxu0 0.0
      %2683 = vmatpush1.msra.mxu0 0.0
      %2684 = vmatprep.subr.mxu0 0.0
      %2685 = vmatpush1.msra.mxu0 %v2652
      %2686 = vmatprep.subr.mxu0 0.0
      %2687 = vmatpush2.msra.mxu0 0.0
      %2688 = vmatprep.subr.mxu0 0.0
      %2689 = vmatpush2.msra.mxu0 0.0
      %2690 = vmatprep.subr.mxu0 0.0
      %2691 = vmatpush2.msra.mxu0 0.0
      %2692 = vmatprep.subr.mxu0 0.0
      %2693 = vmatpush2.msra.mxu0 0.0
      %2694 = vmatprep.subr.mxu0 0.0
      %2695 = vmatpush2.msra.mxu0 0.0
      %2696 = vmatprep.subr.mxu0 0.0
      %2697 = vmatpush2.msra.mxu0 0.0
      %2698 = vmatprep.subr.mxu0 0.0
      %2699 = vmatpush2.msra.mxu0 0.0
      %2700 = vmatprep.subr.mxu0 0.0
      %2701 = vmatpush2.msra.mxu0 0.0
      %2702 = vmatprep.subr.mxu0 0.0
      %2703 = vmatpush2.msra.mxu0 0.0
      %2704 = vmatprep.subr.mxu0 0.0
      %2705 = vmatpush2.msra.mxu0 0.0
      %2706 = vmatprep.subr.mxu0 0.0
      %2707 = vmatpush2.msra.mxu0 0.0
      %2708 = vmatprep.subr.mxu0 0.0
      %2709 = vmatpush2.msra.mxu0 0.0
      %2710 = vmatprep.subr.mxu0 0.0
      %2711 = vmatpush2.msra.mxu0 0.0
      %2712 = vmatprep.subr.mxu0 0.0
      %2713 = vmatpush2.msra.mxu0 0.0
      %2714 = vmatprep.subr.mxu0 0.0
      %2715 = vmatpush2.msra.mxu0 0.0
      %2716 = vmatprep.subr.mxu0 0.0
      %2717 = vmatpush2.msra.mxu0 0.0
      %2718 = vmatprep.mubr.f32.mxu0 0.0
      %2719 = vmatmul.mubr.f32.gmra.mxu0 %v2649
      %v2720 = vpop.f32.mrf.mxu0
      %v2721 = vadd.f32 0.0, %v2720
      %v2722 = vpop.f32.mrf.mxu0
      %2723 = vdwg.mxu0
      %v2725 = vsel %vm250, %v2639, 0
      %2727 = vmatprep.subr.mxu0 0.0
      %2728 = vmatpush1.msra.mxu0 0.0
      %2729 = vmatprep.subr.mxu0 0.0
      %2730 = vmatpush1.msra.mxu0 0.0
      %2731 = vmatprep.subr.mxu0 0.0
      %2732 = vmatpush1.msra.mxu0 0.0
      %2733 = vmatprep.subr.mxu0 0.0
      %2734 = vmatpush1.msra.mxu0 0.0
      %2735 = vmatprep.subr.mxu0 0.0
      %2736 = vmatpush1.msra.mxu0 0.0
      %2737 = vmatprep.subr.mxu0 0.0
      %2738 = vmatpush1.msra.mxu0 0.0
      %2739 = vmatprep.subr.mxu0 0.0
      %2740 = vmatpush1.msra.mxu0 0.0
      %2741 = vmatprep.subr.mxu0 0.0
      %2742 = vmatpush1.msra.mxu0 0.0
      %2743 = vmatprep.subr.mxu0 0.0
      %2744 = vmatpush1.msra.mxu0 0.0
      %2745 = vmatprep.subr.mxu0 0.0
      %2746 = vmatpush1.msra.mxu0 0.0
      %2747 = vmatprep.subr.mxu0 0.0
      %2748 = vmatpush1.msra.mxu0 0.0
      %2749 = vmatprep.subr.mxu0 0.0
      %2750 = vmatpush1.msra.mxu0 0.0
      %2751 = vmatprep.subr.mxu0 0.0
      %2752 = vmatpush1.msra.mxu0 0.0
      %2753 = vmatprep.subr.mxu0 0.0
      %2754 = vmatpush1.msra.mxu0 0.0
      %2755 = vmatprep.subr.mxu0 0.0
      %2756 = vmatpush1.msra.mxu0 0.0
      %2757 = vmatprep.subr.mxu0 0.0
      %2758 = vmatpush1.msra.mxu0 %v2652
      %2759 = vmatprep.subr.mxu0 0.0
      %2760 = vmatpush2.msra.mxu0 0.0
      %2761 = vmatprep.subr.mxu0 0.0
      %2762 = vmatpush2.msra.mxu0 0.0
      %2763 = vmatprep.subr.mxu0 0.0
      %2764 = vmatpush2.msra.mxu0 0.0
      %2765 = vmatprep.subr.mxu0 0.0
      %2766 = vmatpush2.msra.mxu0 0.0
      %2767 = vmatprep.subr.mxu0 0.0
      %2768 = vmatpush2.msra.mxu0 0.0
      %2769 = vmatprep.subr.mxu0 0.0
      %2770 = vmatpush2.msra.mxu0 0.0
      %2771 = vmatprep.subr.mxu0 0.0
      %2772 = vmatpush2.msra.mxu0 0.0
      %2773 = vmatprep.subr.mxu0 0.0
      %2774 = vmatpush2.msra.mxu0 0.0
      %2775 = vmatprep.subr.mxu0 0.0
      %2776 = vmatpush2.msra.mxu0 0.0
      %2777 = vmatprep.subr.mxu0 0.0
      %2778 = vmatpush2.msra.mxu0 0.0
      %2779 = vmatprep.subr.mxu0 0.0
      %2780 = vmatpush2.msra.mxu0 0.0
      %2781 = vmatprep.subr.mxu0 0.0
      %2782 = vmatpush2.msra.mxu0 0.0
      %2783 = vmatprep.subr.mxu0 0.0
      %2784 = vmatpush2.msra.mxu0 0.0
      %2785 = vmatprep.subr.mxu0 0.0
      %2786 = vmatpush2.msra.mxu0 0.0
      %2787 = vmatprep.subr.mxu0 0.0
      %2788 = vmatpush2.msra.mxu0 0.0
      %2789 = vmatprep.subr.mxu0 0.0
      %2790 = vmatpush2.msra.mxu0 0.0
      %2791 = vmatprep.mubr.f32.mxu0 0.0
      %2792 = vmatmul.mubr.f32.gmra.mxu0 %v2725
      %v2793 = vpop.f32.mrf.mxu0
      %v2794 = vadd.f32 0.0, %v2793
      %v2795 = vpop.f32.mrf.mxu0
      %2796 = vdwg.mxu0
      %v2798 = vsel %vm250, %v2640, 0
      %2800 = vmatprep.subr.mxu0 0.0
      %2801 = vmatpush1.msra.mxu0 0.0
      %2802 = vmatprep.subr.mxu0 0.0
      %2803 = vmatpush1.msra.mxu0 0.0
      %2804 = vmatprep.subr.mxu0 0.0
      %2805 = vmatpush1.msra.mxu0 0.0
      %2806 = vmatprep.subr.mxu0 0.0
      %2807 = vmatpush1.msra.mxu0 0.0
      %2808 = vmatprep.subr.mxu0 0.0
      %2809 = vmatpush1.msra.mxu0 0.0
      %2810 = vmatprep.subr.mxu0 0.0
      %2811 = vmatpush1.msra.mxu0 0.0
      %2812 = vmatprep.subr.mxu0 0.0
      %2813 = vmatpush1.msra.mxu0 0.0
      %2814 = vmatprep.subr.mxu0 0.0
      %2815 = vmatpush1.msra.mxu0 0.0
      %2816 = vmatprep.subr.mxu0 0.0
      %2817 = vmatpush1.msra.mxu0 0.0
      %2818 = vmatprep.subr.mxu0 0.0
      %2819 = vmatpush1.msra.mxu0 0.0
      %2820 = vmatprep.subr.mxu0 0.0
      %2821 = vmatpush1.msra.mxu0 0.0
      %2822 = vmatprep.subr.mxu0 0.0
      %2823 = vmatpush1.msra.mxu0 0.0
      %2824 = vmatprep.subr.mxu0 0.0
      %2825 = vmatpush1.msra.mxu0 0.0
      %2826 = vmatprep.subr.mxu0 0.0
      %2827 = vmatpush1.msra.mxu0 0.0
      %2828 = vmatprep.subr.mxu0 0.0
      %2829 = vmatpush1.msra.mxu0 0.0
      %2830 = vmatprep.subr.mxu0 0.0
      %2831 = vmatpush1.msra.mxu0 %v2652
      %2832 = vmatprep.subr.mxu0 0.0
      %2833 = vmatpush2.msra.mxu0 0.0
      %2834 = vmatprep.subr.mxu0 0.0
      %2835 = vmatpush2.msra.mxu0 0.0
      %2836 = vmatprep.subr.mxu0 0.0
      %2837 = vmatpush2.msra.mxu0 0.0
      %2838 = vmatprep.subr.mxu0 0.0
      %2839 = vmatpush2.msra.mxu0 0.0
      %2840 = vmatprep.subr.mxu0 0.0
      %2841 = vmatpush2.msra.mxu0 0.0
      %2842 = vmatprep.subr.mxu0 0.0
      %2843 = vmatpush2.msra.mxu0 0.0
      %2844 = vmatprep.subr.mxu0 0.0
      %2845 = vmatpush2.msra.mxu0 0.0
      %2846 = vmatprep.subr.mxu0 0.0
      %2847 = vmatpush2.msra.mxu0 0.0
      %2848 = vmatprep.subr.mxu0 0.0
      %2849 = vmatpush2.msra.mxu0 0.0
      %2850 = vmatprep.subr.mxu0 0.0
      %2851 = vmatpush2.msra.mxu0 0.0
      %2852 = vmatprep.subr.mxu0 0.0
      %2853 = vmatpush2.msra.mxu0 0.0
      %2854 = vmatprep.subr.mxu0 0.0
      %2855 = vmatpush2.msra.mxu0 0.0
      %2856 = vmatprep.subr.mxu0 0.0
      %2857 = vmatpush2.msra.mxu0 0.0
      %2858 = vmatprep.subr.mxu0 0.0
      %2859 = vmatpush2.msra.mxu0 0.0
      %2860 = vmatprep.subr.mxu0 0.0
      %2861 = vmatpush2.msra.mxu0 0.0
      %2862 = vmatprep.subr.mxu0 0.0
      %2863 = vmatpush2.msra.mxu0 0.0
      %2864 = vmatprep.mubr.f32.mxu0 0.0
      %2865 = vmatmul.mubr.f32.gmra.mxu0 %v2798
      %v2866 = vpop.f32.mrf.mxu0
      %v2867 = vadd.f32 0.0, %v2866
      %v2868 = vpop.f32.mrf.mxu0
      %2869 = vdwg.mxu0
      %v2871 = vsel %vm250, %v2641, 0
      %2873 = vmatprep.subr.mxu0 0.0
      %2874 = vmatpush1.msra.mxu0 0.0
      %2875 = vmatprep.subr.mxu0 0.0
      %2876 = vmatpush1.msra.mxu0 0.0
      %2877 = vmatprep.subr.mxu0 0.0
      %2878 = vmatpush1.msra.mxu0 0.0
      %2879 = vmatprep.subr.mxu0 0.0
      %2880 = vmatpush1.msra.mxu0 0.0
      %2881 = vmatprep.subr.mxu0 0.0
      %2882 = vmatpush1.msra.mxu0 0.0
      %2883 = vmatprep.subr.mxu0 0.0
      %2884 = vmatpush1.msra.mxu0 0.0
      %2885 = vmatprep.subr.mxu0 0.0
      %2886 = vmatpush1.msra.mxu0 0.0
      %2887 = vmatprep.subr.mxu0 0.0
      %2888 = vmatpush1.msra.mxu0 0.0
      %2889 = vmatprep.subr.mxu0 0.0
      %2890 = vmatpush1.msra.mxu0 0.0
      %2891 = vmatprep.subr.mxu0 0.0
      %2892 = vmatpush1.msra.mxu0 0.0
      %2893 = vmatprep.subr.mxu0 0.0
      %2894 = vmatpush1.msra.mxu0 0.0
      %2895 = vmatprep.subr.mxu0 0.0
      %2896 = vmatpush1.msra.mxu0 0.0
      %2897 = vmatprep.subr.mxu0 0.0
      %2898 = vmatpush1.msra.mxu0 0.0
      %2899 = vmatprep.subr.mxu0 0.0
      %2900 = vmatpush1.msra.mxu0 0.0
      %2901 = vmatprep.subr.mxu0 0.0
      %2902 = vmatpush1.msra.mxu0 0.0
      %2903 = vmatprep.subr.mxu0 0.0
      %2904 = vmatpush1.msra.mxu0 %v2652
      %2905 = vmatprep.subr.mxu0 0.0
      %2906 = vmatpush2.msra.mxu0 0.0
      %2907 = vmatprep.subr.mxu0 0.0
      %2908 = vmatpush2.msra.mxu0 0.0
      %2909 = vmatprep.subr.mxu0 0.0
      %2910 = vmatpush2.msra.mxu0 0.0
      %2911 = vmatprep.subr.mxu0 0.0
      %2912 = vmatpush2.msra.mxu0 0.0
      %2913 = vmatprep.subr.mxu0 0.0
      %2914 = vmatpush2.msra.mxu0 0.0
      %2915 = vmatprep.subr.mxu0 0.0
      %2916 = vmatpush2.msra.mxu0 0.0
      %2917 = vmatprep.subr.mxu0 0.0
      %2918 = vmatpush2.msra.mxu0 0.0
      %2919 = vmatprep.subr.mxu0 0.0
      %2920 = vmatpush2.msra.mxu0 0.0
      %2921 = vmatprep.subr.mxu0 0.0
      %2922 = vmatpush2.msra.mxu0 0.0
      %2923 = vmatprep.subr.mxu0 0.0
      %2924 = vmatpush2.msra.mxu0 0.0
      %2925 = vmatprep.subr.mxu0 0.0
      %2926 = vmatpush2.msra.mxu0 0.0
      %2927 = vmatprep.subr.mxu0 0.0
      %2928 = vmatpush2.msra.mxu0 0.0
      %2929 = vmatprep.subr.mxu0 0.0
      %2930 = vmatpush2.msra.mxu0 0.0
      %2931 = vmatprep.subr.mxu0 0.0
      %2932 = vmatpush2.msra.mxu0 0.0
      %2933 = vmatprep.subr.mxu0 0.0
      %2934 = vmatpush2.msra.mxu0 0.0
      %2935 = vmatprep.subr.mxu0 0.0
      %2936 = vmatpush2.msra.mxu0 0.0
      %2937 = vmatprep.mubr.f32.mxu0 0.0
      %2938 = vmatmul.mubr.f32.gmra.mxu0 %v2871
      %v2939 = vpop.f32.mrf.mxu0
      %v2940 = vadd.f32 0.0, %v2939
      %v2941 = vpop.f32.mrf.mxu0
      %2942 = vdwg.mxu0
      %v2944 = vsel %vm250, %v2642, 0
      %2946 = vmatprep.subr.mxu0 0.0
      %2947 = vmatpush1.msra.mxu0 0.0
      %2948 = vmatprep.subr.mxu0 0.0
      %2949 = vmatpush1.msra.mxu0 0.0
      %2950 = vmatprep.subr.mxu0 0.0
      %2951 = vmatpush1.msra.mxu0 0.0
      %2952 = vmatprep.subr.mxu0 0.0
      %2953 = vmatpush1.msra.mxu0 0.0
      %2954 = vmatprep.subr.mxu0 0.0
      %2955 = vmatpush1.msra.mxu0 0.0
      %2956 = vmatprep.subr.mxu0 0.0
      %2957 = vmatpush1.msra.mxu0 0.0
      %2958 = vmatprep.subr.mxu0 0.0
      %2959 = vmatpush1.msra.mxu0 0.0
      %2960 = vmatprep.subr.mxu0 0.0
      %2961 = vmatpush1.msra.mxu0 0.0
      %2962 = vmatprep.subr.mxu0 0.0
      %2963 = vmatpush1.msra.mxu0 0.0
      %2964 = vmatprep.subr.mxu0 0.0
      %2965 = vmatpush1.msra.mxu0 0.0
      %2966 = vmatprep.subr.mxu0 0.0
      %2967 = vmatpush1.msra.mxu0 0.0
      %2968 = vmatprep.subr.mxu0 0.0
      %2969 = vmatpush1.msra.mxu0 0.0
      %2970 = vmatprep.subr.mxu0 0.0
      %2971 = vmatpush1.msra.mxu0 0.0
      %2972 = vmatprep.subr.mxu0 0.0
      %2973 = vmatpush1.msra.mxu0 0.0
      %2974 = vmatprep.subr.mxu0 0.0
      %2975 = vmatpush1.msra.mxu0 0.0
      %2976 = vmatprep.subr.mxu0 0.0
      %2977 = vmatpush1.msra.mxu0 %v2652
      %2978 = vmatprep.subr.mxu0 0.0
      %2979 = vmatpush2.msra.mxu0 0.0
      %2980 = vmatprep.subr.mxu0 0.0
      %2981 = vmatpush2.msra.mxu0 0.0
      %2982 = vmatprep.subr.mxu0 0.0
      %2983 = vmatpush2.msra.mxu0 0.0
      %2984 = vmatprep.subr.mxu0 0.0
      %2985 = vmatpush2.msra.mxu0 0.0
      %2986 = vmatprep.subr.mxu0 0.0
      %2987 = vmatpush2.msra.mxu0 0.0
      %2988 = vmatprep.subr.mxu0 0.0
      %2989 = vmatpush2.msra.mxu0 0.0
      %2990 = vmatprep.subr.mxu0 0.0
      %2991 = vmatpush2.msra.mxu0 0.0
      %2992 = vmatprep.subr.mxu0 0.0
      %2993 = vmatpush2.msra.mxu0 0.0
      %2994 = vmatprep.subr.mxu0 0.0
      %2995 = vmatpush2.msra.mxu0 0.0
      %2996 = vmatprep.subr.mxu0 0.0
      %2997 = vmatpush2.msra.mxu0 0.0
      %2998 = vmatprep.subr.mxu0 0.0
      %2999 = vmatpush2.msra.mxu0 0.0
      %3000 = vmatprep.subr.mxu0 0.0
      %3001 = vmatpush2.msra.mxu0 0.0
      %3002 = vmatprep.subr.mxu0 0.0
      %3003 = vmatpush2.msra.mxu0 0.0
      %3004 = vmatprep.subr.mxu0 0.0
      %3005 = vmatpush2.msra.mxu0 0.0
      %3006 = vmatprep.subr.mxu0 0.0
      %3007 = vmatpush2.msra.mxu0 0.0
      %3008 = vmatprep.subr.mxu0 0.0
      %3009 = vmatpush2.msra.mxu0 0.0
      %3010 = vmatprep.mubr.f32.mxu0 0.0
      %3011 = vmatmul.mubr.f32.gmra.mxu0 %v2944
      %v3012 = vpop.f32.mrf.mxu0
      %v3013 = vadd.f32 0.0, %v3012
      %v3014 = vpop.f32.mrf.mxu0
      %3015 = vdwg.mxu0
      %v3017 = vsel %vm250, %v2643, 0
      %3019 = vmatprep.subr.mxu0 0.0
      %3020 = vmatpush1.msra.mxu0 0.0
      %3021 = vmatprep.subr.mxu0 0.0
      %3022 = vmatpush1.msra.mxu0 0.0
      %3023 = vmatprep.subr.mxu0 0.0
      %3024 = vmatpush1.msra.mxu0 0.0
      %3025 = vmatprep.subr.mxu0 0.0
      %3026 = vmatpush1.msra.mxu0 0.0
      %3027 = vmatprep.subr.mxu0 0.0
      %3028 = vmatpush1.msra.mxu0 0.0
      %3029 = vmatprep.subr.mxu0 0.0
      %3030 = vmatpush1.msra.mxu0 0.0
      %3031 = vmatprep.subr.mxu0 0.0
      %3032 = vmatpush1.msra.mxu0 0.0
      %3033 = vmatprep.subr.mxu0 0.0
      %3034 = vmatpush1.msra.mxu0 0.0
      %3035 = vmatprep.subr.mxu0 0.0
      %3036 = vmatpush1.msra.mxu0 0.0
      %3037 = vmatprep.subr.mxu0 0.0
      %3038 = vmatpush1.msra.mxu0 0.0
      %3039 = vmatprep.subr.mxu0 0.0
      %3040 = vmatpush1.msra.mxu0 0.0
      %3041 = vmatprep.subr.mxu0 0.0
      %3042 = vmatpush1.msra.mxu0 0.0
      %3043 = vmatprep.subr.mxu0 0.0
      %3044 = vmatpush1.msra.mxu0 0.0
      %3045 = vmatprep.subr.mxu0 0.0
      %3046 = vmatpush1.msra.mxu0 0.0
      %3047 = vmatprep.subr.mxu0 0.0
      %3048 = vmatpush1.msra.mxu0 0.0
      %3049 = vmatprep.subr.mxu0 0.0
      %3050 = vmatpush1.msra.mxu0 %v2652
      %3051 = vmatprep.subr.mxu0 0.0
      %3052 = vmatpush2.msra.mxu0 0.0
      %3053 = vmatprep.subr.mxu0 0.0
      %3054 = vmatpush2.msra.mxu0 0.0
      %3055 = vmatprep.subr.mxu0 0.0
      %3056 = vmatpush2.msra.mxu0 0.0
      %3057 = vmatprep.subr.mxu0 0.0
      %3058 = vmatpush2.msra.mxu0 0.0
      %3059 = vmatprep.subr.mxu0 0.0
      %3060 = vmatpush2.msra.mxu0 0.0
      %3061 = vmatprep.subr.mxu0 0.0
      %3062 = vmatpush2.msra.mxu0 0.0
      %3063 = vmatprep.subr.mxu0 0.0
      %3064 = vmatpush2.msra.mxu0 0.0
      %3065 = vmatprep.subr.mxu0 0.0
      %3066 = vmatpush2.msra.mxu0 0.0
      %3067 = vmatprep.subr.mxu0 0.0
      %3068 = vmatpush2.msra.mxu0 0.0
      %3069 = vmatprep.subr.mxu0 0.0
      %3070 = vmatpush2.msra.mxu0 0.0
      %3071 = vmatprep.subr.mxu0 0.0
      %3072 = vmatpush2.msra.mxu0 0.0
      %3073 = vmatprep.subr.mxu0 0.0
      %3074 = vmatpush2.msra.mxu0 0.0
      %3075 = vmatprep.subr.mxu0 0.0
      %3076 = vmatpush2.msra.mxu0 0.0
      %3077 = vmatprep.subr.mxu0 0.0
      %3078 = vmatpush2.msra.mxu0 0.0
      %3079 = vmatprep.subr.mxu0 0.0
      %3080 = vmatpush2.msra.mxu0 0.0
      %3081 = vmatprep.subr.mxu0 0.0
      %3082 = vmatpush2.msra.mxu0 0.0
      %3083 = vmatprep.mubr.f32.mxu0 0.0
      %3084 = vmatmul.mubr.f32.gmra.mxu0 %v3017
      %v3085 = vpop.f32.mrf.mxu0
      %v3086 = vadd.f32 0.0, %v3085
      %v3087 = vpop.f32.mrf.mxu0
      %3088 = vdwg.mxu0
      %v3090 = vsel %vm250, %v2644, 0
      %3092 = vmatprep.subr.mxu0 0.0
      %3093 = vmatpush1.msra.mxu0 0.0
      %3094 = vmatprep.subr.mxu0 0.0
      %3095 = vmatpush1.msra.mxu0 0.0
      %3096 = vmatprep.subr.mxu0 0.0
      %3097 = vmatpush1.msra.mxu0 0.0
      %3098 = vmatprep.subr.mxu0 0.0
      %3099 = vmatpush1.msra.mxu0 0.0
      %3100 = vmatprep.subr.mxu0 0.0
      %3101 = vmatpush1.msra.mxu0 0.0
      %3102 = vmatprep.subr.mxu0 0.0
      %3103 = vmatpush1.msra.mxu0 0.0
      %3104 = vmatprep.subr.mxu0 0.0
      %3105 = vmatpush1.msra.mxu0 0.0
      %3106 = vmatprep.subr.mxu0 0.0
      %3107 = vmatpush1.msra.mxu0 0.0
      %3108 = vmatprep.subr.mxu0 0.0
      %3109 = vmatpush1.msra.mxu0 0.0
      %3110 = vmatprep.subr.mxu0 0.0
      %3111 = vmatpush1.msra.mxu0 0.0
      %3112 = vmatprep.subr.mxu0 0.0
      %3113 = vmatpush1.msra.mxu0 0.0
      %3114 = vmatprep.subr.mxu0 0.0
      %3115 = vmatpush1.msra.mxu0 0.0
      %3116 = vmatprep.subr.mxu0 0.0
      %3117 = vmatpush1.msra.mxu0 0.0
      %3118 = vmatprep.subr.mxu0 0.0
      %3119 = vmatpush1.msra.mxu0 0.0
      %3120 = vmatprep.subr.mxu0 0.0
      %3121 = vmatpush1.msra.mxu0 0.0
      %3122 = vmatprep.subr.mxu0 0.0
      %3123 = vmatpush1.msra.mxu0 %v2652
      %3124 = vmatprep.subr.mxu0 0.0
      %3125 = vmatpush2.msra.mxu0 0.0
      %3126 = vmatprep.subr.mxu0 0.0
      %3127 = vmatpush2.msra.mxu0 0.0
      %3128 = vmatprep.subr.mxu0 0.0
      %3129 = vmatpush2.msra.mxu0 0.0
      %3130 = vmatprep.subr.mxu0 0.0
      %3131 = vmatpush2.msra.mxu0 0.0
      %3132 = vmatprep.subr.mxu0 0.0
      %3133 = vmatpush2.msra.mxu0 0.0
      %3134 = vmatprep.subr.mxu0 0.0
      %3135 = vmatpush2.msra.mxu0 0.0
      %3136 = vmatprep.subr.mxu0 0.0
      %3137 = vmatpush2.msra.mxu0 0.0
      %3138 = vmatprep.subr.mxu0 0.0
      %3139 = vmatpush2.msra.mxu0 0.0
      %3140 = vmatprep.subr.mxu0 0.0
      %3141 = vmatpush2.msra.mxu0 0.0
      %3142 = vmatprep.subr.mxu0 0.0
      %3143 = vmatpush2.msra.mxu0 0.0
      %3144 = vmatprep.subr.mxu0 0.0
      %3145 = vmatpush2.msra.mxu0 0.0
      %3146 = vmatprep.subr.mxu0 0.0
      %3147 = vmatpush2.msra.mxu0 0.0
      %3148 = vmatprep.subr.mxu0 0.0
      %3149 = vmatpush2.msra.mxu0 0.0
      %3150 = vmatprep.subr.mxu0 0.0
      %3151 = vmatpush2.msra.mxu0 0.0
      %3152 = vmatprep.subr.mxu0 0.0
      %3153 = vmatpush2.msra.mxu0 0.0
      %3154 = vmatprep.subr.mxu0 0.0
      %3155 = vmatpush2.msra.mxu0 0.0
      %3156 = vmatprep.mubr.f32.mxu0 0.0
      %3157 = vmatmul.mubr.f32.gmra.mxu0 %v3090
      %v3158 = vpop.f32.mrf.mxu0
      %v3159 = vadd.f32 0.0, %v3158
      %v3160 = vpop.f32.mrf.mxu0
      %3161 = vdwg.mxu0
      %v3163 = vsel %vm250, %v2645, 0
      %3165 = vmatprep.subr.mxu0 0.0
      %3166 = vmatpush1.msra.mxu0 0.0
      %3167 = vmatprep.subr.mxu0 0.0
      %3168 = vmatpush1.msra.mxu0 0.0
      %3169 = vmatprep.subr.mxu0 0.0
      %3170 = vmatpush1.msra.mxu0 0.0
      %3171 = vmatprep.subr.mxu0 0.0
      %3172 = vmatpush1.msra.mxu0 0.0
      %3173 = vmatprep.subr.mxu0 0.0
      %3174 = vmatpush1.msra.mxu0 0.0
      %3175 = vmatprep.subr.mxu0 0.0
      %3176 = vmatpush1.msra.mxu0 0.0
      %3177 = vmatprep.subr.mxu0 0.0
      %3178 = vmatpush1.msra.mxu0 0.0
      %3179 = vmatprep.subr.mxu0 0.0
      %3180 = vmatpush1.msra.mxu0 0.0
      %3181 = vmatprep.subr.mxu0 0.0
      %3182 = vmatpush1.msra.mxu0 0.0
      %3183 = vmatprep.subr.mxu0 0.0
      %3184 = vmatpush1.msra.mxu0 0.0
      %3185 = vmatprep.subr.mxu0 0.0
      %3186 = vmatpush1.msra.mxu0 0.0
      %3187 = vmatprep.subr.mxu0 0.0
      %3188 = vmatpush1.msra.mxu0 0.0
      %3189 = vmatprep.subr.mxu0 0.0
      %3190 = vmatpush1.msra.mxu0 0.0
      %3191 = vmatprep.subr.mxu0 0.0
      %3192 = vmatpush1.msra.mxu0 0.0
      %3193 = vmatprep.subr.mxu0 0.0
      %3194 = vmatpush1.msra.mxu0 0.0
      %3195 = vmatprep.subr.mxu0 0.0
      %3196 = vmatpush1.msra.mxu0 %v2652
      %3197 = vmatprep.subr.mxu0 0.0
      %3198 = vmatpush2.msra.mxu0 0.0
      %3199 = vmatprep.subr.mxu0 0.0
      %3200 = vmatpush2.msra.mxu0 0.0
      %3201 = vmatprep.subr.mxu0 0.0
      %3202 = vmatpush2.msra.mxu0 0.0
      %3203 = vmatprep.subr.mxu0 0.0
      %3204 = vmatpush2.msra.mxu0 0.0
      %3205 = vmatprep.subr.mxu0 0.0
      %3206 = vmatpush2.msra.mxu0 0.0
      %3207 = vmatprep.subr.mxu0 0.0
      %3208 = vmatpush2.msra.mxu0 0.0
      %3209 = vmatprep.subr.mxu0 0.0
      %3210 = vmatpush2.msra.mxu0 0.0
      %3211 = vmatprep.subr.mxu0 0.0
      %3212 = vmatpush2.msra.mxu0 0.0
      %3213 = vmatprep.subr.mxu0 0.0
      %3214 = vmatpush2.msra.mxu0 0.0
      %3215 = vmatprep.subr.mxu0 0.0
      %3216 = vmatpush2.msra.mxu0 0.0
      %3217 = vmatprep.subr.mxu0 0.0
      %3218 = vmatpush2.msra.mxu0 0.0
      %3219 = vmatprep.subr.mxu0 0.0
      %3220 = vmatpush2.msra.mxu0 0.0
      %3221 = vmatprep.subr.mxu0 0.0
      %3222 = vmatpush2.msra.mxu0 0.0
      %3223 = vmatprep.subr.mxu0 0.0
      %3224 = vmatpush2.msra.mxu0 0.0
      %3225 = vmatprep.subr.mxu0 0.0
      %3226 = vmatpush2.msra.mxu0 0.0
      %3227 = vmatprep.subr.mxu0 0.0
      %3228 = vmatpush2.msra.mxu0 0.0
      %3229 = vmatprep.mubr.f32.mxu0 0.0
      %3230 = vmatmul.mubr.f32.gmra.mxu0 %v3163
      %v3231 = vpop.f32.mrf.mxu0
      %v3232 = vadd.f32 0.0, %v3231
      %v3233 = vpop.f32.mrf.mxu0
      %3234 = vdwg.mxu0
      %v3235 = vadd.f32 %v2629, %v2721
      %v3236 = vadd.f32 %v2630, %v2794
      %v3237 = vadd.f32 %v2631, %v2867
      %v3238 = vadd.f32 %v2632, %v2940
      %v3239 = vadd.f32 %v2633, %v3013
      %v3240 = vadd.f32 %v2634, %v3086
      %v3241 = vadd.f32 %v2635, %v3159
      %v3242 = vadd.f32 %v2636, %v3232
      %v3243 = vld [vmem:[%s2031 + $0x1] sm:$0xff]
      %v3244 = vld [vmem:[%s2031 + $0x11] sm:$0xff]
      %v3245 = vld [vmem:[%s2031 + $0x21] sm:$0xff]
      %v3246 = vld [vmem:[%s2031 + $0x31] sm:$0xff]
      %v3247 = vld [vmem:[%s2031 + $0x41] sm:$0xff]
      %v3248 = vld [vmem:[%s2031 + $0x51] sm:$0xff]
      %v3249 = vld [vmem:[%s2031 + $0x61] sm:$0xff]
      %v3250 = vld [vmem:[%s2031 + $0x71] sm:$0xff]
      %s3251 = scalar_lea.vmem %s1, 20
      %v3252 = vld [vmem:[%s3251] sm:$0xf]
      %v3254 = vsel %vm250, %v3243, 0
      %v3257 = vsel %vm254, %v3252, 0
      %3259 = vmatprep.subr.mxu0 0.0
      %3260 = vmatpush1.msra.mxu0 0.0
      %3261 = vmatprep.subr.mxu0 0.0
      %3262 = vmatpush1.msra.mxu0 0.0
      %3263 = vmatprep.subr.mxu0 0.0
      %3264 = vmatpush1.msra.mxu0 0.0
      %3265 = vmatprep.subr.mxu0 0.0
      %3266 = vmatpush1.msra.mxu0 0.0
      %3267 = vmatprep.subr.mxu0 0.0
      %3268 = vmatpush1.msra.mxu0 0.0
      %3269 = vmatprep.subr.mxu0 0.0
      %3270 = vmatpush1.msra.mxu0 0.0
      %3271 = vmatprep.subr.mxu0 0.0
      %3272 = vmatpush1.msra.mxu0 0.0
      %3273 = vmatprep.subr.mxu0 0.0
      %3274 = vmatpush1.msra.mxu0 0.0
      %3275 = vmatprep.subr.mxu0 0.0
      %3276 = vmatpush1.msra.mxu0 0.0
      %3277 = vmatprep.subr.mxu0 0.0
      %3278 = vmatpush1.msra.mxu0 0.0
      %3279 = vmatprep.subr.mxu0 0.0
      %3280 = vmatpush1.msra.mxu0 0.0
      %3281 = vmatprep.subr.mxu0 0.0
      %3282 = vmatpush1.msra.mxu0 0.0
      %3283 = vmatprep.subr.mxu0 0.0
      %3284 = vmatpush1.msra.mxu0 0.0
      %3285 = vmatprep.subr.mxu0 0.0
      %3286 = vmatpush1.msra.mxu0 0.0
      %3287 = vmatprep.subr.mxu0 0.0
      %3288 = vmatpush1.msra.mxu0 0.0
      %3289 = vmatprep.subr.mxu0 0.0
      %3290 = vmatpush1.msra.mxu0 %v3257
      %3291 = vmatprep.subr.mxu0 0.0
      %3292 = vmatpush2.msra.mxu0 0.0
      %3293 = vmatprep.subr.mxu0 0.0
      %3294 = vmatpush2.msra.mxu0 0.0
      %3295 = vmatprep.subr.mxu0 0.0
      %3296 = vmatpush2.msra.mxu0 0.0
      %3297 = vmatprep.subr.mxu0 0.0
      %3298 = vmatpush2.msra.mxu0 0.0
      %3299 = vmatprep.subr.mxu0 0.0
      %3300 = vmatpush2.msra.mxu0 0.0
      %3301 = vmatprep.subr.mxu0 0.0
      %3302 = vmatpush2.msra.mxu0 0.0
      %3303 = vmatprep.subr.mxu0 0.0
      %3304 = vmatpush2.msra.mxu0 0.0
      %3305 = vmatprep.subr.mxu0 0.0
      %3306 = vmatpush2.msra.mxu0 0.0
      %3307 = vmatprep.subr.mxu0 0.0
      %3308 = vmatpush2.msra.mxu0 0.0
      %3309 = vmatprep.subr.mxu0 0.0
      %3310 = vmatpush2.msra.mxu0 0.0
      %3311 = vmatprep.subr.mxu0 0.0
      %3312 = vmatpush2.msra.mxu0 0.0
      %3313 = vmatprep.subr.mxu0 0.0
      %3314 = vmatpush2.msra.mxu0 0.0
      %3315 = vmatprep.subr.mxu0 0.0
      %3316 = vmatpush2.msra.mxu0 0.0
      %3317 = vmatprep.subr.mxu0 0.0
      %3318 = vmatpush2.msra.mxu0 0.0
      %3319 = vmatprep.subr.mxu0 0.0
      %3320 = vmatpush2.msra.mxu0 0.0
      %3321 = vmatprep.subr.mxu0 0.0
      %3322 = vmatpush2.msra.mxu0 0.0
      %3323 = vmatprep.mubr.f32.mxu0 0.0
      %3324 = vmatmul.mubr.f32.gmra.mxu0 %v3254
      %v3325 = vpop.f32.mrf.mxu0
      %v3326 = vadd.f32 0.0, %v3325
      %v3327 = vpop.f32.mrf.mxu0
      %3328 = vdwg.mxu0
      %v3330 = vsel %vm250, %v3244, 0
      %3332 = vmatprep.subr.mxu0 0.0
      %3333 = vmatpush1.msra.mxu0 0.0
      %3334 = vmatprep.subr.mxu0 0.0
      %3335 = vmatpush1.msra.mxu0 0.0
      %3336 = vmatprep.subr.mxu0 0.0
      %3337 = vmatpush1.msra.mxu0 0.0
      %3338 = vmatprep.subr.mxu0 0.0
      %3339 = vmatpush1.msra.mxu0 0.0
      %3340 = vmatprep.subr.mxu0 0.0
      %3341 = vmatpush1.msra.mxu0 0.0
      %3342 = vmatprep.subr.mxu0 0.0
      %3343 = vmatpush1.msra.mxu0 0.0
      %3344 = vmatprep.subr.mxu0 0.0
      %3345 = vmatpush1.msra.mxu0 0.0
      %3346 = vmatprep.subr.mxu0 0.0
      %3347 = vmatpush1.msra.mxu0 0.0
      %3348 = vmatprep.subr.mxu0 0.0
      %3349 = vmatpush1.msra.mxu0 0.0
      %3350 = vmatprep.subr.mxu0 0.0
      %3351 = vmatpush1.msra.mxu0 0.0
      %3352 = vmatprep.subr.mxu0 0.0
      %3353 = vmatpush1.msra.mxu0 0.0
      %3354 = vmatprep.subr.mxu0 0.0
      %3355 = vmatpush1.msra.mxu0 0.0
      %3356 = vmatprep.subr.mxu0 0.0
      %3357 = vmatpush1.msra.mxu0 0.0
      %3358 = vmatprep.subr.mxu0 0.0
      %3359 = vmatpush1.msra.mxu0 0.0
      %3360 = vmatprep.subr.mxu0 0.0
      %3361 = vmatpush1.msra.mxu0 0.0
      %3362 = vmatprep.subr.mxu0 0.0
      %3363 = vmatpush1.msra.mxu0 %v3257
      %3364 = vmatprep.subr.mxu0 0.0
      %3365 = vmatpush2.msra.mxu0 0.0
      %3366 = vmatprep.subr.mxu0 0.0
      %3367 = vmatpush2.msra.mxu0 0.0
      %3368 = vmatprep.subr.mxu0 0.0
      %3369 = vmatpush2.msra.mxu0 0.0
      %3370 = vmatprep.subr.mxu0 0.0
      %3371 = vmatpush2.msra.mxu0 0.0
      %3372 = vmatprep.subr.mxu0 0.0
      %3373 = vmatpush2.msra.mxu0 0.0
      %3374 = vmatprep.subr.mxu0 0.0
      %3375 = vmatpush2.msra.mxu0 0.0
      %3376 = vmatprep.subr.mxu0 0.0
      %3377 = vmatpush2.msra.mxu0 0.0
      %3378 = vmatprep.subr.mxu0 0.0
      %3379 = vmatpush2.msra.mxu0 0.0
      %3380 = vmatprep.subr.mxu0 0.0
      %3381 = vmatpush2.msra.mxu0 0.0
      %3382 = vmatprep.subr.mxu0 0.0
      %3383 = vmatpush2.msra.mxu0 0.0
      %3384 = vmatprep.subr.mxu0 0.0
      %3385 = vmatpush2.msra.mxu0 0.0
      %3386 = vmatprep.subr.mxu0 0.0
      %3387 = vmatpush2.msra.mxu0 0.0
      %3388 = vmatprep.subr.mxu0 0.0
      %3389 = vmatpush2.msra.mxu0 0.0
      %3390 = vmatprep.subr.mxu0 0.0
      %3391 = vmatpush2.msra.mxu0 0.0
      %3392 = vmatprep.subr.mxu0 0.0
      %3393 = vmatpush2.msra.mxu0 0.0
      %3394 = vmatprep.subr.mxu0 0.0
      %3395 = vmatpush2.msra.mxu0 0.0
      %3396 = vmatprep.mubr.f32.mxu0 0.0
      %3397 = vmatmul.mubr.f32.gmra.mxu0 %v3330
      %v3398 = vpop.f32.mrf.mxu0
      %v3399 = vadd.f32 0.0, %v3398
      %v3400 = vpop.f32.mrf.mxu0
      %3401 = vdwg.mxu0
      %v3403 = vsel %vm250, %v3245, 0
      %3405 = vmatprep.subr.mxu0 0.0
      %3406 = vmatpush1.msra.mxu0 0.0
      %3407 = vmatprep.subr.mxu0 0.0
      %3408 = vmatpush1.msra.mxu0 0.0
      %3409 = vmatprep.subr.mxu0 0.0
      %3410 = vmatpush1.msra.mxu0 0.0
      %3411 = vmatprep.subr.mxu0 0.0
      %3412 = vmatpush1.msra.mxu0 0.0
      %3413 = vmatprep.subr.mxu0 0.0
      %3414 = vmatpush1.msra.mxu0 0.0
      %3415 = vmatprep.subr.mxu0 0.0
      %3416 = vmatpush1.msra.mxu0 0.0
      %3417 = vmatprep.subr.mxu0 0.0
      %3418 = vmatpush1.msra.mxu0 0.0
      %3419 = vmatprep.subr.mxu0 0.0
      %3420 = vmatpush1.msra.mxu0 0.0
      %3421 = vmatprep.subr.mxu0 0.0
      %3422 = vmatpush1.msra.mxu0 0.0
      %3423 = vmatprep.subr.mxu0 0.0
      %3424 = vmatpush1.msra.mxu0 0.0
      %3425 = vmatprep.subr.mxu0 0.0
      %3426 = vmatpush1.msra.mxu0 0.0
      %3427 = vmatprep.subr.mxu0 0.0
      %3428 = vmatpush1.msra.mxu0 0.0
      %3429 = vmatprep.subr.mxu0 0.0
      %3430 = vmatpush1.msra.mxu0 0.0
      %3431 = vmatprep.subr.mxu0 0.0
      %3432 = vmatpush1.msra.mxu0 0.0
      %3433 = vmatprep.subr.mxu0 0.0
      %3434 = vmatpush1.msra.mxu0 0.0
      %3435 = vmatprep.subr.mxu0 0.0
      %3436 = vmatpush1.msra.mxu0 %v3257
      %3437 = vmatprep.subr.mxu0 0.0
      %3438 = vmatpush2.msra.mxu0 0.0
      %3439 = vmatprep.subr.mxu0 0.0
      %3440 = vmatpush2.msra.mxu0 0.0
      %3441 = vmatprep.subr.mxu0 0.0
      %3442 = vmatpush2.msra.mxu0 0.0
      %3443 = vmatprep.subr.mxu0 0.0
      %3444 = vmatpush2.msra.mxu0 0.0
      %3445 = vmatprep.subr.mxu0 0.0
      %3446 = vmatpush2.msra.mxu0 0.0
      %3447 = vmatprep.subr.mxu0 0.0
      %3448 = vmatpush2.msra.mxu0 0.0
      %3449 = vmatprep.subr.mxu0 0.0
      %3450 = vmatpush2.msra.mxu0 0.0
      %3451 = vmatprep.subr.mxu0 0.0
      %3452 = vmatpush2.msra.mxu0 0.0
      %3453 = vmatprep.subr.mxu0 0.0
      %3454 = vmatpush2.msra.mxu0 0.0
      %3455 = vmatprep.subr.mxu0 0.0
      %3456 = vmatpush2.msra.mxu0 0.0
      %3457 = vmatprep.subr.mxu0 0.0
      %3458 = vmatpush2.msra.mxu0 0.0
      %3459 = vmatprep.subr.mxu0 0.0
      %3460 = vmatpush2.msra.mxu0 0.0
      %3461 = vmatprep.subr.mxu0 0.0
      %3462 = vmatpush2.msra.mxu0 0.0
      %3463 = vmatprep.subr.mxu0 0.0
      %3464 = vmatpush2.msra.mxu0 0.0
      %3465 = vmatprep.subr.mxu0 0.0
      %3466 = vmatpush2.msra.mxu0 0.0
      %3467 = vmatprep.subr.mxu0 0.0
      %3468 = vmatpush2.msra.mxu0 0.0
      %3469 = vmatprep.mubr.f32.mxu0 0.0
      %3470 = vmatmul.mubr.f32.gmra.mxu0 %v3403
      %v3471 = vpop.f32.mrf.mxu0
      %v3472 = vadd.f32 0.0, %v3471
      %v3473 = vpop.f32.mrf.mxu0
      %3474 = vdwg.mxu0
      %v3476 = vsel %vm250, %v3246, 0
      %3478 = vmatprep.subr.mxu0 0.0
      %3479 = vmatpush1.msra.mxu0 0.0
      %3480 = vmatprep.subr.mxu0 0.0
      %3481 = vmatpush1.msra.mxu0 0.0
      %3482 = vmatprep.subr.mxu0 0.0
      %3483 = vmatpush1.msra.mxu0 0.0
      %3484 = vmatprep.subr.mxu0 0.0
      %3485 = vmatpush1.msra.mxu0 0.0
      %3486 = vmatprep.subr.mxu0 0.0
      %3487 = vmatpush1.msra.mxu0 0.0
      %3488 = vmatprep.subr.mxu0 0.0
      %3489 = vmatpush1.msra.mxu0 0.0
      %3490 = vmatprep.subr.mxu0 0.0
      %3491 = vmatpush1.msra.mxu0 0.0
      %3492 = vmatprep.subr.mxu0 0.0
      %3493 = vmatpush1.msra.mxu0 0.0
      %3494 = vmatprep.subr.mxu0 0.0
      %3495 = vmatpush1.msra.mxu0 0.0
      %3496 = vmatprep.subr.mxu0 0.0
      %3497 = vmatpush1.msra.mxu0 0.0
      %3498 = vmatprep.subr.mxu0 0.0
      %3499 = vmatpush1.msra.mxu0 0.0
      %3500 = vmatprep.subr.mxu0 0.0
      %3501 = vmatpush1.msra.mxu0 0.0
      %3502 = vmatprep.subr.mxu0 0.0
      %3503 = vmatpush1.msra.mxu0 0.0
      %3504 = vmatprep.subr.mxu0 0.0
      %3505 = vmatpush1.msra.mxu0 0.0
      %3506 = vmatprep.subr.mxu0 0.0
      %3507 = vmatpush1.msra.mxu0 0.0
      %3508 = vmatprep.subr.mxu0 0.0
      %3509 = vmatpush1.msra.mxu0 %v3257
      %3510 = vmatprep.subr.mxu0 0.0
      %3511 = vmatpush2.msra.mxu0 0.0
      %3512 = vmatprep.subr.mxu0 0.0
      %3513 = vmatpush2.msra.mxu0 0.0
      %3514 = vmatprep.subr.mxu0 0.0
      %3515 = vmatpush2.msra.mxu0 0.0
      %3516 = vmatprep.subr.mxu0 0.0
      %3517 = vmatpush2.msra.mxu0 0.0
      %3518 = vmatprep.subr.mxu0 0.0
      %3519 = vmatpush2.msra.mxu0 0.0
      %3520 = vmatprep.subr.mxu0 0.0
      %3521 = vmatpush2.msra.mxu0 0.0
      %3522 = vmatprep.subr.mxu0 0.0
      %3523 = vmatpush2.msra.mxu0 0.0
      %3524 = vmatprep.subr.mxu0 0.0
      %3525 = vmatpush2.msra.mxu0 0.0
      %3526 = vmatprep.subr.mxu0 0.0
      %3527 = vmatpush2.msra.mxu0 0.0
      %3528 = vmatprep.subr.mxu0 0.0
      %3529 = vmatpush2.msra.mxu0 0.0
      %3530 = vmatprep.subr.mxu0 0.0
      %3531 = vmatpush2.msra.mxu0 0.0
      %3532 = vmatprep.subr.mxu0 0.0
      %3533 = vmatpush2.msra.mxu0 0.0
      %3534 = vmatprep.subr.mxu0 0.0
      %3535 = vmatpush2.msra.mxu0 0.0
      %3536 = vmatprep.subr.mxu0 0.0
      %3537 = vmatpush2.msra.mxu0 0.0
      %3538 = vmatprep.subr.mxu0 0.0
      %3539 = vmatpush2.msra.mxu0 0.0
      %3540 = vmatprep.subr.mxu0 0.0
      %3541 = vmatpush2.msra.mxu0 0.0
      %3542 = vmatprep.mubr.f32.mxu0 0.0
      %3543 = vmatmul.mubr.f32.gmra.mxu0 %v3476
      %v3544 = vpop.f32.mrf.mxu0
      %v3545 = vadd.f32 0.0, %v3544
      %v3546 = vpop.f32.mrf.mxu0
      %3547 = vdwg.mxu0
      %v3549 = vsel %vm250, %v3247, 0
      %3551 = vmatprep.subr.mxu0 0.0
      %3552 = vmatpush1.msra.mxu0 0.0
      %3553 = vmatprep.subr.mxu0 0.0
      %3554 = vmatpush1.msra.mxu0 0.0
      %3555 = vmatprep.subr.mxu0 0.0
      %3556 = vmatpush1.msra.mxu0 0.0
      %3557 = vmatprep.subr.mxu0 0.0
      %3558 = vmatpush1.msra.mxu0 0.0
      %3559 = vmatprep.subr.mxu0 0.0
      %3560 = vmatpush1.msra.mxu0 0.0
      %3561 = vmatprep.subr.mxu0 0.0
      %3562 = vmatpush1.msra.mxu0 0.0
      %3563 = vmatprep.subr.mxu0 0.0
      %3564 = vmatpush1.msra.mxu0 0.0
      %3565 = vmatprep.subr.mxu0 0.0
      %3566 = vmatpush1.msra.mxu0 0.0
      %3567 = vmatprep.subr.mxu0 0.0
      %3568 = vmatpush1.msra.mxu0 0.0
      %3569 = vmatprep.subr.mxu0 0.0
      %3570 = vmatpush1.msra.mxu0 0.0
      %3571 = vmatprep.subr.mxu0 0.0
      %3572 = vmatpush1.msra.mxu0 0.0
      %3573 = vmatprep.subr.mxu0 0.0
      %3574 = vmatpush1.msra.mxu0 0.0
      %3575 = vmatprep.subr.mxu0 0.0
      %3576 = vmatpush1.msra.mxu0 0.0
      %3577 = vmatprep.subr.mxu0 0.0
      %3578 = vmatpush1.msra.mxu0 0.0
      %3579 = vmatprep.subr.mxu0 0.0
      %3580 = vmatpush1.msra.mxu0 0.0
      %3581 = vmatprep.subr.mxu0 0.0
      %3582 = vmatpush1.msra.mxu0 %v3257
      %3583 = vmatprep.subr.mxu0 0.0
      %3584 = vmatpush2.msra.mxu0 0.0
      %3585 = vmatprep.subr.mxu0 0.0
      %3586 = vmatpush2.msra.mxu0 0.0
      %3587 = vmatprep.subr.mxu0 0.0
      %3588 = vmatpush2.msra.mxu0 0.0
      %3589 = vmatprep.subr.mxu0 0.0
      %3590 = vmatpush2.msra.mxu0 0.0
      %3591 = vmatprep.subr.mxu0 0.0
      %3592 = vmatpush2.msra.mxu0 0.0
      %3593 = vmatprep.subr.mxu0 0.0
      %3594 = vmatpush2.msra.mxu0 0.0
      %3595 = vmatprep.subr.mxu0 0.0
      %3596 = vmatpush2.msra.mxu0 0.0
      %3597 = vmatprep.subr.mxu0 0.0
      %3598 = vmatpush2.msra.mxu0 0.0
      %3599 = vmatprep.subr.mxu0 0.0
      %3600 = vmatpush2.msra.mxu0 0.0
      %3601 = vmatprep.subr.mxu0 0.0
      %3602 = vmatpush2.msra.mxu0 0.0
      %3603 = vmatprep.subr.mxu0 0.0
      %3604 = vmatpush2.msra.mxu0 0.0
      %3605 = vmatprep.subr.mxu0 0.0
      %3606 = vmatpush2.msra.mxu0 0.0
      %3607 = vmatprep.subr.mxu0 0.0
      %3608 = vmatpush2.msra.mxu0 0.0
      %3609 = vmatprep.subr.mxu0 0.0
      %3610 = vmatpush2.msra.mxu0 0.0
      %3611 = vmatprep.subr.mxu0 0.0
      %3612 = vmatpush2.msra.mxu0 0.0
      %3613 = vmatprep.subr.mxu0 0.0
      %3614 = vmatpush2.msra.mxu0 0.0
      %3615 = vmatprep.mubr.f32.mxu0 0.0
      %3616 = vmatmul.mubr.f32.gmra.mxu0 %v3549
      %v3617 = vpop.f32.mrf.mxu0
      %v3618 = vadd.f32 0.0, %v3617
      %v3619 = vpop.f32.mrf.mxu0
      %3620 = vdwg.mxu0
      %v3622 = vsel %vm250, %v3248, 0
      %3624 = vmatprep.subr.mxu0 0.0
      %3625 = vmatpush1.msra.mxu0 0.0
      %3626 = vmatprep.subr.mxu0 0.0
      %3627 = vmatpush1.msra.mxu0 0.0
      %3628 = vmatprep.subr.mxu0 0.0
      %3629 = vmatpush1.msra.mxu0 0.0
      %3630 = vmatprep.subr.mxu0 0.0
      %3631 = vmatpush1.msra.mxu0 0.0
      %3632 = vmatprep.subr.mxu0 0.0
      %3633 = vmatpush1.msra.mxu0 0.0
      %3634 = vmatprep.subr.mxu0 0.0
      %3635 = vmatpush1.msra.mxu0 0.0
      %3636 = vmatprep.subr.mxu0 0.0
      %3637 = vmatpush1.msra.mxu0 0.0
      %3638 = vmatprep.subr.mxu0 0.0
      %3639 = vmatpush1.msra.mxu0 0.0
      %3640 = vmatprep.subr.mxu0 0.0
      %3641 = vmatpush1.msra.mxu0 0.0
      %3642 = vmatprep.subr.mxu0 0.0
      %3643 = vmatpush1.msra.mxu0 0.0
      %3644 = vmatprep.subr.mxu0 0.0
      %3645 = vmatpush1.msra.mxu0 0.0
      %3646 = vmatprep.subr.mxu0 0.0
      %3647 = vmatpush1.msra.mxu0 0.0
      %3648 = vmatprep.subr.mxu0 0.0
      %3649 = vmatpush1.msra.mxu0 0.0
      %3650 = vmatprep.subr.mxu0 0.0
      %3651 = vmatpush1.msra.mxu0 0.0
      %3652 = vmatprep.subr.mxu0 0.0
      %3653 = vmatpush1.msra.mxu0 0.0
      %3654 = vmatprep.subr.mxu0 0.0
      %3655 = vmatpush1.msra.mxu0 %v3257
      %3656 = vmatprep.subr.mxu0 0.0
      %3657 = vmatpush2.msra.mxu0 0.0
      %3658 = vmatprep.subr.mxu0 0.0
      %3659 = vmatpush2.msra.mxu0 0.0
      %3660 = vmatprep.subr.mxu0 0.0
      %3661 = vmatpush2.msra.mxu0 0.0
      %3662 = vmatprep.subr.mxu0 0.0
      %3663 = vmatpush2.msra.mxu0 0.0
      %3664 = vmatprep.subr.mxu0 0.0
      %3665 = vmatpush2.msra.mxu0 0.0
      %3666 = vmatprep.subr.mxu0 0.0
      %3667 = vmatpush2.msra.mxu0 0.0
      %3668 = vmatprep.subr.mxu0 0.0
      %3669 = vmatpush2.msra.mxu0 0.0
      %3670 = vmatprep.subr.mxu0 0.0
      %3671 = vmatpush2.msra.mxu0 0.0
      %3672 = vmatprep.subr.mxu0 0.0
      %3673 = vmatpush2.msra.mxu0 0.0
      %3674 = vmatprep.subr.mxu0 0.0
      %3675 = vmatpush2.msra.mxu0 0.0
      %3676 = vmatprep.subr.mxu0 0.0
      %3677 = vmatpush2.msra.mxu0 0.0
      %3678 = vmatprep.subr.mxu0 0.0
      %3679 = vmatpush2.msra.mxu0 0.0
      %3680 = vmatprep.subr.mxu0 0.0
      %3681 = vmatpush2.msra.mxu0 0.0
      %3682 = vmatprep.subr.mxu0 0.0
      %3683 = vmatpush2.msra.mxu0 0.0
      %3684 = vmatprep.subr.mxu0 0.0
      %3685 = vmatpush2.msra.mxu0 0.0
      %3686 = vmatprep.subr.mxu0 0.0
      %3687 = vmatpush2.msra.mxu0 0.0
      %3688 = vmatprep.mubr.f32.mxu0 0.0
      %3689 = vmatmul.mubr.f32.gmra.mxu0 %v3622
      %v3690 = vpop.f32.mrf.mxu0
      %v3691 = vadd.f32 0.0, %v3690
      %v3692 = vpop.f32.mrf.mxu0
      %3693 = vdwg.mxu0
      %v3695 = vsel %vm250, %v3249, 0
      %3697 = vmatprep.subr.mxu0 0.0
      %3698 = vmatpush1.msra.mxu0 0.0
      %3699 = vmatprep.subr.mxu0 0.0
      %3700 = vmatpush1.msra.mxu0 0.0
      %3701 = vmatprep.subr.mxu0 0.0
      %3702 = vmatpush1.msra.mxu0 0.0
      %3703 = vmatprep.subr.mxu0 0.0
      %3704 = vmatpush1.msra.mxu0 0.0
      %3705 = vmatprep.subr.mxu0 0.0
      %3706 = vmatpush1.msra.mxu0 0.0
      %3707 = vmatprep.subr.mxu0 0.0
      %3708 = vmatpush1.msra.mxu0 0.0
      %3709 = vmatprep.subr.mxu0 0.0
      %3710 = vmatpush1.msra.mxu0 0.0
      %3711 = vmatprep.subr.mxu0 0.0
      %3712 = vmatpush1.msra.mxu0 0.0
      %3713 = vmatprep.subr.mxu0 0.0
      %3714 = vmatpush1.msra.mxu0 0.0
      %3715 = vmatprep.subr.mxu0 0.0
      %3716 = vmatpush1.msra.mxu0 0.0
      %3717 = vmatprep.subr.mxu0 0.0
      %3718 = vmatpush1.msra.mxu0 0.0
      %3719 = vmatprep.subr.mxu0 0.0
      %3720 = vmatpush1.msra.mxu0 0.0
      %3721 = vmatprep.subr.mxu0 0.0
      %3722 = vmatpush1.msra.mxu0 0.0
      %3723 = vmatprep.subr.mxu0 0.0
      %3724 = vmatpush1.msra.mxu0 0.0
      %3725 = vmatprep.subr.mxu0 0.0
      %3726 = vmatpush1.msra.mxu0 0.0
      %3727 = vmatprep.subr.mxu0 0.0
      %3728 = vmatpush1.msra.mxu0 %v3257
      %3729 = vmatprep.subr.mxu0 0.0
      %3730 = vmatpush2.msra.mxu0 0.0
      %3731 = vmatprep.subr.mxu0 0.0
      %3732 = vmatpush2.msra.mxu0 0.0
      %3733 = vmatprep.subr.mxu0 0.0
      %3734 = vmatpush2.msra.mxu0 0.0
      %3735 = vmatprep.subr.mxu0 0.0
      %3736 = vmatpush2.msra.mxu0 0.0
      %3737 = vmatprep.subr.mxu0 0.0
      %3738 = vmatpush2.msra.mxu0 0.0
      %3739 = vmatprep.subr.mxu0 0.0
      %3740 = vmatpush2.msra.mxu0 0.0
      %3741 = vmatprep.subr.mxu0 0.0
      %3742 = vmatpush2.msra.mxu0 0.0
      %3743 = vmatprep.subr.mxu0 0.0
      %3744 = vmatpush2.msra.mxu0 0.0
      %3745 = vmatprep.subr.mxu0 0.0
      %3746 = vmatpush2.msra.mxu0 0.0
      %3747 = vmatprep.subr.mxu0 0.0
      %3748 = vmatpush2.msra.mxu0 0.0
      %3749 = vmatprep.subr.mxu0 0.0
      %3750 = vmatpush2.msra.mxu0 0.0
      %3751 = vmatprep.subr.mxu0 0.0
      %3752 = vmatpush2.msra.mxu0 0.0
      %3753 = vmatprep.subr.mxu0 0.0
      %3754 = vmatpush2.msra.mxu0 0.0
      %3755 = vmatprep.subr.mxu0 0.0
      %3756 = vmatpush2.msra.mxu0 0.0
      %3757 = vmatprep.subr.mxu0 0.0
      %3758 = vmatpush2.msra.mxu0 0.0
      %3759 = vmatprep.subr.mxu0 0.0
      %3760 = vmatpush2.msra.mxu0 0.0
      %3761 = vmatprep.mubr.f32.mxu0 0.0
      %3762 = vmatmul.mubr.f32.gmra.mxu0 %v3695
      %v3763 = vpop.f32.mrf.mxu0
      %v3764 = vadd.f32 0.0, %v3763
      %v3765 = vpop.f32.mrf.mxu0
      %3766 = vdwg.mxu0
      %v3768 = vsel %vm250, %v3250, 0
      %3770 = vmatprep.subr.mxu0 0.0
      %3771 = vmatpush1.msra.mxu0 0.0
      %3772 = vmatprep.subr.mxu0 0.0
      %3773 = vmatpush1.msra.mxu0 0.0
      %3774 = vmatprep.subr.mxu0 0.0
      %3775 = vmatpush1.msra.mxu0 0.0
      %3776 = vmatprep.subr.mxu0 0.0
      %3777 = vmatpush1.msra.mxu0 0.0
      %3778 = vmatprep.subr.mxu0 0.0
      %3779 = vmatpush1.msra.mxu0 0.0
      %3780 = vmatprep.subr.mxu0 0.0
      %3781 = vmatpush1.msra.mxu0 0.0
      %3782 = vmatprep.subr.mxu0 0.0
      %3783 = vmatpush1.msra.mxu0 0.0
      %3784 = vmatprep.subr.mxu0 0.0
      %3785 = vmatpush1.msra.mxu0 0.0
      %3786 = vmatprep.subr.mxu0 0.0
      %3787 = vmatpush1.msra.mxu0 0.0
      %3788 = vmatprep.subr.mxu0 0.0
      %3789 = vmatpush1.msra.mxu0 0.0
      %3790 = vmatprep.subr.mxu0 0.0
      %3791 = vmatpush1.msra.mxu0 0.0
      %3792 = vmatprep.subr.mxu0 0.0
      %3793 = vmatpush1.msra.mxu0 0.0
      %3794 = vmatprep.subr.mxu0 0.0
      %3795 = vmatpush1.msra.mxu0 0.0
      %3796 = vmatprep.subr.mxu0 0.0
      %3797 = vmatpush1.msra.mxu0 0.0
      %3798 = vmatprep.subr.mxu0 0.0
      %3799 = vmatpush1.msra.mxu0 0.0
      %3800 = vmatprep.subr.mxu0 0.0
      %3801 = vmatpush1.msra.mxu0 %v3257
      %3802 = vmatprep.subr.mxu0 0.0
      %3803 = vmatpush2.msra.mxu0 0.0
      %3804 = vmatprep.subr.mxu0 0.0
      %3805 = vmatpush2.msra.mxu0 0.0
      %3806 = vmatprep.subr.mxu0 0.0
      %3807 = vmatpush2.msra.mxu0 0.0
      %3808 = vmatprep.subr.mxu0 0.0
      %3809 = vmatpush2.msra.mxu0 0.0
      %3810 = vmatprep.subr.mxu0 0.0
      %3811 = vmatpush2.msra.mxu0 0.0
      %3812 = vmatprep.subr.mxu0 0.0
      %3813 = vmatpush2.msra.mxu0 0.0
      %3814 = vmatprep.subr.mxu0 0.0
      %3815 = vmatpush2.msra.mxu0 0.0
      %3816 = vmatprep.subr.mxu0 0.0
      %3817 = vmatpush2.msra.mxu0 0.0
      %3818 = vmatprep.subr.mxu0 0.0
      %3819 = vmatpush2.msra.mxu0 0.0
      %3820 = vmatprep.subr.mxu0 0.0
      %3821 = vmatpush2.msra.mxu0 0.0
      %3822 = vmatprep.subr.mxu0 0.0
      %3823 = vmatpush2.msra.mxu0 0.0
      %3824 = vmatprep.subr.mxu0 0.0
      %3825 = vmatpush2.msra.mxu0 0.0
      %3826 = vmatprep.subr.mxu0 0.0
      %3827 = vmatpush2.msra.mxu0 0.0
      %3828 = vmatprep.subr.mxu0 0.0
      %3829 = vmatpush2.msra.mxu0 0.0
      %3830 = vmatprep.subr.mxu0 0.0
      %3831 = vmatpush2.msra.mxu0 0.0
      %3832 = vmatprep.subr.mxu0 0.0
      %3833 = vmatpush2.msra.mxu0 0.0
      %3834 = vmatprep.mubr.f32.mxu0 0.0
      %3835 = vmatmul.mubr.f32.gmra.mxu0 %v3768
      %v3836 = vpop.f32.mrf.mxu0
      %v3837 = vadd.f32 0.0, %v3836
      %v3838 = vpop.f32.mrf.mxu0
      %3839 = vdwg.mxu0
      %v3840 = vadd.f32 %v3235, %v3326
      %v3841 = vadd.f32 %v3236, %v3399
      %v3842 = vadd.f32 %v3237, %v3472
      %v3843 = vadd.f32 %v3238, %v3545
      %v3844 = vadd.f32 %v3239, %v3618
      %v3845 = vadd.f32 %v3240, %v3691
      %v3846 = vadd.f32 %v3241, %v3764
      %v3847 = vadd.f32 %v3242, %v3837
      %s3848 = scalar_lea.vmem %s223, 16
      %v3849 = vld [vmem:[%s3848] sm:$0xff]
      %v3850 = vld [vmem:[%s3848 + $0x10] sm:$0xff]
      %v3851 = vld [vmem:[%s3848 + $0x20] sm:$0xff]
      %v3852 = vld [vmem:[%s3848 + $0x30] sm:$0xff]
      %v3853 = vld [vmem:[%s3848 + $0x40] sm:$0xff]
      %v3854 = vld [vmem:[%s3848 + $0x50] sm:$0xff]
      %v3855 = vld [vmem:[%s3848 + $0x60] sm:$0xff]
      %v3856 = vld [vmem:[%s3848 + $0x70] sm:$0xff]
      %s3857 = scalar_lea.vmem %s1, 24
      %v3858 = vld [vmem:[%s3857] sm:$0xf]
      %v3860 = vsel %vm250, %v3849, 0
      %v3863 = vsel %vm254, %v3858, 0
      %3865 = vmatprep.subr.mxu0 0.0
      %3866 = vmatpush1.msra.mxu0 0.0
      %3867 = vmatprep.subr.mxu0 0.0
      %3868 = vmatpush1.msra.mxu0 0.0
      %3869 = vmatprep.subr.mxu0 0.0
      %3870 = vmatpush1.msra.mxu0 0.0
      %3871 = vmatprep.subr.mxu0 0.0
      %3872 = vmatpush1.msra.mxu0 0.0
      %3873 = vmatprep.subr.mxu0 0.0
      %3874 = vmatpush1.msra.mxu0 0.0
      %3875 = vmatprep.subr.mxu0 0.0
      %3876 = vmatpush1.msra.mxu0 0.0
      %3877 = vmatprep.subr.mxu0 0.0
      %3878 = vmatpush1.msra.mxu0 0.0
      %3879 = vmatprep.subr.mxu0 0.0
      %3880 = vmatpush1.msra.mxu0 0.0
      %3881 = vmatprep.subr.mxu0 0.0
      %3882 = vmatpush1.msra.mxu0 0.0
      %3883 = vmatprep.subr.mxu0 0.0
      %3884 = vmatpush1.msra.mxu0 0.0
      %3885 = vmatprep.subr.mxu0 0.0
      %3886 = vmatpush1.msra.mxu0 0.0
      %3887 = vmatprep.subr.mxu0 0.0
      %3888 = vmatpush1.msra.mxu0 0.0
      %3889 = vmatprep.subr.mxu0 0.0
      %3890 = vmatpush1.msra.mxu0 0.0
      %3891 = vmatprep.subr.mxu0 0.0
      %3892 = vmatpush1.msra.mxu0 0.0
      %3893 = vmatprep.subr.mxu0 0.0
      %3894 = vmatpush1.msra.mxu0 0.0
      %3895 = vmatprep.subr.mxu0 0.0
      %3896 = vmatpush1.msra.mxu0 %v3863
      %3897 = vmatprep.subr.mxu0 0.0
      %3898 = vmatpush2.msra.mxu0 0.0
      %3899 = vmatprep.subr.mxu0 0.0
      %3900 = vmatpush2.msra.mxu0 0.0
      %3901 = vmatprep.subr.mxu0 0.0
      %3902 = vmatpush2.msra.mxu0 0.0
      %3903 = vmatprep.subr.mxu0 0.0
      %3904 = vmatpush2.msra.mxu0 0.0
      %3905 = vmatprep.subr.mxu0 0.0
      %3906 = vmatpush2.msra.mxu0 0.0
      %3907 = vmatprep.subr.mxu0 0.0
      %3908 = vmatpush2.msra.mxu0 0.0
      %3909 = vmatprep.subr.mxu0 0.0
      %3910 = vmatpush2.msra.mxu0 0.0
      %3911 = vmatprep.subr.mxu0 0.0
      %3912 = vmatpush2.msra.mxu0 0.0
      %3913 = vmatprep.subr.mxu0 0.0
      %3914 = vmatpush2.msra.mxu0 0.0
      %3915 = vmatprep.subr.mxu0 0.0
      %3916 = vmatpush2.msra.mxu0 0.0
      %3917 = vmatprep.subr.mxu0 0.0
      %3918 = vmatpush2.msra.mxu0 0.0
      %3919 = vmatprep.subr.mxu0 0.0
      %3920 = vmatpush2.msra.mxu0 0.0
      %3921 = vmatprep.subr.mxu0 0.0
      %3922 = vmatpush2.msra.mxu0 0.0
      %3923 = vmatprep.subr.mxu0 0.0
      %3924 = vmatpush2.msra.mxu0 0.0
      %3925 = vmatprep.subr.mxu0 0.0
      %3926 = vmatpush2.msra.mxu0 0.0
      %3927 = vmatprep.subr.mxu0 0.0
      %3928 = vmatpush2.msra.mxu0 0.0
      %3929 = vmatprep.mubr.f32.mxu0 0.0
      %3930 = vmatmul.mubr.f32.gmra.mxu0 %v3860
      %v3931 = vpop.f32.mrf.mxu0
      %v3932 = vadd.f32 0.0, %v3931
      %v3933 = vpop.f32.mrf.mxu0
      %3934 = vdwg.mxu0
      %v3936 = vsel %vm250, %v3850, 0
      %3938 = vmatprep.subr.mxu0 0.0
      %3939 = vmatpush1.msra.mxu0 0.0
      %3940 = vmatprep.subr.mxu0 0.0
      %3941 = vmatpush1.msra.mxu0 0.0
      %3942 = vmatprep.subr.mxu0 0.0
      %3943 = vmatpush1.msra.mxu0 0.0
      %3944 = vmatprep.subr.mxu0 0.0
      %3945 = vmatpush1.msra.mxu0 0.0
      %3946 = vmatprep.subr.mxu0 0.0
      %3947 = vmatpush1.msra.mxu0 0.0
      %3948 = vmatprep.subr.mxu0 0.0
      %3949 = vmatpush1.msra.mxu0 0.0
      %3950 = vmatprep.subr.mxu0 0.0
      %3951 = vmatpush1.msra.mxu0 0.0
      %3952 = vmatprep.subr.mxu0 0.0
      %3953 = vmatpush1.msra.mxu0 0.0
      %3954 = vmatprep.subr.mxu0 0.0
      %3955 = vmatpush1.msra.mxu0 0.0
      %3956 = vmatprep.subr.mxu0 0.0
      %3957 = vmatpush1.msra.mxu0 0.0
      %3958 = vmatprep.subr.mxu0 0.0
      %3959 = vmatpush1.msra.mxu0 0.0
      %3960 = vmatprep.subr.mxu0 0.0
      %3961 = vmatpush1.msra.mxu0 0.0
      %3962 = vmatprep.subr.mxu0 0.0
      %3963 = vmatpush1.msra.mxu0 0.0
      %3964 = vmatprep.subr.mxu0 0.0
      %3965 = vmatpush1.msra.mxu0 0.0
      %3966 = vmatprep.subr.mxu0 0.0
      %3967 = vmatpush1.msra.mxu0 0.0
      %3968 = vmatprep.subr.mxu0 0.0
      %3969 = vmatpush1.msra.mxu0 %v3863
      %3970 = vmatprep.subr.mxu0 0.0
      %3971 = vmatpush2.msra.mxu0 0.0
      %3972 = vmatprep.subr.mxu0 0.0
      %3973 = vmatpush2.msra.mxu0 0.0
      %3974 = vmatprep.subr.mxu0 0.0
      %3975 = vmatpush2.msra.mxu0 0.0
      %3976 = vmatprep.subr.mxu0 0.0
      %3977 = vmatpush2.msra.mxu0 0.0
      %3978 = vmatprep.subr.mxu0 0.0
      %3979 = vmatpush2.msra.mxu0 0.0
      %3980 = vmatprep.subr.mxu0 0.0
      %3981 = vmatpush2.msra.mxu0 0.0
      %3982 = vmatprep.subr.mxu0 0.0
      %3983 = vmatpush2.msra.mxu0 0.0
      %3984 = vmatprep.subr.mxu0 0.0
      %3985 = vmatpush2.msra.mxu0 0.0
      %3986 = vmatprep.subr.mxu0 0.0
      %3987 = vmatpush2.msra.mxu0 0.0
      %3988 = vmatprep.subr.mxu0 0.0
      %3989 = vmatpush2.msra.mxu0 0.0
      %3990 = vmatprep.subr.mxu0 0.0
      %3991 = vmatpush2.msra.mxu0 0.0
      %3992 = vmatprep.subr.mxu0 0.0
      %3993 = vmatpush2.msra.mxu0 0.0
      %3994 = vmatprep.subr.mxu0 0.0
      %3995 = vmatpush2.msra.mxu0 0.0
      %3996 = vmatprep.subr.mxu0 0.0
      %3997 = vmatpush2.msra.mxu0 0.0
      %3998 = vmatprep.subr.mxu0 0.0
      %3999 = vmatpush2.msra.mxu0 0.0
      %4000 = vmatprep.subr.mxu0 0.0
      %4001 = vmatpush2.msra.mxu0 0.0
      %4002 = vmatprep.mubr.f32.mxu0 0.0
      %4003 = vmatmul.mubr.f32.gmra.mxu0 %v3936
      %v4004 = vpop.f32.mrf.mxu0
      %v4005 = vadd.f32 0.0, %v4004
      %v4006 = vpop.f32.mrf.mxu0
      %4007 = vdwg.mxu0
      %v4009 = vsel %vm250, %v3851, 0
      %4011 = vmatprep.subr.mxu0 0.0
      %4012 = vmatpush1.msra.mxu0 0.0
      %4013 = vmatprep.subr.mxu0 0.0
      %4014 = vmatpush1.msra.mxu0 0.0
      %4015 = vmatprep.subr.mxu0 0.0
      %4016 = vmatpush1.msra.mxu0 0.0
      %4017 = vmatprep.subr.mxu0 0.0
      %4018 = vmatpush1.msra.mxu0 0.0
      %4019 = vmatprep.subr.mxu0 0.0
      %4020 = vmatpush1.msra.mxu0 0.0
      %4021 = vmatprep.subr.mxu0 0.0
      %4022 = vmatpush1.msra.mxu0 0.0
      %4023 = vmatprep.subr.mxu0 0.0
      %4024 = vmatpush1.msra.mxu0 0.0
      %4025 = vmatprep.subr.mxu0 0.0
      %4026 = vmatpush1.msra.mxu0 0.0
      %4027 = vmatprep.subr.mxu0 0.0
      %4028 = vmatpush1.msra.mxu0 0.0
      %4029 = vmatprep.subr.mxu0 0.0
      %4030 = vmatpush1.msra.mxu0 0.0
      %4031 = vmatprep.subr.mxu0 0.0
      %4032 = vmatpush1.msra.mxu0 0.0
      %4033 = vmatprep.subr.mxu0 0.0
      %4034 = vmatpush1.msra.mxu0 0.0
      %4035 = vmatprep.subr.mxu0 0.0
      %4036 = vmatpush1.msra.mxu0 0.0
      %4037 = vmatprep.subr.mxu0 0.0
      %4038 = vmatpush1.msra.mxu0 0.0
      %4039 = vmatprep.subr.mxu0 0.0
      %4040 = vmatpush1.msra.mxu0 0.0
      %4041 = vmatprep.subr.mxu0 0.0
      %4042 = vmatpush1.msra.mxu0 %v3863
      %4043 = vmatprep.subr.mxu0 0.0
      %4044 = vmatpush2.msra.mxu0 0.0
      %4045 = vmatprep.subr.mxu0 0.0
      %4046 = vmatpush2.msra.mxu0 0.0
      %4047 = vmatprep.subr.mxu0 0.0
      %4048 = vmatpush2.msra.mxu0 0.0
      %4049 = vmatprep.subr.mxu0 0.0
      %4050 = vmatpush2.msra.mxu0 0.0
      %4051 = vmatprep.subr.mxu0 0.0
      %4052 = vmatpush2.msra.mxu0 0.0
      %4053 = vmatprep.subr.mxu0 0.0
      %4054 = vmatpush2.msra.mxu0 0.0
      %4055 = vmatprep.subr.mxu0 0.0
      %4056 = vmatpush2.msra.mxu0 0.0
      %4057 = vmatprep.subr.mxu0 0.0
      %4058 = vmatpush2.msra.mxu0 0.0
      %4059 = vmatprep.subr.mxu0 0.0
      %4060 = vmatpush2.msra.mxu0 0.0
      %4061 = vmatprep.subr.mxu0 0.0
      %4062 = vmatpush2.msra.mxu0 0.0
      %4063 = vmatprep.subr.mxu0 0.0
      %4064 = vmatpush2.msra.mxu0 0.0
      %4065 = vmatprep.subr.mxu0 0.0
      %4066 = vmatpush2.msra.mxu0 0.0
      %4067 = vmatprep.subr.mxu0 0.0
      %4068 = vmatpush2.msra.mxu0 0.0
      %4069 = vmatprep.subr.mxu0 0.0
      %4070 = vmatpush2.msra.mxu0 0.0
      %4071 = vmatprep.subr.mxu0 0.0
      %4072 = vmatpush2.msra.mxu0 0.0
      %4073 = vmatprep.subr.mxu0 0.0
      %4074 = vmatpush2.msra.mxu0 0.0
      %4075 = vmatprep.mubr.f32.mxu0 0.0
      %4076 = vmatmul.mubr.f32.gmra.mxu0 %v4009
      %v4077 = vpop.f32.mrf.mxu0
      %v4078 = vadd.f32 0.0, %v4077
      %v4079 = vpop.f32.mrf.mxu0
      %4080 = vdwg.mxu0
      %v4082 = vsel %vm250, %v3852, 0
      %4084 = vmatprep.subr.mxu0 0.0
      %4085 = vmatpush1.msra.mxu0 0.0
      %4086 = vmatprep.subr.mxu0 0.0
      %4087 = vmatpush1.msra.mxu0 0.0
      %4088 = vmatprep.subr.mxu0 0.0
      %4089 = vmatpush1.msra.mxu0 0.0
      %4090 = vmatprep.subr.mxu0 0.0
      %4091 = vmatpush1.msra.mxu0 0.0
      %4092 = vmatprep.subr.mxu0 0.0
      %4093 = vmatpush1.msra.mxu0 0.0
      %4094 = vmatprep.subr.mxu0 0.0
      %4095 = vmatpush1.msra.mxu0 0.0
      %4096 = vmatprep.subr.mxu0 0.0
      %4097 = vmatpush1.msra.mxu0 0.0
      %4098 = vmatprep.subr.mxu0 0.0
      %4099 = vmatpush1.msra.mxu0 0.0
      %4100 = vmatprep.subr.mxu0 0.0
      %4101 = vmatpush1.msra.mxu0 0.0
      %4102 = vmatprep.subr.mxu0 0.0
      %4103 = vmatpush1.msra.mxu0 0.0
      %4104 = vmatprep.subr.mxu0 0.0
      %4105 = vmatpush1.msra.mxu0 0.0
      %4106 = vmatprep.subr.mxu0 0.0
      %4107 = vmatpush1.msra.mxu0 0.0
      %4108 = vmatprep.subr.mxu0 0.0
      %4109 = vmatpush1.msra.mxu0 0.0
      %4110 = vmatprep.subr.mxu0 0.0
      %4111 = vmatpush1.msra.mxu0 0.0
      %4112 = vmatprep.subr.mxu0 0.0
      %4113 = vmatpush1.msra.mxu0 0.0
      %4114 = vmatprep.subr.mxu0 0.0
      %4115 = vmatpush1.msra.mxu0 %v3863
      %4116 = vmatprep.subr.mxu0 0.0
      %4117 = vmatpush2.msra.mxu0 0.0
      %4118 = vmatprep.subr.mxu0 0.0
      %4119 = vmatpush2.msra.mxu0 0.0
      %4120 = vmatprep.subr.mxu0 0.0
      %4121 = vmatpush2.msra.mxu0 0.0
      %4122 = vmatprep.subr.mxu0 0.0
      %4123 = vmatpush2.msra.mxu0 0.0
      %4124 = vmatprep.subr.mxu0 0.0
      %4125 = vmatpush2.msra.mxu0 0.0
      %4126 = vmatprep.subr.mxu0 0.0
      %4127 = vmatpush2.msra.mxu0 0.0
      %4128 = vmatprep.subr.mxu0 0.0
      %4129 = vmatpush2.msra.mxu0 0.0
      %4130 = vmatprep.subr.mxu0 0.0
      %4131 = vmatpush2.msra.mxu0 0.0
      %4132 = vmatprep.subr.mxu0 0.0
      %4133 = vmatpush2.msra.mxu0 0.0
      %4134 = vmatprep.subr.mxu0 0.0
      %4135 = vmatpush2.msra.mxu0 0.0
      %4136 = vmatprep.subr.mxu0 0.0
      %4137 = vmatpush2.msra.mxu0 0.0
      %4138 = vmatprep.subr.mxu0 0.0
      %4139 = vmatpush2.msra.mxu0 0.0
      %4140 = vmatprep.subr.mxu0 0.0
      %4141 = vmatpush2.msra.mxu0 0.0
      %4142 = vmatprep.subr.mxu0 0.0
      %4143 = vmatpush2.msra.mxu0 0.0
      %4144 = vmatprep.subr.mxu0 0.0
      %4145 = vmatpush2.msra.mxu0 0.0
      %4146 = vmatprep.subr.mxu0 0.0
      %4147 = vmatpush2.msra.mxu0 0.0
      %4148 = vmatprep.mubr.f32.mxu0 0.0
      %4149 = vmatmul.mubr.f32.gmra.mxu0 %v4082
      %v4150 = vpop.f32.mrf.mxu0
      %v4151 = vadd.f32 0.0, %v4150
      %v4152 = vpop.f32.mrf.mxu0
      %4153 = vdwg.mxu0
      %v4155 = vsel %vm250, %v3853, 0
      %4157 = vmatprep.subr.mxu0 0.0
      %4158 = vmatpush1.msra.mxu0 0.0
      %4159 = vmatprep.subr.mxu0 0.0
      %4160 = vmatpush1.msra.mxu0 0.0
      %4161 = vmatprep.subr.mxu0 0.0
      %4162 = vmatpush1.msra.mxu0 0.0
      %4163 = vmatprep.subr.mxu0 0.0
      %4164 = vmatpush1.msra.mxu0 0.0
      %4165 = vmatprep.subr.mxu0 0.0
      %4166 = vmatpush1.msra.mxu0 0.0
      %4167 = vmatprep.subr.mxu0 0.0
      %4168 = vmatpush1.msra.mxu0 0.0
      %4169 = vmatprep.subr.mxu0 0.0
      %4170 = vmatpush1.msra.mxu0 0.0
      %4171 = vmatprep.subr.mxu0 0.0
      %4172 = vmatpush1.msra.mxu0 0.0
      %4173 = vmatprep.subr.mxu0 0.0
      %4174 = vmatpush1.msra.mxu0 0.0
      %4175 = vmatprep.subr.mxu0 0.0
      %4176 = vmatpush1.msra.mxu0 0.0
      %4177 = vmatprep.subr.mxu0 0.0
      %4178 = vmatpush1.msra.mxu0 0.0
      %4179 = vmatprep.subr.mxu0 0.0
      %4180 = vmatpush1.msra.mxu0 0.0
      %4181 = vmatprep.subr.mxu0 0.0
      %4182 = vmatpush1.msra.mxu0 0.0
      %4183 = vmatprep.subr.mxu0 0.0
      %4184 = vmatpush1.msra.mxu0 0.0
      %4185 = vmatprep.subr.mxu0 0.0
      %4186 = vmatpush1.msra.mxu0 0.0
      %4187 = vmatprep.subr.mxu0 0.0
      %4188 = vmatpush1.msra.mxu0 %v3863
      %4189 = vmatprep.subr.mxu0 0.0
      %4190 = vmatpush2.msra.mxu0 0.0
      %4191 = vmatprep.subr.mxu0 0.0
      %4192 = vmatpush2.msra.mxu0 0.0
      %4193 = vmatprep.subr.mxu0 0.0
      %4194 = vmatpush2.msra.mxu0 0.0
      %4195 = vmatprep.subr.mxu0 0.0
      %4196 = vmatpush2.msra.mxu0 0.0
      %4197 = vmatprep.subr.mxu0 0.0
      %4198 = vmatpush2.msra.mxu0 0.0
      %4199 = vmatprep.subr.mxu0 0.0
      %4200 = vmatpush2.msra.mxu0 0.0
      %4201 = vmatprep.subr.mxu0 0.0
      %4202 = vmatpush2.msra.mxu0 0.0
      %4203 = vmatprep.subr.mxu0 0.0
      %4204 = vmatpush2.msra.mxu0 0.0
      %4205 = vmatprep.subr.mxu0 0.0
      %4206 = vmatpush2.msra.mxu0 0.0
      %4207 = vmatprep.subr.mxu0 0.0
      %4208 = vmatpush2.msra.mxu0 0.0
      %4209 = vmatprep.subr.mxu0 0.0
      %4210 = vmatpush2.msra.mxu0 0.0
      %4211 = vmatprep.subr.mxu0 0.0
      %4212 = vmatpush2.msra.mxu0 0.0
      %4213 = vmatprep.subr.mxu0 0.0
      %4214 = vmatpush2.msra.mxu0 0.0
      %4215 = vmatprep.subr.mxu0 0.0
      %4216 = vmatpush2.msra.mxu0 0.0
      %4217 = vmatprep.subr.mxu0 0.0
      %4218 = vmatpush2.msra.mxu0 0.0
      %4219 = vmatprep.subr.mxu0 0.0
      %4220 = vmatpush2.msra.mxu0 0.0
      %4221 = vmatprep.mubr.f32.mxu0 0.0
      %4222 = vmatmul.mubr.f32.gmra.mxu0 %v4155
      %v4223 = vpop.f32.mrf.mxu0
      %v4224 = vadd.f32 0.0, %v4223
      %v4225 = vpop.f32.mrf.mxu0
      %4226 = vdwg.mxu0
      %v4228 = vsel %vm250, %v3854, 0
      %4230 = vmatprep.subr.mxu0 0.0
      %4231 = vmatpush1.msra.mxu0 0.0
      %4232 = vmatprep.subr.mxu0 0.0
      %4233 = vmatpush1.msra.mxu0 0.0
      %4234 = vmatprep.subr.mxu0 0.0
      %4235 = vmatpush1.msra.mxu0 0.0
      %4236 = vmatprep.subr.mxu0 0.0
      %4237 = vmatpush1.msra.mxu0 0.0
      %4238 = vmatprep.subr.mxu0 0.0
      %4239 = vmatpush1.msra.mxu0 0.0
      %4240 = vmatprep.subr.mxu0 0.0
      %4241 = vmatpush1.msra.mxu0 0.0
      %4242 = vmatprep.subr.mxu0 0.0
      %4243 = vmatpush1.msra.mxu0 0.0
      %4244 = vmatprep.subr.mxu0 0.0
      %4245 = vmatpush1.msra.mxu0 0.0
      %4246 = vmatprep.subr.mxu0 0.0
      %4247 = vmatpush1.msra.mxu0 0.0
      %4248 = vmatprep.subr.mxu0 0.0
      %4249 = vmatpush1.msra.mxu0 0.0
      %4250 = vmatprep.subr.mxu0 0.0
      %4251 = vmatpush1.msra.mxu0 0.0
      %4252 = vmatprep.subr.mxu0 0.0
      %4253 = vmatpush1.msra.mxu0 0.0
      %4254 = vmatprep.subr.mxu0 0.0
      %4255 = vmatpush1.msra.mxu0 0.0
      %4256 = vmatprep.subr.mxu0 0.0
      %4257 = vmatpush1.msra.mxu0 0.0
      %4258 = vmatprep.subr.mxu0 0.0
      %4259 = vmatpush1.msra.mxu0 0.0
      %4260 = vmatprep.subr.mxu0 0.0
      %4261 = vmatpush1.msra.mxu0 %v3863
      %4262 = vmatprep.subr.mxu0 0.0
      %4263 = vmatpush2.msra.mxu0 0.0
      %4264 = vmatprep.subr.mxu0 0.0
      %4265 = vmatpush2.msra.mxu0 0.0
      %4266 = vmatprep.subr.mxu0 0.0
      %4267 = vmatpush2.msra.mxu0 0.0
      %4268 = vmatprep.subr.mxu0 0.0
      %4269 = vmatpush2.msra.mxu0 0.0
      %4270 = vmatprep.subr.mxu0 0.0
      %4271 = vmatpush2.msra.mxu0 0.0
      %4272 = vmatprep.subr.mxu0 0.0
      %4273 = vmatpush2.msra.mxu0 0.0
      %4274 = vmatprep.subr.mxu0 0.0
      %4275 = vmatpush2.msra.mxu0 0.0
      %4276 = vmatprep.subr.mxu0 0.0
      %4277 = vmatpush2.msra.mxu0 0.0
      %4278 = vmatprep.subr.mxu0 0.0
      %4279 = vmatpush2.msra.mxu0 0.0
      %4280 = vmatprep.subr.mxu0 0.0
      %4281 = vmatpush2.msra.mxu0 0.0
      %4282 = vmatprep.subr.mxu0 0.0
      %4283 = vmatpush2.msra.mxu0 0.0
      %4284 = vmatprep.subr.mxu0 0.0
      %4285 = vmatpush2.msra.mxu0 0.0
      %4286 = vmatprep.subr.mxu0 0.0
      %4287 = vmatpush2.msra.mxu0 0.0
      %4288 = vmatprep.subr.mxu0 0.0
      %4289 = vmatpush2.msra.mxu0 0.0
      %4290 = vmatprep.subr.mxu0 0.0
      %4291 = vmatpush2.msra.mxu0 0.0
      %4292 = vmatprep.subr.mxu0 0.0
      %4293 = vmatpush2.msra.mxu0 0.0
      %4294 = vmatprep.mubr.f32.mxu0 0.0
      %4295 = vmatmul.mubr.f32.gmra.mxu0 %v4228
      %v4296 = vpop.f32.mrf.mxu0
      %v4297 = vadd.f32 0.0, %v4296
      %v4298 = vpop.f32.mrf.mxu0
      %4299 = vdwg.mxu0
      %v4301 = vsel %vm250, %v3855, 0
      %4303 = vmatprep.subr.mxu0 0.0
      %4304 = vmatpush1.msra.mxu0 0.0
      %4305 = vmatprep.subr.mxu0 0.0
      %4306 = vmatpush1.msra.mxu0 0.0
      %4307 = vmatprep.subr.mxu0 0.0
      %4308 = vmatpush1.msra.mxu0 0.0
      %4309 = vmatprep.subr.mxu0 0.0
      %4310 = vmatpush1.msra.mxu0 0.0
      %4311 = vmatprep.subr.mxu0 0.0
      %4312 = vmatpush1.msra.mxu0 0.0
      %4313 = vmatprep.subr.mxu0 0.0
      %4314 = vmatpush1.msra.mxu0 0.0
      %4315 = vmatprep.subr.mxu0 0.0
      %4316 = vmatpush1.msra.mxu0 0.0
      %4317 = vmatprep.subr.mxu0 0.0
      %4318 = vmatpush1.msra.mxu0 0.0
      %4319 = vmatprep.subr.mxu0 0.0
      %4320 = vmatpush1.msra.mxu0 0.0
      %4321 = vmatprep.subr.mxu0 0.0
      %4322 = vmatpush1.msra.mxu0 0.0
      %4323 = vmatprep.subr.mxu0 0.0
      %4324 = vmatpush1.msra.mxu0 0.0
      %4325 = vmatprep.subr.mxu0 0.0
      %4326 = vmatpush1.msra.mxu0 0.0
      %4327 = vmatprep.subr.mxu0 0.0
      %4328 = vmatpush1.msra.mxu0 0.0
      %4329 = vmatprep.subr.mxu0 0.0
      %4330 = vmatpush1.msra.mxu0 0.0
      %4331 = vmatprep.subr.mxu0 0.0
      %4332 = vmatpush1.msra.mxu0 0.0
      %4333 = vmatprep.subr.mxu0 0.0
      %4334 = vmatpush1.msra.mxu0 %v3863
      %4335 = vmatprep.subr.mxu0 0.0
      %4336 = vmatpush2.msra.mxu0 0.0
      %4337 = vmatprep.subr.mxu0 0.0
      %4338 = vmatpush2.msra.mxu0 0.0
      %4339 = vmatprep.subr.mxu0 0.0
      %4340 = vmatpush2.msra.mxu0 0.0
      %4341 = vmatprep.subr.mxu0 0.0
      %4342 = vmatpush2.msra.mxu0 0.0
      %4343 = vmatprep.subr.mxu0 0.0
      %4344 = vmatpush2.msra.mxu0 0.0
      %4345 = vmatprep.subr.mxu0 0.0
      %4346 = vmatpush2.msra.mxu0 0.0
      %4347 = vmatprep.subr.mxu0 0.0
      %4348 = vmatpush2.msra.mxu0 0.0
      %4349 = vmatprep.subr.mxu0 0.0
      %4350 = vmatpush2.msra.mxu0 0.0
      %4351 = vmatprep.subr.mxu0 0.0
      %4352 = vmatpush2.msra.mxu0 0.0
      %4353 = vmatprep.subr.mxu0 0.0
      %4354 = vmatpush2.msra.mxu0 0.0
      %4355 = vmatprep.subr.mxu0 0.0
      %4356 = vmatpush2.msra.mxu0 0.0
      %4357 = vmatprep.subr.mxu0 0.0
      %4358 = vmatpush2.msra.mxu0 0.0
      %4359 = vmatprep.subr.mxu0 0.0
      %4360 = vmatpush2.msra.mxu0 0.0
      %4361 = vmatprep.subr.mxu0 0.0
      %4362 = vmatpush2.msra.mxu0 0.0
      %4363 = vmatprep.subr.mxu0 0.0
      %4364 = vmatpush2.msra.mxu0 0.0
      %4365 = vmatprep.subr.mxu0 0.0
      %4366 = vmatpush2.msra.mxu0 0.0
      %4367 = vmatprep.mubr.f32.mxu0 0.0
      %4368 = vmatmul.mubr.f32.gmra.mxu0 %v4301
      %v4369 = vpop.f32.mrf.mxu0
      %v4370 = vadd.f32 0.0, %v4369
      %v4371 = vpop.f32.mrf.mxu0
      %4372 = vdwg.mxu0
      %v4374 = vsel %vm250, %v3856, 0
      %4376 = vmatprep.subr.mxu0 0.0
      %4377 = vmatpush1.msra.mxu0 0.0
      %4378 = vmatprep.subr.mxu0 0.0
      %4379 = vmatpush1.msra.mxu0 0.0
      %4380 = vmatprep.subr.mxu0 0.0
      %4381 = vmatpush1.msra.mxu0 0.0
      %4382 = vmatprep.subr.mxu0 0.0
      %4383 = vmatpush1.msra.mxu0 0.0
      %4384 = vmatprep.subr.mxu0 0.0
      %4385 = vmatpush1.msra.mxu0 0.0
      %4386 = vmatprep.subr.mxu0 0.0
      %4387 = vmatpush1.msra.mxu0 0.0
      %4388 = vmatprep.subr.mxu0 0.0
      %4389 = vmatpush1.msra.mxu0 0.0
      %4390 = vmatprep.subr.mxu0 0.0
      %4391 = vmatpush1.msra.mxu0 0.0
      %4392 = vmatprep.subr.mxu0 0.0
      %4393 = vmatpush1.msra.mxu0 0.0
      %4394 = vmatprep.subr.mxu0 0.0
      %4395 = vmatpush1.msra.mxu0 0.0
      %4396 = vmatprep.subr.mxu0 0.0
      %4397 = vmatpush1.msra.mxu0 0.0
      %4398 = vmatprep.subr.mxu0 0.0
      %4399 = vmatpush1.msra.mxu0 0.0
      %4400 = vmatprep.subr.mxu0 0.0
      %4401 = vmatpush1.msra.mxu0 0.0
      %4402 = vmatprep.subr.mxu0 0.0
      %4403 = vmatpush1.msra.mxu0 0.0
      %4404 = vmatprep.subr.mxu0 0.0
      %4405 = vmatpush1.msra.mxu0 0.0
      %4406 = vmatprep.subr.mxu0 0.0
      %4407 = vmatpush1.msra.mxu0 %v3863
      %4408 = vmatprep.subr.mxu0 0.0
      %4409 = vmatpush2.msra.mxu0 0.0
      %4410 = vmatprep.subr.mxu0 0.0
      %4411 = vmatpush2.msra.mxu0 0.0
      %4412 = vmatprep.subr.mxu0 0.0
      %4413 = vmatpush2.msra.mxu0 0.0
      %4414 = vmatprep.subr.mxu0 0.0
      %4415 = vmatpush2.msra.mxu0 0.0
      %4416 = vmatprep.subr.mxu0 0.0
      %4417 = vmatpush2.msra.mxu0 0.0
      %4418 = vmatprep.subr.mxu0 0.0
      %4419 = vmatpush2.msra.mxu0 0.0
      %4420 = vmatprep.subr.mxu0 0.0
      %4421 = vmatpush2.msra.mxu0 0.0
      %4422 = vmatprep.subr.mxu0 0.0
      %4423 = vmatpush2.msra.mxu0 0.0
      %4424 = vmatprep.subr.mxu0 0.0
      %4425 = vmatpush2.msra.mxu0 0.0
      %4426 = vmatprep.subr.mxu0 0.0
      %4427 = vmatpush2.msra.mxu0 0.0
      %4428 = vmatprep.subr.mxu0 0.0
      %4429 = vmatpush2.msra.mxu0 0.0
      %4430 = vmatprep.subr.mxu0 0.0
      %4431 = vmatpush2.msra.mxu0 0.0
      %4432 = vmatprep.subr.mxu0 0.0
      %4433 = vmatpush2.msra.mxu0 0.0
      %4434 = vmatprep.subr.mxu0 0.0
      %4435 = vmatpush2.msra.mxu0 0.0
      %4436 = vmatprep.subr.mxu0 0.0
      %4437 = vmatpush2.msra.mxu0 0.0
      %4438 = vmatprep.subr.mxu0 0.0
      %4439 = vmatpush2.msra.mxu0 0.0
      %4440 = vmatprep.mubr.f32.mxu0 0.0
      %4441 = vmatmul.mubr.f32.gmra.mxu0 %v4374
      %v4442 = vpop.f32.mrf.mxu0
      %v4443 = vadd.f32 0.0, %v4442
      %v4444 = vpop.f32.mrf.mxu0
      %4445 = vdwg.mxu0
      %v4446 = vadd.f32 %v3840, %v3932
      %v4447 = vadd.f32 %v3841, %v4005
      %v4448 = vadd.f32 %v3842, %v4078
      %v4449 = vadd.f32 %v3843, %v4151
      %v4450 = vadd.f32 %v3844, %v4224
      %v4451 = vadd.f32 %v3845, %v4297
      %v4452 = vadd.f32 %v3846, %v4370
      %v4453 = vadd.f32 %v3847, %v4443
      %s4454 = scalar_lea.vmem %s223, 160
      %v4455 = vld [vmem:[%s4454] sm:$0xff]
      %v4456 = vld [vmem:[%s4454 + $0x10] sm:$0xff]
      %v4457 = vld [vmem:[%s4454 + $0x20] sm:$0xff]
      %v4458 = vld [vmem:[%s4454 + $0x30] sm:$0xff]
      %v4459 = vld [vmem:[%s4454 + $0x40] sm:$0xff]
      %v4460 = vld [vmem:[%s4454 + $0x50] sm:$0xff]
      %v4461 = vld [vmem:[%s4454 + $0x60] sm:$0xff]
      %v4462 = vld [vmem:[%s4454 + $0x70] sm:$0xff]
      %s4463 = scalar_lea.vmem %s1, 28
      %v4464 = vld [vmem:[%s4463] sm:$0xf]
      %v4466 = vsel %vm250, %v4455, 0
      %v4469 = vsel %vm254, %v4464, 0
      %4471 = vmatprep.subr.mxu0 0.0
      %4472 = vmatpush1.msra.mxu0 0.0
      %4473 = vmatprep.subr.mxu0 0.0
      %4474 = vmatpush1.msra.mxu0 0.0
      %4475 = vmatprep.subr.mxu0 0.0
      %4476 = vmatpush1.msra.mxu0 0.0
      %4477 = vmatprep.subr.mxu0 0.0
      %4478 = vmatpush1.msra.mxu0 0.0
      %4479 = vmatprep.subr.mxu0 0.0
      %4480 = vmatpush1.msra.mxu0 0.0
      %4481 = vmatprep.subr.mxu0 0.0
      %4482 = vmatpush1.msra.mxu0 0.0
      %4483 = vmatprep.subr.mxu0 0.0
      %4484 = vmatpush1.msra.mxu0 0.0
      %4485 = vmatprep.subr.mxu0 0.0
      %4486 = vmatpush1.msra.mxu0 0.0
      %4487 = vmatprep.subr.mxu0 0.0
      %4488 = vmatpush1.msra.mxu0 0.0
      %4489 = vmatprep.subr.mxu0 0.0
      %4490 = vmatpush1.msra.mxu0 0.0
      %4491 = vmatprep.subr.mxu0 0.0
      %4492 = vmatpush1.msra.mxu0 0.0
      %4493 = vmatprep.subr.mxu0 0.0
      %4494 = vmatpush1.msra.mxu0 0.0
      %4495 = vmatprep.subr.mxu0 0.0
      %4496 = vmatpush1.msra.mxu0 0.0
      %4497 = vmatprep.subr.mxu0 0.0
      %4498 = vmatpush1.msra.mxu0 0.0
      %4499 = vmatprep.subr.mxu0 0.0
      %4500 = vmatpush1.msra.mxu0 0.0
      %4501 = vmatprep.subr.mxu0 0.0
      %4502 = vmatpush1.msra.mxu0 %v4469
      %4503 = vmatprep.subr.mxu0 0.0
      %4504 = vmatpush2.msra.mxu0 0.0
      %4505 = vmatprep.subr.mxu0 0.0
      %4506 = vmatpush2.msra.mxu0 0.0
      %4507 = vmatprep.subr.mxu0 0.0
      %4508 = vmatpush2.msra.mxu0 0.0
      %4509 = vmatprep.subr.mxu0 0.0
      %4510 = vmatpush2.msra.mxu0 0.0
      %4511 = vmatprep.subr.mxu0 0.0
      %4512 = vmatpush2.msra.mxu0 0.0
      %4513 = vmatprep.subr.mxu0 0.0
      %4514 = vmatpush2.msra.mxu0 0.0
      %4515 = vmatprep.subr.mxu0 0.0
      %4516 = vmatpush2.msra.mxu0 0.0
      %4517 = vmatprep.subr.mxu0 0.0
      %4518 = vmatpush2.msra.mxu0 0.0
      %4519 = vmatprep.subr.mxu0 0.0
      %4520 = vmatpush2.msra.mxu0 0.0
      %4521 = vmatprep.subr.mxu0 0.0
      %4522 = vmatpush2.msra.mxu0 0.0
      %4523 = vmatprep.subr.mxu0 0.0
      %4524 = vmatpush2.msra.mxu0 0.0
      %4525 = vmatprep.subr.mxu0 0.0
      %4526 = vmatpush2.msra.mxu0 0.0
      %4527 = vmatprep.subr.mxu0 0.0
      %4528 = vmatpush2.msra.mxu0 0.0
      %4529 = vmatprep.subr.mxu0 0.0
      %4530 = vmatpush2.msra.mxu0 0.0
      %4531 = vmatprep.subr.mxu0 0.0
      %4532 = vmatpush2.msra.mxu0 0.0
      %4533 = vmatprep.subr.mxu0 0.0
      %4534 = vmatpush2.msra.mxu0 0.0
      %4535 = vmatprep.mubr.f32.mxu0 0.0
      %4536 = vmatmul.mubr.f32.gmra.mxu0 %v4466
      %v4537 = vpop.f32.mrf.mxu0
      %v4538 = vadd.f32 0.0, %v4537
      %v4539 = vpop.f32.mrf.mxu0
      %4540 = vdwg.mxu0
      %v4542 = vsel %vm250, %v4456, 0
      %4544 = vmatprep.subr.mxu0 0.0
      %4545 = vmatpush1.msra.mxu0 0.0
      %4546 = vmatprep.subr.mxu0 0.0
      %4547 = vmatpush1.msra.mxu0 0.0
      %4548 = vmatprep.subr.mxu0 0.0
      %4549 = vmatpush1.msra.mxu0 0.0
      %4550 = vmatprep.subr.mxu0 0.0
      %4551 = vmatpush1.msra.mxu0 0.0
      %4552 = vmatprep.subr.mxu0 0.0
      %4553 = vmatpush1.msra.mxu0 0.0
      %4554 = vmatprep.subr.mxu0 0.0
      %4555 = vmatpush1.msra.mxu0 0.0
      %4556 = vmatprep.subr.mxu0 0.0
      %4557 = vmatpush1.msra.mxu0 0.0
      %4558 = vmatprep.subr.mxu0 0.0
      %4559 = vmatpush1.msra.mxu0 0.0
      %4560 = vmatprep.subr.mxu0 0.0
      %4561 = vmatpush1.msra.mxu0 0.0
      %4562 = vmatprep.subr.mxu0 0.0
      %4563 = vmatpush1.msra.mxu0 0.0
      %4564 = vmatprep.subr.mxu0 0.0
      %4565 = vmatpush1.msra.mxu0 0.0
      %4566 = vmatprep.subr.mxu0 0.0
      %4567 = vmatpush1.msra.mxu0 0.0
      %4568 = vmatprep.subr.mxu0 0.0
      %4569 = vmatpush1.msra.mxu0 0.0
      %4570 = vmatprep.subr.mxu0 0.0
      %4571 = vmatpush1.msra.mxu0 0.0
      %4572 = vmatprep.subr.mxu0 0.0
      %4573 = vmatpush1.msra.mxu0 0.0
      %4574 = vmatprep.subr.mxu0 0.0
      %4575 = vmatpush1.msra.mxu0 %v4469
      %4576 = vmatprep.subr.mxu0 0.0
      %4577 = vmatpush2.msra.mxu0 0.0
      %4578 = vmatprep.subr.mxu0 0.0
      %4579 = vmatpush2.msra.mxu0 0.0
      %4580 = vmatprep.subr.mxu0 0.0
      %4581 = vmatpush2.msra.mxu0 0.0
      %4582 = vmatprep.subr.mxu0 0.0
      %4583 = vmatpush2.msra.mxu0 0.0
      %4584 = vmatprep.subr.mxu0 0.0
      %4585 = vmatpush2.msra.mxu0 0.0
      %4586 = vmatprep.subr.mxu0 0.0
      %4587 = vmatpush2.msra.mxu0 0.0
      %4588 = vmatprep.subr.mxu0 0.0
      %4589 = vmatpush2.msra.mxu0 0.0
      %4590 = vmatprep.subr.mxu0 0.0
      %4591 = vmatpush2.msra.mxu0 0.0
      %4592 = vmatprep.subr.mxu0 0.0
      %4593 = vmatpush2.msra.mxu0 0.0
      %4594 = vmatprep.subr.mxu0 0.0
      %4595 = vmatpush2.msra.mxu0 0.0
      %4596 = vmatprep.subr.mxu0 0.0
      %4597 = vmatpush2.msra.mxu0 0.0
      %4598 = vmatprep.subr.mxu0 0.0
      %4599 = vmatpush2.msra.mxu0 0.0
      %4600 = vmatprep.subr.mxu0 0.0
      %4601 = vmatpush2.msra.mxu0 0.0
      %4602 = vmatprep.subr.mxu0 0.0
      %4603 = vmatpush2.msra.mxu0 0.0
      %4604 = vmatprep.subr.mxu0 0.0
      %4605 = vmatpush2.msra.mxu0 0.0
      %4606 = vmatprep.subr.mxu0 0.0
      %4607 = vmatpush2.msra.mxu0 0.0
      %4608 = vmatprep.mubr.f32.mxu0 0.0
      %4609 = vmatmul.mubr.f32.gmra.mxu0 %v4542
      %v4610 = vpop.f32.mrf.mxu0
      %v4611 = vadd.f32 0.0, %v4610
      %v4612 = vpop.f32.mrf.mxu0
      %4613 = vdwg.mxu0
      %v4615 = vsel %vm250, %v4457, 0
      %4617 = vmatprep.subr.mxu0 0.0
      %4618 = vmatpush1.msra.mxu0 0.0
      %4619 = vmatprep.subr.mxu0 0.0
      %4620 = vmatpush1.msra.mxu0 0.0
      %4621 = vmatprep.subr.mxu0 0.0
      %4622 = vmatpush1.msra.mxu0 0.0
      %4623 = vmatprep.subr.mxu0 0.0
      %4624 = vmatpush1.msra.mxu0 0.0
      %4625 = vmatprep.subr.mxu0 0.0
      %4626 = vmatpush1.msra.mxu0 0.0
      %4627 = vmatprep.subr.mxu0 0.0
      %4628 = vmatpush1.msra.mxu0 0.0
      %4629 = vmatprep.subr.mxu0 0.0
      %4630 = vmatpush1.msra.mxu0 0.0
      %4631 = vmatprep.subr.mxu0 0.0
      %4632 = vmatpush1.msra.mxu0 0.0
      %4633 = vmatprep.subr.mxu0 0.0
      %4634 = vmatpush1.msra.mxu0 0.0
      %4635 = vmatprep.subr.mxu0 0.0
      %4636 = vmatpush1.msra.mxu0 0.0
      %4637 = vmatprep.subr.mxu0 0.0
      %4638 = vmatpush1.msra.mxu0 0.0
      %4639 = vmatprep.subr.mxu0 0.0
      %4640 = vmatpush1.msra.mxu0 0.0
      %4641 = vmatprep.subr.mxu0 0.0
      %4642 = vmatpush1.msra.mxu0 0.0
      %4643 = vmatprep.subr.mxu0 0.0
      %4644 = vmatpush1.msra.mxu0 0.0
      %4645 = vmatprep.subr.mxu0 0.0
      %4646 = vmatpush1.msra.mxu0 0.0
      %4647 = vmatprep.subr.mxu0 0.0
      %4648 = vmatpush1.msra.mxu0 %v4469
      %4649 = vmatprep.subr.mxu0 0.0
      %4650 = vmatpush2.msra.mxu0 0.0
      %4651 = vmatprep.subr.mxu0 0.0
      %4652 = vmatpush2.msra.mxu0 0.0
      %4653 = vmatprep.subr.mxu0 0.0
      %4654 = vmatpush2.msra.mxu0 0.0
      %4655 = vmatprep.subr.mxu0 0.0
      %4656 = vmatpush2.msra.mxu0 0.0
      %4657 = vmatprep.subr.mxu0 0.0
      %4658 = vmatpush2.msra.mxu0 0.0
      %4659 = vmatprep.subr.mxu0 0.0
      %4660 = vmatpush2.msra.mxu0 0.0
      %4661 = vmatprep.subr.mxu0 0.0
      %4662 = vmatpush2.msra.mxu0 0.0
      %4663 = vmatprep.subr.mxu0 0.0
      %4664 = vmatpush2.msra.mxu0 0.0
      %4665 = vmatprep.subr.mxu0 0.0
      %4666 = vmatpush2.msra.mxu0 0.0
      %4667 = vmatprep.subr.mxu0 0.0
      %4668 = vmatpush2.msra.mxu0 0.0
      %4669 = vmatprep.subr.mxu0 0.0
      %4670 = vmatpush2.msra.mxu0 0.0
      %4671 = vmatprep.subr.mxu0 0.0
      %4672 = vmatpush2.msra.mxu0 0.0
      %4673 = vmatprep.subr.mxu0 0.0
      %4674 = vmatpush2.msra.mxu0 0.0
      %4675 = vmatprep.subr.mxu0 0.0
      %4676 = vmatpush2.msra.mxu0 0.0
      %4677 = vmatprep.subr.mxu0 0.0
      %4678 = vmatpush2.msra.mxu0 0.0
      %4679 = vmatprep.subr.mxu0 0.0
      %4680 = vmatpush2.msra.mxu0 0.0
      %4681 = vmatprep.mubr.f32.mxu0 0.0
      %4682 = vmatmul.mubr.f32.gmra.mxu0 %v4615
      %v4683 = vpop.f32.mrf.mxu0
      %v4684 = vadd.f32 0.0, %v4683
      %v4685 = vpop.f32.mrf.mxu0
      %4686 = vdwg.mxu0
      %v4688 = vsel %vm250, %v4458, 0
      %4690 = vmatprep.subr.mxu0 0.0
      %4691 = vmatpush1.msra.mxu0 0.0
      %4692 = vmatprep.subr.mxu0 0.0
      %4693 = vmatpush1.msra.mxu0 0.0
      %4694 = vmatprep.subr.mxu0 0.0
      %4695 = vmatpush1.msra.mxu0 0.0
      %4696 = vmatprep.subr.mxu0 0.0
      %4697 = vmatpush1.msra.mxu0 0.0
      %4698 = vmatprep.subr.mxu0 0.0
      %4699 = vmatpush1.msra.mxu0 0.0
      %4700 = vmatprep.subr.mxu0 0.0
      %4701 = vmatpush1.msra.mxu0 0.0
      %4702 = vmatprep.subr.mxu0 0.0
      %4703 = vmatpush1.msra.mxu0 0.0
      %4704 = vmatprep.subr.mxu0 0.0
      %4705 = vmatpush1.msra.mxu0 0.0
      %4706 = vmatprep.subr.mxu0 0.0
      %4707 = vmatpush1.msra.mxu0 0.0
      %4708 = vmatprep.subr.mxu0 0.0
      %4709 = vmatpush1.msra.mxu0 0.0
      %4710 = vmatprep.subr.mxu0 0.0
      %4711 = vmatpush1.msra.mxu0 0.0
      %4712 = vmatprep.subr.mxu0 0.0
      %4713 = vmatpush1.msra.mxu0 0.0
      %4714 = vmatprep.subr.mxu0 0.0
      %4715 = vmatpush1.msra.mxu0 0.0
      %4716 = vmatprep.subr.mxu0 0.0
      %4717 = vmatpush1.msra.mxu0 0.0
      %4718 = vmatprep.subr.mxu0 0.0
      %4719 = vmatpush1.msra.mxu0 0.0
      %4720 = vmatprep.subr.mxu0 0.0
      %4721 = vmatpush1.msra.mxu0 %v4469
      %4722 = vmatprep.subr.mxu0 0.0
      %4723 = vmatpush2.msra.mxu0 0.0
      %4724 = vmatprep.subr.mxu0 0.0
      %4725 = vmatpush2.msra.mxu0 0.0
      %4726 = vmatprep.subr.mxu0 0.0
      %4727 = vmatpush2.msra.mxu0 0.0
      %4728 = vmatprep.subr.mxu0 0.0
      %4729 = vmatpush2.msra.mxu0 0.0
      %4730 = vmatprep.subr.mxu0 0.0
      %4731 = vmatpush2.msra.mxu0 0.0
      %4732 = vmatprep.subr.mxu0 0.0
      %4733 = vmatpush2.msra.mxu0 0.0
      %4734 = vmatprep.subr.mxu0 0.0
      %4735 = vmatpush2.msra.mxu0 0.0
      %4736 = vmatprep.subr.mxu0 0.0
      %4737 = vmatpush2.msra.mxu0 0.0
      %4738 = vmatprep.subr.mxu0 0.0
      %4739 = vmatpush2.msra.mxu0 0.0
      %4740 = vmatprep.subr.mxu0 0.0
      %4741 = vmatpush2.msra.mxu0 0.0
      %4742 = vmatprep.subr.mxu0 0.0
      %4743 = vmatpush2.msra.mxu0 0.0
      %4744 = vmatprep.subr.mxu0 0.0
      %4745 = vmatpush2.msra.mxu0 0.0
      %4746 = vmatprep.subr.mxu0 0.0
      %4747 = vmatpush2.msra.mxu0 0.0
      %4748 = vmatprep.subr.mxu0 0.0
      %4749 = vmatpush2.msra.mxu0 0.0
      %4750 = vmatprep.subr.mxu0 0.0
      %4751 = vmatpush2.msra.mxu0 0.0
      %4752 = vmatprep.subr.mxu0 0.0
      %4753 = vmatpush2.msra.mxu0 0.0
      %4754 = vmatprep.mubr.f32.mxu0 0.0
      %4755 = vmatmul.mubr.f32.gmra.mxu0 %v4688
      %v4756 = vpop.f32.mrf.mxu0
      %v4757 = vadd.f32 0.0, %v4756
      %v4758 = vpop.f32.mrf.mxu0
      %4759 = vdwg.mxu0
      %v4761 = vsel %vm250, %v4459, 0
      %4763 = vmatprep.subr.mxu0 0.0
      %4764 = vmatpush1.msra.mxu0 0.0
      %4765 = vmatprep.subr.mxu0 0.0
      %4766 = vmatpush1.msra.mxu0 0.0
      %4767 = vmatprep.subr.mxu0 0.0
      %4768 = vmatpush1.msra.mxu0 0.0
      %4769 = vmatprep.subr.mxu0 0.0
      %4770 = vmatpush1.msra.mxu0 0.0
      %4771 = vmatprep.subr.mxu0 0.0
      %4772 = vmatpush1.msra.mxu0 0.0
      %4773 = vmatprep.subr.mxu0 0.0
      %4774 = vmatpush1.msra.mxu0 0.0
      %4775 = vmatprep.subr.mxu0 0.0
      %4776 = vmatpush1.msra.mxu0 0.0
      %4777 = vmatprep.subr.mxu0 0.0
      %4778 = vmatpush1.msra.mxu0 0.0
      %4779 = vmatprep.subr.mxu0 0.0
      %4780 = vmatpush1.msra.mxu0 0.0
      %4781 = vmatprep.subr.mxu0 0.0
      %4782 = vmatpush1.msra.mxu0 0.0
      %4783 = vmatprep.subr.mxu0 0.0
      %4784 = vmatpush1.msra.mxu0 0.0
      %4785 = vmatprep.subr.mxu0 0.0
      %4786 = vmatpush1.msra.mxu0 0.0
      %4787 = vmatprep.subr.mxu0 0.0
      %4788 = vmatpush1.msra.mxu0 0.0
      %4789 = vmatprep.subr.mxu0 0.0
      %4790 = vmatpush1.msra.mxu0 0.0
      %4791 = vmatprep.subr.mxu0 0.0
      %4792 = vmatpush1.msra.mxu0 0.0
      %4793 = vmatprep.subr.mxu0 0.0
      %4794 = vmatpush1.msra.mxu0 %v4469
      %4795 = vmatprep.subr.mxu0 0.0
      %4796 = vmatpush2.msra.mxu0 0.0
      %4797 = vmatprep.subr.mxu0 0.0
      %4798 = vmatpush2.msra.mxu0 0.0
      %4799 = vmatprep.subr.mxu0 0.0
      %4800 = vmatpush2.msra.mxu0 0.0
      %4801 = vmatprep.subr.mxu0 0.0
      %4802 = vmatpush2.msra.mxu0 0.0
      %4803 = vmatprep.subr.mxu0 0.0
      %4804 = vmatpush2.msra.mxu0 0.0
      %4805 = vmatprep.subr.mxu0 0.0
      %4806 = vmatpush2.msra.mxu0 0.0
      %4807 = vmatprep.subr.mxu0 0.0
      %4808 = vmatpush2.msra.mxu0 0.0
      %4809 = vmatprep.subr.mxu0 0.0
      %4810 = vmatpush2.msra.mxu0 0.0
      %4811 = vmatprep.subr.mxu0 0.0
      %4812 = vmatpush2.msra.mxu0 0.0
      %4813 = vmatprep.subr.mxu0 0.0
      %4814 = vmatpush2.msra.mxu0 0.0
      %4815 = vmatprep.subr.mxu0 0.0
      %4816 = vmatpush2.msra.mxu0 0.0
      %4817 = vmatprep.subr.mxu0 0.0
      %4818 = vmatpush2.msra.mxu0 0.0
      %4819 = vmatprep.subr.mxu0 0.0
      %4820 = vmatpush2.msra.mxu0 0.0
      %4821 = vmatprep.subr.mxu0 0.0
      %4822 = vmatpush2.msra.mxu0 0.0
      %4823 = vmatprep.subr.mxu0 0.0
      %4824 = vmatpush2.msra.mxu0 0.0
      %4825 = vmatprep.subr.mxu0 0.0
      %4826 = vmatpush2.msra.mxu0 0.0
      %4827 = vmatprep.mubr.f32.mxu0 0.0
      %4828 = vmatmul.mubr.f32.gmra.mxu0 %v4761
      %v4829 = vpop.f32.mrf.mxu0
      %v4830 = vadd.f32 0.0, %v4829
      %v4831 = vpop.f32.mrf.mxu0
      %4832 = vdwg.mxu0
      %v4834 = vsel %vm250, %v4460, 0
      %4836 = vmatprep.subr.mxu0 0.0
      %4837 = vmatpush1.msra.mxu0 0.0
      %4838 = vmatprep.subr.mxu0 0.0
      %4839 = vmatpush1.msra.mxu0 0.0
      %4840 = vmatprep.subr.mxu0 0.0
      %4841 = vmatpush1.msra.mxu0 0.0
      %4842 = vmatprep.subr.mxu0 0.0
      %4843 = vmatpush1.msra.mxu0 0.0
      %4844 = vmatprep.subr.mxu0 0.0
      %4845 = vmatpush1.msra.mxu0 0.0
      %4846 = vmatprep.subr.mxu0 0.0
      %4847 = vmatpush1.msra.mxu0 0.0
      %4848 = vmatprep.subr.mxu0 0.0
      %4849 = vmatpush1.msra.mxu0 0.0
      %4850 = vmatprep.subr.mxu0 0.0
      %4851 = vmatpush1.msra.mxu0 0.0
      %4852 = vmatprep.subr.mxu0 0.0
      %4853 = vmatpush1.msra.mxu0 0.0
      %4854 = vmatprep.subr.mxu0 0.0
      %4855 = vmatpush1.msra.mxu0 0.0
      %4856 = vmatprep.subr.mxu0 0.0
      %4857 = vmatpush1.msra.mxu0 0.0
      %4858 = vmatprep.subr.mxu0 0.0
      %4859 = vmatpush1.msra.mxu0 0.0
      %4860 = vmatprep.subr.mxu0 0.0
      %4861 = vmatpush1.msra.mxu0 0.0
      %4862 = vmatprep.subr.mxu0 0.0
      %4863 = vmatpush1.msra.mxu0 0.0
      %4864 = vmatprep.subr.mxu0 0.0
      %4865 = vmatpush1.msra.mxu0 0.0
      %4866 = vmatprep.subr.mxu0 0.0
      %4867 = vmatpush1.msra.mxu0 %v4469
      %4868 = vmatprep.subr.mxu0 0.0
      %4869 = vmatpush2.msra.mxu0 0.0
      %4870 = vmatprep.subr.mxu0 0.0
      %4871 = vmatpush2.msra.mxu0 0.0
      %4872 = vmatprep.subr.mxu0 0.0
      %4873 = vmatpush2.msra.mxu0 0.0
      %4874 = vmatprep.subr.mxu0 0.0
      %4875 = vmatpush2.msra.mxu0 0.0
      %4876 = vmatprep.subr.mxu0 0.0
      %4877 = vmatpush2.msra.mxu0 0.0
      %4878 = vmatprep.subr.mxu0 0.0
      %4879 = vmatpush2.msra.mxu0 0.0
      %4880 = vmatprep.subr.mxu0 0.0
      %4881 = vmatpush2.msra.mxu0 0.0
      %4882 = vmatprep.subr.mxu0 0.0
      %4883 = vmatpush2.msra.mxu0 0.0
      %4884 = vmatprep.subr.mxu0 0.0
      %4885 = vmatpush2.msra.mxu0 0.0
      %4886 = vmatprep.subr.mxu0 0.0
      %4887 = vmatpush2.msra.mxu0 0.0
      %4888 = vmatprep.subr.mxu0 0.0
      %4889 = vmatpush2.msra.mxu0 0.0
      %4890 = vmatprep.subr.mxu0 0.0
      %4891 = vmatpush2.msra.mxu0 0.0
      %4892 = vmatprep.subr.mxu0 0.0
      %4893 = vmatpush2.msra.mxu0 0.0
      %4894 = vmatprep.subr.mxu0 0.0
      %4895 = vmatpush2.msra.mxu0 0.0
      %4896 = vmatprep.subr.mxu0 0.0
      %4897 = vmatpush2.msra.mxu0 0.0
      %4898 = vmatprep.subr.mxu0 0.0
      %4899 = vmatpush2.msra.mxu0 0.0
      %4900 = vmatprep.mubr.f32.mxu0 0.0
      %4901 = vmatmul.mubr.f32.gmra.mxu0 %v4834
      %v4902 = vpop.f32.mrf.mxu0
      %v4903 = vadd.f32 0.0, %v4902
      %v4904 = vpop.f32.mrf.mxu0
      %4905 = vdwg.mxu0
      %v4907 = vsel %vm250, %v4461, 0
      %4909 = vmatprep.subr.mxu0 0.0
      %4910 = vmatpush1.msra.mxu0 0.0
      %4911 = vmatprep.subr.mxu0 0.0
      %4912 = vmatpush1.msra.mxu0 0.0
      %4913 = vmatprep.subr.mxu0 0.0
      %4914 = vmatpush1.msra.mxu0 0.0
      %4915 = vmatprep.subr.mxu0 0.0
      %4916 = vmatpush1.msra.mxu0 0.0
      %4917 = vmatprep.subr.mxu0 0.0
      %4918 = vmatpush1.msra.mxu0 0.0
      %4919 = vmatprep.subr.mxu0 0.0
      %4920 = vmatpush1.msra.mxu0 0.0
      %4921 = vmatprep.subr.mxu0 0.0
      %4922 = vmatpush1.msra.mxu0 0.0
      %4923 = vmatprep.subr.mxu0 0.0
      %4924 = vmatpush1.msra.mxu0 0.0
      %4925 = vmatprep.subr.mxu0 0.0
      %4926 = vmatpush1.msra.mxu0 0.0
      %4927 = vmatprep.subr.mxu0 0.0
      %4928 = vmatpush1.msra.mxu0 0.0
      %4929 = vmatprep.subr.mxu0 0.0
      %4930 = vmatpush1.msra.mxu0 0.0
      %4931 = vmatprep.subr.mxu0 0.0
      %4932 = vmatpush1.msra.mxu0 0.0
      %4933 = vmatprep.subr.mxu0 0.0
      %4934 = vmatpush1.msra.mxu0 0.0
      %4935 = vmatprep.subr.mxu0 0.0
      %4936 = vmatpush1.msra.mxu0 0.0
      %4937 = vmatprep.subr.mxu0 0.0
      %4938 = vmatpush1.msra.mxu0 0.0
      %4939 = vmatprep.subr.mxu0 0.0
      %4940 = vmatpush1.msra.mxu0 %v4469
      %4941 = vmatprep.subr.mxu0 0.0
      %4942 = vmatpush2.msra.mxu0 0.0
      %4943 = vmatprep.subr.mxu0 0.0
      %4944 = vmatpush2.msra.mxu0 0.0
      %4945 = vmatprep.subr.mxu0 0.0
      %4946 = vmatpush2.msra.mxu0 0.0
      %4947 = vmatprep.subr.mxu0 0.0
      %4948 = vmatpush2.msra.mxu0 0.0
      %4949 = vmatprep.subr.mxu0 0.0
      %4950 = vmatpush2.msra.mxu0 0.0
      %4951 = vmatprep.subr.mxu0 0.0
      %4952 = vmatpush2.msra.mxu0 0.0
      %4953 = vmatprep.subr.mxu0 0.0
      %4954 = vmatpush2.msra.mxu0 0.0
      %4955 = vmatprep.subr.mxu0 0.0
      %4956 = vmatpush2.msra.mxu0 0.0
      %4957 = vmatprep.subr.mxu0 0.0
      %4958 = vmatpush2.msra.mxu0 0.0
      %4959 = vmatprep.subr.mxu0 0.0
      %4960 = vmatpush2.msra.mxu0 0.0
      %4961 = vmatprep.subr.mxu0 0.0
      %4962 = vmatpush2.msra.mxu0 0.0
      %4963 = vmatprep.subr.mxu0 0.0
      %4964 = vmatpush2.msra.mxu0 0.0
      %4965 = vmatprep.subr.mxu0 0.0
      %4966 = vmatpush2.msra.mxu0 0.0
      %4967 = vmatprep.subr.mxu0 0.0
      %4968 = vmatpush2.msra.mxu0 0.0
      %4969 = vmatprep.subr.mxu0 0.0
      %4970 = vmatpush2.msra.mxu0 0.0
      %4971 = vmatprep.subr.mxu0 0.0
      %4972 = vmatpush2.msra.mxu0 0.0
      %4973 = vmatprep.mubr.f32.mxu0 0.0
      %4974 = vmatmul.mubr.f32.gmra.mxu0 %v4907
      %v4975 = vpop.f32.mrf.mxu0
      %v4976 = vadd.f32 0.0, %v4975
      %v4977 = vpop.f32.mrf.mxu0
      %4978 = vdwg.mxu0
      %v4980 = vsel %vm250, %v4462, 0
      %4982 = vmatprep.subr.mxu0 0.0
      %4983 = vmatpush1.msra.mxu0 0.0
      %4984 = vmatprep.subr.mxu0 0.0
      %4985 = vmatpush1.msra.mxu0 0.0
      %4986 = vmatprep.subr.mxu0 0.0
      %4987 = vmatpush1.msra.mxu0 0.0
      %4988 = vmatprep.subr.mxu0 0.0
      %4989 = vmatpush1.msra.mxu0 0.0
      %4990 = vmatprep.subr.mxu0 0.0
      %4991 = vmatpush1.msra.mxu0 0.0
      %4992 = vmatprep.subr.mxu0 0.0
      %4993 = vmatpush1.msra.mxu0 0.0
      %4994 = vmatprep.subr.mxu0 0.0
      %4995 = vmatpush1.msra.mxu0 0.0
      %4996 = vmatprep.subr.mxu0 0.0
      %4997 = vmatpush1.msra.mxu0 0.0
      %4998 = vmatprep.subr.mxu0 0.0
      %4999 = vmatpush1.msra.mxu0 0.0
      %5000 = vmatprep.subr.mxu0 0.0
      %5001 = vmatpush1.msra.mxu0 0.0
      %5002 = vmatprep.subr.mxu0 0.0
      %5003 = vmatpush1.msra.mxu0 0.0
      %5004 = vmatprep.subr.mxu0 0.0
      %5005 = vmatpush1.msra.mxu0 0.0
      %5006 = vmatprep.subr.mxu0 0.0
      %5007 = vmatpush1.msra.mxu0 0.0
      %5008 = vmatprep.subr.mxu0 0.0
      %5009 = vmatpush1.msra.mxu0 0.0
      %5010 = vmatprep.subr.mxu0 0.0
      %5011 = vmatpush1.msra.mxu0 0.0
      %5012 = vmatprep.subr.mxu0 0.0
      %5013 = vmatpush1.msra.mxu0 %v4469
      %5014 = vmatprep.subr.mxu0 0.0
      %5015 = vmatpush2.msra.mxu0 0.0
      %5016 = vmatprep.subr.mxu0 0.0
      %5017 = vmatpush2.msra.mxu0 0.0
      %5018 = vmatprep.subr.mxu0 0.0
      %5019 = vmatpush2.msra.mxu0 0.0
      %5020 = vmatprep.subr.mxu0 0.0
      %5021 = vmatpush2.msra.mxu0 0.0
      %5022 = vmatprep.subr.mxu0 0.0
      %5023 = vmatpush2.msra.mxu0 0.0
      %5024 = vmatprep.subr.mxu0 0.0
      %5025 = vmatpush2.msra.mxu0 0.0
      %5026 = vmatprep.subr.mxu0 0.0
      %5027 = vmatpush2.msra.mxu0 0.0
      %5028 = vmatprep.subr.mxu0 0.0
      %5029 = vmatpush2.msra.mxu0 0.0
      %5030 = vmatprep.subr.mxu0 0.0
      %5031 = vmatpush2.msra.mxu0 0.0
      %5032 = vmatprep.subr.mxu0 0.0
      %5033 = vmatpush2.msra.mxu0 0.0
      %5034 = vmatprep.subr.mxu0 0.0
      %5035 = vmatpush2.msra.mxu0 0.0
      %5036 = vmatprep.subr.mxu0 0.0
      %5037 = vmatpush2.msra.mxu0 0.0
      %5038 = vmatprep.subr.mxu0 0.0
      %5039 = vmatpush2.msra.mxu0 0.0
      %5040 = vmatprep.subr.mxu0 0.0
      %5041 = vmatpush2.msra.mxu0 0.0
      %5042 = vmatprep.subr.mxu0 0.0
      %5043 = vmatpush2.msra.mxu0 0.0
      %5044 = vmatprep.subr.mxu0 0.0
      %5045 = vmatpush2.msra.mxu0 0.0
      %5046 = vmatprep.mubr.f32.mxu0 0.0
      %5047 = vmatmul.mubr.f32.gmra.mxu0 %v4980
      %v5048 = vpop.f32.mrf.mxu0
      %v5049 = vadd.f32 0.0, %v5048
      %v5050 = vpop.f32.mrf.mxu0
      %5051 = vdwg.mxu0
      %v5052 = vadd.f32 %v4446, %v4538
      %v5053 = vadd.f32 %v4447, %v4611
      %v5054 = vadd.f32 %v4448, %v4684
      %v5055 = vadd.f32 %v4449, %v4757
      %v5056 = vadd.f32 %v4450, %v4830
      %v5057 = vadd.f32 %v4451, %v4903
      %v5058 = vadd.f32 %v4452, %v4976
      %v5059 = vadd.f32 %v4453, %v5049
      %v5060 = vld [vmem:[%s3848 + $0x1] sm:$0xff]
      %v5061 = vld [vmem:[%s3848 + $0x11] sm:$0xff]
      %v5062 = vld [vmem:[%s3848 + $0x21] sm:$0xff]
      %v5063 = vld [vmem:[%s3848 + $0x31] sm:$0xff]
      %v5064 = vld [vmem:[%s3848 + $0x41] sm:$0xff]
      %v5065 = vld [vmem:[%s3848 + $0x51] sm:$0xff]
      %v5066 = vld [vmem:[%s3848 + $0x61] sm:$0xff]
      %v5067 = vld [vmem:[%s3848 + $0x71] sm:$0xff]
      %s5068 = scalar_lea.vmem %s1, 32
      %v5069 = vld [vmem:[%s5068] sm:$0xf]
      %v5071 = vsel %vm250, %v5060, 0
      %v5074 = vsel %vm254, %v5069, 0
      %5076 = vmatprep.subr.mxu0 0.0
      %5077 = vmatpush1.msra.mxu0 0.0
      %5078 = vmatprep.subr.mxu0 0.0
      %5079 = vmatpush1.msra.mxu0 0.0
      %5080 = vmatprep.subr.mxu0 0.0
      %5081 = vmatpush1.msra.mxu0 0.0
      %5082 = vmatprep.subr.mxu0 0.0
      %5083 = vmatpush1.msra.mxu0 0.0
      %5084 = vmatprep.subr.mxu0 0.0
      %5085 = vmatpush1.msra.mxu0 0.0
      %5086 = vmatprep.subr.mxu0 0.0
      %5087 = vmatpush1.msra.mxu0 0.0
      %5088 = vmatprep.subr.mxu0 0.0
      %5089 = vmatpush1.msra.mxu0 0.0
      %5090 = vmatprep.subr.mxu0 0.0
      %5091 = vmatpush1.msra.mxu0 0.0
      %5092 = vmatprep.subr.mxu0 0.0
      %5093 = vmatpush1.msra.mxu0 0.0
      %5094 = vmatprep.subr.mxu0 0.0
      %5095 = vmatpush1.msra.mxu0 0.0
      %5096 = vmatprep.subr.mxu0 0.0
      %5097 = vmatpush1.msra.mxu0 0.0
      %5098 = vmatprep.subr.mxu0 0.0
      %5099 = vmatpush1.msra.mxu0 0.0
      %5100 = vmatprep.subr.mxu0 0.0
      %5101 = vmatpush1.msra.mxu0 0.0
      %5102 = vmatprep.subr.mxu0 0.0
      %5103 = vmatpush1.msra.mxu0 0.0
      %5104 = vmatprep.subr.mxu0 0.0
      %5105 = vmatpush1.msra.mxu0 0.0
      %5106 = vmatprep.subr.mxu0 0.0
      %5107 = vmatpush1.msra.mxu0 %v5074
      %5108 = vmatprep.subr.mxu0 0.0
      %5109 = vmatpush2.msra.mxu0 0.0
      %5110 = vmatprep.subr.mxu0 0.0
      %5111 = vmatpush2.msra.mxu0 0.0
      %5112 = vmatprep.subr.mxu0 0.0
      %5113 = vmatpush2.msra.mxu0 0.0
      %5114 = vmatprep.subr.mxu0 0.0
      %5115 = vmatpush2.msra.mxu0 0.0
      %5116 = vmatprep.subr.mxu0 0.0
      %5117 = vmatpush2.msra.mxu0 0.0
      %5118 = vmatprep.subr.mxu0 0.0
      %5119 = vmatpush2.msra.mxu0 0.0
      %5120 = vmatprep.subr.mxu0 0.0
      %5121 = vmatpush2.msra.mxu0 0.0
      %5122 = vmatprep.subr.mxu0 0.0
      %5123 = vmatpush2.msra.mxu0 0.0
      %5124 = vmatprep.subr.mxu0 0.0
      %5125 = vmatpush2.msra.mxu0 0.0
      %5126 = vmatprep.subr.mxu0 0.0
      %5127 = vmatpush2.msra.mxu0 0.0
      %5128 = vmatprep.subr.mxu0 0.0
      %5129 = vmatpush2.msra.mxu0 0.0
      %5130 = vmatprep.subr.mxu0 0.0
      %5131 = vmatpush2.msra.mxu0 0.0
      %5132 = vmatprep.subr.mxu0 0.0
      %5133 = vmatpush2.msra.mxu0 0.0
      %5134 = vmatprep.subr.mxu0 0.0
      %5135 = vmatpush2.msra.mxu0 0.0
      %5136 = vmatprep.subr.mxu0 0.0
      %5137 = vmatpush2.msra.mxu0 0.0
      %5138 = vmatprep.subr.mxu0 0.0
      %5139 = vmatpush2.msra.mxu0 0.0
      %5140 = vmatprep.mubr.f32.mxu0 0.0
      %5141 = vmatmul.mubr.f32.gmra.mxu0 %v5071
      %v5142 = vpop.f32.mrf.mxu0
      %v5143 = vadd.f32 0.0, %v5142
      %v5144 = vpop.f32.mrf.mxu0
      %5145 = vdwg.mxu0
      %v5147 = vsel %vm250, %v5061, 0
      %5149 = vmatprep.subr.mxu0 0.0
      %5150 = vmatpush1.msra.mxu0 0.0
      %5151 = vmatprep.subr.mxu0 0.0
      %5152 = vmatpush1.msra.mxu0 0.0
      %5153 = vmatprep.subr.mxu0 0.0
      %5154 = vmatpush1.msra.mxu0 0.0
      %5155 = vmatprep.subr.mxu0 0.0
      %5156 = vmatpush1.msra.mxu0 0.0
      %5157 = vmatprep.subr.mxu0 0.0
      %5158 = vmatpush1.msra.mxu0 0.0
      %5159 = vmatprep.subr.mxu0 0.0
      %5160 = vmatpush1.msra.mxu0 0.0
      %5161 = vmatprep.subr.mxu0 0.0
      %5162 = vmatpush1.msra.mxu0 0.0
      %5163 = vmatprep.subr.mxu0 0.0
      %5164 = vmatpush1.msra.mxu0 0.0
      %5165 = vmatprep.subr.mxu0 0.0
      %5166 = vmatpush1.msra.mxu0 0.0
      %5167 = vmatprep.subr.mxu0 0.0
      %5168 = vmatpush1.msra.mxu0 0.0
      %5169 = vmatprep.subr.mxu0 0.0
      %5170 = vmatpush1.msra.mxu0 0.0
      %5171 = vmatprep.subr.mxu0 0.0
      %5172 = vmatpush1.msra.mxu0 0.0
      %5173 = vmatprep.subr.mxu0 0.0
      %5174 = vmatpush1.msra.mxu0 0.0
      %5175 = vmatprep.subr.mxu0 0.0
      %5176 = vmatpush1.msra.mxu0 0.0
      %5177 = vmatprep.subr.mxu0 0.0
      %5178 = vmatpush1.msra.mxu0 0.0
      %5179 = vmatprep.subr.mxu0 0.0
      %5180 = vmatpush1.msra.mxu0 %v5074
      %5181 = vmatprep.subr.mxu0 0.0
      %5182 = vmatpush2.msra.mxu0 0.0
      %5183 = vmatprep.subr.mxu0 0.0
      %5184 = vmatpush2.msra.mxu0 0.0
      %5185 = vmatprep.subr.mxu0 0.0
      %5186 = vmatpush2.msra.mxu0 0.0
      %5187 = vmatprep.subr.mxu0 0.0
      %5188 = vmatpush2.msra.mxu0 0.0
      %5189 = vmatprep.subr.mxu0 0.0
      %5190 = vmatpush2.msra.mxu0 0.0
      %5191 = vmatprep.subr.mxu0 0.0
      %5192 = vmatpush2.msra.mxu0 0.0
      %5193 = vmatprep.subr.mxu0 0.0
      %5194 = vmatpush2.msra.mxu0 0.0
      %5195 = vmatprep.subr.mxu0 0.0
      %5196 = vmatpush2.msra.mxu0 0.0
      %5197 = vmatprep.subr.mxu0 0.0
      %5198 = vmatpush2.msra.mxu0 0.0
      %5199 = vmatprep.subr.mxu0 0.0
      %5200 = vmatpush2.msra.mxu0 0.0
      %5201 = vmatprep.subr.mxu0 0.0
      %5202 = vmatpush2.msra.mxu0 0.0
      %5203 = vmatprep.subr.mxu0 0.0
      %5204 = vmatpush2.msra.mxu0 0.0
      %5205 = vmatprep.subr.mxu0 0.0
      %5206 = vmatpush2.msra.mxu0 0.0
      %5207 = vmatprep.subr.mxu0 0.0
      %5208 = vmatpush2.msra.mxu0 0.0
      %5209 = vmatprep.subr.mxu0 0.0
      %5210 = vmatpush2.msra.mxu0 0.0
      %5211 = vmatprep.subr.mxu0 0.0
      %5212 = vmatpush2.msra.mxu0 0.0
      %5213 = vmatprep.mubr.f32.mxu0 0.0
      %5214 = vmatmul.mubr.f32.gmra.mxu0 %v5147
      %v5215 = vpop.f32.mrf.mxu0
      %v5216 = vadd.f32 0.0, %v5215
      %v5217 = vpop.f32.mrf.mxu0
      %5218 = vdwg.mxu0
      %v5220 = vsel %vm250, %v5062, 0
      %5222 = vmatprep.subr.mxu0 0.0
      %5223 = vmatpush1.msra.mxu0 0.0
      %5224 = vmatprep.subr.mxu0 0.0
      %5225 = vmatpush1.msra.mxu0 0.0
      %5226 = vmatprep.subr.mxu0 0.0
      %5227 = vmatpush1.msra.mxu0 0.0
      %5228 = vmatprep.subr.mxu0 0.0
      %5229 = vmatpush1.msra.mxu0 0.0
      %5230 = vmatprep.subr.mxu0 0.0
      %5231 = vmatpush1.msra.mxu0 0.0
      %5232 = vmatprep.subr.mxu0 0.0
      %5233 = vmatpush1.msra.mxu0 0.0
      %5234 = vmatprep.subr.mxu0 0.0
      %5235 = vmatpush1.msra.mxu0 0.0
      %5236 = vmatprep.subr.mxu0 0.0
      %5237 = vmatpush1.msra.mxu0 0.0
      %5238 = vmatprep.subr.mxu0 0.0
      %5239 = vmatpush1.msra.mxu0 0.0
      %5240 = vmatprep.subr.mxu0 0.0
      %5241 = vmatpush1.msra.mxu0 0.0
      %5242 = vmatprep.subr.mxu0 0.0
      %5243 = vmatpush1.msra.mxu0 0.0
      %5244 = vmatprep.subr.mxu0 0.0
      %5245 = vmatpush1.msra.mxu0 0.0
      %5246 = vmatprep.subr.mxu0 0.0
      %5247 = vmatpush1.msra.mxu0 0.0
      %5248 = vmatprep.subr.mxu0 0.0
      %5249 = vmatpush1.msra.mxu0 0.0
      %5250 = vmatprep.subr.mxu0 0.0
      %5251 = vmatpush1.msra.mxu0 0.0
      %5252 = vmatprep.subr.mxu0 0.0
      %5253 = vmatpush1.msra.mxu0 %v5074
      %5254 = vmatprep.subr.mxu0 0.0
      %5255 = vmatpush2.msra.mxu0 0.0
      %5256 = vmatprep.subr.mxu0 0.0
      %5257 = vmatpush2.msra.mxu0 0.0
      %5258 = vmatprep.subr.mxu0 0.0
      %5259 = vmatpush2.msra.mxu0 0.0
      %5260 = vmatprep.subr.mxu0 0.0
      %5261 = vmatpush2.msra.mxu0 0.0
      %5262 = vmatprep.subr.mxu0 0.0
      %5263 = vmatpush2.msra.mxu0 0.0
      %5264 = vmatprep.subr.mxu0 0.0
      %5265 = vmatpush2.msra.mxu0 0.0
      %5266 = vmatprep.subr.mxu0 0.0
      %5267 = vmatpush2.msra.mxu0 0.0
      %5268 = vmatprep.subr.mxu0 0.0
      %5269 = vmatpush2.msra.mxu0 0.0
      %5270 = vmatprep.subr.mxu0 0.0
      %5271 = vmatpush2.msra.mxu0 0.0
      %5272 = vmatprep.subr.mxu0 0.0
      %5273 = vmatpush2.msra.mxu0 0.0
      %5274 = vmatprep.subr.mxu0 0.0
      %5275 = vmatpush2.msra.mxu0 0.0
      %5276 = vmatprep.subr.mxu0 0.0
      %5277 = vmatpush2.msra.mxu0 0.0
      %5278 = vmatprep.subr.mxu0 0.0
      %5279 = vmatpush2.msra.mxu0 0.0
      %5280 = vmatprep.subr.mxu0 0.0
      %5281 = vmatpush2.msra.mxu0 0.0
      %5282 = vmatprep.subr.mxu0 0.0
      %5283 = vmatpush2.msra.mxu0 0.0
      %5284 = vmatprep.subr.mxu0 0.0
      %5285 = vmatpush2.msra.mxu0 0.0
      %5286 = vmatprep.mubr.f32.mxu0 0.0
      %5287 = vmatmul.mubr.f32.gmra.mxu0 %v5220
      %v5288 = vpop.f32.mrf.mxu0
      %v5289 = vadd.f32 0.0, %v5288
      %v5290 = vpop.f32.mrf.mxu0
      %5291 = vdwg.mxu0
      %v5293 = vsel %vm250, %v5063, 0
      %5295 = vmatprep.subr.mxu0 0.0
      %5296 = vmatpush1.msra.mxu0 0.0
      %5297 = vmatprep.subr.mxu0 0.0
      %5298 = vmatpush1.msra.mxu0 0.0
      %5299 = vmatprep.subr.mxu0 0.0
      %5300 = vmatpush1.msra.mxu0 0.0
      %5301 = vmatprep.subr.mxu0 0.0
      %5302 = vmatpush1.msra.mxu0 0.0
      %5303 = vmatprep.subr.mxu0 0.0
      %5304 = vmatpush1.msra.mxu0 0.0
      %5305 = vmatprep.subr.mxu0 0.0
      %5306 = vmatpush1.msra.mxu0 0.0
      %5307 = vmatprep.subr.mxu0 0.0
      %5308 = vmatpush1.msra.mxu0 0.0
      %5309 = vmatprep.subr.mxu0 0.0
      %5310 = vmatpush1.msra.mxu0 0.0
      %5311 = vmatprep.subr.mxu0 0.0
      %5312 = vmatpush1.msra.mxu0 0.0
      %5313 = vmatprep.subr.mxu0 0.0
      %5314 = vmatpush1.msra.mxu0 0.0
      %5315 = vmatprep.subr.mxu0 0.0
      %5316 = vmatpush1.msra.mxu0 0.0
      %5317 = vmatprep.subr.mxu0 0.0
      %5318 = vmatpush1.msra.mxu0 0.0
      %5319 = vmatprep.subr.mxu0 0.0
      %5320 = vmatpush1.msra.mxu0 0.0
      %5321 = vmatprep.subr.mxu0 0.0
      %5322 = vmatpush1.msra.mxu0 0.0
      %5323 = vmatprep.subr.mxu0 0.0
      %5324 = vmatpush1.msra.mxu0 0.0
      %5325 = vmatprep.subr.mxu0 0.0
      %5326 = vmatpush1.msra.mxu0 %v5074
      %5327 = vmatprep.subr.mxu0 0.0
      %5328 = vmatpush2.msra.mxu0 0.0
      %5329 = vmatprep.subr.mxu0 0.0
      %5330 = vmatpush2.msra.mxu0 0.0
      %5331 = vmatprep.subr.mxu0 0.0
      %5332 = vmatpush2.msra.mxu0 0.0
      %5333 = vmatprep.subr.mxu0 0.0
      %5334 = vmatpush2.msra.mxu0 0.0
      %5335 = vmatprep.subr.mxu0 0.0
      %5336 = vmatpush2.msra.mxu0 0.0
      %5337 = vmatprep.subr.mxu0 0.0
      %5338 = vmatpush2.msra.mxu0 0.0
      %5339 = vmatprep.subr.mxu0 0.0
      %5340 = vmatpush2.msra.mxu0 0.0
      %5341 = vmatprep.subr.mxu0 0.0
      %5342 = vmatpush2.msra.mxu0 0.0
      %5343 = vmatprep.subr.mxu0 0.0
      %5344 = vmatpush2.msra.mxu0 0.0
      %5345 = vmatprep.subr.mxu0 0.0
      %5346 = vmatpush2.msra.mxu0 0.0
      %5347 = vmatprep.subr.mxu0 0.0
      %5348 = vmatpush2.msra.mxu0 0.0
      %5349 = vmatprep.subr.mxu0 0.0
      %5350 = vmatpush2.msra.mxu0 0.0
      %5351 = vmatprep.subr.mxu0 0.0
      %5352 = vmatpush2.msra.mxu0 0.0
      %5353 = vmatprep.subr.mxu0 0.0
      %5354 = vmatpush2.msra.mxu0 0.0
      %5355 = vmatprep.subr.mxu0 0.0
      %5356 = vmatpush2.msra.mxu0 0.0
      %5357 = vmatprep.subr.mxu0 0.0
      %5358 = vmatpush2.msra.mxu0 0.0
      %5359 = vmatprep.mubr.f32.mxu0 0.0
      %5360 = vmatmul.mubr.f32.gmra.mxu0 %v5293
      %v5361 = vpop.f32.mrf.mxu0
      %v5362 = vadd.f32 0.0, %v5361
      %v5363 = vpop.f32.mrf.mxu0
      %5364 = vdwg.mxu0
      %v5366 = vsel %vm250, %v5064, 0
      %5368 = vmatprep.subr.mxu0 0.0
      %5369 = vmatpush1.msra.mxu0 0.0
      %5370 = vmatprep.subr.mxu0 0.0
      %5371 = vmatpush1.msra.mxu0 0.0
      %5372 = vmatprep.subr.mxu0 0.0
      %5373 = vmatpush1.msra.mxu0 0.0
      %5374 = vmatprep.subr.mxu0 0.0
      %5375 = vmatpush1.msra.mxu0 0.0
      %5376 = vmatprep.subr.mxu0 0.0
      %5377 = vmatpush1.msra.mxu0 0.0
      %5378 = vmatprep.subr.mxu0 0.0
      %5379 = vmatpush1.msra.mxu0 0.0
      %5380 = vmatprep.subr.mxu0 0.0
      %5381 = vmatpush1.msra.mxu0 0.0
      %5382 = vmatprep.subr.mxu0 0.0
      %5383 = vmatpush1.msra.mxu0 0.0
      %5384 = vmatprep.subr.mxu0 0.0
      %5385 = vmatpush1.msra.mxu0 0.0
      %5386 = vmatprep.subr.mxu0 0.0
      %5387 = vmatpush1.msra.mxu0 0.0
      %5388 = vmatprep.subr.mxu0 0.0
      %5389 = vmatpush1.msra.mxu0 0.0
      %5390 = vmatprep.subr.mxu0 0.0
      %5391 = vmatpush1.msra.mxu0 0.0
      %5392 = vmatprep.subr.mxu0 0.0
      %5393 = vmatpush1.msra.mxu0 0.0
      %5394 = vmatprep.subr.mxu0 0.0
      %5395 = vmatpush1.msra.mxu0 0.0
      %5396 = vmatprep.subr.mxu0 0.0
      %5397 = vmatpush1.msra.mxu0 0.0
      %5398 = vmatprep.subr.mxu0 0.0
      %5399 = vmatpush1.msra.mxu0 %v5074
      %5400 = vmatprep.subr.mxu0 0.0
      %5401 = vmatpush2.msra.mxu0 0.0
      %5402 = vmatprep.subr.mxu0 0.0
      %5403 = vmatpush2.msra.mxu0 0.0
      %5404 = vmatprep.subr.mxu0 0.0
      %5405 = vmatpush2.msra.mxu0 0.0
      %5406 = vmatprep.subr.mxu0 0.0
      %5407 = vmatpush2.msra.mxu0 0.0
      %5408 = vmatprep.subr.mxu0 0.0
      %5409 = vmatpush2.msra.mxu0 0.0
      %5410 = vmatprep.subr.mxu0 0.0
      %5411 = vmatpush2.msra.mxu0 0.0
      %5412 = vmatprep.subr.mxu0 0.0
      %5413 = vmatpush2.msra.mxu0 0.0
      %5414 = vmatprep.subr.mxu0 0.0
      %5415 = vmatpush2.msra.mxu0 0.0
      %5416 = vmatprep.subr.mxu0 0.0
      %5417 = vmatpush2.msra.mxu0 0.0
      %5418 = vmatprep.subr.mxu0 0.0
      %5419 = vmatpush2.msra.mxu0 0.0
      %5420 = vmatprep.subr.mxu0 0.0
      %5421 = vmatpush2.msra.mxu0 0.0
      %5422 = vmatprep.subr.mxu0 0.0
      %5423 = vmatpush2.msra.mxu0 0.0
      %5424 = vmatprep.subr.mxu0 0.0
      %5425 = vmatpush2.msra.mxu0 0.0
      %5426 = vmatprep.subr.mxu0 0.0
      %5427 = vmatpush2.msra.mxu0 0.0
      %5428 = vmatprep.subr.mxu0 0.0
      %5429 = vmatpush2.msra.mxu0 0.0
      %5430 = vmatprep.subr.mxu0 0.0
      %5431 = vmatpush2.msra.mxu0 0.0
      %5432 = vmatprep.mubr.f32.mxu0 0.0
      %5433 = vmatmul.mubr.f32.gmra.mxu0 %v5366
      %v5434 = vpop.f32.mrf.mxu0
      %v5435 = vadd.f32 0.0, %v5434
      %v5436 = vpop.f32.mrf.mxu0
      %5437 = vdwg.mxu0
      %v5439 = vsel %vm250, %v5065, 0
      %5441 = vmatprep.subr.mxu0 0.0
      %5442 = vmatpush1.msra.mxu0 0.0
      %5443 = vmatprep.subr.mxu0 0.0
      %5444 = vmatpush1.msra.mxu0 0.0
      %5445 = vmatprep.subr.mxu0 0.0
      %5446 = vmatpush1.msra.mxu0 0.0
      %5447 = vmatprep.subr.mxu0 0.0
      %5448 = vmatpush1.msra.mxu0 0.0
      %5449 = vmatprep.subr.mxu0 0.0
      %5450 = vmatpush1.msra.mxu0 0.0
      %5451 = vmatprep.subr.mxu0 0.0
      %5452 = vmatpush1.msra.mxu0 0.0
      %5453 = vmatprep.subr.mxu0 0.0
      %5454 = vmatpush1.msra.mxu0 0.0
      %5455 = vmatprep.subr.mxu0 0.0
      %5456 = vmatpush1.msra.mxu0 0.0
      %5457 = vmatprep.subr.mxu0 0.0
      %5458 = vmatpush1.msra.mxu0 0.0
      %5459 = vmatprep.subr.mxu0 0.0
      %5460 = vmatpush1.msra.mxu0 0.0
      %5461 = vmatprep.subr.mxu0 0.0
      %5462 = vmatpush1.msra.mxu0 0.0
      %5463 = vmatprep.subr.mxu0 0.0
      %5464 = vmatpush1.msra.mxu0 0.0
      %5465 = vmatprep.subr.mxu0 0.0
      %5466 = vmatpush1.msra.mxu0 0.0
      %5467 = vmatprep.subr.mxu0 0.0
      %5468 = vmatpush1.msra.mxu0 0.0
      %5469 = vmatprep.subr.mxu0 0.0
      %5470 = vmatpush1.msra.mxu0 0.0
      %5471 = vmatprep.subr.mxu0 0.0
      %5472 = vmatpush1.msra.mxu0 %v5074
      %5473 = vmatprep.subr.mxu0 0.0
      %5474 = vmatpush2.msra.mxu0 0.0
      %5475 = vmatprep.subr.mxu0 0.0
      %5476 = vmatpush2.msra.mxu0 0.0
      %5477 = vmatprep.subr.mxu0 0.0
      %5478 = vmatpush2.msra.mxu0 0.0
      %5479 = vmatprep.subr.mxu0 0.0
      %5480 = vmatpush2.msra.mxu0 0.0
      %5481 = vmatprep.subr.mxu0 0.0
      %5482 = vmatpush2.msra.mxu0 0.0
      %5483 = vmatprep.subr.mxu0 0.0
      %5484 = vmatpush2.msra.mxu0 0.0
      %5485 = vmatprep.subr.mxu0 0.0
      %5486 = vmatpush2.msra.mxu0 0.0
      %5487 = vmatprep.subr.mxu0 0.0
      %5488 = vmatpush2.msra.mxu0 0.0
      %5489 = vmatprep.subr.mxu0 0.0
      %5490 = vmatpush2.msra.mxu0 0.0
      %5491 = vmatprep.subr.mxu0 0.0
      %5492 = vmatpush2.msra.mxu0 0.0
      %5493 = vmatprep.subr.mxu0 0.0
      %5494 = vmatpush2.msra.mxu0 0.0
      %5495 = vmatprep.subr.mxu0 0.0
      %5496 = vmatpush2.msra.mxu0 0.0
      %5497 = vmatprep.subr.mxu0 0.0
      %5498 = vmatpush2.msra.mxu0 0.0
      %5499 = vmatprep.subr.mxu0 0.0
      %5500 = vmatpush2.msra.mxu0 0.0
      %5501 = vmatprep.subr.mxu0 0.0
      %5502 = vmatpush2.msra.mxu0 0.0
      %5503 = vmatprep.subr.mxu0 0.0
      %5504 = vmatpush2.msra.mxu0 0.0
      %5505 = vmatprep.mubr.f32.mxu0 0.0
      %5506 = vmatmul.mubr.f32.gmra.mxu0 %v5439
      %v5507 = vpop.f32.mrf.mxu0
      %v5508 = vadd.f32 0.0, %v5507
      %v5509 = vpop.f32.mrf.mxu0
      %5510 = vdwg.mxu0
      %v5512 = vsel %vm250, %v5066, 0
      %5514 = vmatprep.subr.mxu0 0.0
      %5515 = vmatpush1.msra.mxu0 0.0
      %5516 = vmatprep.subr.mxu0 0.0
      %5517 = vmatpush1.msra.mxu0 0.0
      %5518 = vmatprep.subr.mxu0 0.0
      %5519 = vmatpush1.msra.mxu0 0.0
      %5520 = vmatprep.subr.mxu0 0.0
      %5521 = vmatpush1.msra.mxu0 0.0
      %5522 = vmatprep.subr.mxu0 0.0
      %5523 = vmatpush1.msra.mxu0 0.0
      %5524 = vmatprep.subr.mxu0 0.0
      %5525 = vmatpush1.msra.mxu0 0.0
      %5526 = vmatprep.subr.mxu0 0.0
      %5527 = vmatpush1.msra.mxu0 0.0
      %5528 = vmatprep.subr.mxu0 0.0
      %5529 = vmatpush1.msra.mxu0 0.0
      %5530 = vmatprep.subr.mxu0 0.0
      %5531 = vmatpush1.msra.mxu0 0.0
      %5532 = vmatprep.subr.mxu0 0.0
      %5533 = vmatpush1.msra.mxu0 0.0
      %5534 = vmatprep.subr.mxu0 0.0
      %5535 = vmatpush1.msra.mxu0 0.0
      %5536 = vmatprep.subr.mxu0 0.0
      %5537 = vmatpush1.msra.mxu0 0.0
      %5538 = vmatprep.subr.mxu0 0.0
      %5539 = vmatpush1.msra.mxu0 0.0
      %5540 = vmatprep.subr.mxu0 0.0
      %5541 = vmatpush1.msra.mxu0 0.0
      %5542 = vmatprep.subr.mxu0 0.0
      %5543 = vmatpush1.msra.mxu0 0.0
      %5544 = vmatprep.subr.mxu0 0.0
      %5545 = vmatpush1.msra.mxu0 %v5074
      %5546 = vmatprep.subr.mxu0 0.0
      %5547 = vmatpush2.msra.mxu0 0.0
      %5548 = vmatprep.subr.mxu0 0.0
      %5549 = vmatpush2.msra.mxu0 0.0
      %5550 = vmatprep.subr.mxu0 0.0
      %5551 = vmatpush2.msra.mxu0 0.0
      %5552 = vmatprep.subr.mxu0 0.0
      %5553 = vmatpush2.msra.mxu0 0.0
      %5554 = vmatprep.subr.mxu0 0.0
      %5555 = vmatpush2.msra.mxu0 0.0
      %5556 = vmatprep.subr.mxu0 0.0
      %5557 = vmatpush2.msra.mxu0 0.0
      %5558 = vmatprep.subr.mxu0 0.0
      %5559 = vmatpush2.msra.mxu0 0.0
      %5560 = vmatprep.subr.mxu0 0.0
      %5561 = vmatpush2.msra.mxu0 0.0
      %5562 = vmatprep.subr.mxu0 0.0
      %5563 = vmatpush2.msra.mxu0 0.0
      %5564 = vmatprep.subr.mxu0 0.0
      %5565 = vmatpush2.msra.mxu0 0.0
      %5566 = vmatprep.subr.mxu0 0.0
      %5567 = vmatpush2.msra.mxu0 0.0
      %5568 = vmatprep.subr.mxu0 0.0
      %5569 = vmatpush2.msra.mxu0 0.0
      %5570 = vmatprep.subr.mxu0 0.0
      %5571 = vmatpush2.msra.mxu0 0.0
      %5572 = vmatprep.subr.mxu0 0.0
      %5573 = vmatpush2.msra.mxu0 0.0
      %5574 = vmatprep.subr.mxu0 0.0
      %5575 = vmatpush2.msra.mxu0 0.0
      %5576 = vmatprep.subr.mxu0 0.0
      %5577 = vmatpush2.msra.mxu0 0.0
      %5578 = vmatprep.mubr.f32.mxu0 0.0
      %5579 = vmatmul.mubr.f32.gmra.mxu0 %v5512
      %v5580 = vpop.f32.mrf.mxu0
      %v5581 = vadd.f32 0.0, %v5580
      %v5582 = vpop.f32.mrf.mxu0
      %5583 = vdwg.mxu0
      %v5585 = vsel %vm250, %v5067, 0
      %5587 = vmatprep.subr.mxu0 0.0
      %5588 = vmatpush1.msra.mxu0 0.0
      %5589 = vmatprep.subr.mxu0 0.0
      %5590 = vmatpush1.msra.mxu0 0.0
      %5591 = vmatprep.subr.mxu0 0.0
      %5592 = vmatpush1.msra.mxu0 0.0
      %5593 = vmatprep.subr.mxu0 0.0
      %5594 = vmatpush1.msra.mxu0 0.0
      %5595 = vmatprep.subr.mxu0 0.0
      %5596 = vmatpush1.msra.mxu0 0.0
      %5597 = vmatprep.subr.mxu0 0.0
      %5598 = vmatpush1.msra.mxu0 0.0
      %5599 = vmatprep.subr.mxu0 0.0
      %5600 = vmatpush1.msra.mxu0 0.0
      %5601 = vmatprep.subr.mxu0 0.0
      %5602 = vmatpush1.msra.mxu0 0.0
      %5603 = vmatprep.subr.mxu0 0.0
      %5604 = vmatpush1.msra.mxu0 0.0
      %5605 = vmatprep.subr.mxu0 0.0
      %5606 = vmatpush1.msra.mxu0 0.0
      %5607 = vmatprep.subr.mxu0 0.0
      %5608 = vmatpush1.msra.mxu0 0.0
      %5609 = vmatprep.subr.mxu0 0.0
      %5610 = vmatpush1.msra.mxu0 0.0
      %5611 = vmatprep.subr.mxu0 0.0
      %5612 = vmatpush1.msra.mxu0 0.0
      %5613 = vmatprep.subr.mxu0 0.0
      %5614 = vmatpush1.msra.mxu0 0.0
      %5615 = vmatprep.subr.mxu0 0.0
      %5616 = vmatpush1.msra.mxu0 0.0
      %5617 = vmatprep.subr.mxu0 0.0
      %5618 = vmatpush1.msra.mxu0 %v5074
      %5619 = vmatprep.subr.mxu0 0.0
      %5620 = vmatpush2.msra.mxu0 0.0
      %5621 = vmatprep.subr.mxu0 0.0
      %5622 = vmatpush2.msra.mxu0 0.0
      %5623 = vmatprep.subr.mxu0 0.0
      %5624 = vmatpush2.msra.mxu0 0.0
      %5625 = vmatprep.subr.mxu0 0.0
      %5626 = vmatpush2.msra.mxu0 0.0
      %5627 = vmatprep.subr.mxu0 0.0
      %5628 = vmatpush2.msra.mxu0 0.0
      %5629 = vmatprep.subr.mxu0 0.0
      %5630 = vmatpush2.msra.mxu0 0.0
      %5631 = vmatprep.subr.mxu0 0.0
      %5632 = vmatpush2.msra.mxu0 0.0
      %5633 = vmatprep.subr.mxu0 0.0
      %5634 = vmatpush2.msra.mxu0 0.0
      %5635 = vmatprep.subr.mxu0 0.0
      %5636 = vmatpush2.msra.mxu0 0.0
      %5637 = vmatprep.subr.mxu0 0.0
      %5638 = vmatpush2.msra.mxu0 0.0
      %5639 = vmatprep.subr.mxu0 0.0
      %5640 = vmatpush2.msra.mxu0 0.0
      %5641 = vmatprep.subr.mxu0 0.0
      %5642 = vmatpush2.msra.mxu0 0.0
      %5643 = vmatprep.subr.mxu0 0.0
      %5644 = vmatpush2.msra.mxu0 0.0
      %5645 = vmatprep.subr.mxu0 0.0
      %5646 = vmatpush2.msra.mxu0 0.0
      %5647 = vmatprep.subr.mxu0 0.0
      %5648 = vmatpush2.msra.mxu0 0.0
      %5649 = vmatprep.subr.mxu0 0.0
      %5650 = vmatpush2.msra.mxu0 0.0
      %5651 = vmatprep.mubr.f32.mxu0 0.0
      %5652 = vmatmul.mubr.f32.gmra.mxu0 %v5585
      %v5653 = vpop.f32.mrf.mxu0
      %v5654 = vadd.f32 0.0, %v5653
      %v5655 = vpop.f32.mrf.mxu0
      %5656 = vdwg.mxu0
      %v5657 = vadd.f32 %v5052, %v5143
      %v5658 = vadd.f32 %v5053, %v5216
      %v5659 = vadd.f32 %v5054, %v5289
      %v5660 = vadd.f32 %v5055, %v5362
      %v5661 = vadd.f32 %v5056, %v5435
      %v5662 = vadd.f32 %v5057, %v5508
      %v5663 = vadd.f32 %v5058, %v5581
      %v5664 = vadd.f32 %v5059, %v5654
      %v5665 = vld [vmem:[%s2] sm:$0x1]
      %v5667 = vlaneseq
      %v5668 = vshrl.u32 %v5667, 7
      %v5669 = vsub.s32 0, %v5668
      %v5670 = vrot.slane %v5665, %v5669
      %v5672 = vadd.f32 %v5657, %v5670
      %v5673 = vadd.f32 %v5658, %v5670
      %v5674 = vadd.f32 %v5659, %v5670
      %v5675 = vadd.f32 %v5660, %v5670
      %v5676 = vadd.f32 %v5661, %v5670
      %v5677 = vadd.f32 %v5662, %v5670
      %v5678 = vadd.f32 %v5663, %v5670
      %v5679 = vadd.f32 %v5664, %v5670
      %vm5680 = vcmp.ge.f32.partialorder %v5672, 0.0
      %vm5681 = vcmp.ge.f32.partialorder %v5673, 0.0
      %vm5682 = vcmp.ge.f32.partialorder %v5674, 0.0
      %vm5683 = vcmp.ge.f32.partialorder %v5675, 0.0
      %vm5684 = vcmp.ge.f32.partialorder %v5676, 0.0
      %vm5685 = vcmp.ge.f32.partialorder %v5677, 0.0
      %vm5686 = vcmp.ge.f32.partialorder %v5678, 0.0
      %vm5687 = vcmp.ge.f32.partialorder %v5679, 0.0
      %v5688 = vmul.f32 %v5672, 0.01
      %v5689 = vmul.f32 %v5673, 0.01
      %v5690 = vmul.f32 %v5674, 0.01
      %v5691 = vmul.f32 %v5675, 0.01
      %v5692 = vmul.f32 %v5676, 0.01
      %v5693 = vmul.f32 %v5677, 0.01
      %v5694 = vmul.f32 %v5678, 0.01
      %v5695 = vmul.f32 %v5679, 0.01
      %v5696 = vsel %vm5680, %v5672, %v5688
      %v5697 = vsel %vm5681, %v5673, %v5689
      %v5698 = vsel %vm5682, %v5674, %v5690
      %v5699 = vsel %vm5683, %v5675, %v5691
      %v5700 = vsel %vm5684, %v5676, %v5692
      %v5701 = vsel %vm5685, %v5677, %v5693
      %v5702 = vsel %vm5686, %v5678, %v5694
      %v5703 = vsel %vm5687, %v5679, %v5695
      %5704 = vst.msk [vmem:[#allocation2] sm:$0xff] %vm250, 0.0
      %vm5705 = vcmask 25600
      %5706 = vst.msk [vmem:[#allocation2 + $0x8] sm:$0x3] %vm5705, 0.0
      %5707 = vst.msk [vmem:[#allocation2 + $0x10] sm:$0xff] %vm250, 0.0
      %5708 = vst.msk [vmem:[#allocation2 + $0x18] sm:$0x3] %vm5705, 0.0
      %5709 = vst.msk [vmem:[#allocation2 + $0x20] sm:$0xff] %vm250, 0.0
      %5710 = vst.msk [vmem:[#allocation2 + $0x28] sm:$0x3] %vm5705, 0.0
      %5711 = vst.msk [vmem:[#allocation2 + $0x30] sm:$0xff] %vm250, 0.0
      %5712 = vst.msk [vmem:[#allocation2 + $0x38] sm:$0x3] %vm5705, 0.0
      %5713 = vst.msk [vmem:[#allocation2 + $0x40] sm:$0xff] %vm250, 0.0
      %5714 = vst.msk [vmem:[#allocation2 + $0x48] sm:$0x3] %vm5705, 0.0
      %5715 = vst.msk [vmem:[#allocation2 + $0x50] sm:$0xff] %vm250, 0.0
      %5716 = vst.msk [vmem:[#allocation2 + $0x58] sm:$0x3] %vm5705, 0.0
      %5717 = vst.msk [vmem:[#allocation2 + $0x60] sm:$0xff] %vm250, 0.0
      %5718 = vst.msk [vmem:[#allocation2 + $0x68] sm:$0x3] %vm5705, 0.0
      %5719 = vst.msk [vmem:[#allocation2 + $0x70] sm:$0xff] %vm250, 0.0
      %5720 = vst.msk [vmem:[#allocation2 + $0x78] sm:$0x3] %vm5705, 0.0
      %5721 = vst.msk [vmem:[#allocation2 + $0x80] sm:$0xff] %vm250, 0.0
      %5722 = vst.msk [vmem:[#allocation2 + $0x88] sm:$0x3] %vm5705, 0.0
      %5723 = vst.msk [vmem:[#allocation2 + $0x90] sm:$0xff] %vm250, 0.0
      %5724 = vst.msk [vmem:[#allocation2 + $0x98] sm:$0x3] %vm5705, 0.0
      %s5725 = scalar_lea.vmem [#allocation2], 16
      %5726 = vst.msk [vmem:[%s5725 + $0x1] sm:$0xff] %vm250, %v5696
      %5727 = vst.msk [vmem:[%s5725 + $0x11] sm:$0xff] %vm250, %v5697
      %5728 = vst.msk [vmem:[%s5725 + $0x21] sm:$0xff] %vm250, %v5698
      %5729 = vst.msk [vmem:[%s5725 + $0x31] sm:$0xff] %vm250, %v5699
      %5730 = vst.msk [vmem:[%s5725 + $0x41] sm:$0xff] %vm250, %v5700
      %5731 = vst.msk [vmem:[%s5725 + $0x51] sm:$0xff] %vm250, %v5701
      %5732 = vst.msk [vmem:[%s5725 + $0x61] sm:$0xff] %vm250, %v5702
      %5733 = vst.msk [vmem:[%s5725 + $0x71] sm:$0xff] %vm250, %v5703
      %v5734 = vld [vmem:[#allocation2] sm:$0xff]
      %v5735 = vld [vmem:[#allocation2 + $0x10] sm:$0xff]
      %v5736 = vld [vmem:[#allocation2 + $0x20] sm:$0xff]
      %v5737 = vld [vmem:[#allocation2 + $0x30] sm:$0xff]
      %v5738 = vld [vmem:[#allocation2 + $0x40] sm:$0xff]
      %v5739 = vld [vmem:[#allocation2 + $0x50] sm:$0xff]
      %v5740 = vld [vmem:[#allocation2 + $0x60] sm:$0xff]
      %v5741 = vld [vmem:[#allocation2 + $0x70] sm:$0xff]
      %v5742 = vld [vmem:[%s3] sm:$0xf]
      %v5743 = vld [vmem:[#allocation2 + $0x1] sm:$0xff]
      %v5744 = vld [vmem:[#allocation2 + $0x11] sm:$0xff]
      %v5745 = vld [vmem:[#allocation2 + $0x21] sm:$0xff]
      %v5746 = vld [vmem:[#allocation2 + $0x31] sm:$0xff]
      %v5747 = vld [vmem:[#allocation2 + $0x41] sm:$0xff]
      %v5748 = vld [vmem:[#allocation2 + $0x51] sm:$0xff]
      %v5749 = vld [vmem:[#allocation2 + $0x61] sm:$0xff]
      %v5750 = vld [vmem:[#allocation2 + $0x71] sm:$0xff]
      %s5751 = scalar_lea.vmem %s3, 4
      %v5752 = vld [vmem:[%s5751] sm:$0xf]
      %v5754 = vsel %vm250, %v5743, 0
      %v5757 = vsel %vm254, %v5752, 0
      %5759 = vmatprep.subr.mxu0 0.0
      %5760 = vmatpush1.msra.mxu0 0.0
      %5761 = vmatprep.subr.mxu0 0.0
      %5762 = vmatpush1.msra.mxu0 0.0
      %5763 = vmatprep.subr.mxu0 0.0
      %5764 = vmatpush1.msra.mxu0 0.0
      %5765 = vmatprep.subr.mxu0 0.0
      %5766 = vmatpush1.msra.mxu0 0.0
      %5767 = vmatprep.subr.mxu0 0.0
      %5768 = vmatpush1.msra.mxu0 0.0
      %5769 = vmatprep.subr.mxu0 0.0
      %5770 = vmatpush1.msra.mxu0 0.0
      %5771 = vmatprep.subr.mxu0 0.0
      %5772 = vmatpush1.msra.mxu0 0.0
      %5773 = vmatprep.subr.mxu0 0.0
      %5774 = vmatpush1.msra.mxu0 0.0
      %5775 = vmatprep.subr.mxu0 0.0
      %5776 = vmatpush1.msra.mxu0 0.0
      %5777 = vmatprep.subr.mxu0 0.0
      %5778 = vmatpush1.msra.mxu0 0.0
      %5779 = vmatprep.subr.mxu0 0.0
      %5780 = vmatpush1.msra.mxu0 0.0
      %5781 = vmatprep.subr.mxu0 0.0
      %5782 = vmatpush1.msra.mxu0 0.0
      %5783 = vmatprep.subr.mxu0 0.0
      %5784 = vmatpush1.msra.mxu0 0.0
      %5785 = vmatprep.subr.mxu0 0.0
      %5786 = vmatpush1.msra.mxu0 0.0
      %5787 = vmatprep.subr.mxu0 0.0
      %5788 = vmatpush1.msra.mxu0 0.0
      %5789 = vmatprep.subr.mxu0 0.0
      %5790 = vmatpush1.msra.mxu0 %v5757
      %5791 = vmatprep.subr.mxu0 0.0
      %5792 = vmatpush2.msra.mxu0 0.0
      %5793 = vmatprep.subr.mxu0 0.0
      %5794 = vmatpush2.msra.mxu0 0.0
      %5795 = vmatprep.subr.mxu0 0.0
      %5796 = vmatpush2.msra.mxu0 0.0
      %5797 = vmatprep.subr.mxu0 0.0
      %5798 = vmatpush2.msra.mxu0 0.0
      %5799 = vmatprep.subr.mxu0 0.0
      %5800 = vmatpush2.msra.mxu0 0.0
      %5801 = vmatprep.subr.mxu0 0.0
      %5802 = vmatpush2.msra.mxu0 0.0
      %5803 = vmatprep.subr.mxu0 0.0
      %5804 = vmatpush2.msra.mxu0 0.0
      %5805 = vmatprep.subr.mxu0 0.0
      %5806 = vmatpush2.msra.mxu0 0.0
      %5807 = vmatprep.subr.mxu0 0.0
      %5808 = vmatpush2.msra.mxu0 0.0
      %5809 = vmatprep.subr.mxu0 0.0
      %5810 = vmatpush2.msra.mxu0 0.0
      %5811 = vmatprep.subr.mxu0 0.0
      %5812 = vmatpush2.msra.mxu0 0.0
      %5813 = vmatprep.subr.mxu0 0.0
      %5814 = vmatpush2.msra.mxu0 0.0
      %5815 = vmatprep.subr.mxu0 0.0
      %5816 = vmatpush2.msra.mxu0 0.0
      %5817 = vmatprep.subr.mxu0 0.0
      %5818 = vmatpush2.msra.mxu0 0.0
      %5819 = vmatprep.subr.mxu0 0.0
      %5820 = vmatpush2.msra.mxu0 0.0
      %5821 = vmatprep.subr.mxu0 0.0
      %5822 = vmatpush2.msra.mxu0 0.0
      %5823 = vmatprep.mubr.f32.mxu0 0.0
      %5824 = vmatmul.mubr.f32.gmra.mxu0 %v5754
      %v5825 = vpop.f32.mrf.mxu0
      %v5826 = vadd.f32 0.0, %v5825
      %v5827 = vpop.f32.mrf.mxu0
      %5828 = vdwg.mxu0
      %v5830 = vsel %vm250, %v5744, 0
      %5832 = vmatprep.subr.mxu0 0.0
      %5833 = vmatpush1.msra.mxu0 0.0
      %5834 = vmatprep.subr.mxu0 0.0
      %5835 = vmatpush1.msra.mxu0 0.0
      %5836 = vmatprep.subr.mxu0 0.0
      %5837 = vmatpush1.msra.mxu0 0.0
      %5838 = vmatprep.subr.mxu0 0.0
      %5839 = vmatpush1.msra.mxu0 0.0
      %5840 = vmatprep.subr.mxu0 0.0
      %5841 = vmatpush1.msra.mxu0 0.0
      %5842 = vmatprep.subr.mxu0 0.0
      %5843 = vmatpush1.msra.mxu0 0.0
      %5844 = vmatprep.subr.mxu0 0.0
      %5845 = vmatpush1.msra.mxu0 0.0
      %5846 = vmatprep.subr.mxu0 0.0
      %5847 = vmatpush1.msra.mxu0 0.0
      %5848 = vmatprep.subr.mxu0 0.0
      %5849 = vmatpush1.msra.mxu0 0.0
      %5850 = vmatprep.subr.mxu0 0.0
      %5851 = vmatpush1.msra.mxu0 0.0
      %5852 = vmatprep.subr.mxu0 0.0
      %5853 = vmatpush1.msra.mxu0 0.0
      %5854 = vmatprep.subr.mxu0 0.0
      %5855 = vmatpush1.msra.mxu0 0.0
      %5856 = vmatprep.subr.mxu0 0.0
      %5857 = vmatpush1.msra.mxu0 0.0
      %5858 = vmatprep.subr.mxu0 0.0
      %5859 = vmatpush1.msra.mxu0 0.0
      %5860 = vmatprep.subr.mxu0 0.0
      %5861 = vmatpush1.msra.mxu0 0.0
      %5862 = vmatprep.subr.mxu0 0.0
      %5863 = vmatpush1.msra.mxu0 %v5757
      %5864 = vmatprep.subr.mxu0 0.0
      %5865 = vmatpush2.msra.mxu0 0.0
      %5866 = vmatprep.subr.mxu0 0.0
      %5867 = vmatpush2.msra.mxu0 0.0
      %5868 = vmatprep.subr.mxu0 0.0
      %5869 = vmatpush2.msra.mxu0 0.0
      %5870 = vmatprep.subr.mxu0 0.0
      %5871 = vmatpush2.msra.mxu0 0.0
      %5872 = vmatprep.subr.mxu0 0.0
      %5873 = vmatpush2.msra.mxu0 0.0
      %5874 = vmatprep.subr.mxu0 0.0
      %5875 = vmatpush2.msra.mxu0 0.0
      %5876 = vmatprep.subr.mxu0 0.0
      %5877 = vmatpush2.msra.mxu0 0.0
      %5878 = vmatprep.subr.mxu0 0.0
      %5879 = vmatpush2.msra.mxu0 0.0
      %5880 = vmatprep.subr.mxu0 0.0
      %5881 = vmatpush2.msra.mxu0 0.0
      %5882 = vmatprep.subr.mxu0 0.0
      %5883 = vmatpush2.msra.mxu0 0.0
      %5884 = vmatprep.subr.mxu0 0.0
      %5885 = vmatpush2.msra.mxu0 0.0
      %5886 = vmatprep.subr.mxu0 0.0
      %5887 = vmatpush2.msra.mxu0 0.0
      %5888 = vmatprep.subr.mxu0 0.0
      %5889 = vmatpush2.msra.mxu0 0.0
      %5890 = vmatprep.subr.mxu0 0.0
      %5891 = vmatpush2.msra.mxu0 0.0
      %5892 = vmatprep.subr.mxu0 0.0
      %5893 = vmatpush2.msra.mxu0 0.0
      %5894 = vmatprep.subr.mxu0 0.0
      %5895 = vmatpush2.msra.mxu0 0.0
      %5896 = vmatprep.mubr.f32.mxu0 0.0
      %5897 = vmatmul.mubr.f32.gmra.mxu0 %v5830
      %v5898 = vpop.f32.mrf.mxu0
      %v5899 = vadd.f32 0.0, %v5898
      %v5900 = vpop.f32.mrf.mxu0
      %5901 = vdwg.mxu0
      %v5903 = vsel %vm250, %v5745, 0
      %5905 = vmatprep.subr.mxu0 0.0
      %5906 = vmatpush1.msra.mxu0 0.0
      %5907 = vmatprep.subr.mxu0 0.0
      %5908 = vmatpush1.msra.mxu0 0.0
      %5909 = vmatprep.subr.mxu0 0.0
      %5910 = vmatpush1.msra.mxu0 0.0
      %5911 = vmatprep.subr.mxu0 0.0
      %5912 = vmatpush1.msra.mxu0 0.0
      %5913 = vmatprep.subr.mxu0 0.0
      %5914 = vmatpush1.msra.mxu0 0.0
      %5915 = vmatprep.subr.mxu0 0.0
      %5916 = vmatpush1.msra.mxu0 0.0
      %5917 = vmatprep.subr.mxu0 0.0
      %5918 = vmatpush1.msra.mxu0 0.0
      %5919 = vmatprep.subr.mxu0 0.0
      %5920 = vmatpush1.msra.mxu0 0.0
      %5921 = vmatprep.subr.mxu0 0.0
      %5922 = vmatpush1.msra.mxu0 0.0
      %5923 = vmatprep.subr.mxu0 0.0
      %5924 = vmatpush1.msra.mxu0 0.0
      %5925 = vmatprep.subr.mxu0 0.0
      %5926 = vmatpush1.msra.mxu0 0.0
      %5927 = vmatprep.subr.mxu0 0.0
      %5928 = vmatpush1.msra.mxu0 0.0
      %5929 = vmatprep.subr.mxu0 0.0
      %5930 = vmatpush1.msra.mxu0 0.0
      %5931 = vmatprep.subr.mxu0 0.0
      %5932 = vmatpush1.msra.mxu0 0.0
      %5933 = vmatprep.subr.mxu0 0.0
      %5934 = vmatpush1.msra.mxu0 0.0
      %5935 = vmatprep.subr.mxu0 0.0
      %5936 = vmatpush1.msra.mxu0 %v5757
      %5937 = vmatprep.subr.mxu0 0.0
      %5938 = vmatpush2.msra.mxu0 0.0
      %5939 = vmatprep.subr.mxu0 0.0
      %5940 = vmatpush2.msra.mxu0 0.0
      %5941 = vmatprep.subr.mxu0 0.0
      %5942 = vmatpush2.msra.mxu0 0.0
      %5943 = vmatprep.subr.mxu0 0.0
      %5944 = vmatpush2.msra.mxu0 0.0
      %5945 = vmatprep.subr.mxu0 0.0
      %5946 = vmatpush2.msra.mxu0 0.0
      %5947 = vmatprep.subr.mxu0 0.0
      %5948 = vmatpush2.msra.mxu0 0.0
      %5949 = vmatprep.subr.mxu0 0.0
      %5950 = vmatpush2.msra.mxu0 0.0
      %5951 = vmatprep.subr.mxu0 0.0
      %5952 = vmatpush2.msra.mxu0 0.0
      %5953 = vmatprep.subr.mxu0 0.0
      %5954 = vmatpush2.msra.mxu0 0.0
      %5955 = vmatprep.subr.mxu0 0.0
      %5956 = vmatpush2.msra.mxu0 0.0
      %5957 = vmatprep.subr.mxu0 0.0
      %5958 = vmatpush2.msra.mxu0 0.0
      %5959 = vmatprep.subr.mxu0 0.0
      %5960 = vmatpush2.msra.mxu0 0.0
      %5961 = vmatprep.subr.mxu0 0.0
      %5962 = vmatpush2.msra.mxu0 0.0
      %5963 = vmatprep.subr.mxu0 0.0
      %5964 = vmatpush2.msra.mxu0 0.0
      %5965 = vmatprep.subr.mxu0 0.0
      %5966 = vmatpush2.msra.mxu0 0.0
      %5967 = vmatprep.subr.mxu0 0.0
      %5968 = vmatpush2.msra.mxu0 0.0
      %5969 = vmatprep.mubr.f32.mxu0 0.0
      %5970 = vmatmul.mubr.f32.gmra.mxu0 %v5903
      %v5971 = vpop.f32.mrf.mxu0
      %v5972 = vadd.f32 0.0, %v5971
      %v5973 = vpop.f32.mrf.mxu0
      %5974 = vdwg.mxu0
      %v5976 = vsel %vm250, %v5746, 0
      %5978 = vmatprep.subr.mxu0 0.0
      %5979 = vmatpush1.msra.mxu0 0.0
      %5980 = vmatprep.subr.mxu0 0.0
      %5981 = vmatpush1.msra.mxu0 0.0
      %5982 = vmatprep.subr.mxu0 0.0
      %5983 = vmatpush1.msra.mxu0 0.0
      %5984 = vmatprep.subr.mxu0 0.0
      %5985 = vmatpush1.msra.mxu0 0.0
      %5986 = vmatprep.subr.mxu0 0.0
      %5987 = vmatpush1.msra.mxu0 0.0
      %5988 = vmatprep.subr.mxu0 0.0
      %5989 = vmatpush1.msra.mxu0 0.0
      %5990 = vmatprep.subr.mxu0 0.0
      %5991 = vmatpush1.msra.mxu0 0.0
      %5992 = vmatprep.subr.mxu0 0.0
      %5993 = vmatpush1.msra.mxu0 0.0
      %5994 = vmatprep.subr.mxu0 0.0
      %5995 = vmatpush1.msra.mxu0 0.0
      %5996 = vmatprep.subr.mxu0 0.0
      %5997 = vmatpush1.msra.mxu0 0.0
      %5998 = vmatprep.subr.mxu0 0.0
      %5999 = vmatpush1.msra.mxu0 0.0
      %6000 = vmatprep.subr.mxu0 0.0
      %6001 = vmatpush1.msra.mxu0 0.0
      %6002 = vmatprep.subr.mxu0 0.0
      %6003 = vmatpush1.msra.mxu0 0.0
      %6004 = vmatprep.subr.mxu0 0.0
      %6005 = vmatpush1.msra.mxu0 0.0
      %6006 = vmatprep.subr.mxu0 0.0
      %6007 = vmatpush1.msra.mxu0 0.0
      %6008 = vmatprep.subr.mxu0 0.0
      %6009 = vmatpush1.msra.mxu0 %v5757
      %6010 = vmatprep.subr.mxu0 0.0
      %6011 = vmatpush2.msra.mxu0 0.0
      %6012 = vmatprep.subr.mxu0 0.0
      %6013 = vmatpush2.msra.mxu0 0.0
      %6014 = vmatprep.subr.mxu0 0.0
      %6015 = vmatpush2.msra.mxu0 0.0
      %6016 = vmatprep.subr.mxu0 0.0
      %6017 = vmatpush2.msra.mxu0 0.0
      %6018 = vmatprep.subr.mxu0 0.0
      %6019 = vmatpush2.msra.mxu0 0.0
      %6020 = vmatprep.subr.mxu0 0.0
      %6021 = vmatpush2.msra.mxu0 0.0
      %6022 = vmatprep.subr.mxu0 0.0
      %6023 = vmatpush2.msra.mxu0 0.0
      %6024 = vmatprep.subr.mxu0 0.0
      %6025 = vmatpush2.msra.mxu0 0.0
      %6026 = vmatprep.subr.mxu0 0.0
      %6027 = vmatpush2.msra.mxu0 0.0
      %6028 = vmatprep.subr.mxu0 0.0
      %6029 = vmatpush2.msra.mxu0 0.0
      %6030 = vmatprep.subr.mxu0 0.0
      %6031 = vmatpush2.msra.mxu0 0.0
      %6032 = vmatprep.subr.mxu0 0.0
      %6033 = vmatpush2.msra.mxu0 0.0
      %6034 = vmatprep.subr.mxu0 0.0
      %6035 = vmatpush2.msra.mxu0 0.0
      %6036 = vmatprep.subr.mxu0 0.0
      %6037 = vmatpush2.msra.mxu0 0.0
      %6038 = vmatprep.subr.mxu0 0.0
      %6039 = vmatpush2.msra.mxu0 0.0
      %6040 = vmatprep.subr.mxu0 0.0
      %6041 = vmatpush2.msra.mxu0 0.0
      %6042 = vmatprep.mubr.f32.mxu0 0.0
      %6043 = vmatmul.mubr.f32.gmra.mxu0 %v5976
      %v6044 = vpop.f32.mrf.mxu0
      %v6045 = vadd.f32 0.0, %v6044
      %v6046 = vpop.f32.mrf.mxu0
      %6047 = vdwg.mxu0
      %v6049 = vsel %vm250, %v5747, 0
      %6051 = vmatprep.subr.mxu0 0.0
      %6052 = vmatpush1.msra.mxu0 0.0
      %6053 = vmatprep.subr.mxu0 0.0
      %6054 = vmatpush1.msra.mxu0 0.0
      %6055 = vmatprep.subr.mxu0 0.0
      %6056 = vmatpush1.msra.mxu0 0.0
      %6057 = vmatprep.subr.mxu0 0.0
      %6058 = vmatpush1.msra.mxu0 0.0
      %6059 = vmatprep.subr.mxu0 0.0
      %6060 = vmatpush1.msra.mxu0 0.0
      %6061 = vmatprep.subr.mxu0 0.0
      %6062 = vmatpush1.msra.mxu0 0.0
      %6063 = vmatprep.subr.mxu0 0.0
      %6064 = vmatpush1.msra.mxu0 0.0
      %6065 = vmatprep.subr.mxu0 0.0
      %6066 = vmatpush1.msra.mxu0 0.0
      %6067 = vmatprep.subr.mxu0 0.0
      %6068 = vmatpush1.msra.mxu0 0.0
      %6069 = vmatprep.subr.mxu0 0.0
      %6070 = vmatpush1.msra.mxu0 0.0
      %6071 = vmatprep.subr.mxu0 0.0
      %6072 = vmatpush1.msra.mxu0 0.0
      %6073 = vmatprep.subr.mxu0 0.0
      %6074 = vmatpush1.msra.mxu0 0.0
      %6075 = vmatprep.subr.mxu0 0.0
      %6076 = vmatpush1.msra.mxu0 0.0
      %6077 = vmatprep.subr.mxu0 0.0
      %6078 = vmatpush1.msra.mxu0 0.0
      %6079 = vmatprep.subr.mxu0 0.0
      %6080 = vmatpush1.msra.mxu0 0.0
      %6081 = vmatprep.subr.mxu0 0.0
      %6082 = vmatpush1.msra.mxu0 %v5757
      %6083 = vmatprep.subr.mxu0 0.0
      %6084 = vmatpush2.msra.mxu0 0.0
      %6085 = vmatprep.subr.mxu0 0.0
      %6086 = vmatpush2.msra.mxu0 0.0
      %6087 = vmatprep.subr.mxu0 0.0
      %6088 = vmatpush2.msra.mxu0 0.0
      %6089 = vmatprep.subr.mxu0 0.0
      %6090 = vmatpush2.msra.mxu0 0.0
      %6091 = vmatprep.subr.mxu0 0.0
      %6092 = vmatpush2.msra.mxu0 0.0
      %6093 = vmatprep.subr.mxu0 0.0
      %6094 = vmatpush2.msra.mxu0 0.0
      %6095 = vmatprep.subr.mxu0 0.0
      %6096 = vmatpush2.msra.mxu0 0.0
      %6097 = vmatprep.subr.mxu0 0.0
      %6098 = vmatpush2.msra.mxu0 0.0
      %6099 = vmatprep.subr.mxu0 0.0
      %6100 = vmatpush2.msra.mxu0 0.0
      %6101 = vmatprep.subr.mxu0 0.0
      %6102 = vmatpush2.msra.mxu0 0.0
      %6103 = vmatprep.subr.mxu0 0.0
      %6104 = vmatpush2.msra.mxu0 0.0
      %6105 = vmatprep.subr.mxu0 0.0
      %6106 = vmatpush2.msra.mxu0 0.0
      %6107 = vmatprep.subr.mxu0 0.0
      %6108 = vmatpush2.msra.mxu0 0.0
      %6109 = vmatprep.subr.mxu0 0.0
      %6110 = vmatpush2.msra.mxu0 0.0
      %6111 = vmatprep.subr.mxu0 0.0
      %6112 = vmatpush2.msra.mxu0 0.0
      %6113 = vmatprep.subr.mxu0 0.0
      %6114 = vmatpush2.msra.mxu0 0.0
      %6115 = vmatprep.mubr.f32.mxu0 0.0
      %6116 = vmatmul.mubr.f32.gmra.mxu0 %v6049
      %v6117 = vpop.f32.mrf.mxu0
      %v6118 = vadd.f32 0.0, %v6117
      %v6119 = vpop.f32.mrf.mxu0
      %6120 = vdwg.mxu0
      %v6122 = vsel %vm250, %v5748, 0
      %6124 = vmatprep.subr.mxu0 0.0
      %6125 = vmatpush1.msra.mxu0 0.0
      %6126 = vmatprep.subr.mxu0 0.0
      %6127 = vmatpush1.msra.mxu0 0.0
      %6128 = vmatprep.subr.mxu0 0.0
      %6129 = vmatpush1.msra.mxu0 0.0
      %6130 = vmatprep.subr.mxu0 0.0
      %6131 = vmatpush1.msra.mxu0 0.0
      %6132 = vmatprep.subr.mxu0 0.0
      %6133 = vmatpush1.msra.mxu0 0.0
      %6134 = vmatprep.subr.mxu0 0.0
      %6135 = vmatpush1.msra.mxu0 0.0
      %6136 = vmatprep.subr.mxu0 0.0
      %6137 = vmatpush1.msra.mxu0 0.0
      %6138 = vmatprep.subr.mxu0 0.0
      %6139 = vmatpush1.msra.mxu0 0.0
      %6140 = vmatprep.subr.mxu0 0.0
      %6141 = vmatpush1.msra.mxu0 0.0
      %6142 = vmatprep.subr.mxu0 0.0
      %6143 = vmatpush1.msra.mxu0 0.0
      %6144 = vmatprep.subr.mxu0 0.0
      %6145 = vmatpush1.msra.mxu0 0.0
      %6146 = vmatprep.subr.mxu0 0.0
      %6147 = vmatpush1.msra.mxu0 0.0
      %6148 = vmatprep.subr.mxu0 0.0
      %6149 = vmatpush1.msra.mxu0 0.0
      %6150 = vmatprep.subr.mxu0 0.0
      %6151 = vmatpush1.msra.mxu0 0.0
      %6152 = vmatprep.subr.mxu0 0.0
      %6153 = vmatpush1.msra.mxu0 0.0
      %6154 = vmatprep.subr.mxu0 0.0
      %6155 = vmatpush1.msra.mxu0 %v5757
      %6156 = vmatprep.subr.mxu0 0.0
      %6157 = vmatpush2.msra.mxu0 0.0
      %6158 = vmatprep.subr.mxu0 0.0
      %6159 = vmatpush2.msra.mxu0 0.0
      %6160 = vmatprep.subr.mxu0 0.0
      %6161 = vmatpush2.msra.mxu0 0.0
      %6162 = vmatprep.subr.mxu0 0.0
      %6163 = vmatpush2.msra.mxu0 0.0
      %6164 = vmatprep.subr.mxu0 0.0
      %6165 = vmatpush2.msra.mxu0 0.0
      %6166 = vmatprep.subr.mxu0 0.0
      %6167 = vmatpush2.msra.mxu0 0.0
      %6168 = vmatprep.subr.mxu0 0.0
      %6169 = vmatpush2.msra.mxu0 0.0
      %6170 = vmatprep.subr.mxu0 0.0
      %6171 = vmatpush2.msra.mxu0 0.0
      %6172 = vmatprep.subr.mxu0 0.0
      %6173 = vmatpush2.msra.mxu0 0.0
      %6174 = vmatprep.subr.mxu0 0.0
      %6175 = vmatpush2.msra.mxu0 0.0
      %6176 = vmatprep.subr.mxu0 0.0
      %6177 = vmatpush2.msra.mxu0 0.0
      %6178 = vmatprep.subr.mxu0 0.0
      %6179 = vmatpush2.msra.mxu0 0.0
      %6180 = vmatprep.subr.mxu0 0.0
      %6181 = vmatpush2.msra.mxu0 0.0
      %6182 = vmatprep.subr.mxu0 0.0
      %6183 = vmatpush2.msra.mxu0 0.0
      %6184 = vmatprep.subr.mxu0 0.0
      %6185 = vmatpush2.msra.mxu0 0.0
      %6186 = vmatprep.subr.mxu0 0.0
      %6187 = vmatpush2.msra.mxu0 0.0
      %6188 = vmatprep.mubr.f32.mxu0 0.0
      %6189 = vmatmul.mubr.f32.gmra.mxu0 %v6122
      %v6190 = vpop.f32.mrf.mxu0
      %v6191 = vadd.f32 0.0, %v6190
      %v6192 = vpop.f32.mrf.mxu0
      %6193 = vdwg.mxu0
      %v6195 = vsel %vm250, %v5749, 0
      %6197 = vmatprep.subr.mxu0 0.0
      %6198 = vmatpush1.msra.mxu0 0.0
      %6199 = vmatprep.subr.mxu0 0.0
      %6200 = vmatpush1.msra.mxu0 0.0
      %6201 = vmatprep.subr.mxu0 0.0
      %6202 = vmatpush1.msra.mxu0 0.0
      %6203 = vmatprep.subr.mxu0 0.0
      %6204 = vmatpush1.msra.mxu0 0.0
      %6205 = vmatprep.subr.mxu0 0.0
      %6206 = vmatpush1.msra.mxu0 0.0
      %6207 = vmatprep.subr.mxu0 0.0
      %6208 = vmatpush1.msra.mxu0 0.0
      %6209 = vmatprep.subr.mxu0 0.0
      %6210 = vmatpush1.msra.mxu0 0.0
      %6211 = vmatprep.subr.mxu0 0.0
      %6212 = vmatpush1.msra.mxu0 0.0
      %6213 = vmatprep.subr.mxu0 0.0
      %6214 = vmatpush1.msra.mxu0 0.0
      %6215 = vmatprep.subr.mxu0 0.0
      %6216 = vmatpush1.msra.mxu0 0.0
      %6217 = vmatprep.subr.mxu0 0.0
      %6218 = vmatpush1.msra.mxu0 0.0
      %6219 = vmatprep.subr.mxu0 0.0
      %6220 = vmatpush1.msra.mxu0 0.0
      %6221 = vmatprep.subr.mxu0 0.0
      %6222 = vmatpush1.msra.mxu0 0.0
      %6223 = vmatprep.subr.mxu0 0.0
      %6224 = vmatpush1.msra.mxu0 0.0
      %6225 = vmatprep.subr.mxu0 0.0
      %6226 = vmatpush1.msra.mxu0 0.0
      %6227 = vmatprep.subr.mxu0 0.0
      %6228 = vmatpush1.msra.mxu0 %v5757
      %6229 = vmatprep.subr.mxu0 0.0
      %6230 = vmatpush2.msra.mxu0 0.0
      %6231 = vmatprep.subr.mxu0 0.0
      %6232 = vmatpush2.msra.mxu0 0.0
      %6233 = vmatprep.subr.mxu0 0.0
      %6234 = vmatpush2.msra.mxu0 0.0
      %6235 = vmatprep.subr.mxu0 0.0
      %6236 = vmatpush2.msra.mxu0 0.0
      %6237 = vmatprep.subr.mxu0 0.0
      %6238 = vmatpush2.msra.mxu0 0.0
      %6239 = vmatprep.subr.mxu0 0.0
      %6240 = vmatpush2.msra.mxu0 0.0
      %6241 = vmatprep.subr.mxu0 0.0
      %6242 = vmatpush2.msra.mxu0 0.0
      %6243 = vmatprep.subr.mxu0 0.0
      %6244 = vmatpush2.msra.mxu0 0.0
      %6245 = vmatprep.subr.mxu0 0.0
      %6246 = vmatpush2.msra.mxu0 0.0
      %6247 = vmatprep.subr.mxu0 0.0
      %6248 = vmatpush2.msra.mxu0 0.0
      %6249 = vmatprep.subr.mxu0 0.0
      %6250 = vmatpush2.msra.mxu0 0.0
      %6251 = vmatprep.subr.mxu0 0.0
      %6252 = vmatpush2.msra.mxu0 0.0
      %6253 = vmatprep.subr.mxu0 0.0
      %6254 = vmatpush2.msra.mxu0 0.0
      %6255 = vmatprep.subr.mxu0 0.0
      %6256 = vmatpush2.msra.mxu0 0.0
      %6257 = vmatprep.subr.mxu0 0.0
      %6258 = vmatpush2.msra.mxu0 0.0
      %6259 = vmatprep.subr.mxu0 0.0
      %6260 = vmatpush2.msra.mxu0 0.0
      %6261 = vmatprep.mubr.f32.mxu0 0.0
      %6262 = vmatmul.mubr.f32.gmra.mxu0 %v6195
      %v6263 = vpop.f32.mrf.mxu0
      %v6264 = vadd.f32 0.0, %v6263
      %v6265 = vpop.f32.mrf.mxu0
      %6266 = vdwg.mxu0
      %v6268 = vsel %vm250, %v5750, 0
      %6270 = vmatprep.subr.mxu0 0.0
      %6271 = vmatpush1.msra.mxu0 0.0
      %6272 = vmatprep.subr.mxu0 0.0
      %6273 = vmatpush1.msra.mxu0 0.0
      %6274 = vmatprep.subr.mxu0 0.0
      %6275 = vmatpush1.msra.mxu0 0.0
      %6276 = vmatprep.subr.mxu0 0.0
      %6277 = vmatpush1.msra.mxu0 0.0
      %6278 = vmatprep.subr.mxu0 0.0
      %6279 = vmatpush1.msra.mxu0 0.0
      %6280 = vmatprep.subr.mxu0 0.0
      %6281 = vmatpush1.msra.mxu0 0.0
      %6282 = vmatprep.subr.mxu0 0.0
      %6283 = vmatpush1.msra.mxu0 0.0
      %6284 = vmatprep.subr.mxu0 0.0
      %6285 = vmatpush1.msra.mxu0 0.0
      %6286 = vmatprep.subr.mxu0 0.0
      %6287 = vmatpush1.msra.mxu0 0.0
      %6288 = vmatprep.subr.mxu0 0.0
      %6289 = vmatpush1.msra.mxu0 0.0
      %6290 = vmatprep.subr.mxu0 0.0
      %6291 = vmatpush1.msra.mxu0 0.0
      %6292 = vmatprep.subr.mxu0 0.0
      %6293 = vmatpush1.msra.mxu0 0.0
      %6294 = vmatprep.subr.mxu0 0.0
      %6295 = vmatpush1.msra.mxu0 0.0
      %6296 = vmatprep.subr.mxu0 0.0
      %6297 = vmatpush1.msra.mxu0 0.0
      %6298 = vmatprep.subr.mxu0 0.0
      %6299 = vmatpush1.msra.mxu0 0.0
      %6300 = vmatprep.subr.mxu0 0.0
      %6301 = vmatpush1.msra.mxu0 %v5757
      %6302 = vmatprep.subr.mxu0 0.0
      %6303 = vmatpush2.msra.mxu0 0.0
      %6304 = vmatprep.subr.mxu0 0.0
      %6305 = vmatpush2.msra.mxu0 0.0
      %6306 = vmatprep.subr.mxu0 0.0
      %6307 = vmatpush2.msra.mxu0 0.0
      %6308 = vmatprep.subr.mxu0 0.0
      %6309 = vmatpush2.msra.mxu0 0.0
      %6310 = vmatprep.subr.mxu0 0.0
      %6311 = vmatpush2.msra.mxu0 0.0
      %6312 = vmatprep.subr.mxu0 0.0
      %6313 = vmatpush2.msra.mxu0 0.0
      %6314 = vmatprep.subr.mxu0 0.0
      %6315 = vmatpush2.msra.mxu0 0.0
      %6316 = vmatprep.subr.mxu0 0.0
      %6317 = vmatpush2.msra.mxu0 0.0
      %6318 = vmatprep.subr.mxu0 0.0
      %6319 = vmatpush2.msra.mxu0 0.0
      %6320 = vmatprep.subr.mxu0 0.0
      %6321 = vmatpush2.msra.mxu0 0.0
      %6322 = vmatprep.subr.mxu0 0.0
      %6323 = vmatpush2.msra.mxu0 0.0
      %6324 = vmatprep.subr.mxu0 0.0
      %6325 = vmatpush2.msra.mxu0 0.0
      %6326 = vmatprep.subr.mxu0 0.0
      %6327 = vmatpush2.msra.mxu0 0.0
      %6328 = vmatprep.subr.mxu0 0.0
      %6329 = vmatpush2.msra.mxu0 0.0
      %6330 = vmatprep.subr.mxu0 0.0
      %6331 = vmatpush2.msra.mxu0 0.0
      %6332 = vmatprep.subr.mxu0 0.0
      %6333 = vmatpush2.msra.mxu0 0.0
      %6334 = vmatprep.mubr.f32.mxu0 0.0
      %6335 = vmatmul.mubr.f32.gmra.mxu0 %v6268
      %v6336 = vpop.f32.mrf.mxu0
      %v6337 = vadd.f32 0.0, %v6336
      %v6338 = vpop.f32.mrf.mxu0
      %6339 = vdwg.mxu0
      %v6341 = vsel %vm250, %v5734, 0
      %v6344 = vsel %vm254, %v5742, 0
      %6346 = vmatprep.subr.mxu0 0.0
      %6347 = vmatpush1.msra.mxu0 0.0
      %6348 = vmatprep.subr.mxu0 0.0
      %6349 = vmatpush1.msra.mxu0 0.0
      %6350 = vmatprep.subr.mxu0 0.0
      %6351 = vmatpush1.msra.mxu0 0.0
      %6352 = vmatprep.subr.mxu0 0.0
      %6353 = vmatpush1.msra.mxu0 0.0
      %6354 = vmatprep.subr.mxu0 0.0
      %6355 = vmatpush1.msra.mxu0 0.0
      %6356 = vmatprep.subr.mxu0 0.0
      %6357 = vmatpush1.msra.mxu0 0.0
      %6358 = vmatprep.subr.mxu0 0.0
      %6359 = vmatpush1.msra.mxu0 0.0
      %6360 = vmatprep.subr.mxu0 0.0
      %6361 = vmatpush1.msra.mxu0 0.0
      %6362 = vmatprep.subr.mxu0 0.0
      %6363 = vmatpush1.msra.mxu0 0.0
      %6364 = vmatprep.subr.mxu0 0.0
      %6365 = vmatpush1.msra.mxu0 0.0
      %6366 = vmatprep.subr.mxu0 0.0
      %6367 = vmatpush1.msra.mxu0 0.0
      %6368 = vmatprep.subr.mxu0 0.0
      %6369 = vmatpush1.msra.mxu0 0.0
      %6370 = vmatprep.subr.mxu0 0.0
      %6371 = vmatpush1.msra.mxu0 0.0
      %6372 = vmatprep.subr.mxu0 0.0
      %6373 = vmatpush1.msra.mxu0 0.0
      %6374 = vmatprep.subr.mxu0 0.0
      %6375 = vmatpush1.msra.mxu0 0.0
      %6376 = vmatprep.subr.mxu0 0.0
      %6377 = vmatpush1.msra.mxu0 %v6344
      %6378 = vmatprep.subr.mxu0 0.0
      %6379 = vmatpush2.msra.mxu0 0.0
      %6380 = vmatprep.subr.mxu0 0.0
      %6381 = vmatpush2.msra.mxu0 0.0
      %6382 = vmatprep.subr.mxu0 0.0
      %6383 = vmatpush2.msra.mxu0 0.0
      %6384 = vmatprep.subr.mxu0 0.0
      %6385 = vmatpush2.msra.mxu0 0.0
      %6386 = vmatprep.subr.mxu0 0.0
      %6387 = vmatpush2.msra.mxu0 0.0
      %6388 = vmatprep.subr.mxu0 0.0
      %6389 = vmatpush2.msra.mxu0 0.0
      %6390 = vmatprep.subr.mxu0 0.0
      %6391 = vmatpush2.msra.mxu0 0.0
      %6392 = vmatprep.subr.mxu0 0.0
      %6393 = vmatpush2.msra.mxu0 0.0
      %6394 = vmatprep.subr.mxu0 0.0
      %6395 = vmatpush2.msra.mxu0 0.0
      %6396 = vmatprep.subr.mxu0 0.0
      %6397 = vmatpush2.msra.mxu0 0.0
      %6398 = vmatprep.subr.mxu0 0.0
      %6399 = vmatpush2.msra.mxu0 0.0
      %6400 = vmatprep.subr.mxu0 0.0
      %6401 = vmatpush2.msra.mxu0 0.0
      %6402 = vmatprep.subr.mxu0 0.0
      %6403 = vmatpush2.msra.mxu0 0.0
      %6404 = vmatprep.subr.mxu0 0.0
      %6405 = vmatpush2.msra.mxu0 0.0
      %6406 = vmatprep.subr.mxu0 0.0
      %6407 = vmatpush2.msra.mxu0 0.0
      %6408 = vmatprep.subr.mxu0 0.0
      %6409 = vmatpush2.msra.mxu0 0.0
      %6410 = vmatprep.mubr.f32.mxu0 0.0
      %6411 = vmatmul.mubr.f32.gmra.mxu0 %v6341
      %v6412 = vpop.f32.mrf.mxu0
      %v6413 = vadd.f32 %v5826, %v6412
      %v6414 = vpop.f32.mrf.mxu0
      %6415 = vdwg.mxu0
      %v6417 = vsel %vm250, %v5735, 0
      %6419 = vmatprep.subr.mxu0 0.0
      %6420 = vmatpush1.msra.mxu0 0.0
      %6421 = vmatprep.subr.mxu0 0.0
      %6422 = vmatpush1.msra.mxu0 0.0
      %6423 = vmatprep.subr.mxu0 0.0
      %6424 = vmatpush1.msra.mxu0 0.0
      %6425 = vmatprep.subr.mxu0 0.0
      %6426 = vmatpush1.msra.mxu0 0.0
      %6427 = vmatprep.subr.mxu0 0.0
      %6428 = vmatpush1.msra.mxu0 0.0
      %6429 = vmatprep.subr.mxu0 0.0
      %6430 = vmatpush1.msra.mxu0 0.0
      %6431 = vmatprep.subr.mxu0 0.0
      %6432 = vmatpush1.msra.mxu0 0.0
      %6433 = vmatprep.subr.mxu0 0.0
      %6434 = vmatpush1.msra.mxu0 0.0
      %6435 = vmatprep.subr.mxu0 0.0
      %6436 = vmatpush1.msra.mxu0 0.0
      %6437 = vmatprep.subr.mxu0 0.0
      %6438 = vmatpush1.msra.mxu0 0.0
      %6439 = vmatprep.subr.mxu0 0.0
      %6440 = vmatpush1.msra.mxu0 0.0
      %6441 = vmatprep.subr.mxu0 0.0
      %6442 = vmatpush1.msra.mxu0 0.0
      %6443 = vmatprep.subr.mxu0 0.0
      %6444 = vmatpush1.msra.mxu0 0.0
      %6445 = vmatprep.subr.mxu0 0.0
      %6446 = vmatpush1.msra.mxu0 0.0
      %6447 = vmatprep.subr.mxu0 0.0
      %6448 = vmatpush1.msra.mxu0 0.0
      %6449 = vmatprep.subr.mxu0 0.0
      %6450 = vmatpush1.msra.mxu0 %v6344
      %6451 = vmatprep.subr.mxu0 0.0
      %6452 = vmatpush2.msra.mxu0 0.0
      %6453 = vmatprep.subr.mxu0 0.0
      %6454 = vmatpush2.msra.mxu0 0.0
      %6455 = vmatprep.subr.mxu0 0.0
      %6456 = vmatpush2.msra.mxu0 0.0
      %6457 = vmatprep.subr.mxu0 0.0
      %6458 = vmatpush2.msra.mxu0 0.0
      %6459 = vmatprep.subr.mxu0 0.0
      %6460 = vmatpush2.msra.mxu0 0.0
      %6461 = vmatprep.subr.mxu0 0.0
      %6462 = vmatpush2.msra.mxu0 0.0
      %6463 = vmatprep.subr.mxu0 0.0
      %6464 = vmatpush2.msra.mxu0 0.0
      %6465 = vmatprep.subr.mxu0 0.0
      %6466 = vmatpush2.msra.mxu0 0.0
      %6467 = vmatprep.subr.mxu0 0.0
      %6468 = vmatpush2.msra.mxu0 0.0
      %6469 = vmatprep.subr.mxu0 0.0
      %6470 = vmatpush2.msra.mxu0 0.0
      %6471 = vmatprep.subr.mxu0 0.0
      %6472 = vmatpush2.msra.mxu0 0.0
      %6473 = vmatprep.subr.mxu0 0.0
      %6474 = vmatpush2.msra.mxu0 0.0
      %6475 = vmatprep.subr.mxu0 0.0
      %6476 = vmatpush2.msra.mxu0 0.0
      %6477 = vmatprep.subr.mxu0 0.0
      %6478 = vmatpush2.msra.mxu0 0.0
      %6479 = vmatprep.subr.mxu0 0.0
      %6480 = vmatpush2.msra.mxu0 0.0
      %6481 = vmatprep.subr.mxu0 0.0
      %6482 = vmatpush2.msra.mxu0 0.0
      %6483 = vmatprep.mubr.f32.mxu0 0.0
      %6484 = vmatmul.mubr.f32.gmra.mxu0 %v6417
      %v6485 = vpop.f32.mrf.mxu0
      %v6486 = vadd.f32 %v5899, %v6485
      %v6487 = vpop.f32.mrf.mxu0
      %6488 = vdwg.mxu0
      %v6490 = vsel %vm250, %v5736, 0
      %6492 = vmatprep.subr.mxu0 0.0
      %6493 = vmatpush1.msra.mxu0 0.0
      %6494 = vmatprep.subr.mxu0 0.0
      %6495 = vmatpush1.msra.mxu0 0.0
      %6496 = vmatprep.subr.mxu0 0.0
      %6497 = vmatpush1.msra.mxu0 0.0
      %6498 = vmatprep.subr.mxu0 0.0
      %6499 = vmatpush1.msra.mxu0 0.0
      %6500 = vmatprep.subr.mxu0 0.0
      %6501 = vmatpush1.msra.mxu0 0.0
      %6502 = vmatprep.subr.mxu0 0.0
      %6503 = vmatpush1.msra.mxu0 0.0
      %6504 = vmatprep.subr.mxu0 0.0
      %6505 = vmatpush1.msra.mxu0 0.0
      %6506 = vmatprep.subr.mxu0 0.0
      %6507 = vmatpush1.msra.mxu0 0.0
      %6508 = vmatprep.subr.mxu0 0.0
      %6509 = vmatpush1.msra.mxu0 0.0
      %6510 = vmatprep.subr.mxu0 0.0
      %6511 = vmatpush1.msra.mxu0 0.0
      %6512 = vmatprep.subr.mxu0 0.0
      %6513 = vmatpush1.msra.mxu0 0.0
      %6514 = vmatprep.subr.mxu0 0.0
      %6515 = vmatpush1.msra.mxu0 0.0
      %6516 = vmatprep.subr.mxu0 0.0
      %6517 = vmatpush1.msra.mxu0 0.0
      %6518 = vmatprep.subr.mxu0 0.0
      %6519 = vmatpush1.msra.mxu0 0.0
      %6520 = vmatprep.subr.mxu0 0.0
      %6521 = vmatpush1.msra.mxu0 0.0
      %6522 = vmatprep.subr.mxu0 0.0
      %6523 = vmatpush1.msra.mxu0 %v6344
      %6524 = vmatprep.subr.mxu0 0.0
      %6525 = vmatpush2.msra.mxu0 0.0
      %6526 = vmatprep.subr.mxu0 0.0
      %6527 = vmatpush2.msra.mxu0 0.0
      %6528 = vmatprep.subr.mxu0 0.0
      %6529 = vmatpush2.msra.mxu0 0.0
      %6530 = vmatprep.subr.mxu0 0.0
      %6531 = vmatpush2.msra.mxu0 0.0
      %6532 = vmatprep.subr.mxu0 0.0
      %6533 = vmatpush2.msra.mxu0 0.0
      %6534 = vmatprep.subr.mxu0 0.0
      %6535 = vmatpush2.msra.mxu0 0.0
      %6536 = vmatprep.subr.mxu0 0.0
      %6537 = vmatpush2.msra.mxu0 0.0
      %6538 = vmatprep.subr.mxu0 0.0
      %6539 = vmatpush2.msra.mxu0 0.0
      %6540 = vmatprep.subr.mxu0 0.0
      %6541 = vmatpush2.msra.mxu0 0.0
      %6542 = vmatprep.subr.mxu0 0.0
      %6543 = vmatpush2.msra.mxu0 0.0
      %6544 = vmatprep.subr.mxu0 0.0
      %6545 = vmatpush2.msra.mxu0 0.0
      %6546 = vmatprep.subr.mxu0 0.0
      %6547 = vmatpush2.msra.mxu0 0.0
      %6548 = vmatprep.subr.mxu0 0.0
      %6549 = vmatpush2.msra.mxu0 0.0
      %6550 = vmatprep.subr.mxu0 0.0
      %6551 = vmatpush2.msra.mxu0 0.0
      %6552 = vmatprep.subr.mxu0 0.0
      %6553 = vmatpush2.msra.mxu0 0.0
      %6554 = vmatprep.subr.mxu0 0.0
      %6555 = vmatpush2.msra.mxu0 0.0
      %6556 = vmatprep.mubr.f32.mxu0 0.0
      %6557 = vmatmul.mubr.f32.gmra.mxu0 %v6490
      %v6558 = vpop.f32.mrf.mxu0
      %v6559 = vadd.f32 %v5972, %v6558
      %v6560 = vpop.f32.mrf.mxu0
      %6561 = vdwg.mxu0
      %v6563 = vsel %vm250, %v5737, 0
      %6565 = vmatprep.subr.mxu0 0.0
      %6566 = vmatpush1.msra.mxu0 0.0
      %6567 = vmatprep.subr.mxu0 0.0
      %6568 = vmatpush1.msra.mxu0 0.0
      %6569 = vmatprep.subr.mxu0 0.0
      %6570 = vmatpush1.msra.mxu0 0.0
      %6571 = vmatprep.subr.mxu0 0.0
      %6572 = vmatpush1.msra.mxu0 0.0
      %6573 = vmatprep.subr.mxu0 0.0
      %6574 = vmatpush1.msra.mxu0 0.0
      %6575 = vmatprep.subr.mxu0 0.0
      %6576 = vmatpush1.msra.mxu0 0.0
      %6577 = vmatprep.subr.mxu0 0.0
      %6578 = vmatpush1.msra.mxu0 0.0
      %6579 = vmatprep.subr.mxu0 0.0
      %6580 = vmatpush1.msra.mxu0 0.0
      %6581 = vmatprep.subr.mxu0 0.0
      %6582 = vmatpush1.msra.mxu0 0.0
      %6583 = vmatprep.subr.mxu0 0.0
      %6584 = vmatpush1.msra.mxu0 0.0
      %6585 = vmatprep.subr.mxu0 0.0
      %6586 = vmatpush1.msra.mxu0 0.0
      %6587 = vmatprep.subr.mxu0 0.0
      %6588 = vmatpush1.msra.mxu0 0.0
      %6589 = vmatprep.subr.mxu0 0.0
      %6590 = vmatpush1.msra.mxu0 0.0
      %6591 = vmatprep.subr.mxu0 0.0
      %6592 = vmatpush1.msra.mxu0 0.0
      %6593 = vmatprep.subr.mxu0 0.0
      %6594 = vmatpush1.msra.mxu0 0.0
      %6595 = vmatprep.subr.mxu0 0.0
      %6596 = vmatpush1.msra.mxu0 %v6344
      %6597 = vmatprep.subr.mxu0 0.0
      %6598 = vmatpush2.msra.mxu0 0.0
      %6599 = vmatprep.subr.mxu0 0.0
      %6600 = vmatpush2.msra.mxu0 0.0
      %6601 = vmatprep.subr.mxu0 0.0
      %6602 = vmatpush2.msra.mxu0 0.0
      %6603 = vmatprep.subr.mxu0 0.0
      %6604 = vmatpush2.msra.mxu0 0.0
      %6605 = vmatprep.subr.mxu0 0.0
      %6606 = vmatpush2.msra.mxu0 0.0
      %6607 = vmatprep.subr.mxu0 0.0
      %6608 = vmatpush2.msra.mxu0 0.0
      %6609 = vmatprep.subr.mxu0 0.0
      %6610 = vmatpush2.msra.mxu0 0.0
      %6611 = vmatprep.subr.mxu0 0.0
      %6612 = vmatpush2.msra.mxu0 0.0
      %6613 = vmatprep.subr.mxu0 0.0
      %6614 = vmatpush2.msra.mxu0 0.0
      %6615 = vmatprep.subr.mxu0 0.0
      %6616 = vmatpush2.msra.mxu0 0.0
      %6617 = vmatprep.subr.mxu0 0.0
      %6618 = vmatpush2.msra.mxu0 0.0
      %6619 = vmatprep.subr.mxu0 0.0
      %6620 = vmatpush2.msra.mxu0 0.0
      %6621 = vmatprep.subr.mxu0 0.0
      %6622 = vmatpush2.msra.mxu0 0.0
      %6623 = vmatprep.subr.mxu0 0.0
      %6624 = vmatpush2.msra.mxu0 0.0
      %6625 = vmatprep.subr.mxu0 0.0
      %6626 = vmatpush2.msra.mxu0 0.0
      %6627 = vmatprep.subr.mxu0 0.0
      %6628 = vmatpush2.msra.mxu0 0.0
      %6629 = vmatprep.mubr.f32.mxu0 0.0
      %6630 = vmatmul.mubr.f32.gmra.mxu0 %v6563
      %v6631 = vpop.f32.mrf.mxu0
      %v6632 = vadd.f32 %v6045, %v6631
      %v6633 = vpop.f32.mrf.mxu0
      %6634 = vdwg.mxu0
      %v6636 = vsel %vm250, %v5738, 0
      %6638 = vmatprep.subr.mxu0 0.0
      %6639 = vmatpush1.msra.mxu0 0.0
      %6640 = vmatprep.subr.mxu0 0.0
      %6641 = vmatpush1.msra.mxu0 0.0
      %6642 = vmatprep.subr.mxu0 0.0
      %6643 = vmatpush1.msra.mxu0 0.0
      %6644 = vmatprep.subr.mxu0 0.0
      %6645 = vmatpush1.msra.mxu0 0.0
      %6646 = vmatprep.subr.mxu0 0.0
      %6647 = vmatpush1.msra.mxu0 0.0
      %6648 = vmatprep.subr.mxu0 0.0
      %6649 = vmatpush1.msra.mxu0 0.0
      %6650 = vmatprep.subr.mxu0 0.0
      %6651 = vmatpush1.msra.mxu0 0.0
      %6652 = vmatprep.subr.mxu0 0.0
      %6653 = vmatpush1.msra.mxu0 0.0
      %6654 = vmatprep.subr.mxu0 0.0
      %6655 = vmatpush1.msra.mxu0 0.0
      %6656 = vmatprep.subr.mxu0 0.0
      %6657 = vmatpush1.msra.mxu0 0.0
      %6658 = vmatprep.subr.mxu0 0.0
      %6659 = vmatpush1.msra.mxu0 0.0
      %6660 = vmatprep.subr.mxu0 0.0
      %6661 = vmatpush1.msra.mxu0 0.0
      %6662 = vmatprep.subr.mxu0 0.0
      %6663 = vmatpush1.msra.mxu0 0.0
      %6664 = vmatprep.subr.mxu0 0.0
      %6665 = vmatpush1.msra.mxu0 0.0
      %6666 = vmatprep.subr.mxu0 0.0
      %6667 = vmatpush1.msra.mxu0 0.0
      %6668 = vmatprep.subr.mxu0 0.0
      %6669 = vmatpush1.msra.mxu0 %v6344
      %6670 = vmatprep.subr.mxu0 0.0
      %6671 = vmatpush2.msra.mxu0 0.0
      %6672 = vmatprep.subr.mxu0 0.0
      %6673 = vmatpush2.msra.mxu0 0.0
      %6674 = vmatprep.subr.mxu0 0.0
      %6675 = vmatpush2.msra.mxu0 0.0
      %6676 = vmatprep.subr.mxu0 0.0
      %6677 = vmatpush2.msra.mxu0 0.0
      %6678 = vmatprep.subr.mxu0 0.0
      %6679 = vmatpush2.msra.mxu0 0.0
      %6680 = vmatprep.subr.mxu0 0.0
      %6681 = vmatpush2.msra.mxu0 0.0
      %6682 = vmatprep.subr.mxu0 0.0
      %6683 = vmatpush2.msra.mxu0 0.0
      %6684 = vmatprep.subr.mxu0 0.0
      %6685 = vmatpush2.msra.mxu0 0.0
      %6686 = vmatprep.subr.mxu0 0.0
      %6687 = vmatpush2.msra.mxu0 0.0
      %6688 = vmatprep.subr.mxu0 0.0
      %6689 = vmatpush2.msra.mxu0 0.0
      %6690 = vmatprep.subr.mxu0 0.0
      %6691 = vmatpush2.msra.mxu0 0.0
      %6692 = vmatprep.subr.mxu0 0.0
      %6693 = vmatpush2.msra.mxu0 0.0
      %6694 = vmatprep.subr.mxu0 0.0
      %6695 = vmatpush2.msra.mxu0 0.0
      %6696 = vmatprep.subr.mxu0 0.0
      %6697 = vmatpush2.msra.mxu0 0.0
      %6698 = vmatprep.subr.mxu0 0.0
      %6699 = vmatpush2.msra.mxu0 0.0
      %6700 = vmatprep.subr.mxu0 0.0
      %6701 = vmatpush2.msra.mxu0 0.0
      %6702 = vmatprep.mubr.f32.mxu0 0.0
      %6703 = vmatmul.mubr.f32.gmra.mxu0 %v6636
      %v6704 = vpop.f32.mrf.mxu0
      %v6705 = vadd.f32 %v6118, %v6704
      %v6706 = vpop.f32.mrf.mxu0
      %6707 = vdwg.mxu0
      %v6709 = vsel %vm250, %v5739, 0
      %6711 = vmatprep.subr.mxu0 0.0
      %6712 = vmatpush1.msra.mxu0 0.0
      %6713 = vmatprep.subr.mxu0 0.0
      %6714 = vmatpush1.msra.mxu0 0.0
      %6715 = vmatprep.subr.mxu0 0.0
      %6716 = vmatpush1.msra.mxu0 0.0
      %6717 = vmatprep.subr.mxu0 0.0
      %6718 = vmatpush1.msra.mxu0 0.0
      %6719 = vmatprep.subr.mxu0 0.0
      %6720 = vmatpush1.msra.mxu0 0.0
      %6721 = vmatprep.subr.mxu0 0.0
      %6722 = vmatpush1.msra.mxu0 0.0
      %6723 = vmatprep.subr.mxu0 0.0
      %6724 = vmatpush1.msra.mxu0 0.0
      %6725 = vmatprep.subr.mxu0 0.0
      %6726 = vmatpush1.msra.mxu0 0.0
      %6727 = vmatprep.subr.mxu0 0.0
      %6728 = vmatpush1.msra.mxu0 0.0
      %6729 = vmatprep.subr.mxu0 0.0
      %6730 = vmatpush1.msra.mxu0 0.0
      %6731 = vmatprep.subr.mxu0 0.0
      %6732 = vmatpush1.msra.mxu0 0.0
      %6733 = vmatprep.subr.mxu0 0.0
      %6734 = vmatpush1.msra.mxu0 0.0
      %6735 = vmatprep.subr.mxu0 0.0
      %6736 = vmatpush1.msra.mxu0 0.0
      %6737 = vmatprep.subr.mxu0 0.0
      %6738 = vmatpush1.msra.mxu0 0.0
      %6739 = vmatprep.subr.mxu0 0.0
      %6740 = vmatpush1.msra.mxu0 0.0
      %6741 = vmatprep.subr.mxu0 0.0
      %6742 = vmatpush1.msra.mxu0 %v6344
      %6743 = vmatprep.subr.mxu0 0.0
      %6744 = vmatpush2.msra.mxu0 0.0
      %6745 = vmatprep.subr.mxu0 0.0
      %6746 = vmatpush2.msra.mxu0 0.0
      %6747 = vmatprep.subr.mxu0 0.0
      %6748 = vmatpush2.msra.mxu0 0.0
      %6749 = vmatprep.subr.mxu0 0.0
      %6750 = vmatpush2.msra.mxu0 0.0
      %6751 = vmatprep.subr.mxu0 0.0
      %6752 = vmatpush2.msra.mxu0 0.0
      %6753 = vmatprep.subr.mxu0 0.0
      %6754 = vmatpush2.msra.mxu0 0.0
      %6755 = vmatprep.subr.mxu0 0.0
      %6756 = vmatpush2.msra.mxu0 0.0
      %6757 = vmatprep.subr.mxu0 0.0
      %6758 = vmatpush2.msra.mxu0 0.0
      %6759 = vmatprep.subr.mxu0 0.0
      %6760 = vmatpush2.msra.mxu0 0.0
      %6761 = vmatprep.subr.mxu0 0.0
      %6762 = vmatpush2.msra.mxu0 0.0
      %6763 = vmatprep.subr.mxu0 0.0
      %6764 = vmatpush2.msra.mxu0 0.0
      %6765 = vmatprep.subr.mxu0 0.0
      %6766 = vmatpush2.msra.mxu0 0.0
      %6767 = vmatprep.subr.mxu0 0.0
      %6768 = vmatpush2.msra.mxu0 0.0
      %6769 = vmatprep.subr.mxu0 0.0
      %6770 = vmatpush2.msra.mxu0 0.0
      %6771 = vmatprep.subr.mxu0 0.0
      %6772 = vmatpush2.msra.mxu0 0.0
      %6773 = vmatprep.subr.mxu0 0.0
      %6774 = vmatpush2.msra.mxu0 0.0
      %6775 = vmatprep.mubr.f32.mxu0 0.0
      %6776 = vmatmul.mubr.f32.gmra.mxu0 %v6709
      %v6777 = vpop.f32.mrf.mxu0
      %v6778 = vadd.f32 %v6191, %v6777
      %v6779 = vpop.f32.mrf.mxu0
      %6780 = vdwg.mxu0
      %v6782 = vsel %vm250, %v5740, 0
      %6784 = vmatprep.subr.mxu0 0.0
      %6785 = vmatpush1.msra.mxu0 0.0
      %6786 = vmatprep.subr.mxu0 0.0
      %6787 = vmatpush1.msra.mxu0 0.0
      %6788 = vmatprep.subr.mxu0 0.0
      %6789 = vmatpush1.msra.mxu0 0.0
      %6790 = vmatprep.subr.mxu0 0.0
      %6791 = vmatpush1.msra.mxu0 0.0
      %6792 = vmatprep.subr.mxu0 0.0
      %6793 = vmatpush1.msra.mxu0 0.0
      %6794 = vmatprep.subr.mxu0 0.0
      %6795 = vmatpush1.msra.mxu0 0.0
      %6796 = vmatprep.subr.mxu0 0.0
      %6797 = vmatpush1.msra.mxu0 0.0
      %6798 = vmatprep.subr.mxu0 0.0
      %6799 = vmatpush1.msra.mxu0 0.0
      %6800 = vmatprep.subr.mxu0 0.0
      %6801 = vmatpush1.msra.mxu0 0.0
      %6802 = vmatprep.subr.mxu0 0.0
      %6803 = vmatpush1.msra.mxu0 0.0
      %6804 = vmatprep.subr.mxu0 0.0
      %6805 = vmatpush1.msra.mxu0 0.0
      %6806 = vmatprep.subr.mxu0 0.0
      %6807 = vmatpush1.msra.mxu0 0.0
      %6808 = vmatprep.subr.mxu0 0.0
      %6809 = vmatpush1.msra.mxu0 0.0
      %6810 = vmatprep.subr.mxu0 0.0
      %6811 = vmatpush1.msra.mxu0 0.0
      %6812 = vmatprep.subr.mxu0 0.0
      %6813 = vmatpush1.msra.mxu0 0.0
      %6814 = vmatprep.subr.mxu0 0.0
      %6815 = vmatpush1.msra.mxu0 %v6344
      %6816 = vmatprep.subr.mxu0 0.0
      %6817 = vmatpush2.msra.mxu0 0.0
      %6818 = vmatprep.subr.mxu0 0.0
      %6819 = vmatpush2.msra.mxu0 0.0
      %6820 = vmatprep.subr.mxu0 0.0
      %6821 = vmatpush2.msra.mxu0 0.0
      %6822 = vmatprep.subr.mxu0 0.0
      %6823 = vmatpush2.msra.mxu0 0.0
      %6824 = vmatprep.subr.mxu0 0.0
      %6825 = vmatpush2.msra.mxu0 0.0
      %6826 = vmatprep.subr.mxu0 0.0
      %6827 = vmatpush2.msra.mxu0 0.0
      %6828 = vmatprep.subr.mxu0 0.0
      %6829 = vmatpush2.msra.mxu0 0.0
      %6830 = vmatprep.subr.mxu0 0.0
      %6831 = vmatpush2.msra.mxu0 0.0
      %6832 = vmatprep.subr.mxu0 0.0
      %6833 = vmatpush2.msra.mxu0 0.0
      %6834 = vmatprep.subr.mxu0 0.0
      %6835 = vmatpush2.msra.mxu0 0.0
      %6836 = vmatprep.subr.mxu0 0.0
      %6837 = vmatpush2.msra.mxu0 0.0
      %6838 = vmatprep.subr.mxu0 0.0
      %6839 = vmatpush2.msra.mxu0 0.0
      %6840 = vmatprep.subr.mxu0 0.0
      %6841 = vmatpush2.msra.mxu0 0.0
      %6842 = vmatprep.subr.mxu0 0.0
      %6843 = vmatpush2.msra.mxu0 0.0
      %6844 = vmatprep.subr.mxu0 0.0
      %6845 = vmatpush2.msra.mxu0 0.0
      %6846 = vmatprep.subr.mxu0 0.0
      %6847 = vmatpush2.msra.mxu0 0.0
      %6848 = vmatprep.mubr.f32.mxu0 0.0
      %6849 = vmatmul.mubr.f32.gmra.mxu0 %v6782
      %v6850 = vpop.f32.mrf.mxu0
      %v6851 = vadd.f32 %v6264, %v6850
      %v6852 = vpop.f32.mrf.mxu0
      %6853 = vdwg.mxu0
      %v6855 = vsel %vm250, %v5741, 0
      %6857 = vmatprep.subr.mxu0 0.0
      %6858 = vmatpush1.msra.mxu0 0.0
      %6859 = vmatprep.subr.mxu0 0.0
      %6860 = vmatpush1.msra.mxu0 0.0
      %6861 = vmatprep.subr.mxu0 0.0
      %6862 = vmatpush1.msra.mxu0 0.0
      %6863 = vmatprep.subr.mxu0 0.0
      %6864 = vmatpush1.msra.mxu0 0.0
      %6865 = vmatprep.subr.mxu0 0.0
      %6866 = vmatpush1.msra.mxu0 0.0
      %6867 = vmatprep.subr.mxu0 0.0
      %6868 = vmatpush1.msra.mxu0 0.0
      %6869 = vmatprep.subr.mxu0 0.0
      %6870 = vmatpush1.msra.mxu0 0.0
      %6871 = vmatprep.subr.mxu0 0.0
      %6872 = vmatpush1.msra.mxu0 0.0
      %6873 = vmatprep.subr.mxu0 0.0
      %6874 = vmatpush1.msra.mxu0 0.0
      %6875 = vmatprep.subr.mxu0 0.0
      %6876 = vmatpush1.msra.mxu0 0.0
      %6877 = vmatprep.subr.mxu0 0.0
      %6878 = vmatpush1.msra.mxu0 0.0
      %6879 = vmatprep.subr.mxu0 0.0
      %6880 = vmatpush1.msra.mxu0 0.0
      %6881 = vmatprep.subr.mxu0 0.0
      %6882 = vmatpush1.msra.mxu0 0.0
      %6883 = vmatprep.subr.mxu0 0.0
      %6884 = vmatpush1.msra.mxu0 0.0
      %6885 = vmatprep.subr.mxu0 0.0
      %6886 = vmatpush1.msra.mxu0 0.0
      %6887 = vmatprep.subr.mxu0 0.0
      %6888 = vmatpush1.msra.mxu0 %v6344
      %6889 = vmatprep.subr.mxu0 0.0
      %6890 = vmatpush2.msra.mxu0 0.0
      %6891 = vmatprep.subr.mxu0 0.0
      %6892 = vmatpush2.msra.mxu0 0.0
      %6893 = vmatprep.subr.mxu0 0.0
      %6894 = vmatpush2.msra.mxu0 0.0
      %6895 = vmatprep.subr.mxu0 0.0
      %6896 = vmatpush2.msra.mxu0 0.0
      %6897 = vmatprep.subr.mxu0 0.0
      %6898 = vmatpush2.msra.mxu0 0.0
      %6899 = vmatprep.subr.mxu0 0.0
      %6900 = vmatpush2.msra.mxu0 0.0
      %6901 = vmatprep.subr.mxu0 0.0
      %6902 = vmatpush2.msra.mxu0 0.0
      %6903 = vmatprep.subr.mxu0 0.0
      %6904 = vmatpush2.msra.mxu0 0.0
      %6905 = vmatprep.subr.mxu0 0.0
      %6906 = vmatpush2.msra.mxu0 0.0
      %6907 = vmatprep.subr.mxu0 0.0
      %6908 = vmatpush2.msra.mxu0 0.0
      %6909 = vmatprep.subr.mxu0 0.0
      %6910 = vmatpush2.msra.mxu0 0.0
      %6911 = vmatprep.subr.mxu0 0.0
      %6912 = vmatpush2.msra.mxu0 0.0
      %6913 = vmatprep.subr.mxu0 0.0
      %6914 = vmatpush2.msra.mxu0 0.0
      %6915 = vmatprep.subr.mxu0 0.0
      %6916 = vmatpush2.msra.mxu0 0.0
      %6917 = vmatprep.subr.mxu0 0.0
      %6918 = vmatpush2.msra.mxu0 0.0
      %6919 = vmatprep.subr.mxu0 0.0
      %6920 = vmatpush2.msra.mxu0 0.0
      %6921 = vmatprep.mubr.f32.mxu0 0.0
      %6922 = vmatmul.mubr.f32.gmra.mxu0 %v6855
      %v6923 = vpop.f32.mrf.mxu0
      %v6924 = vadd.f32 %v6337, %v6923
      %v6925 = vpop.f32.mrf.mxu0
      %6926 = vdwg.mxu0
      %v6927 = vld [vmem:[#allocation2 + $0x2] sm:$0xff]
      %v6928 = vld [vmem:[#allocation2 + $0x12] sm:$0xff]
      %v6929 = vld [vmem:[#allocation2 + $0x22] sm:$0xff]
      %v6930 = vld [vmem:[#allocation2 + $0x32] sm:$0xff]
      %v6931 = vld [vmem:[#allocation2 + $0x42] sm:$0xff]
      %v6932 = vld [vmem:[#allocation2 + $0x52] sm:$0xff]
      %v6933 = vld [vmem:[#allocation2 + $0x62] sm:$0xff]
      %v6934 = vld [vmem:[#allocation2 + $0x72] sm:$0xff]
      %s6935 = scalar_lea.vmem %s3, 8
      %v6936 = vld [vmem:[%s6935] sm:$0xf]
      %v6938 = vsel %vm250, %v6927, 0
      %v6941 = vsel %vm254, %v6936, 0
      %6943 = vmatprep.subr.mxu0 0.0
      %6944 = vmatpush1.msra.mxu0 0.0
      %6945 = vmatprep.subr.mxu0 0.0
      %6946 = vmatpush1.msra.mxu0 0.0
      %6947 = vmatprep.subr.mxu0 0.0
      %6948 = vmatpush1.msra.mxu0 0.0
      %6949 = vmatprep.subr.mxu0 0.0
      %6950 = vmatpush1.msra.mxu0 0.0
      %6951 = vmatprep.subr.mxu0 0.0
      %6952 = vmatpush1.msra.mxu0 0.0
      %6953 = vmatprep.subr.mxu0 0.0
      %6954 = vmatpush1.msra.mxu0 0.0
      %6955 = vmatprep.subr.mxu0 0.0
      %6956 = vmatpush1.msra.mxu0 0.0
      %6957 = vmatprep.subr.mxu0 0.0
      %6958 = vmatpush1.msra.mxu0 0.0
      %6959 = vmatprep.subr.mxu0 0.0
      %6960 = vmatpush1.msra.mxu0 0.0
      %6961 = vmatprep.subr.mxu0 0.0
      %6962 = vmatpush1.msra.mxu0 0.0
      %6963 = vmatprep.subr.mxu0 0.0
      %6964 = vmatpush1.msra.mxu0 0.0
      %6965 = vmatprep.subr.mxu0 0.0
      %6966 = vmatpush1.msra.mxu0 0.0
      %6967 = vmatprep.subr.mxu0 0.0
      %6968 = vmatpush1.msra.mxu0 0.0
      %6969 = vmatprep.subr.mxu0 0.0
      %6970 = vmatpush1.msra.mxu0 0.0
      %6971 = vmatprep.subr.mxu0 0.0
      %6972 = vmatpush1.msra.mxu0 0.0
      %6973 = vmatprep.subr.mxu0 0.0
      %6974 = vmatpush1.msra.mxu0 %v6941
      %6975 = vmatprep.subr.mxu0 0.0
      %6976 = vmatpush2.msra.mxu0 0.0
      %6977 = vmatprep.subr.mxu0 0.0
      %6978 = vmatpush2.msra.mxu0 0.0
      %6979 = vmatprep.subr.mxu0 0.0
      %6980 = vmatpush2.msra.mxu0 0.0
      %6981 = vmatprep.subr.mxu0 0.0
      %6982 = vmatpush2.msra.mxu0 0.0
      %6983 = vmatprep.subr.mxu0 0.0
      %6984 = vmatpush2.msra.mxu0 0.0
      %6985 = vmatprep.subr.mxu0 0.0
      %6986 = vmatpush2.msra.mxu0 0.0
      %6987 = vmatprep.subr.mxu0 0.0
      %6988 = vmatpush2.msra.mxu0 0.0
      %6989 = vmatprep.subr.mxu0 0.0
      %6990 = vmatpush2.msra.mxu0 0.0
      %6991 = vmatprep.subr.mxu0 0.0
      %6992 = vmatpush2.msra.mxu0 0.0
      %6993 = vmatprep.subr.mxu0 0.0
      %6994 = vmatpush2.msra.mxu0 0.0
      %6995 = vmatprep.subr.mxu0 0.0
      %6996 = vmatpush2.msra.mxu0 0.0
      %6997 = vmatprep.subr.mxu0 0.0
      %6998 = vmatpush2.msra.mxu0 0.0
      %6999 = vmatprep.subr.mxu0 0.0
      %7000 = vmatpush2.msra.mxu0 0.0
      %7001 = vmatprep.subr.mxu0 0.0
      %7002 = vmatpush2.msra.mxu0 0.0
      %7003 = vmatprep.subr.mxu0 0.0
      %7004 = vmatpush2.msra.mxu0 0.0
      %7005 = vmatprep.subr.mxu0 0.0
      %7006 = vmatpush2.msra.mxu0 0.0
      %7007 = vmatprep.mubr.f32.mxu0 0.0
      %7008 = vmatmul.mubr.f32.gmra.mxu0 %v6938
      %v7009 = vpop.f32.mrf.mxu0
      %v7010 = vadd.f32 0.0, %v7009
      %v7011 = vpop.f32.mrf.mxu0
      %7012 = vdwg.mxu0
      %v7014 = vsel %vm250, %v6928, 0
      %7016 = vmatprep.subr.mxu0 0.0
      %7017 = vmatpush1.msra.mxu0 0.0
      %7018 = vmatprep.subr.mxu0 0.0
      %7019 = vmatpush1.msra.mxu0 0.0
      %7020 = vmatprep.subr.mxu0 0.0
      %7021 = vmatpush1.msra.mxu0 0.0
      %7022 = vmatprep.subr.mxu0 0.0
      %7023 = vmatpush1.msra.mxu0 0.0
      %7024 = vmatprep.subr.mxu0 0.0
      %7025 = vmatpush1.msra.mxu0 0.0
      %7026 = vmatprep.subr.mxu0 0.0
      %7027 = vmatpush1.msra.mxu0 0.0
      %7028 = vmatprep.subr.mxu0 0.0
      %7029 = vmatpush1.msra.mxu0 0.0
      %7030 = vmatprep.subr.mxu0 0.0
      %7031 = vmatpush1.msra.mxu0 0.0
      %7032 = vmatprep.subr.mxu0 0.0
      %7033 = vmatpush1.msra.mxu0 0.0
      %7034 = vmatprep.subr.mxu0 0.0
      %7035 = vmatpush1.msra.mxu0 0.0
      %7036 = vmatprep.subr.mxu0 0.0
      %7037 = vmatpush1.msra.mxu0 0.0
      %7038 = vmatprep.subr.mxu0 0.0
      %7039 = vmatpush1.msra.mxu0 0.0
      %7040 = vmatprep.subr.mxu0 0.0
      %7041 = vmatpush1.msra.mxu0 0.0
      %7042 = vmatprep.subr.mxu0 0.0
      %7043 = vmatpush1.msra.mxu0 0.0
      %7044 = vmatprep.subr.mxu0 0.0
      %7045 = vmatpush1.msra.mxu0 0.0
      %7046 = vmatprep.subr.mxu0 0.0
      %7047 = vmatpush1.msra.mxu0 %v6941
      %7048 = vmatprep.subr.mxu0 0.0
      %7049 = vmatpush2.msra.mxu0 0.0
      %7050 = vmatprep.subr.mxu0 0.0
      %7051 = vmatpush2.msra.mxu0 0.0
      %7052 = vmatprep.subr.mxu0 0.0
      %7053 = vmatpush2.msra.mxu0 0.0
      %7054 = vmatprep.subr.mxu0 0.0
      %7055 = vmatpush2.msra.mxu0 0.0
      %7056 = vmatprep.subr.mxu0 0.0
      %7057 = vmatpush2.msra.mxu0 0.0
      %7058 = vmatprep.subr.mxu0 0.0
      %7059 = vmatpush2.msra.mxu0 0.0
      %7060 = vmatprep.subr.mxu0 0.0
      %7061 = vmatpush2.msra.mxu0 0.0
      %7062 = vmatprep.subr.mxu0 0.0
      %7063 = vmatpush2.msra.mxu0 0.0
      %7064 = vmatprep.subr.mxu0 0.0
      %7065 = vmatpush2.msra.mxu0 0.0
      %7066 = vmatprep.subr.mxu0 0.0
      %7067 = vmatpush2.msra.mxu0 0.0
      %7068 = vmatprep.subr.mxu0 0.0
      %7069 = vmatpush2.msra.mxu0 0.0
      %7070 = vmatprep.subr.mxu0 0.0
      %7071 = vmatpush2.msra.mxu0 0.0
      %7072 = vmatprep.subr.mxu0 0.0
      %7073 = vmatpush2.msra.mxu0 0.0
      %7074 = vmatprep.subr.mxu0 0.0
      %7075 = vmatpush2.msra.mxu0 0.0
      %7076 = vmatprep.subr.mxu0 0.0
      %7077 = vmatpush2.msra.mxu0 0.0
      %7078 = vmatprep.subr.mxu0 0.0
      %7079 = vmatpush2.msra.mxu0 0.0
      %7080 = vmatprep.mubr.f32.mxu0 0.0
      %7081 = vmatmul.mubr.f32.gmra.mxu0 %v7014
      %v7082 = vpop.f32.mrf.mxu0
      %v7083 = vadd.f32 0.0, %v7082
      %v7084 = vpop.f32.mrf.mxu0
      %7085 = vdwg.mxu0
      %v7087 = vsel %vm250, %v6929, 0
      %7089 = vmatprep.subr.mxu0 0.0
      %7090 = vmatpush1.msra.mxu0 0.0
      %7091 = vmatprep.subr.mxu0 0.0
      %7092 = vmatpush1.msra.mxu0 0.0
      %7093 = vmatprep.subr.mxu0 0.0
      %7094 = vmatpush1.msra.mxu0 0.0
      %7095 = vmatprep.subr.mxu0 0.0
      %7096 = vmatpush1.msra.mxu0 0.0
      %7097 = vmatprep.subr.mxu0 0.0
      %7098 = vmatpush1.msra.mxu0 0.0
      %7099 = vmatprep.subr.mxu0 0.0
      %7100 = vmatpush1.msra.mxu0 0.0
      %7101 = vmatprep.subr.mxu0 0.0
      %7102 = vmatpush1.msra.mxu0 0.0
      %7103 = vmatprep.subr.mxu0 0.0
      %7104 = vmatpush1.msra.mxu0 0.0
      %7105 = vmatprep.subr.mxu0 0.0
      %7106 = vmatpush1.msra.mxu0 0.0
      %7107 = vmatprep.subr.mxu0 0.0
      %7108 = vmatpush1.msra.mxu0 0.0
      %7109 = vmatprep.subr.mxu0 0.0
      %7110 = vmatpush1.msra.mxu0 0.0
      %7111 = vmatprep.subr.mxu0 0.0
      %7112 = vmatpush1.msra.mxu0 0.0
      %7113 = vmatprep.subr.mxu0 0.0
      %7114 = vmatpush1.msra.mxu0 0.0
      %7115 = vmatprep.subr.mxu0 0.0
      %7116 = vmatpush1.msra.mxu0 0.0
      %7117 = vmatprep.subr.mxu0 0.0
      %7118 = vmatpush1.msra.mxu0 0.0
      %7119 = vmatprep.subr.mxu0 0.0
      %7120 = vmatpush1.msra.mxu0 %v6941
      %7121 = vmatprep.subr.mxu0 0.0
      %7122 = vmatpush2.msra.mxu0 0.0
      %7123 = vmatprep.subr.mxu0 0.0
      %7124 = vmatpush2.msra.mxu0 0.0
      %7125 = vmatprep.subr.mxu0 0.0
      %7126 = vmatpush2.msra.mxu0 0.0
      %7127 = vmatprep.subr.mxu0 0.0
      %7128 = vmatpush2.msra.mxu0 0.0
      %7129 = vmatprep.subr.mxu0 0.0
      %7130 = vmatpush2.msra.mxu0 0.0
      %7131 = vmatprep.subr.mxu0 0.0
      %7132 = vmatpush2.msra.mxu0 0.0
      %7133 = vmatprep.subr.mxu0 0.0
      %7134 = vmatpush2.msra.mxu0 0.0
      %7135 = vmatprep.subr.mxu0 0.0
      %7136 = vmatpush2.msra.mxu0 0.0
      %7137 = vmatprep.subr.mxu0 0.0
      %7138 = vmatpush2.msra.mxu0 0.0
      %7139 = vmatprep.subr.mxu0 0.0
      %7140 = vmatpush2.msra.mxu0 0.0
      %7141 = vmatprep.subr.mxu0 0.0
      %7142 = vmatpush2.msra.mxu0 0.0
      %7143 = vmatprep.subr.mxu0 0.0
      %7144 = vmatpush2.msra.mxu0 0.0
      %7145 = vmatprep.subr.mxu0 0.0
      %7146 = vmatpush2.msra.mxu0 0.0
      %7147 = vmatprep.subr.mxu0 0.0
      %7148 = vmatpush2.msra.mxu0 0.0
      %7149 = vmatprep.subr.mxu0 0.0
      %7150 = vmatpush2.msra.mxu0 0.0
      %7151 = vmatprep.subr.mxu0 0.0
      %7152 = vmatpush2.msra.mxu0 0.0
      %7153 = vmatprep.mubr.f32.mxu0 0.0
      %7154 = vmatmul.mubr.f32.gmra.mxu0 %v7087
      %v7155 = vpop.f32.mrf.mxu0
      %v7156 = vadd.f32 0.0, %v7155
      %v7157 = vpop.f32.mrf.mxu0
      %7158 = vdwg.mxu0
      %v7160 = vsel %vm250, %v6930, 0
      %7162 = vmatprep.subr.mxu0 0.0
      %7163 = vmatpush1.msra.mxu0 0.0
      %7164 = vmatprep.subr.mxu0 0.0
      %7165 = vmatpush1.msra.mxu0 0.0
      %7166 = vmatprep.subr.mxu0 0.0
      %7167 = vmatpush1.msra.mxu0 0.0
      %7168 = vmatprep.subr.mxu0 0.0
      %7169 = vmatpush1.msra.mxu0 0.0
      %7170 = vmatprep.subr.mxu0 0.0
      %7171 = vmatpush1.msra.mxu0 0.0
      %7172 = vmatprep.subr.mxu0 0.0
      %7173 = vmatpush1.msra.mxu0 0.0
      %7174 = vmatprep.subr.mxu0 0.0
      %7175 = vmatpush1.msra.mxu0 0.0
      %7176 = vmatprep.subr.mxu0 0.0
      %7177 = vmatpush1.msra.mxu0 0.0
      %7178 = vmatprep.subr.mxu0 0.0
      %7179 = vmatpush1.msra.mxu0 0.0
      %7180 = vmatprep.subr.mxu0 0.0
      %7181 = vmatpush1.msra.mxu0 0.0
      %7182 = vmatprep.subr.mxu0 0.0
      %7183 = vmatpush1.msra.mxu0 0.0
      %7184 = vmatprep.subr.mxu0 0.0
      %7185 = vmatpush1.msra.mxu0 0.0
      %7186 = vmatprep.subr.mxu0 0.0
      %7187 = vmatpush1.msra.mxu0 0.0
      %7188 = vmatprep.subr.mxu0 0.0
      %7189 = vmatpush1.msra.mxu0 0.0
      %7190 = vmatprep.subr.mxu0 0.0
      %7191 = vmatpush1.msra.mxu0 0.0
      %7192 = vmatprep.subr.mxu0 0.0
      %7193 = vmatpush1.msra.mxu0 %v6941
      %7194 = vmatprep.subr.mxu0 0.0
      %7195 = vmatpush2.msra.mxu0 0.0
      %7196 = vmatprep.subr.mxu0 0.0
      %7197 = vmatpush2.msra.mxu0 0.0
      %7198 = vmatprep.subr.mxu0 0.0
      %7199 = vmatpush2.msra.mxu0 0.0
      %7200 = vmatprep.subr.mxu0 0.0
      %7201 = vmatpush2.msra.mxu0 0.0
      %7202 = vmatprep.subr.mxu0 0.0
      %7203 = vmatpush2.msra.mxu0 0.0
      %7204 = vmatprep.subr.mxu0 0.0
      %7205 = vmatpush2.msra.mxu0 0.0
      %7206 = vmatprep.subr.mxu0 0.0
      %7207 = vmatpush2.msra.mxu0 0.0
      %7208 = vmatprep.subr.mxu0 0.0
      %7209 = vmatpush2.msra.mxu0 0.0
      %7210 = vmatprep.subr.mxu0 0.0
      %7211 = vmatpush2.msra.mxu0 0.0
      %7212 = vmatprep.subr.mxu0 0.0
      %7213 = vmatpush2.msra.mxu0 0.0
      %7214 = vmatprep.subr.mxu0 0.0
      %7215 = vmatpush2.msra.mxu0 0.0
      %7216 = vmatprep.subr.mxu0 0.0
      %7217 = vmatpush2.msra.mxu0 0.0
      %7218 = vmatprep.subr.mxu0 0.0
      %7219 = vmatpush2.msra.mxu0 0.0
      %7220 = vmatprep.subr.mxu0 0.0
      %7221 = vmatpush2.msra.mxu0 0.0
      %7222 = vmatprep.subr.mxu0 0.0
      %7223 = vmatpush2.msra.mxu0 0.0
      %7224 = vmatprep.subr.mxu0 0.0
      %7225 = vmatpush2.msra.mxu0 0.0
      %7226 = vmatprep.mubr.f32.mxu0 0.0
      %7227 = vmatmul.mubr.f32.gmra.mxu0 %v7160
      %v7228 = vpop.f32.mrf.mxu0
      %v7229 = vadd.f32 0.0, %v7228
      %v7230 = vpop.f32.mrf.mxu0
      %7231 = vdwg.mxu0
      %v7233 = vsel %vm250, %v6931, 0
      %7235 = vmatprep.subr.mxu0 0.0
      %7236 = vmatpush1.msra.mxu0 0.0
      %7237 = vmatprep.subr.mxu0 0.0
      %7238 = vmatpush1.msra.mxu0 0.0
      %7239 = vmatprep.subr.mxu0 0.0
      %7240 = vmatpush1.msra.mxu0 0.0
      %7241 = vmatprep.subr.mxu0 0.0
      %7242 = vmatpush1.msra.mxu0 0.0
      %7243 = vmatprep.subr.mxu0 0.0
      %7244 = vmatpush1.msra.mxu0 0.0
      %7245 = vmatprep.subr.mxu0 0.0
      %7246 = vmatpush1.msra.mxu0 0.0
      %7247 = vmatprep.subr.mxu0 0.0
      %7248 = vmatpush1.msra.mxu0 0.0
      %7249 = vmatprep.subr.mxu0 0.0
      %7250 = vmatpush1.msra.mxu0 0.0
      %7251 = vmatprep.subr.mxu0 0.0
      %7252 = vmatpush1.msra.mxu0 0.0
      %7253 = vmatprep.subr.mxu0 0.0
      %7254 = vmatpush1.msra.mxu0 0.0
      %7255 = vmatprep.subr.mxu0 0.0
      %7256 = vmatpush1.msra.mxu0 0.0
      %7257 = vmatprep.subr.mxu0 0.0
      %7258 = vmatpush1.msra.mxu0 0.0
      %7259 = vmatprep.subr.mxu0 0.0
      %7260 = vmatpush1.msra.mxu0 0.0
      %7261 = vmatprep.subr.mxu0 0.0
      %7262 = vmatpush1.msra.mxu0 0.0
      %7263 = vmatprep.subr.mxu0 0.0
      %7264 = vmatpush1.msra.mxu0 0.0
      %7265 = vmatprep.subr.mxu0 0.0
      %7266 = vmatpush1.msra.mxu0 %v6941
      %7267 = vmatprep.subr.mxu0 0.0
      %7268 = vmatpush2.msra.mxu0 0.0
      %7269 = vmatprep.subr.mxu0 0.0
      %7270 = vmatpush2.msra.mxu0 0.0
      %7271 = vmatprep.subr.mxu0 0.0
      %7272 = vmatpush2.msra.mxu0 0.0
      %7273 = vmatprep.subr.mxu0 0.0
      %7274 = vmatpush2.msra.mxu0 0.0
      %7275 = vmatprep.subr.mxu0 0.0
      %7276 = vmatpush2.msra.mxu0 0.0
      %7277 = vmatprep.subr.mxu0 0.0
      %7278 = vmatpush2.msra.mxu0 0.0
      %7279 = vmatprep.subr.mxu0 0.0
      %7280 = vmatpush2.msra.mxu0 0.0
      %7281 = vmatprep.subr.mxu0 0.0
      %7282 = vmatpush2.msra.mxu0 0.0
      %7283 = vmatprep.subr.mxu0 0.0
      %7284 = vmatpush2.msra.mxu0 0.0
      %7285 = vmatprep.subr.mxu0 0.0
      %7286 = vmatpush2.msra.mxu0 0.0
      %7287 = vmatprep.subr.mxu0 0.0
      %7288 = vmatpush2.msra.mxu0 0.0
      %7289 = vmatprep.subr.mxu0 0.0
      %7290 = vmatpush2.msra.mxu0 0.0
      %7291 = vmatprep.subr.mxu0 0.0
      %7292 = vmatpush2.msra.mxu0 0.0
      %7293 = vmatprep.subr.mxu0 0.0
      %7294 = vmatpush2.msra.mxu0 0.0
      %7295 = vmatprep.subr.mxu0 0.0
      %7296 = vmatpush2.msra.mxu0 0.0
      %7297 = vmatprep.subr.mxu0 0.0
      %7298 = vmatpush2.msra.mxu0 0.0
      %7299 = vmatprep.mubr.f32.mxu0 0.0
      %7300 = vmatmul.mubr.f32.gmra.mxu0 %v7233
      %v7301 = vpop.f32.mrf.mxu0
      %v7302 = vadd.f32 0.0, %v7301
      %v7303 = vpop.f32.mrf.mxu0
      %7304 = vdwg.mxu0
      %v7306 = vsel %vm250, %v6932, 0
      %7308 = vmatprep.subr.mxu0 0.0
      %7309 = vmatpush1.msra.mxu0 0.0
      %7310 = vmatprep.subr.mxu0 0.0
      %7311 = vmatpush1.msra.mxu0 0.0
      %7312 = vmatprep.subr.mxu0 0.0
      %7313 = vmatpush1.msra.mxu0 0.0
      %7314 = vmatprep.subr.mxu0 0.0
      %7315 = vmatpush1.msra.mxu0 0.0
      %7316 = vmatprep.subr.mxu0 0.0
      %7317 = vmatpush1.msra.mxu0 0.0
      %7318 = vmatprep.subr.mxu0 0.0
      %7319 = vmatpush1.msra.mxu0 0.0
      %7320 = vmatprep.subr.mxu0 0.0
      %7321 = vmatpush1.msra.mxu0 0.0
      %7322 = vmatprep.subr.mxu0 0.0
      %7323 = vmatpush1.msra.mxu0 0.0
      %7324 = vmatprep.subr.mxu0 0.0
      %7325 = vmatpush1.msra.mxu0 0.0
      %7326 = vmatprep.subr.mxu0 0.0
      %7327 = vmatpush1.msra.mxu0 0.0
      %7328 = vmatprep.subr.mxu0 0.0
      %7329 = vmatpush1.msra.mxu0 0.0
      %7330 = vmatprep.subr.mxu0 0.0
      %7331 = vmatpush1.msra.mxu0 0.0
      %7332 = vmatprep.subr.mxu0 0.0
      %7333 = vmatpush1.msra.mxu0 0.0
      %7334 = vmatprep.subr.mxu0 0.0
      %7335 = vmatpush1.msra.mxu0 0.0
      %7336 = vmatprep.subr.mxu0 0.0
      %7337 = vmatpush1.msra.mxu0 0.0
      %7338 = vmatprep.subr.mxu0 0.0
      %7339 = vmatpush1.msra.mxu0 %v6941
      %7340 = vmatprep.subr.mxu0 0.0
      %7341 = vmatpush2.msra.mxu0 0.0
      %7342 = vmatprep.subr.mxu0 0.0
      %7343 = vmatpush2.msra.mxu0 0.0
      %7344 = vmatprep.subr.mxu0 0.0
      %7345 = vmatpush2.msra.mxu0 0.0
      %7346 = vmatprep.subr.mxu0 0.0
      %7347 = vmatpush2.msra.mxu0 0.0
      %7348 = vmatprep.subr.mxu0 0.0
      %7349 = vmatpush2.msra.mxu0 0.0
      %7350 = vmatprep.subr.mxu0 0.0
      %7351 = vmatpush2.msra.mxu0 0.0
      %7352 = vmatprep.subr.mxu0 0.0
      %7353 = vmatpush2.msra.mxu0 0.0
      %7354 = vmatprep.subr.mxu0 0.0
      %7355 = vmatpush2.msra.mxu0 0.0
      %7356 = vmatprep.subr.mxu0 0.0
      %7357 = vmatpush2.msra.mxu0 0.0
      %7358 = vmatprep.subr.mxu0 0.0
      %7359 = vmatpush2.msra.mxu0 0.0
      %7360 = vmatprep.subr.mxu0 0.0
      %7361 = vmatpush2.msra.mxu0 0.0
      %7362 = vmatprep.subr.mxu0 0.0
      %7363 = vmatpush2.msra.mxu0 0.0
      %7364 = vmatprep.subr.mxu0 0.0
      %7365 = vmatpush2.msra.mxu0 0.0
      %7366 = vmatprep.subr.mxu0 0.0
      %7367 = vmatpush2.msra.mxu0 0.0
      %7368 = vmatprep.subr.mxu0 0.0
      %7369 = vmatpush2.msra.mxu0 0.0
      %7370 = vmatprep.subr.mxu0 0.0
      %7371 = vmatpush2.msra.mxu0 0.0
      %7372 = vmatprep.mubr.f32.mxu0 0.0
      %7373 = vmatmul.mubr.f32.gmra.mxu0 %v7306
      %v7374 = vpop.f32.mrf.mxu0
      %v7375 = vadd.f32 0.0, %v7374
      %v7376 = vpop.f32.mrf.mxu0
      %7377 = vdwg.mxu0
      %v7379 = vsel %vm250, %v6933, 0
      %7381 = vmatprep.subr.mxu0 0.0
      %7382 = vmatpush1.msra.mxu0 0.0
      %7383 = vmatprep.subr.mxu0 0.0
      %7384 = vmatpush1.msra.mxu0 0.0
      %7385 = vmatprep.subr.mxu0 0.0
      %7386 = vmatpush1.msra.mxu0 0.0
      %7387 = vmatprep.subr.mxu0 0.0
      %7388 = vmatpush1.msra.mxu0 0.0
      %7389 = vmatprep.subr.mxu0 0.0
      %7390 = vmatpush1.msra.mxu0 0.0
      %7391 = vmatprep.subr.mxu0 0.0
      %7392 = vmatpush1.msra.mxu0 0.0
      %7393 = vmatprep.subr.mxu0 0.0
      %7394 = vmatpush1.msra.mxu0 0.0
      %7395 = vmatprep.subr.mxu0 0.0
      %7396 = vmatpush1.msra.mxu0 0.0
      %7397 = vmatprep.subr.mxu0 0.0
      %7398 = vmatpush1.msra.mxu0 0.0
      %7399 = vmatprep.subr.mxu0 0.0
      %7400 = vmatpush1.msra.mxu0 0.0
      %7401 = vmatprep.subr.mxu0 0.0
      %7402 = vmatpush1.msra.mxu0 0.0
      %7403 = vmatprep.subr.mxu0 0.0
      %7404 = vmatpush1.msra.mxu0 0.0
      %7405 = vmatprep.subr.mxu0 0.0
      %7406 = vmatpush1.msra.mxu0 0.0
      %7407 = vmatprep.subr.mxu0 0.0
      %7408 = vmatpush1.msra.mxu0 0.0
      %7409 = vmatprep.subr.mxu0 0.0
      %7410 = vmatpush1.msra.mxu0 0.0
      %7411 = vmatprep.subr.mxu0 0.0
      %7412 = vmatpush1.msra.mxu0 %v6941
      %7413 = vmatprep.subr.mxu0 0.0
      %7414 = vmatpush2.msra.mxu0 0.0
      %7415 = vmatprep.subr.mxu0 0.0
      %7416 = vmatpush2.msra.mxu0 0.0
      %7417 = vmatprep.subr.mxu0 0.0
      %7418 = vmatpush2.msra.mxu0 0.0
      %7419 = vmatprep.subr.mxu0 0.0
      %7420 = vmatpush2.msra.mxu0 0.0
      %7421 = vmatprep.subr.mxu0 0.0
      %7422 = vmatpush2.msra.mxu0 0.0
      %7423 = vmatprep.subr.mxu0 0.0
      %7424 = vmatpush2.msra.mxu0 0.0
      %7425 = vmatprep.subr.mxu0 0.0
      %7426 = vmatpush2.msra.mxu0 0.0
      %7427 = vmatprep.subr.mxu0 0.0
      %7428 = vmatpush2.msra.mxu0 0.0
      %7429 = vmatprep.subr.mxu0 0.0
      %7430 = vmatpush2.msra.mxu0 0.0
      %7431 = vmatprep.subr.mxu0 0.0
      %7432 = vmatpush2.msra.mxu0 0.0
      %7433 = vmatprep.subr.mxu0 0.0
      %7434 = vmatpush2.msra.mxu0 0.0
      %7435 = vmatprep.subr.mxu0 0.0
      %7436 = vmatpush2.msra.mxu0 0.0
      %7437 = vmatprep.subr.mxu0 0.0
      %7438 = vmatpush2.msra.mxu0 0.0
      %7439 = vmatprep.subr.mxu0 0.0
      %7440 = vmatpush2.msra.mxu0 0.0
      %7441 = vmatprep.subr.mxu0 0.0
      %7442 = vmatpush2.msra.mxu0 0.0
      %7443 = vmatprep.subr.mxu0 0.0
      %7444 = vmatpush2.msra.mxu0 0.0
      %7445 = vmatprep.mubr.f32.mxu0 0.0
      %7446 = vmatmul.mubr.f32.gmra.mxu0 %v7379
      %v7447 = vpop.f32.mrf.mxu0
      %v7448 = vadd.f32 0.0, %v7447
      %v7449 = vpop.f32.mrf.mxu0
      %7450 = vdwg.mxu0
      %v7452 = vsel %vm250, %v6934, 0
      %7454 = vmatprep.subr.mxu0 0.0
      %7455 = vmatpush1.msra.mxu0 0.0
      %7456 = vmatprep.subr.mxu0 0.0
      %7457 = vmatpush1.msra.mxu0 0.0
      %7458 = vmatprep.subr.mxu0 0.0
      %7459 = vmatpush1.msra.mxu0 0.0
      %7460 = vmatprep.subr.mxu0 0.0
      %7461 = vmatpush1.msra.mxu0 0.0
      %7462 = vmatprep.subr.mxu0 0.0
      %7463 = vmatpush1.msra.mxu0 0.0
      %7464 = vmatprep.subr.mxu0 0.0
      %7465 = vmatpush1.msra.mxu0 0.0
      %7466 = vmatprep.subr.mxu0 0.0
      %7467 = vmatpush1.msra.mxu0 0.0
      %7468 = vmatprep.subr.mxu0 0.0
      %7469 = vmatpush1.msra.mxu0 0.0
      %7470 = vmatprep.subr.mxu0 0.0
      %7471 = vmatpush1.msra.mxu0 0.0
      %7472 = vmatprep.subr.mxu0 0.0
      %7473 = vmatpush1.msra.mxu0 0.0
      %7474 = vmatprep.subr.mxu0 0.0
      %7475 = vmatpush1.msra.mxu0 0.0
      %7476 = vmatprep.subr.mxu0 0.0
      %7477 = vmatpush1.msra.mxu0 0.0
      %7478 = vmatprep.subr.mxu0 0.0
      %7479 = vmatpush1.msra.mxu0 0.0
      %7480 = vmatprep.subr.mxu0 0.0
      %7481 = vmatpush1.msra.mxu0 0.0
      %7482 = vmatprep.subr.mxu0 0.0
      %7483 = vmatpush1.msra.mxu0 0.0
      %7484 = vmatprep.subr.mxu0 0.0
      %7485 = vmatpush1.msra.mxu0 %v6941
      %7486 = vmatprep.subr.mxu0 0.0
      %7487 = vmatpush2.msra.mxu0 0.0
      %7488 = vmatprep.subr.mxu0 0.0
      %7489 = vmatpush2.msra.mxu0 0.0
      %7490 = vmatprep.subr.mxu0 0.0
      %7491 = vmatpush2.msra.mxu0 0.0
      %7492 = vmatprep.subr.mxu0 0.0
      %7493 = vmatpush2.msra.mxu0 0.0
      %7494 = vmatprep.subr.mxu0 0.0
      %7495 = vmatpush2.msra.mxu0 0.0
      %7496 = vmatprep.subr.mxu0 0.0
      %7497 = vmatpush2.msra.mxu0 0.0
      %7498 = vmatprep.subr.mxu0 0.0
      %7499 = vmatpush2.msra.mxu0 0.0
      %7500 = vmatprep.subr.mxu0 0.0
      %7501 = vmatpush2.msra.mxu0 0.0
      %7502 = vmatprep.subr.mxu0 0.0
      %7503 = vmatpush2.msra.mxu0 0.0
      %7504 = vmatprep.subr.mxu0 0.0
      %7505 = vmatpush2.msra.mxu0 0.0
      %7506 = vmatprep.subr.mxu0 0.0
      %7507 = vmatpush2.msra.mxu0 0.0
      %7508 = vmatprep.subr.mxu0 0.0
      %7509 = vmatpush2.msra.mxu0 0.0
      %7510 = vmatprep.subr.mxu0 0.0
      %7511 = vmatpush2.msra.mxu0 0.0
      %7512 = vmatprep.subr.mxu0 0.0
      %7513 = vmatpush2.msra.mxu0 0.0
      %7514 = vmatprep.subr.mxu0 0.0
      %7515 = vmatpush2.msra.mxu0 0.0
      %7516 = vmatprep.subr.mxu0 0.0
      %7517 = vmatpush2.msra.mxu0 0.0
      %7518 = vmatprep.mubr.f32.mxu0 0.0
      %7519 = vmatmul.mubr.f32.gmra.mxu0 %v7452
      %v7520 = vpop.f32.mrf.mxu0
      %v7521 = vadd.f32 0.0, %v7520
      %v7522 = vpop.f32.mrf.mxu0
      %7523 = vdwg.mxu0
      %v7524 = vadd.f32 %v6413, %v7010
      %v7525 = vadd.f32 %v6486, %v7083
      %v7526 = vadd.f32 %v6559, %v7156
      %v7527 = vadd.f32 %v6632, %v7229
      %v7528 = vadd.f32 %v6705, %v7302
      %v7529 = vadd.f32 %v6778, %v7375
      %v7530 = vadd.f32 %v6851, %v7448
      %v7531 = vadd.f32 %v6924, %v7521
      %v7532 = vld [vmem:[%s5725] sm:$0xff]
      %v7533 = vld [vmem:[%s5725 + $0x10] sm:$0xff]
      %v7534 = vld [vmem:[%s5725 + $0x20] sm:$0xff]
      %v7535 = vld [vmem:[%s5725 + $0x30] sm:$0xff]
      %v7536 = vld [vmem:[%s5725 + $0x40] sm:$0xff]
      %v7537 = vld [vmem:[%s5725 + $0x50] sm:$0xff]
      %v7538 = vld [vmem:[%s5725 + $0x60] sm:$0xff]
      %v7539 = vld [vmem:[%s5725 + $0x70] sm:$0xff]
      %s7540 = scalar_lea.vmem %s3, 12
      %v7541 = vld [vmem:[%s7540] sm:$0xf]
      %v7543 = vsel %vm250, %v7532, 0
      %v7546 = vsel %vm254, %v7541, 0
      %7548 = vmatprep.subr.mxu0 0.0
      %7549 = vmatpush1.msra.mxu0 0.0
      %7550 = vmatprep.subr.mxu0 0.0
      %7551 = vmatpush1.msra.mxu0 0.0
      %7552 = vmatprep.subr.mxu0 0.0
      %7553 = vmatpush1.msra.mxu0 0.0
      %7554 = vmatprep.subr.mxu0 0.0
      %7555 = vmatpush1.msra.mxu0 0.0
      %7556 = vmatprep.subr.mxu0 0.0
      %7557 = vmatpush1.msra.mxu0 0.0
      %7558 = vmatprep.subr.mxu0 0.0
      %7559 = vmatpush1.msra.mxu0 0.0
      %7560 = vmatprep.subr.mxu0 0.0
      %7561 = vmatpush1.msra.mxu0 0.0
      %7562 = vmatprep.subr.mxu0 0.0
      %7563 = vmatpush1.msra.mxu0 0.0
      %7564 = vmatprep.subr.mxu0 0.0
      %7565 = vmatpush1.msra.mxu0 0.0
      %7566 = vmatprep.subr.mxu0 0.0
      %7567 = vmatpush1.msra.mxu0 0.0
      %7568 = vmatprep.subr.mxu0 0.0
      %7569 = vmatpush1.msra.mxu0 0.0
      %7570 = vmatprep.subr.mxu0 0.0
      %7571 = vmatpush1.msra.mxu0 0.0
      %7572 = vmatprep.subr.mxu0 0.0
      %7573 = vmatpush1.msra.mxu0 0.0
      %7574 = vmatprep.subr.mxu0 0.0
      %7575 = vmatpush1.msra.mxu0 0.0
      %7576 = vmatprep.subr.mxu0 0.0
      %7577 = vmatpush1.msra.mxu0 0.0
      %7578 = vmatprep.subr.mxu0 0.0
      %7579 = vmatpush1.msra.mxu0 %v7546
      %7580 = vmatprep.subr.mxu0 0.0
      %7581 = vmatpush2.msra.mxu0 0.0
      %7582 = vmatprep.subr.mxu0 0.0
      %7583 = vmatpush2.msra.mxu0 0.0
      %7584 = vmatprep.subr.mxu0 0.0
      %7585 = vmatpush2.msra.mxu0 0.0
      %7586 = vmatprep.subr.mxu0 0.0
      %7587 = vmatpush2.msra.mxu0 0.0
      %7588 = vmatprep.subr.mxu0 0.0
      %7589 = vmatpush2.msra.mxu0 0.0
      %7590 = vmatprep.subr.mxu0 0.0
      %7591 = vmatpush2.msra.mxu0 0.0
      %7592 = vmatprep.subr.mxu0 0.0
      %7593 = vmatpush2.msra.mxu0 0.0
      %7594 = vmatprep.subr.mxu0 0.0
      %7595 = vmatpush2.msra.mxu0 0.0
      %7596 = vmatprep.subr.mxu0 0.0
      %7597 = vmatpush2.msra.mxu0 0.0
      %7598 = vmatprep.subr.mxu0 0.0
      %7599 = vmatpush2.msra.mxu0 0.0
      %7600 = vmatprep.subr.mxu0 0.0
      %7601 = vmatpush2.msra.mxu0 0.0
      %7602 = vmatprep.subr.mxu0 0.0
      %7603 = vmatpush2.msra.mxu0 0.0
      %7604 = vmatprep.subr.mxu0 0.0
      %7605 = vmatpush2.msra.mxu0 0.0
      %7606 = vmatprep.subr.mxu0 0.0
      %7607 = vmatpush2.msra.mxu0 0.0
      %7608 = vmatprep.subr.mxu0 0.0
      %7609 = vmatpush2.msra.mxu0 0.0
      %7610 = vmatprep.subr.mxu0 0.0
      %7611 = vmatpush2.msra.mxu0 0.0
      %7612 = vmatprep.mubr.f32.mxu0 0.0
      %7613 = vmatmul.mubr.f32.gmra.mxu0 %v7543
      %v7614 = vpop.f32.mrf.mxu0
      %v7615 = vadd.f32 0.0, %v7614
      %v7616 = vpop.f32.mrf.mxu0
      %7617 = vdwg.mxu0
      %v7619 = vsel %vm250, %v7533, 0
      %7621 = vmatprep.subr.mxu0 0.0
      %7622 = vmatpush1.msra.mxu0 0.0
      %7623 = vmatprep.subr.mxu0 0.0
      %7624 = vmatpush1.msra.mxu0 0.0
      %7625 = vmatprep.subr.mxu0 0.0
      %7626 = vmatpush1.msra.mxu0 0.0
      %7627 = vmatprep.subr.mxu0 0.0
      %7628 = vmatpush1.msra.mxu0 0.0
      %7629 = vmatprep.subr.mxu0 0.0
      %7630 = vmatpush1.msra.mxu0 0.0
      %7631 = vmatprep.subr.mxu0 0.0
      %7632 = vmatpush1.msra.mxu0 0.0
      %7633 = vmatprep.subr.mxu0 0.0
      %7634 = vmatpush1.msra.mxu0 0.0
      %7635 = vmatprep.subr.mxu0 0.0
      %7636 = vmatpush1.msra.mxu0 0.0
      %7637 = vmatprep.subr.mxu0 0.0
      %7638 = vmatpush1.msra.mxu0 0.0
      %7639 = vmatprep.subr.mxu0 0.0
      %7640 = vmatpush1.msra.mxu0 0.0
      %7641 = vmatprep.subr.mxu0 0.0
      %7642 = vmatpush1.msra.mxu0 0.0
      %7643 = vmatprep.subr.mxu0 0.0
      %7644 = vmatpush1.msra.mxu0 0.0
      %7645 = vmatprep.subr.mxu0 0.0
      %7646 = vmatpush1.msra.mxu0 0.0
      %7647 = vmatprep.subr.mxu0 0.0
      %7648 = vmatpush1.msra.mxu0 0.0
      %7649 = vmatprep.subr.mxu0 0.0
      %7650 = vmatpush1.msra.mxu0 0.0
      %7651 = vmatprep.subr.mxu0 0.0
      %7652 = vmatpush1.msra.mxu0 %v7546
      %7653 = vmatprep.subr.mxu0 0.0
      %7654 = vmatpush2.msra.mxu0 0.0
      %7655 = vmatprep.subr.mxu0 0.0
      %7656 = vmatpush2.msra.mxu0 0.0
      %7657 = vmatprep.subr.mxu0 0.0
      %7658 = vmatpush2.msra.mxu0 0.0
      %7659 = vmatprep.subr.mxu0 0.0
      %7660 = vmatpush2.msra.mxu0 0.0
      %7661 = vmatprep.subr.mxu0 0.0
      %7662 = vmatpush2.msra.mxu0 0.0
      %7663 = vmatprep.subr.mxu0 0.0
      %7664 = vmatpush2.msra.mxu0 0.0
      %7665 = vmatprep.subr.mxu0 0.0
      %7666 = vmatpush2.msra.mxu0 0.0
      %7667 = vmatprep.subr.mxu0 0.0
      %7668 = vmatpush2.msra.mxu0 0.0
      %7669 = vmatprep.subr.mxu0 0.0
      %7670 = vmatpush2.msra.mxu0 0.0
      %7671 = vmatprep.subr.mxu0 0.0
      %7672 = vmatpush2.msra.mxu0 0.0
      %7673 = vmatprep.subr.mxu0 0.0
      %7674 = vmatpush2.msra.mxu0 0.0
      %7675 = vmatprep.subr.mxu0 0.0
      %7676 = vmatpush2.msra.mxu0 0.0
      %7677 = vmatprep.subr.mxu0 0.0
      %7678 = vmatpush2.msra.mxu0 0.0
      %7679 = vmatprep.subr.mxu0 0.0
      %7680 = vmatpush2.msra.mxu0 0.0
      %7681 = vmatprep.subr.mxu0 0.0
      %7682 = vmatpush2.msra.mxu0 0.0
      %7683 = vmatprep.subr.mxu0 0.0
      %7684 = vmatpush2.msra.mxu0 0.0
      %7685 = vmatprep.mubr.f32.mxu0 0.0
      %7686 = vmatmul.mubr.f32.gmra.mxu0 %v7619
      %v7687 = vpop.f32.mrf.mxu0
      %v7688 = vadd.f32 0.0, %v7687
      %v7689 = vpop.f32.mrf.mxu0
      %7690 = vdwg.mxu0
      %v7692 = vsel %vm250, %v7534, 0
      %7694 = vmatprep.subr.mxu0 0.0
      %7695 = vmatpush1.msra.mxu0 0.0
      %7696 = vmatprep.subr.mxu0 0.0
      %7697 = vmatpush1.msra.mxu0 0.0
      %7698 = vmatprep.subr.mxu0 0.0
      %7699 = vmatpush1.msra.mxu0 0.0
      %7700 = vmatprep.subr.mxu0 0.0
      %7701 = vmatpush1.msra.mxu0 0.0
      %7702 = vmatprep.subr.mxu0 0.0
      %7703 = vmatpush1.msra.mxu0 0.0
      %7704 = vmatprep.subr.mxu0 0.0
      %7705 = vmatpush1.msra.mxu0 0.0
      %7706 = vmatprep.subr.mxu0 0.0
      %7707 = vmatpush1.msra.mxu0 0.0
      %7708 = vmatprep.subr.mxu0 0.0
      %7709 = vmatpush1.msra.mxu0 0.0
      %7710 = vmatprep.subr.mxu0 0.0
      %7711 = vmatpush1.msra.mxu0 0.0
      %7712 = vmatprep.subr.mxu0 0.0
      %7713 = vmatpush1.msra.mxu0 0.0
      %7714 = vmatprep.subr.mxu0 0.0
      %7715 = vmatpush1.msra.mxu0 0.0
      %7716 = vmatprep.subr.mxu0 0.0
      %7717 = vmatpush1.msra.mxu0 0.0
      %7718 = vmatprep.subr.mxu0 0.0
      %7719 = vmatpush1.msra.mxu0 0.0
      %7720 = vmatprep.subr.mxu0 0.0
      %7721 = vmatpush1.msra.mxu0 0.0
      %7722 = vmatprep.subr.mxu0 0.0
      %7723 = vmatpush1.msra.mxu0 0.0
      %7724 = vmatprep.subr.mxu0 0.0
      %7725 = vmatpush1.msra.mxu0 %v7546
      %7726 = vmatprep.subr.mxu0 0.0
      %7727 = vmatpush2.msra.mxu0 0.0
      %7728 = vmatprep.subr.mxu0 0.0
      %7729 = vmatpush2.msra.mxu0 0.0
      %7730 = vmatprep.subr.mxu0 0.0
      %7731 = vmatpush2.msra.mxu0 0.0
      %7732 = vmatprep.subr.mxu0 0.0
      %7733 = vmatpush2.msra.mxu0 0.0
      %7734 = vmatprep.subr.mxu0 0.0
      %7735 = vmatpush2.msra.mxu0 0.0
      %7736 = vmatprep.subr.mxu0 0.0
      %7737 = vmatpush2.msra.mxu0 0.0
      %7738 = vmatprep.subr.mxu0 0.0
      %7739 = vmatpush2.msra.mxu0 0.0
      %7740 = vmatprep.subr.mxu0 0.0
      %7741 = vmatpush2.msra.mxu0 0.0
      %7742 = vmatprep.subr.mxu0 0.0
      %7743 = vmatpush2.msra.mxu0 0.0
      %7744 = vmatprep.subr.mxu0 0.0
      %7745 = vmatpush2.msra.mxu0 0.0
      %7746 = vmatprep.subr.mxu0 0.0
      %7747 = vmatpush2.msra.mxu0 0.0
      %7748 = vmatprep.subr.mxu0 0.0
      %7749 = vmatpush2.msra.mxu0 0.0
      %7750 = vmatprep.subr.mxu0 0.0
      %7751 = vmatpush2.msra.mxu0 0.0
      %7752 = vmatprep.subr.mxu0 0.0
      %7753 = vmatpush2.msra.mxu0 0.0
      %7754 = vmatprep.subr.mxu0 0.0
      %7755 = vmatpush2.msra.mxu0 0.0
      %7756 = vmatprep.subr.mxu0 0.0
      %7757 = vmatpush2.msra.mxu0 0.0
      %7758 = vmatprep.mubr.f32.mxu0 0.0
      %7759 = vmatmul.mubr.f32.gmra.mxu0 %v7692
      %v7760 = vpop.f32.mrf.mxu0
      %v7761 = vadd.f32 0.0, %v7760
      %v7762 = vpop.f32.mrf.mxu0
      %7763 = vdwg.mxu0
      %v7765 = vsel %vm250, %v7535, 0
      %7767 = vmatprep.subr.mxu0 0.0
      %7768 = vmatpush1.msra.mxu0 0.0
      %7769 = vmatprep.subr.mxu0 0.0
      %7770 = vmatpush1.msra.mxu0 0.0
      %7771 = vmatprep.subr.mxu0 0.0
      %7772 = vmatpush1.msra.mxu0 0.0
      %7773 = vmatprep.subr.mxu0 0.0
      %7774 = vmatpush1.msra.mxu0 0.0
      %7775 = vmatprep.subr.mxu0 0.0
      %7776 = vmatpush1.msra.mxu0 0.0
      %7777 = vmatprep.subr.mxu0 0.0
      %7778 = vmatpush1.msra.mxu0 0.0
      %7779 = vmatprep.subr.mxu0 0.0
      %7780 = vmatpush1.msra.mxu0 0.0
      %7781 = vmatprep.subr.mxu0 0.0
      %7782 = vmatpush1.msra.mxu0 0.0
      %7783 = vmatprep.subr.mxu0 0.0
      %7784 = vmatpush1.msra.mxu0 0.0
      %7785 = vmatprep.subr.mxu0 0.0
      %7786 = vmatpush1.msra.mxu0 0.0
      %7787 = vmatprep.subr.mxu0 0.0
      %7788 = vmatpush1.msra.mxu0 0.0
      %7789 = vmatprep.subr.mxu0 0.0
      %7790 = vmatpush1.msra.mxu0 0.0
      %7791 = vmatprep.subr.mxu0 0.0
      %7792 = vmatpush1.msra.mxu0 0.0
      %7793 = vmatprep.subr.mxu0 0.0
      %7794 = vmatpush1.msra.mxu0 0.0
      %7795 = vmatprep.subr.mxu0 0.0
      %7796 = vmatpush1.msra.mxu0 0.0
      %7797 = vmatprep.subr.mxu0 0.0
      %7798 = vmatpush1.msra.mxu0 %v7546
      %7799 = vmatprep.subr.mxu0 0.0
      %7800 = vmatpush2.msra.mxu0 0.0
      %7801 = vmatprep.subr.mxu0 0.0
      %7802 = vmatpush2.msra.mxu0 0.0
      %7803 = vmatprep.subr.mxu0 0.0
      %7804 = vmatpush2.msra.mxu0 0.0
      %7805 = vmatprep.subr.mxu0 0.0
      %7806 = vmatpush2.msra.mxu0 0.0
      %7807 = vmatprep.subr.mxu0 0.0
      %7808 = vmatpush2.msra.mxu0 0.0
      %7809 = vmatprep.subr.mxu0 0.0
      %7810 = vmatpush2.msra.mxu0 0.0
      %7811 = vmatprep.subr.mxu0 0.0
      %7812 = vmatpush2.msra.mxu0 0.0
      %7813 = vmatprep.subr.mxu0 0.0
      %7814 = vmatpush2.msra.mxu0 0.0
      %7815 = vmatprep.subr.mxu0 0.0
      %7816 = vmatpush2.msra.mxu0 0.0
      %7817 = vmatprep.subr.mxu0 0.0
      %7818 = vmatpush2.msra.mxu0 0.0
      %7819 = vmatprep.subr.mxu0 0.0
      %7820 = vmatpush2.msra.mxu0 0.0
      %7821 = vmatprep.subr.mxu0 0.0
      %7822 = vmatpush2.msra.mxu0 0.0
      %7823 = vmatprep.subr.mxu0 0.0
      %7824 = vmatpush2.msra.mxu0 0.0
      %7825 = vmatprep.subr.mxu0 0.0
      %7826 = vmatpush2.msra.mxu0 0.0
      %7827 = vmatprep.subr.mxu0 0.0
      %7828 = vmatpush2.msra.mxu0 0.0
      %7829 = vmatprep.subr.mxu0 0.0
      %7830 = vmatpush2.msra.mxu0 0.0
      %7831 = vmatprep.mubr.f32.mxu0 0.0
      %7832 = vmatmul.mubr.f32.gmra.mxu0 %v7765
      %v7833 = vpop.f32.mrf.mxu0
      %v7834 = vadd.f32 0.0, %v7833
      %v7835 = vpop.f32.mrf.mxu0
      %7836 = vdwg.mxu0
      %v7838 = vsel %vm250, %v7536, 0
      %7840 = vmatprep.subr.mxu0 0.0
      %7841 = vmatpush1.msra.mxu0 0.0
      %7842 = vmatprep.subr.mxu0 0.0
      %7843 = vmatpush1.msra.mxu0 0.0
      %7844 = vmatprep.subr.mxu0 0.0
      %7845 = vmatpush1.msra.mxu0 0.0
      %7846 = vmatprep.subr.mxu0 0.0
      %7847 = vmatpush1.msra.mxu0 0.0
      %7848 = vmatprep.subr.mxu0 0.0
      %7849 = vmatpush1.msra.mxu0 0.0
      %7850 = vmatprep.subr.mxu0 0.0
      %7851 = vmatpush1.msra.mxu0 0.0
      %7852 = vmatprep.subr.mxu0 0.0
      %7853 = vmatpush1.msra.mxu0 0.0
      %7854 = vmatprep.subr.mxu0 0.0
      %7855 = vmatpush1.msra.mxu0 0.0
      %7856 = vmatprep.subr.mxu0 0.0
      %7857 = vmatpush1.msra.mxu0 0.0
      %7858 = vmatprep.subr.mxu0 0.0
      %7859 = vmatpush1.msra.mxu0 0.0
      %7860 = vmatprep.subr.mxu0 0.0
      %7861 = vmatpush1.msra.mxu0 0.0
      %7862 = vmatprep.subr.mxu0 0.0
      %7863 = vmatpush1.msra.mxu0 0.0
      %7864 = vmatprep.subr.mxu0 0.0
      %7865 = vmatpush1.msra.mxu0 0.0
      %7866 = vmatprep.subr.mxu0 0.0
      %7867 = vmatpush1.msra.mxu0 0.0
      %7868 = vmatprep.subr.mxu0 0.0
      %7869 = vmatpush1.msra.mxu0 0.0
      %7870 = vmatprep.subr.mxu0 0.0
      %7871 = vmatpush1.msra.mxu0 %v7546
      %7872 = vmatprep.subr.mxu0 0.0
      %7873 = vmatpush2.msra.mxu0 0.0
      %7874 = vmatprep.subr.mxu0 0.0
      %7875 = vmatpush2.msra.mxu0 0.0
      %7876 = vmatprep.subr.mxu0 0.0
      %7877 = vmatpush2.msra.mxu0 0.0
      %7878 = vmatprep.subr.mxu0 0.0
      %7879 = vmatpush2.msra.mxu0 0.0
      %7880 = vmatprep.subr.mxu0 0.0
      %7881 = vmatpush2.msra.mxu0 0.0
      %7882 = vmatprep.subr.mxu0 0.0
      %7883 = vmatpush2.msra.mxu0 0.0
      %7884 = vmatprep.subr.mxu0 0.0
      %7885 = vmatpush2.msra.mxu0 0.0
      %7886 = vmatprep.subr.mxu0 0.0
      %7887 = vmatpush2.msra.mxu0 0.0
      %7888 = vmatprep.subr.mxu0 0.0
      %7889 = vmatpush2.msra.mxu0 0.0
      %7890 = vmatprep.subr.mxu0 0.0
      %7891 = vmatpush2.msra.mxu0 0.0
      %7892 = vmatprep.subr.mxu0 0.0
      %7893 = vmatpush2.msra.mxu0 0.0
      %7894 = vmatprep.subr.mxu0 0.0
      %7895 = vmatpush2.msra.mxu0 0.0
      %7896 = vmatprep.subr.mxu0 0.0
      %7897 = vmatpush2.msra.mxu0 0.0
      %7898 = vmatprep.subr.mxu0 0.0
      %7899 = vmatpush2.msra.mxu0 0.0
      %7900 = vmatprep.subr.mxu0 0.0
      %7901 = vmatpush2.msra.mxu0 0.0
      %7902 = vmatprep.subr.mxu0 0.0
      %7903 = vmatpush2.msra.mxu0 0.0
      %7904 = vmatprep.mubr.f32.mxu0 0.0
      %7905 = vmatmul.mubr.f32.gmra.mxu0 %v7838
      %v7906 = vpop.f32.mrf.mxu0
      %v7907 = vadd.f32 0.0, %v7906
      %v7908 = vpop.f32.mrf.mxu0
      %7909 = vdwg.mxu0
      %v7911 = vsel %vm250, %v7537, 0
      %7913 = vmatprep.subr.mxu0 0.0
      %7914 = vmatpush1.msra.mxu0 0.0
      %7915 = vmatprep.subr.mxu0 0.0
      %7916 = vmatpush1.msra.mxu0 0.0
      %7917 = vmatprep.subr.mxu0 0.0
      %7918 = vmatpush1.msra.mxu0 0.0
      %7919 = vmatprep.subr.mxu0 0.0
      %7920 = vmatpush1.msra.mxu0 0.0
      %7921 = vmatprep.subr.mxu0 0.0
      %7922 = vmatpush1.msra.mxu0 0.0
      %7923 = vmatprep.subr.mxu0 0.0
      %7924 = vmatpush1.msra.mxu0 0.0
      %7925 = vmatprep.subr.mxu0 0.0
      %7926 = vmatpush1.msra.mxu0 0.0
      %7927 = vmatprep.subr.mxu0 0.0
      %7928 = vmatpush1.msra.mxu0 0.0
      %7929 = vmatprep.subr.mxu0 0.0
      %7930 = vmatpush1.msra.mxu0 0.0
      %7931 = vmatprep.subr.mxu0 0.0
      %7932 = vmatpush1.msra.mxu0 0.0
      %7933 = vmatprep.subr.mxu0 0.0
      %7934 = vmatpush1.msra.mxu0 0.0
      %7935 = vmatprep.subr.mxu0 0.0
      %7936 = vmatpush1.msra.mxu0 0.0
      %7937 = vmatprep.subr.mxu0 0.0
      %7938 = vmatpush1.msra.mxu0 0.0
      %7939 = vmatprep.subr.mxu0 0.0
      %7940 = vmatpush1.msra.mxu0 0.0
      %7941 = vmatprep.subr.mxu0 0.0
      %7942 = vmatpush1.msra.mxu0 0.0
      %7943 = vmatprep.subr.mxu0 0.0
      %7944 = vmatpush1.msra.mxu0 %v7546
      %7945 = vmatprep.subr.mxu0 0.0
      %7946 = vmatpush2.msra.mxu0 0.0
      %7947 = vmatprep.subr.mxu0 0.0
      %7948 = vmatpush2.msra.mxu0 0.0
      %7949 = vmatprep.subr.mxu0 0.0
      %7950 = vmatpush2.msra.mxu0 0.0
      %7951 = vmatprep.subr.mxu0 0.0
      %7952 = vmatpush2.msra.mxu0 0.0
      %7953 = vmatprep.subr.mxu0 0.0
      %7954 = vmatpush2.msra.mxu0 0.0
      %7955 = vmatprep.subr.mxu0 0.0
      %7956 = vmatpush2.msra.mxu0 0.0
      %7957 = vmatprep.subr.mxu0 0.0
      %7958 = vmatpush2.msra.mxu0 0.0
      %7959 = vmatprep.subr.mxu0 0.0
      %7960 = vmatpush2.msra.mxu0 0.0
      %7961 = vmatprep.subr.mxu0 0.0
      %7962 = vmatpush2.msra.mxu0 0.0
      %7963 = vmatprep.subr.mxu0 0.0
      %7964 = vmatpush2.msra.mxu0 0.0
      %7965 = vmatprep.subr.mxu0 0.0
      %7966 = vmatpush2.msra.mxu0 0.0
      %7967 = vmatprep.subr.mxu0 0.0
      %7968 = vmatpush2.msra.mxu0 0.0
      %7969 = vmatprep.subr.mxu0 0.0
      %7970 = vmatpush2.msra.mxu0 0.0
      %7971 = vmatprep.subr.mxu0 0.0
      %7972 = vmatpush2.msra.mxu0 0.0
      %7973 = vmatprep.subr.mxu0 0.0
      %7974 = vmatpush2.msra.mxu0 0.0
      %7975 = vmatprep.subr.mxu0 0.0
      %7976 = vmatpush2.msra.mxu0 0.0
      %7977 = vmatprep.mubr.f32.mxu0 0.0
      %7978 = vmatmul.mubr.f32.gmra.mxu0 %v7911
      %v7979 = vpop.f32.mrf.mxu0
      %v7980 = vadd.f32 0.0, %v7979
      %v7981 = vpop.f32.mrf.mxu0
      %7982 = vdwg.mxu0
      %v7984 = vsel %vm250, %v7538, 0
      %7986 = vmatprep.subr.mxu0 0.0
      %7987 = vmatpush1.msra.mxu0 0.0
      %7988 = vmatprep.subr.mxu0 0.0
      %7989 = vmatpush1.msra.mxu0 0.0
      %7990 = vmatprep.subr.mxu0 0.0
      %7991 = vmatpush1.msra.mxu0 0.0
      %7992 = vmatprep.subr.mxu0 0.0
      %7993 = vmatpush1.msra.mxu0 0.0
      %7994 = vmatprep.subr.mxu0 0.0
      %7995 = vmatpush1.msra.mxu0 0.0
      %7996 = vmatprep.subr.mxu0 0.0
      %7997 = vmatpush1.msra.mxu0 0.0
      %7998 = vmatprep.subr.mxu0 0.0
      %7999 = vmatpush1.msra.mxu0 0.0
      %8000 = vmatprep.subr.mxu0 0.0
      %8001 = vmatpush1.msra.mxu0 0.0
      %8002 = vmatprep.subr.mxu0 0.0
      %8003 = vmatpush1.msra.mxu0 0.0
      %8004 = vmatprep.subr.mxu0 0.0
      %8005 = vmatpush1.msra.mxu0 0.0
      %8006 = vmatprep.subr.mxu0 0.0
      %8007 = vmatpush1.msra.mxu0 0.0
      %8008 = vmatprep.subr.mxu0 0.0
      %8009 = vmatpush1.msra.mxu0 0.0
      %8010 = vmatprep.subr.mxu0 0.0
      %8011 = vmatpush1.msra.mxu0 0.0
      %8012 = vmatprep.subr.mxu0 0.0
      %8013 = vmatpush1.msra.mxu0 0.0
      %8014 = vmatprep.subr.mxu0 0.0
      %8015 = vmatpush1.msra.mxu0 0.0
      %8016 = vmatprep.subr.mxu0 0.0
      %8017 = vmatpush1.msra.mxu0 %v7546
      %8018 = vmatprep.subr.mxu0 0.0
      %8019 = vmatpush2.msra.mxu0 0.0
      %8020 = vmatprep.subr.mxu0 0.0
      %8021 = vmatpush2.msra.mxu0 0.0
      %8022 = vmatprep.subr.mxu0 0.0
      %8023 = vmatpush2.msra.mxu0 0.0
      %8024 = vmatprep.subr.mxu0 0.0
      %8025 = vmatpush2.msra.mxu0 0.0
      %8026 = vmatprep.subr.mxu0 0.0
      %8027 = vmatpush2.msra.mxu0 0.0
      %8028 = vmatprep.subr.mxu0 0.0
      %8029 = vmatpush2.msra.mxu0 0.0
      %8030 = vmatprep.subr.mxu0 0.0
      %8031 = vmatpush2.msra.mxu0 0.0
      %8032 = vmatprep.subr.mxu0 0.0
      %8033 = vmatpush2.msra.mxu0 0.0
      %8034 = vmatprep.subr.mxu0 0.0
      %8035 = vmatpush2.msra.mxu0 0.0
      %8036 = vmatprep.subr.mxu0 0.0
      %8037 = vmatpush2.msra.mxu0 0.0
      %8038 = vmatprep.subr.mxu0 0.0
      %8039 = vmatpush2.msra.mxu0 0.0
      %8040 = vmatprep.subr.mxu0 0.0
      %8041 = vmatpush2.msra.mxu0 0.0
      %8042 = vmatprep.subr.mxu0 0.0
      %8043 = vmatpush2.msra.mxu0 0.0
      %8044 = vmatprep.subr.mxu0 0.0
      %8045 = vmatpush2.msra.mxu0 0.0
      %8046 = vmatprep.subr.mxu0 0.0
      %8047 = vmatpush2.msra.mxu0 0.0
      %8048 = vmatprep.subr.mxu0 0.0
      %8049 = vmatpush2.msra.mxu0 0.0
      %8050 = vmatprep.mubr.f32.mxu0 0.0
      %8051 = vmatmul.mubr.f32.gmra.mxu0 %v7984
      %v8052 = vpop.f32.mrf.mxu0
      %v8053 = vadd.f32 0.0, %v8052
      %v8054 = vpop.f32.mrf.mxu0
      %8055 = vdwg.mxu0
      %v8057 = vsel %vm250, %v7539, 0
      %8059 = vmatprep.subr.mxu0 0.0
      %8060 = vmatpush1.msra.mxu0 0.0
      %8061 = vmatprep.subr.mxu0 0.0
      %8062 = vmatpush1.msra.mxu0 0.0
      %8063 = vmatprep.subr.mxu0 0.0
      %8064 = vmatpush1.msra.mxu0 0.0
      %8065 = vmatprep.subr.mxu0 0.0
      %8066 = vmatpush1.msra.mxu0 0.0
      %8067 = vmatprep.subr.mxu0 0.0
      %8068 = vmatpush1.msra.mxu0 0.0
      %8069 = vmatprep.subr.mxu0 0.0
      %8070 = vmatpush1.msra.mxu0 0.0
      %8071 = vmatprep.subr.mxu0 0.0
      %8072 = vmatpush1.msra.mxu0 0.0
      %8073 = vmatprep.subr.mxu0 0.0
      %8074 = vmatpush1.msra.mxu0 0.0
      %8075 = vmatprep.subr.mxu0 0.0
      %8076 = vmatpush1.msra.mxu0 0.0
      %8077 = vmatprep.subr.mxu0 0.0
      %8078 = vmatpush1.msra.mxu0 0.0
      %8079 = vmatprep.subr.mxu0 0.0
      %8080 = vmatpush1.msra.mxu0 0.0
      %8081 = vmatprep.subr.mxu0 0.0
      %8082 = vmatpush1.msra.mxu0 0.0
      %8083 = vmatprep.subr.mxu0 0.0
      %8084 = vmatpush1.msra.mxu0 0.0
      %8085 = vmatprep.subr.mxu0 0.0
      %8086 = vmatpush1.msra.mxu0 0.0
      %8087 = vmatprep.subr.mxu0 0.0
      %8088 = vmatpush1.msra.mxu0 0.0
      %8089 = vmatprep.subr.mxu0 0.0
      %8090 = vmatpush1.msra.mxu0 %v7546
      %8091 = vmatprep.subr.mxu0 0.0
      %8092 = vmatpush2.msra.mxu0 0.0
      %8093 = vmatprep.subr.mxu0 0.0
      %8094 = vmatpush2.msra.mxu0 0.0
      %8095 = vmatprep.subr.mxu0 0.0
      %8096 = vmatpush2.msra.mxu0 0.0
      %8097 = vmatprep.subr.mxu0 0.0
      %8098 = vmatpush2.msra.mxu0 0.0
      %8099 = vmatprep.subr.mxu0 0.0
      %8100 = vmatpush2.msra.mxu0 0.0
      %8101 = vmatprep.subr.mxu0 0.0
      %8102 = vmatpush2.msra.mxu0 0.0
      %8103 = vmatprep.subr.mxu0 0.0
      %8104 = vmatpush2.msra.mxu0 0.0
      %8105 = vmatprep.subr.mxu0 0.0
      %8106 = vmatpush2.msra.mxu0 0.0
      %8107 = vmatprep.subr.mxu0 0.0
      %8108 = vmatpush2.msra.mxu0 0.0
      %8109 = vmatprep.subr.mxu0 0.0
      %8110 = vmatpush2.msra.mxu0 0.0
      %8111 = vmatprep.subr.mxu0 0.0
      %8112 = vmatpush2.msra.mxu0 0.0
      %8113 = vmatprep.subr.mxu0 0.0
      %8114 = vmatpush2.msra.mxu0 0.0
      %8115 = vmatprep.subr.mxu0 0.0
      %8116 = vmatpush2.msra.mxu0 0.0
      %8117 = vmatprep.subr.mxu0 0.0
      %8118 = vmatpush2.msra.mxu0 0.0
      %8119 = vmatprep.subr.mxu0 0.0
      %8120 = vmatpush2.msra.mxu0 0.0
      %8121 = vmatprep.subr.mxu0 0.0
      %8122 = vmatpush2.msra.mxu0 0.0
      %8123 = vmatprep.mubr.f32.mxu0 0.0
      %8124 = vmatmul.mubr.f32.gmra.mxu0 %v8057
      %v8125 = vpop.f32.mrf.mxu0
      %v8126 = vadd.f32 0.0, %v8125
      %v8127 = vpop.f32.mrf.mxu0
      %8128 = vdwg.mxu0
      %v8129 = vadd.f32 %v7524, %v7615
      %v8130 = vadd.f32 %v7525, %v7688
      %v8131 = vadd.f32 %v7526, %v7761
      %v8132 = vadd.f32 %v7527, %v7834
      %v8133 = vadd.f32 %v7528, %v7907
      %v8134 = vadd.f32 %v7529, %v7980
      %v8135 = vadd.f32 %v7530, %v8053
      %v8136 = vadd.f32 %v7531, %v8126
      %v8137 = vld [vmem:[%s5725 + $0x1] sm:$0xff]
      %v8138 = vld [vmem:[%s5725 + $0x11] sm:$0xff]
      %v8139 = vld [vmem:[%s5725 + $0x21] sm:$0xff]
      %v8140 = vld [vmem:[%s5725 + $0x31] sm:$0xff]
      %v8141 = vld [vmem:[%s5725 + $0x41] sm:$0xff]
      %v8142 = vld [vmem:[%s5725 + $0x51] sm:$0xff]
      %v8143 = vld [vmem:[%s5725 + $0x61] sm:$0xff]
      %v8144 = vld [vmem:[%s5725 + $0x71] sm:$0xff]
      %s8145 = scalar_lea.vmem %s3, 16
      %v8146 = vld [vmem:[%s8145] sm:$0xf]
      %v8148 = vsel %vm250, %v8137, 0
      %v8151 = vsel %vm254, %v8146, 0
      %8153 = vmatprep.subr.mxu0 0.0
      %8154 = vmatpush1.msra.mxu0 0.0
      %8155 = vmatprep.subr.mxu0 0.0
      %8156 = vmatpush1.msra.mxu0 0.0
      %8157 = vmatprep.subr.mxu0 0.0
      %8158 = vmatpush1.msra.mxu0 0.0
      %8159 = vmatprep.subr.mxu0 0.0
      %8160 = vmatpush1.msra.mxu0 0.0
      %8161 = vmatprep.subr.mxu0 0.0
      %8162 = vmatpush1.msra.mxu0 0.0
      %8163 = vmatprep.subr.mxu0 0.0
      %8164 = vmatpush1.msra.mxu0 0.0
      %8165 = vmatprep.subr.mxu0 0.0
      %8166 = vmatpush1.msra.mxu0 0.0
      %8167 = vmatprep.subr.mxu0 0.0
      %8168 = vmatpush1.msra.mxu0 0.0
      %8169 = vmatprep.subr.mxu0 0.0
      %8170 = vmatpush1.msra.mxu0 0.0
      %8171 = vmatprep.subr.mxu0 0.0
      %8172 = vmatpush1.msra.mxu0 0.0
      %8173 = vmatprep.subr.mxu0 0.0
      %8174 = vmatpush1.msra.mxu0 0.0
      %8175 = vmatprep.subr.mxu0 0.0
      %8176 = vmatpush1.msra.mxu0 0.0
      %8177 = vmatprep.subr.mxu0 0.0
      %8178 = vmatpush1.msra.mxu0 0.0
      %8179 = vmatprep.subr.mxu0 0.0
      %8180 = vmatpush1.msra.mxu0 0.0
      %8181 = vmatprep.subr.mxu0 0.0
      %8182 = vmatpush1.msra.mxu0 0.0
      %8183 = vmatprep.subr.mxu0 0.0
      %8184 = vmatpush1.msra.mxu0 %v8151
      %8185 = vmatprep.subr.mxu0 0.0
      %8186 = vmatpush2.msra.mxu0 0.0
      %8187 = vmatprep.subr.mxu0 0.0
      %8188 = vmatpush2.msra.mxu0 0.0
      %8189 = vmatprep.subr.mxu0 0.0
      %8190 = vmatpush2.msra.mxu0 0.0
      %8191 = vmatprep.subr.mxu0 0.0
      %8192 = vmatpush2.msra.mxu0 0.0
      %8193 = vmatprep.subr.mxu0 0.0
      %8194 = vmatpush2.msra.mxu0 0.0
      %8195 = vmatprep.subr.mxu0 0.0
      %8196 = vmatpush2.msra.mxu0 0.0
      %8197 = vmatprep.subr.mxu0 0.0
      %8198 = vmatpush2.msra.mxu0 0.0
      %8199 = vmatprep.subr.mxu0 0.0
      %8200 = vmatpush2.msra.mxu0 0.0
      %8201 = vmatprep.subr.mxu0 0.0
      %8202 = vmatpush2.msra.mxu0 0.0
      %8203 = vmatprep.subr.mxu0 0.0
      %8204 = vmatpush2.msra.mxu0 0.0
      %8205 = vmatprep.subr.mxu0 0.0
      %8206 = vmatpush2.msra.mxu0 0.0
      %8207 = vmatprep.subr.mxu0 0.0
      %8208 = vmatpush2.msra.mxu0 0.0
      %8209 = vmatprep.subr.mxu0 0.0
      %8210 = vmatpush2.msra.mxu0 0.0
      %8211 = vmatprep.subr.mxu0 0.0
      %8212 = vmatpush2.msra.mxu0 0.0
      %8213 = vmatprep.subr.mxu0 0.0
      %8214 = vmatpush2.msra.mxu0 0.0
      %8215 = vmatprep.subr.mxu0 0.0
      %8216 = vmatpush2.msra.mxu0 0.0
      %8217 = vmatprep.mubr.f32.mxu0 0.0
      %8218 = vmatmul.mubr.f32.gmra.mxu0 %v8148
      %v8219 = vpop.f32.mrf.mxu0
      %v8220 = vadd.f32 0.0, %v8219
      %v8221 = vpop.f32.mrf.mxu0
      %8222 = vdwg.mxu0
      %v8224 = vsel %vm250, %v8138, 0
      %8226 = vmatprep.subr.mxu0 0.0
      %8227 = vmatpush1.msra.mxu0 0.0
      %8228 = vmatprep.subr.mxu0 0.0
      %8229 = vmatpush1.msra.mxu0 0.0
      %8230 = vmatprep.subr.mxu0 0.0
      %8231 = vmatpush1.msra.mxu0 0.0
      %8232 = vmatprep.subr.mxu0 0.0
      %8233 = vmatpush1.msra.mxu0 0.0
      %8234 = vmatprep.subr.mxu0 0.0
      %8235 = vmatpush1.msra.mxu0 0.0
      %8236 = vmatprep.subr.mxu0 0.0
      %8237 = vmatpush1.msra.mxu0 0.0
      %8238 = vmatprep.subr.mxu0 0.0
      %8239 = vmatpush1.msra.mxu0 0.0
      %8240 = vmatprep.subr.mxu0 0.0
      %8241 = vmatpush1.msra.mxu0 0.0
      %8242 = vmatprep.subr.mxu0 0.0
      %8243 = vmatpush1.msra.mxu0 0.0
      %8244 = vmatprep.subr.mxu0 0.0
      %8245 = vmatpush1.msra.mxu0 0.0
      %8246 = vmatprep.subr.mxu0 0.0
      %8247 = vmatpush1.msra.mxu0 0.0
      %8248 = vmatprep.subr.mxu0 0.0
      %8249 = vmatpush1.msra.mxu0 0.0
      %8250 = vmatprep.subr.mxu0 0.0
      %8251 = vmatpush1.msra.mxu0 0.0
      %8252 = vmatprep.subr.mxu0 0.0
      %8253 = vmatpush1.msra.mxu0 0.0
      %8254 = vmatprep.subr.mxu0 0.0
      %8255 = vmatpush1.msra.mxu0 0.0
      %8256 = vmatprep.subr.mxu0 0.0
      %8257 = vmatpush1.msra.mxu0 %v8151
      %8258 = vmatprep.subr.mxu0 0.0
      %8259 = vmatpush2.msra.mxu0 0.0
      %8260 = vmatprep.subr.mxu0 0.0
      %8261 = vmatpush2.msra.mxu0 0.0
      %8262 = vmatprep.subr.mxu0 0.0
      %8263 = vmatpush2.msra.mxu0 0.0
      %8264 = vmatprep.subr.mxu0 0.0
      %8265 = vmatpush2.msra.mxu0 0.0
      %8266 = vmatprep.subr.mxu0 0.0
      %8267 = vmatpush2.msra.mxu0 0.0
      %8268 = vmatprep.subr.mxu0 0.0
      %8269 = vmatpush2.msra.mxu0 0.0
      %8270 = vmatprep.subr.mxu0 0.0
      %8271 = vmatpush2.msra.mxu0 0.0
      %8272 = vmatprep.subr.mxu0 0.0
      %8273 = vmatpush2.msra.mxu0 0.0
      %8274 = vmatprep.subr.mxu0 0.0
      %8275 = vmatpush2.msra.mxu0 0.0
      %8276 = vmatprep.subr.mxu0 0.0
      %8277 = vmatpush2.msra.mxu0 0.0
      %8278 = vmatprep.subr.mxu0 0.0
      %8279 = vmatpush2.msra.mxu0 0.0
      %8280 = vmatprep.subr.mxu0 0.0
      %8281 = vmatpush2.msra.mxu0 0.0
      %8282 = vmatprep.subr.mxu0 0.0
      %8283 = vmatpush2.msra.mxu0 0.0
      %8284 = vmatprep.subr.mxu0 0.0
      %8285 = vmatpush2.msra.mxu0 0.0
      %8286 = vmatprep.subr.mxu0 0.0
      %8287 = vmatpush2.msra.mxu0 0.0
      %8288 = vmatprep.subr.mxu0 0.0
      %8289 = vmatpush2.msra.mxu0 0.0
      %8290 = vmatprep.mubr.f32.mxu0 0.0
      %8291 = vmatmul.mubr.f32.gmra.mxu0 %v8224
      %v8292 = vpop.f32.mrf.mxu0
      %v8293 = vadd.f32 0.0, %v8292
      %v8294 = vpop.f32.mrf.mxu0
      %8295 = vdwg.mxu0
      %v8297 = vsel %vm250, %v8139, 0
      %8299 = vmatprep.subr.mxu0 0.0
      %8300 = vmatpush1.msra.mxu0 0.0
      %8301 = vmatprep.subr.mxu0 0.0
      %8302 = vmatpush1.msra.mxu0 0.0
      %8303 = vmatprep.subr.mxu0 0.0
      %8304 = vmatpush1.msra.mxu0 0.0
      %8305 = vmatprep.subr.mxu0 0.0
      %8306 = vmatpush1.msra.mxu0 0.0
      %8307 = vmatprep.subr.mxu0 0.0
      %8308 = vmatpush1.msra.mxu0 0.0
      %8309 = vmatprep.subr.mxu0 0.0
      %8310 = vmatpush1.msra.mxu0 0.0
      %8311 = vmatprep.subr.mxu0 0.0
      %8312 = vmatpush1.msra.mxu0 0.0
      %8313 = vmatprep.subr.mxu0 0.0
      %8314 = vmatpush1.msra.mxu0 0.0
      %8315 = vmatprep.subr.mxu0 0.0
      %8316 = vmatpush1.msra.mxu0 0.0
      %8317 = vmatprep.subr.mxu0 0.0
      %8318 = vmatpush1.msra.mxu0 0.0
      %8319 = vmatprep.subr.mxu0 0.0
      %8320 = vmatpush1.msra.mxu0 0.0
      %8321 = vmatprep.subr.mxu0 0.0
      %8322 = vmatpush1.msra.mxu0 0.0
      %8323 = vmatprep.subr.mxu0 0.0
      %8324 = vmatpush1.msra.mxu0 0.0
      %8325 = vmatprep.subr.mxu0 0.0
      %8326 = vmatpush1.msra.mxu0 0.0
      %8327 = vmatprep.subr.mxu0 0.0
      %8328 = vmatpush1.msra.mxu0 0.0
      %8329 = vmatprep.subr.mxu0 0.0
      %8330 = vmatpush1.msra.mxu0 %v8151
      %8331 = vmatprep.subr.mxu0 0.0
      %8332 = vmatpush2.msra.mxu0 0.0
      %8333 = vmatprep.subr.mxu0 0.0
      %8334 = vmatpush2.msra.mxu0 0.0
      %8335 = vmatprep.subr.mxu0 0.0
      %8336 = vmatpush2.msra.mxu0 0.0
      %8337 = vmatprep.subr.mxu0 0.0
      %8338 = vmatpush2.msra.mxu0 0.0
      %8339 = vmatprep.subr.mxu0 0.0
      %8340 = vmatpush2.msra.mxu0 0.0
      %8341 = vmatprep.subr.mxu0 0.0
      %8342 = vmatpush2.msra.mxu0 0.0
      %8343 = vmatprep.subr.mxu0 0.0
      %8344 = vmatpush2.msra.mxu0 0.0
      %8345 = vmatprep.subr.mxu0 0.0
      %8346 = vmatpush2.msra.mxu0 0.0
      %8347 = vmatprep.subr.mxu0 0.0
      %8348 = vmatpush2.msra.mxu0 0.0
      %8349 = vmatprep.subr.mxu0 0.0
      %8350 = vmatpush2.msra.mxu0 0.0
      %8351 = vmatprep.subr.mxu0 0.0
      %8352 = vmatpush2.msra.mxu0 0.0
      %8353 = vmatprep.subr.mxu0 0.0
      %8354 = vmatpush2.msra.mxu0 0.0
      %8355 = vmatprep.subr.mxu0 0.0
      %8356 = vmatpush2.msra.mxu0 0.0
      %8357 = vmatprep.subr.mxu0 0.0
      %8358 = vmatpush2.msra.mxu0 0.0
      %8359 = vmatprep.subr.mxu0 0.0
      %8360 = vmatpush2.msra.mxu0 0.0
      %8361 = vmatprep.subr.mxu0 0.0
      %8362 = vmatpush2.msra.mxu0 0.0
      %8363 = vmatprep.mubr.f32.mxu0 0.0
      %8364 = vmatmul.mubr.f32.gmra.mxu0 %v8297
      %v8365 = vpop.f32.mrf.mxu0
      %v8366 = vadd.f32 0.0, %v8365
      %v8367 = vpop.f32.mrf.mxu0
      %8368 = vdwg.mxu0
      %v8370 = vsel %vm250, %v8140, 0
      %8372 = vmatprep.subr.mxu0 0.0
      %8373 = vmatpush1.msra.mxu0 0.0
      %8374 = vmatprep.subr.mxu0 0.0
      %8375 = vmatpush1.msra.mxu0 0.0
      %8376 = vmatprep.subr.mxu0 0.0
      %8377 = vmatpush1.msra.mxu0 0.0
      %8378 = vmatprep.subr.mxu0 0.0
      %8379 = vmatpush1.msra.mxu0 0.0
      %8380 = vmatprep.subr.mxu0 0.0
      %8381 = vmatpush1.msra.mxu0 0.0
      %8382 = vmatprep.subr.mxu0 0.0
      %8383 = vmatpush1.msra.mxu0 0.0
      %8384 = vmatprep.subr.mxu0 0.0
      %8385 = vmatpush1.msra.mxu0 0.0
      %8386 = vmatprep.subr.mxu0 0.0
      %8387 = vmatpush1.msra.mxu0 0.0
      %8388 = vmatprep.subr.mxu0 0.0
      %8389 = vmatpush1.msra.mxu0 0.0
      %8390 = vmatprep.subr.mxu0 0.0
      %8391 = vmatpush1.msra.mxu0 0.0
      %8392 = vmatprep.subr.mxu0 0.0
      %8393 = vmatpush1.msra.mxu0 0.0
      %8394 = vmatprep.subr.mxu0 0.0
      %8395 = vmatpush1.msra.mxu0 0.0
      %8396 = vmatprep.subr.mxu0 0.0
      %8397 = vmatpush1.msra.mxu0 0.0
      %8398 = vmatprep.subr.mxu0 0.0
      %8399 = vmatpush1.msra.mxu0 0.0
      %8400 = vmatprep.subr.mxu0 0.0
      %8401 = vmatpush1.msra.mxu0 0.0
      %8402 = vmatprep.subr.mxu0 0.0
      %8403 = vmatpush1.msra.mxu0 %v8151
      %8404 = vmatprep.subr.mxu0 0.0
      %8405 = vmatpush2.msra.mxu0 0.0
      %8406 = vmatprep.subr.mxu0 0.0
      %8407 = vmatpush2.msra.mxu0 0.0
      %8408 = vmatprep.subr.mxu0 0.0
      %8409 = vmatpush2.msra.mxu0 0.0
      %8410 = vmatprep.subr.mxu0 0.0
      %8411 = vmatpush2.msra.mxu0 0.0
      %8412 = vmatprep.subr.mxu0 0.0
      %8413 = vmatpush2.msra.mxu0 0.0
      %8414 = vmatprep.subr.mxu0 0.0
      %8415 = vmatpush2.msra.mxu0 0.0
      %8416 = vmatprep.subr.mxu0 0.0
      %8417 = vmatpush2.msra.mxu0 0.0
      %8418 = vmatprep.subr.mxu0 0.0
      %8419 = vmatpush2.msra.mxu0 0.0
      %8420 = vmatprep.subr.mxu0 0.0
      %8421 = vmatpush2.msra.mxu0 0.0
      %8422 = vmatprep.subr.mxu0 0.0
      %8423 = vmatpush2.msra.mxu0 0.0
      %8424 = vmatprep.subr.mxu0 0.0
      %8425 = vmatpush2.msra.mxu0 0.0
      %8426 = vmatprep.subr.mxu0 0.0
      %8427 = vmatpush2.msra.mxu0 0.0
      %8428 = vmatprep.subr.mxu0 0.0
      %8429 = vmatpush2.msra.mxu0 0.0
      %8430 = vmatprep.subr.mxu0 0.0
      %8431 = vmatpush2.msra.mxu0 0.0
      %8432 = vmatprep.subr.mxu0 0.0
      %8433 = vmatpush2.msra.mxu0 0.0
      %8434 = vmatprep.subr.mxu0 0.0
      %8435 = vmatpush2.msra.mxu0 0.0
      %8436 = vmatprep.mubr.f32.mxu0 0.0
      %8437 = vmatmul.mubr.f32.gmra.mxu0 %v8370
      %v8438 = vpop.f32.mrf.mxu0
      %v8439 = vadd.f32 0.0, %v8438
      %v8440 = vpop.f32.mrf.mxu0
      %8441 = vdwg.mxu0
      %v8443 = vsel %vm250, %v8141, 0
      %8445 = vmatprep.subr.mxu0 0.0
      %8446 = vmatpush1.msra.mxu0 0.0
      %8447 = vmatprep.subr.mxu0 0.0
      %8448 = vmatpush1.msra.mxu0 0.0
      %8449 = vmatprep.subr.mxu0 0.0
      %8450 = vmatpush1.msra.mxu0 0.0
      %8451 = vmatprep.subr.mxu0 0.0
      %8452 = vmatpush1.msra.mxu0 0.0
      %8453 = vmatprep.subr.mxu0 0.0
      %8454 = vmatpush1.msra.mxu0 0.0
      %8455 = vmatprep.subr.mxu0 0.0
      %8456 = vmatpush1.msra.mxu0 0.0
      %8457 = vmatprep.subr.mxu0 0.0
      %8458 = vmatpush1.msra.mxu0 0.0
      %8459 = vmatprep.subr.mxu0 0.0
      %8460 = vmatpush1.msra.mxu0 0.0
      %8461 = vmatprep.subr.mxu0 0.0
      %8462 = vmatpush1.msra.mxu0 0.0
      %8463 = vmatprep.subr.mxu0 0.0
      %8464 = vmatpush1.msra.mxu0 0.0
      %8465 = vmatprep.subr.mxu0 0.0
      %8466 = vmatpush1.msra.mxu0 0.0
      %8467 = vmatprep.subr.mxu0 0.0
      %8468 = vmatpush1.msra.mxu0 0.0
      %8469 = vmatprep.subr.mxu0 0.0
      %8470 = vmatpush1.msra.mxu0 0.0
      %8471 = vmatprep.subr.mxu0 0.0
      %8472 = vmatpush1.msra.mxu0 0.0
      %8473 = vmatprep.subr.mxu0 0.0
      %8474 = vmatpush1.msra.mxu0 0.0
      %8475 = vmatprep.subr.mxu0 0.0
      %8476 = vmatpush1.msra.mxu0 %v8151
      %8477 = vmatprep.subr.mxu0 0.0
      %8478 = vmatpush2.msra.mxu0 0.0
      %8479 = vmatprep.subr.mxu0 0.0
      %8480 = vmatpush2.msra.mxu0 0.0
      %8481 = vmatprep.subr.mxu0 0.0
      %8482 = vmatpush2.msra.mxu0 0.0
      %8483 = vmatprep.subr.mxu0 0.0
      %8484 = vmatpush2.msra.mxu0 0.0
      %8485 = vmatprep.subr.mxu0 0.0
      %8486 = vmatpush2.msra.mxu0 0.0
      %8487 = vmatprep.subr.mxu0 0.0
      %8488 = vmatpush2.msra.mxu0 0.0
      %8489 = vmatprep.subr.mxu0 0.0
      %8490 = vmatpush2.msra.mxu0 0.0
      %8491 = vmatprep.subr.mxu0 0.0
      %8492 = vmatpush2.msra.mxu0 0.0
      %8493 = vmatprep.subr.mxu0 0.0
      %8494 = vmatpush2.msra.mxu0 0.0
      %8495 = vmatprep.subr.mxu0 0.0
      %8496 = vmatpush2.msra.mxu0 0.0
      %8497 = vmatprep.subr.mxu0 0.0
      %8498 = vmatpush2.msra.mxu0 0.0
      %8499 = vmatprep.subr.mxu0 0.0
      %8500 = vmatpush2.msra.mxu0 0.0
      %8501 = vmatprep.subr.mxu0 0.0
      %8502 = vmatpush2.msra.mxu0 0.0
      %8503 = vmatprep.subr.mxu0 0.0
      %8504 = vmatpush2.msra.mxu0 0.0
      %8505 = vmatprep.subr.mxu0 0.0
      %8506 = vmatpush2.msra.mxu0 0.0
      %8507 = vmatprep.subr.mxu0 0.0
      %8508 = vmatpush2.msra.mxu0 0.0
      %8509 = vmatprep.mubr.f32.mxu0 0.0
      %8510 = vmatmul.mubr.f32.gmra.mxu0 %v8443
      %v8511 = vpop.f32.mrf.mxu0
      %v8512 = vadd.f32 0.0, %v8511
      %v8513 = vpop.f32.mrf.mxu0
      %8514 = vdwg.mxu0
      %v8516 = vsel %vm250, %v8142, 0
      %8518 = vmatprep.subr.mxu0 0.0
      %8519 = vmatpush1.msra.mxu0 0.0
      %8520 = vmatprep.subr.mxu0 0.0
      %8521 = vmatpush1.msra.mxu0 0.0
      %8522 = vmatprep.subr.mxu0 0.0
      %8523 = vmatpush1.msra.mxu0 0.0
      %8524 = vmatprep.subr.mxu0 0.0
      %8525 = vmatpush1.msra.mxu0 0.0
      %8526 = vmatprep.subr.mxu0 0.0
      %8527 = vmatpush1.msra.mxu0 0.0
      %8528 = vmatprep.subr.mxu0 0.0
      %8529 = vmatpush1.msra.mxu0 0.0
      %8530 = vmatprep.subr.mxu0 0.0
      %8531 = vmatpush1.msra.mxu0 0.0
      %8532 = vmatprep.subr.mxu0 0.0
      %8533 = vmatpush1.msra.mxu0 0.0
      %8534 = vmatprep.subr.mxu0 0.0
      %8535 = vmatpush1.msra.mxu0 0.0
      %8536 = vmatprep.subr.mxu0 0.0
      %8537 = vmatpush1.msra.mxu0 0.0
      %8538 = vmatprep.subr.mxu0 0.0
      %8539 = vmatpush1.msra.mxu0 0.0
      %8540 = vmatprep.subr.mxu0 0.0
      %8541 = vmatpush1.msra.mxu0 0.0
      %8542 = vmatprep.subr.mxu0 0.0
      %8543 = vmatpush1.msra.mxu0 0.0
      %8544 = vmatprep.subr.mxu0 0.0
      %8545 = vmatpush1.msra.mxu0 0.0
      %8546 = vmatprep.subr.mxu0 0.0
      %8547 = vmatpush1.msra.mxu0 0.0
      %8548 = vmatprep.subr.mxu0 0.0
      %8549 = vmatpush1.msra.mxu0 %v8151
      %8550 = vmatprep.subr.mxu0 0.0
      %8551 = vmatpush2.msra.mxu0 0.0
      %8552 = vmatprep.subr.mxu0 0.0
      %8553 = vmatpush2.msra.mxu0 0.0
      %8554 = vmatprep.subr.mxu0 0.0
      %8555 = vmatpush2.msra.mxu0 0.0
      %8556 = vmatprep.subr.mxu0 0.0
      %8557 = vmatpush2.msra.mxu0 0.0
      %8558 = vmatprep.subr.mxu0 0.0
      %8559 = vmatpush2.msra.mxu0 0.0
      %8560 = vmatprep.subr.mxu0 0.0
      %8561 = vmatpush2.msra.mxu0 0.0
      %8562 = vmatprep.subr.mxu0 0.0
      %8563 = vmatpush2.msra.mxu0 0.0
      %8564 = vmatprep.subr.mxu0 0.0
      %8565 = vmatpush2.msra.mxu0 0.0
      %8566 = vmatprep.subr.mxu0 0.0
      %8567 = vmatpush2.msra.mxu0 0.0
      %8568 = vmatprep.subr.mxu0 0.0
      %8569 = vmatpush2.msra.mxu0 0.0
      %8570 = vmatprep.subr.mxu0 0.0
      %8571 = vmatpush2.msra.mxu0 0.0
      %8572 = vmatprep.subr.mxu0 0.0
      %8573 = vmatpush2.msra.mxu0 0.0
      %8574 = vmatprep.subr.mxu0 0.0
      %8575 = vmatpush2.msra.mxu0 0.0
      %8576 = vmatprep.subr.mxu0 0.0
      %8577 = vmatpush2.msra.mxu0 0.0
      %8578 = vmatprep.subr.mxu0 0.0
      %8579 = vmatpush2.msra.mxu0 0.0
      %8580 = vmatprep.subr.mxu0 0.0
      %8581 = vmatpush2.msra.mxu0 0.0
      %8582 = vmatprep.mubr.f32.mxu0 0.0
      %8583 = vmatmul.mubr.f32.gmra.mxu0 %v8516
      %v8584 = vpop.f32.mrf.mxu0
      %v8585 = vadd.f32 0.0, %v8584
      %v8586 = vpop.f32.mrf.mxu0
      %8587 = vdwg.mxu0
      %v8589 = vsel %vm250, %v8143, 0
      %8591 = vmatprep.subr.mxu0 0.0
      %8592 = vmatpush1.msra.mxu0 0.0
      %8593 = vmatprep.subr.mxu0 0.0
      %8594 = vmatpush1.msra.mxu0 0.0
      %8595 = vmatprep.subr.mxu0 0.0
      %8596 = vmatpush1.msra.mxu0 0.0
      %8597 = vmatprep.subr.mxu0 0.0
      %8598 = vmatpush1.msra.mxu0 0.0
      %8599 = vmatprep.subr.mxu0 0.0
      %8600 = vmatpush1.msra.mxu0 0.0
      %8601 = vmatprep.subr.mxu0 0.0
      %8602 = vmatpush1.msra.mxu0 0.0
      %8603 = vmatprep.subr.mxu0 0.0
      %8604 = vmatpush1.msra.mxu0 0.0
      %8605 = vmatprep.subr.mxu0 0.0
      %8606 = vmatpush1.msra.mxu0 0.0
      %8607 = vmatprep.subr.mxu0 0.0
      %8608 = vmatpush1.msra.mxu0 0.0
      %8609 = vmatprep.subr.mxu0 0.0
      %8610 = vmatpush1.msra.mxu0 0.0
      %8611 = vmatprep.subr.mxu0 0.0
      %8612 = vmatpush1.msra.mxu0 0.0
      %8613 = vmatprep.subr.mxu0 0.0
      %8614 = vmatpush1.msra.mxu0 0.0
      %8615 = vmatprep.subr.mxu0 0.0
      %8616 = vmatpush1.msra.mxu0 0.0
      %8617 = vmatprep.subr.mxu0 0.0
      %8618 = vmatpush1.msra.mxu0 0.0
      %8619 = vmatprep.subr.mxu0 0.0
      %8620 = vmatpush1.msra.mxu0 0.0
      %8621 = vmatprep.subr.mxu0 0.0
      %8622 = vmatpush1.msra.mxu0 %v8151
      %8623 = vmatprep.subr.mxu0 0.0
      %8624 = vmatpush2.msra.mxu0 0.0
      %8625 = vmatprep.subr.mxu0 0.0
      %8626 = vmatpush2.msra.mxu0 0.0
      %8627 = vmatprep.subr.mxu0 0.0
      %8628 = vmatpush2.msra.mxu0 0.0
      %8629 = vmatprep.subr.mxu0 0.0
      %8630 = vmatpush2.msra.mxu0 0.0
      %8631 = vmatprep.subr.mxu0 0.0
      %8632 = vmatpush2.msra.mxu0 0.0
      %8633 = vmatprep.subr.mxu0 0.0
      %8634 = vmatpush2.msra.mxu0 0.0
      %8635 = vmatprep.subr.mxu0 0.0
      %8636 = vmatpush2.msra.mxu0 0.0
      %8637 = vmatprep.subr.mxu0 0.0
      %8638 = vmatpush2.msra.mxu0 0.0
      %8639 = vmatprep.subr.mxu0 0.0
      %8640 = vmatpush2.msra.mxu0 0.0
      %8641 = vmatprep.subr.mxu0 0.0
      %8642 = vmatpush2.msra.mxu0 0.0
      %8643 = vmatprep.subr.mxu0 0.0
      %8644 = vmatpush2.msra.mxu0 0.0
      %8645 = vmatprep.subr.mxu0 0.0
      %8646 = vmatpush2.msra.mxu0 0.0
      %8647 = vmatprep.subr.mxu0 0.0
      %8648 = vmatpush2.msra.mxu0 0.0
      %8649 = vmatprep.subr.mxu0 0.0
      %8650 = vmatpush2.msra.mxu0 0.0
      %8651 = vmatprep.subr.mxu0 0.0
      %8652 = vmatpush2.msra.mxu0 0.0
      %8653 = vmatprep.subr.mxu0 0.0
      %8654 = vmatpush2.msra.mxu0 0.0
      %8655 = vmatprep.mubr.f32.mxu0 0.0
      %8656 = vmatmul.mubr.f32.gmra.mxu0 %v8589
      %v8657 = vpop.f32.mrf.mxu0
      %v8658 = vadd.f32 0.0, %v8657
      %v8659 = vpop.f32.mrf.mxu0
      %8660 = vdwg.mxu0
      %v8662 = vsel %vm250, %v8144, 0
      %8664 = vmatprep.subr.mxu0 0.0
      %8665 = vmatpush1.msra.mxu0 0.0
      %8666 = vmatprep.subr.mxu0 0.0
      %8667 = vmatpush1.msra.mxu0 0.0
      %8668 = vmatprep.subr.mxu0 0.0
      %8669 = vmatpush1.msra.mxu0 0.0
      %8670 = vmatprep.subr.mxu0 0.0
      %8671 = vmatpush1.msra.mxu0 0.0
      %8672 = vmatprep.subr.mxu0 0.0
      %8673 = vmatpush1.msra.mxu0 0.0
      %8674 = vmatprep.subr.mxu0 0.0
      %8675 = vmatpush1.msra.mxu0 0.0
      %8676 = vmatprep.subr.mxu0 0.0
      %8677 = vmatpush1.msra.mxu0 0.0
      %8678 = vmatprep.subr.mxu0 0.0
      %8679 = vmatpush1.msra.mxu0 0.0
      %8680 = vmatprep.subr.mxu0 0.0
      %8681 = vmatpush1.msra.mxu0 0.0
      %8682 = vmatprep.subr.mxu0 0.0
      %8683 = vmatpush1.msra.mxu0 0.0
      %8684 = vmatprep.subr.mxu0 0.0
      %8685 = vmatpush1.msra.mxu0 0.0
      %8686 = vmatprep.subr.mxu0 0.0
      %8687 = vmatpush1.msra.mxu0 0.0
      %8688 = vmatprep.subr.mxu0 0.0
      %8689 = vmatpush1.msra.mxu0 0.0
      %8690 = vmatprep.subr.mxu0 0.0
      %8691 = vmatpush1.msra.mxu0 0.0
      %8692 = vmatprep.subr.mxu0 0.0
      %8693 = vmatpush1.msra.mxu0 0.0
      %8694 = vmatprep.subr.mxu0 0.0
      %8695 = vmatpush1.msra.mxu0 %v8151
      %8696 = vmatprep.subr.mxu0 0.0
      %8697 = vmatpush2.msra.mxu0 0.0
      %8698 = vmatprep.subr.mxu0 0.0
      %8699 = vmatpush2.msra.mxu0 0.0
      %8700 = vmatprep.subr.mxu0 0.0
      %8701 = vmatpush2.msra.mxu0 0.0
      %8702 = vmatprep.subr.mxu0 0.0
      %8703 = vmatpush2.msra.mxu0 0.0
      %8704 = vmatprep.subr.mxu0 0.0
      %8705 = vmatpush2.msra.mxu0 0.0
      %8706 = vmatprep.subr.mxu0 0.0
      %8707 = vmatpush2.msra.mxu0 0.0
      %8708 = vmatprep.subr.mxu0 0.0
      %8709 = vmatpush2.msra.mxu0 0.0
      %8710 = vmatprep.subr.mxu0 0.0
      %8711 = vmatpush2.msra.mxu0 0.0
      %8712 = vmatprep.subr.mxu0 0.0
      %8713 = vmatpush2.msra.mxu0 0.0
      %8714 = vmatprep.subr.mxu0 0.0
      %8715 = vmatpush2.msra.mxu0 0.0
      %8716 = vmatprep.subr.mxu0 0.0
      %8717 = vmatpush2.msra.mxu0 0.0
      %8718 = vmatprep.subr.mxu0 0.0
      %8719 = vmatpush2.msra.mxu0 0.0
      %8720 = vmatprep.subr.mxu0 0.0
      %8721 = vmatpush2.msra.mxu0 0.0
      %8722 = vmatprep.subr.mxu0 0.0
      %8723 = vmatpush2.msra.mxu0 0.0
      %8724 = vmatprep.subr.mxu0 0.0
      %8725 = vmatpush2.msra.mxu0 0.0
      %8726 = vmatprep.subr.mxu0 0.0
      %8727 = vmatpush2.msra.mxu0 0.0
      %8728 = vmatprep.mubr.f32.mxu0 0.0
      %8729 = vmatmul.mubr.f32.gmra.mxu0 %v8662
      %v8730 = vpop.f32.mrf.mxu0
      %v8731 = vadd.f32 0.0, %v8730
      %v8732 = vpop.f32.mrf.mxu0
      %8733 = vdwg.mxu0
      %v8734 = vadd.f32 %v8129, %v8220
      %v8735 = vadd.f32 %v8130, %v8293
      %v8736 = vadd.f32 %v8131, %v8366
      %v8737 = vadd.f32 %v8132, %v8439
      %v8738 = vadd.f32 %v8133, %v8512
      %v8739 = vadd.f32 %v8134, %v8585
      %v8740 = vadd.f32 %v8135, %v8658
      %v8741 = vadd.f32 %v8136, %v8731
      %v8742 = vld [vmem:[%s5725 + $0x2] sm:$0xff]
      %v8743 = vld [vmem:[%s5725 + $0x12] sm:$0xff]
      %v8744 = vld [vmem:[%s5725 + $0x22] sm:$0xff]
      %v8745 = vld [vmem:[%s5725 + $0x32] sm:$0xff]
      %v8746 = vld [vmem:[%s5725 + $0x42] sm:$0xff]
      %v8747 = vld [vmem:[%s5725 + $0x52] sm:$0xff]
      %v8748 = vld [vmem:[%s5725 + $0x62] sm:$0xff]
      %v8749 = vld [vmem:[%s5725 + $0x72] sm:$0xff]
      %s8750 = scalar_lea.vmem %s3, 20
      %v8751 = vld [vmem:[%s8750] sm:$0xf]
      %v8753 = vsel %vm250, %v8742, 0
      %v8756 = vsel %vm254, %v8751, 0
      %8758 = vmatprep.subr.mxu0 0.0
      %8759 = vmatpush1.msra.mxu0 0.0
      %8760 = vmatprep.subr.mxu0 0.0
      %8761 = vmatpush1.msra.mxu0 0.0
      %8762 = vmatprep.subr.mxu0 0.0
      %8763 = vmatpush1.msra.mxu0 0.0
      %8764 = vmatprep.subr.mxu0 0.0
      %8765 = vmatpush1.msra.mxu0 0.0
      %8766 = vmatprep.subr.mxu0 0.0
      %8767 = vmatpush1.msra.mxu0 0.0
      %8768 = vmatprep.subr.mxu0 0.0
      %8769 = vmatpush1.msra.mxu0 0.0
      %8770 = vmatprep.subr.mxu0 0.0
      %8771 = vmatpush1.msra.mxu0 0.0
      %8772 = vmatprep.subr.mxu0 0.0
      %8773 = vmatpush1.msra.mxu0 0.0
      %8774 = vmatprep.subr.mxu0 0.0
      %8775 = vmatpush1.msra.mxu0 0.0
      %8776 = vmatprep.subr.mxu0 0.0
      %8777 = vmatpush1.msra.mxu0 0.0
      %8778 = vmatprep.subr.mxu0 0.0
      %8779 = vmatpush1.msra.mxu0 0.0
      %8780 = vmatprep.subr.mxu0 0.0
      %8781 = vmatpush1.msra.mxu0 0.0
      %8782 = vmatprep.subr.mxu0 0.0
      %8783 = vmatpush1.msra.mxu0 0.0
      %8784 = vmatprep.subr.mxu0 0.0
      %8785 = vmatpush1.msra.mxu0 0.0
      %8786 = vmatprep.subr.mxu0 0.0
      %8787 = vmatpush1.msra.mxu0 0.0
      %8788 = vmatprep.subr.mxu0 0.0
      %8789 = vmatpush1.msra.mxu0 %v8756
      %8790 = vmatprep.subr.mxu0 0.0
      %8791 = vmatpush2.msra.mxu0 0.0
      %8792 = vmatprep.subr.mxu0 0.0
      %8793 = vmatpush2.msra.mxu0 0.0
      %8794 = vmatprep.subr.mxu0 0.0
      %8795 = vmatpush2.msra.mxu0 0.0
      %8796 = vmatprep.subr.mxu0 0.0
      %8797 = vmatpush2.msra.mxu0 0.0
      %8798 = vmatprep.subr.mxu0 0.0
      %8799 = vmatpush2.msra.mxu0 0.0
      %8800 = vmatprep.subr.mxu0 0.0
      %8801 = vmatpush2.msra.mxu0 0.0
      %8802 = vmatprep.subr.mxu0 0.0
      %8803 = vmatpush2.msra.mxu0 0.0
      %8804 = vmatprep.subr.mxu0 0.0
      %8805 = vmatpush2.msra.mxu0 0.0
      %8806 = vmatprep.subr.mxu0 0.0
      %8807 = vmatpush2.msra.mxu0 0.0
      %8808 = vmatprep.subr.mxu0 0.0
      %8809 = vmatpush2.msra.mxu0 0.0
      %8810 = vmatprep.subr.mxu0 0.0
      %8811 = vmatpush2.msra.mxu0 0.0
      %8812 = vmatprep.subr.mxu0 0.0
      %8813 = vmatpush2.msra.mxu0 0.0
      %8814 = vmatprep.subr.mxu0 0.0
      %8815 = vmatpush2.msra.mxu0 0.0
      %8816 = vmatprep.subr.mxu0 0.0
      %8817 = vmatpush2.msra.mxu0 0.0
      %8818 = vmatprep.subr.mxu0 0.0
      %8819 = vmatpush2.msra.mxu0 0.0
      %8820 = vmatprep.subr.mxu0 0.0
      %8821 = vmatpush2.msra.mxu0 0.0
      %8822 = vmatprep.mubr.f32.mxu0 0.0
      %8823 = vmatmul.mubr.f32.gmra.mxu0 %v8753
      %v8824 = vpop.f32.mrf.mxu0
      %v8825 = vadd.f32 0.0, %v8824
      %v8826 = vpop.f32.mrf.mxu0
      %8827 = vdwg.mxu0
      %v8829 = vsel %vm250, %v8743, 0
      %8831 = vmatprep.subr.mxu0 0.0
      %8832 = vmatpush1.msra.mxu0 0.0
      %8833 = vmatprep.subr.mxu0 0.0
      %8834 = vmatpush1.msra.mxu0 0.0
      %8835 = vmatprep.subr.mxu0 0.0
      %8836 = vmatpush1.msra.mxu0 0.0
      %8837 = vmatprep.subr.mxu0 0.0
      %8838 = vmatpush1.msra.mxu0 0.0
      %8839 = vmatprep.subr.mxu0 0.0
      %8840 = vmatpush1.msra.mxu0 0.0
      %8841 = vmatprep.subr.mxu0 0.0
      %8842 = vmatpush1.msra.mxu0 0.0
      %8843 = vmatprep.subr.mxu0 0.0
      %8844 = vmatpush1.msra.mxu0 0.0
      %8845 = vmatprep.subr.mxu0 0.0
      %8846 = vmatpush1.msra.mxu0 0.0
      %8847 = vmatprep.subr.mxu0 0.0
      %8848 = vmatpush1.msra.mxu0 0.0
      %8849 = vmatprep.subr.mxu0 0.0
      %8850 = vmatpush1.msra.mxu0 0.0
      %8851 = vmatprep.subr.mxu0 0.0
      %8852 = vmatpush1.msra.mxu0 0.0
      %8853 = vmatprep.subr.mxu0 0.0
      %8854 = vmatpush1.msra.mxu0 0.0
      %8855 = vmatprep.subr.mxu0 0.0
      %8856 = vmatpush1.msra.mxu0 0.0
      %8857 = vmatprep.subr.mxu0 0.0
      %8858 = vmatpush1.msra.mxu0 0.0
      %8859 = vmatprep.subr.mxu0 0.0
      %8860 = vmatpush1.msra.mxu0 0.0
      %8861 = vmatprep.subr.mxu0 0.0
      %8862 = vmatpush1.msra.mxu0 %v8756
      %8863 = vmatprep.subr.mxu0 0.0
      %8864 = vmatpush2.msra.mxu0 0.0
      %8865 = vmatprep.subr.mxu0 0.0
      %8866 = vmatpush2.msra.mxu0 0.0
      %8867 = vmatprep.subr.mxu0 0.0
      %8868 = vmatpush2.msra.mxu0 0.0
      %8869 = vmatprep.subr.mxu0 0.0
      %8870 = vmatpush2.msra.mxu0 0.0
      %8871 = vmatprep.subr.mxu0 0.0
      %8872 = vmatpush2.msra.mxu0 0.0
      %8873 = vmatprep.subr.mxu0 0.0
      %8874 = vmatpush2.msra.mxu0 0.0
      %8875 = vmatprep.subr.mxu0 0.0
      %8876 = vmatpush2.msra.mxu0 0.0
      %8877 = vmatprep.subr.mxu0 0.0
      %8878 = vmatpush2.msra.mxu0 0.0
      %8879 = vmatprep.subr.mxu0 0.0
      %8880 = vmatpush2.msra.mxu0 0.0
      %8881 = vmatprep.subr.mxu0 0.0
      %8882 = vmatpush2.msra.mxu0 0.0
      %8883 = vmatprep.subr.mxu0 0.0
      %8884 = vmatpush2.msra.mxu0 0.0
      %8885 = vmatprep.subr.mxu0 0.0
      %8886 = vmatpush2.msra.mxu0 0.0
      %8887 = vmatprep.subr.mxu0 0.0
      %8888 = vmatpush2.msra.mxu0 0.0
      %8889 = vmatprep.subr.mxu0 0.0
      %8890 = vmatpush2.msra.mxu0 0.0
      %8891 = vmatprep.subr.mxu0 0.0
      %8892 = vmatpush2.msra.mxu0 0.0
      %8893 = vmatprep.subr.mxu0 0.0
      %8894 = vmatpush2.msra.mxu0 0.0
      %8895 = vmatprep.mubr.f32.mxu0 0.0
      %8896 = vmatmul.mubr.f32.gmra.mxu0 %v8829
      %v8897 = vpop.f32.mrf.mxu0
      %v8898 = vadd.f32 0.0, %v8897
      %v8899 = vpop.f32.mrf.mxu0
      %8900 = vdwg.mxu0
      %v8902 = vsel %vm250, %v8744, 0
      %8904 = vmatprep.subr.mxu0 0.0
      %8905 = vmatpush1.msra.mxu0 0.0
      %8906 = vmatprep.subr.mxu0 0.0
      %8907 = vmatpush1.msra.mxu0 0.0
      %8908 = vmatprep.subr.mxu0 0.0
      %8909 = vmatpush1.msra.mxu0 0.0
      %8910 = vmatprep.subr.mxu0 0.0
      %8911 = vmatpush1.msra.mxu0 0.0
      %8912 = vmatprep.subr.mxu0 0.0
      %8913 = vmatpush1.msra.mxu0 0.0
      %8914 = vmatprep.subr.mxu0 0.0
      %8915 = vmatpush1.msra.mxu0 0.0
      %8916 = vmatprep.subr.mxu0 0.0
      %8917 = vmatpush1.msra.mxu0 0.0
      %8918 = vmatprep.subr.mxu0 0.0
      %8919 = vmatpush1.msra.mxu0 0.0
      %8920 = vmatprep.subr.mxu0 0.0
      %8921 = vmatpush1.msra.mxu0 0.0
      %8922 = vmatprep.subr.mxu0 0.0
      %8923 = vmatpush1.msra.mxu0 0.0
      %8924 = vmatprep.subr.mxu0 0.0
      %8925 = vmatpush1.msra.mxu0 0.0
      %8926 = vmatprep.subr.mxu0 0.0
      %8927 = vmatpush1.msra.mxu0 0.0
      %8928 = vmatprep.subr.mxu0 0.0
      %8929 = vmatpush1.msra.mxu0 0.0
      %8930 = vmatprep.subr.mxu0 0.0
      %8931 = vmatpush1.msra.mxu0 0.0
      %8932 = vmatprep.subr.mxu0 0.0
      %8933 = vmatpush1.msra.mxu0 0.0
      %8934 = vmatprep.subr.mxu0 0.0
      %8935 = vmatpush1.msra.mxu0 %v8756
      %8936 = vmatprep.subr.mxu0 0.0
      %8937 = vmatpush2.msra.mxu0 0.0
      %8938 = vmatprep.subr.mxu0 0.0
      %8939 = vmatpush2.msra.mxu0 0.0
      %8940 = vmatprep.subr.mxu0 0.0
      %8941 = vmatpush2.msra.mxu0 0.0
      %8942 = vmatprep.subr.mxu0 0.0
      %8943 = vmatpush2.msra.mxu0 0.0
      %8944 = vmatprep.subr.mxu0 0.0
      %8945 = vmatpush2.msra.mxu0 0.0
      %8946 = vmatprep.subr.mxu0 0.0
      %8947 = vmatpush2.msra.mxu0 0.0
      %8948 = vmatprep.subr.mxu0 0.0
      %8949 = vmatpush2.msra.mxu0 0.0
      %8950 = vmatprep.subr.mxu0 0.0
      %8951 = vmatpush2.msra.mxu0 0.0
      %8952 = vmatprep.subr.mxu0 0.0
      %8953 = vmatpush2.msra.mxu0 0.0
      %8954 = vmatprep.subr.mxu0 0.0
      %8955 = vmatpush2.msra.mxu0 0.0
      %8956 = vmatprep.subr.mxu0 0.0
      %8957 = vmatpush2.msra.mxu0 0.0
      %8958 = vmatprep.subr.mxu0 0.0
      %8959 = vmatpush2.msra.mxu0 0.0
      %8960 = vmatprep.subr.mxu0 0.0
      %8961 = vmatpush2.msra.mxu0 0.0
      %8962 = vmatprep.subr.mxu0 0.0
      %8963 = vmatpush2.msra.mxu0 0.0
      %8964 = vmatprep.subr.mxu0 0.0
      %8965 = vmatpush2.msra.mxu0 0.0
      %8966 = vmatprep.subr.mxu0 0.0
      %8967 = vmatpush2.msra.mxu0 0.0
      %8968 = vmatprep.mubr.f32.mxu0 0.0
      %8969 = vmatmul.mubr.f32.gmra.mxu0 %v8902
      %v8970 = vpop.f32.mrf.mxu0
      %v8971 = vadd.f32 0.0, %v8970
      %v8972 = vpop.f32.mrf.mxu0
      %8973 = vdwg.mxu0
      %v8975 = vsel %vm250, %v8745, 0
      %8977 = vmatprep.subr.mxu0 0.0
      %8978 = vmatpush1.msra.mxu0 0.0
      %8979 = vmatprep.subr.mxu0 0.0
      %8980 = vmatpush1.msra.mxu0 0.0
      %8981 = vmatprep.subr.mxu0 0.0
      %8982 = vmatpush1.msra.mxu0 0.0
      %8983 = vmatprep.subr.mxu0 0.0
      %8984 = vmatpush1.msra.mxu0 0.0
      %8985 = vmatprep.subr.mxu0 0.0
      %8986 = vmatpush1.msra.mxu0 0.0
      %8987 = vmatprep.subr.mxu0 0.0
      %8988 = vmatpush1.msra.mxu0 0.0
      %8989 = vmatprep.subr.mxu0 0.0
      %8990 = vmatpush1.msra.mxu0 0.0
      %8991 = vmatprep.subr.mxu0 0.0
      %8992 = vmatpush1.msra.mxu0 0.0
      %8993 = vmatprep.subr.mxu0 0.0
      %8994 = vmatpush1.msra.mxu0 0.0
      %8995 = vmatprep.subr.mxu0 0.0
      %8996 = vmatpush1.msra.mxu0 0.0
      %8997 = vmatprep.subr.mxu0 0.0
      %8998 = vmatpush1.msra.mxu0 0.0
      %8999 = vmatprep.subr.mxu0 0.0
      %9000 = vmatpush1.msra.mxu0 0.0
      %9001 = vmatprep.subr.mxu0 0.0
      %9002 = vmatpush1.msra.mxu0 0.0
      %9003 = vmatprep.subr.mxu0 0.0
      %9004 = vmatpush1.msra.mxu0 0.0
      %9005 = vmatprep.subr.mxu0 0.0
      %9006 = vmatpush1.msra.mxu0 0.0
      %9007 = vmatprep.subr.mxu0 0.0
      %9008 = vmatpush1.msra.mxu0 %v8756
      %9009 = vmatprep.subr.mxu0 0.0
      %9010 = vmatpush2.msra.mxu0 0.0
      %9011 = vmatprep.subr.mxu0 0.0
      %9012 = vmatpush2.msra.mxu0 0.0
      %9013 = vmatprep.subr.mxu0 0.0
      %9014 = vmatpush2.msra.mxu0 0.0
      %9015 = vmatprep.subr.mxu0 0.0
      %9016 = vmatpush2.msra.mxu0 0.0
      %9017 = vmatprep.subr.mxu0 0.0
      %9018 = vmatpush2.msra.mxu0 0.0
      %9019 = vmatprep.subr.mxu0 0.0
      %9020 = vmatpush2.msra.mxu0 0.0
      %9021 = vmatprep.subr.mxu0 0.0
      %9022 = vmatpush2.msra.mxu0 0.0
      %9023 = vmatprep.subr.mxu0 0.0
      %9024 = vmatpush2.msra.mxu0 0.0
      %9025 = vmatprep.subr.mxu0 0.0
      %9026 = vmatpush2.msra.mxu0 0.0
      %9027 = vmatprep.subr.mxu0 0.0
      %9028 = vmatpush2.msra.mxu0 0.0
      %9029 = vmatprep.subr.mxu0 0.0
      %9030 = vmatpush2.msra.mxu0 0.0
      %9031 = vmatprep.subr.mxu0 0.0
      %9032 = vmatpush2.msra.mxu0 0.0
      %9033 = vmatprep.subr.mxu0 0.0
      %9034 = vmatpush2.msra.mxu0 0.0
      %9035 = vmatprep.subr.mxu0 0.0
      %9036 = vmatpush2.msra.mxu0 0.0
      %9037 = vmatprep.subr.mxu0 0.0
      %9038 = vmatpush2.msra.mxu0 0.0
      %9039 = vmatprep.subr.mxu0 0.0
      %9040 = vmatpush2.msra.mxu0 0.0
      %9041 = vmatprep.mubr.f32.mxu0 0.0
      %9042 = vmatmul.mubr.f32.gmra.mxu0 %v8975
      %v9043 = vpop.f32.mrf.mxu0
      %v9044 = vadd.f32 0.0, %v9043
      %v9045 = vpop.f32.mrf.mxu0
      %9046 = vdwg.mxu0
      %v9048 = vsel %vm250, %v8746, 0
      %9050 = vmatprep.subr.mxu0 0.0
      %9051 = vmatpush1.msra.mxu0 0.0
      %9052 = vmatprep.subr.mxu0 0.0
      %9053 = vmatpush1.msra.mxu0 0.0
      %9054 = vmatprep.subr.mxu0 0.0
      %9055 = vmatpush1.msra.mxu0 0.0
      %9056 = vmatprep.subr.mxu0 0.0
      %9057 = vmatpush1.msra.mxu0 0.0
      %9058 = vmatprep.subr.mxu0 0.0
      %9059 = vmatpush1.msra.mxu0 0.0
      %9060 = vmatprep.subr.mxu0 0.0
      %9061 = vmatpush1.msra.mxu0 0.0
      %9062 = vmatprep.subr.mxu0 0.0
      %9063 = vmatpush1.msra.mxu0 0.0
      %9064 = vmatprep.subr.mxu0 0.0
      %9065 = vmatpush1.msra.mxu0 0.0
      %9066 = vmatprep.subr.mxu0 0.0
      %9067 = vmatpush1.msra.mxu0 0.0
      %9068 = vmatprep.subr.mxu0 0.0
      %9069 = vmatpush1.msra.mxu0 0.0
      %9070 = vmatprep.subr.mxu0 0.0
      %9071 = vmatpush1.msra.mxu0 0.0
      %9072 = vmatprep.subr.mxu0 0.0
      %9073 = vmatpush1.msra.mxu0 0.0
      %9074 = vmatprep.subr.mxu0 0.0
      %9075 = vmatpush1.msra.mxu0 0.0
      %9076 = vmatprep.subr.mxu0 0.0
      %9077 = vmatpush1.msra.mxu0 0.0
      %9078 = vmatprep.subr.mxu0 0.0
      %9079 = vmatpush1.msra.mxu0 0.0
      %9080 = vmatprep.subr.mxu0 0.0
      %9081 = vmatpush1.msra.mxu0 %v8756
      %9082 = vmatprep.subr.mxu0 0.0
      %9083 = vmatpush2.msra.mxu0 0.0
      %9084 = vmatprep.subr.mxu0 0.0
      %9085 = vmatpush2.msra.mxu0 0.0
      %9086 = vmatprep.subr.mxu0 0.0
      %9087 = vmatpush2.msra.mxu0 0.0
      %9088 = vmatprep.subr.mxu0 0.0
      %9089 = vmatpush2.msra.mxu0 0.0
      %9090 = vmatprep.subr.mxu0 0.0
      %9091 = vmatpush2.msra.mxu0 0.0
      %9092 = vmatprep.subr.mxu0 0.0
      %9093 = vmatpush2.msra.mxu0 0.0
      %9094 = vmatprep.subr.mxu0 0.0
      %9095 = vmatpush2.msra.mxu0 0.0
      %9096 = vmatprep.subr.mxu0 0.0
      %9097 = vmatpush2.msra.mxu0 0.0
      %9098 = vmatprep.subr.mxu0 0.0
      %9099 = vmatpush2.msra.mxu0 0.0
      %9100 = vmatprep.subr.mxu0 0.0
      %9101 = vmatpush2.msra.mxu0 0.0
      %9102 = vmatprep.subr.mxu0 0.0
      %9103 = vmatpush2.msra.mxu0 0.0
      %9104 = vmatprep.subr.mxu0 0.0
      %9105 = vmatpush2.msra.mxu0 0.0
      %9106 = vmatprep.subr.mxu0 0.0
      %9107 = vmatpush2.msra.mxu0 0.0
      %9108 = vmatprep.subr.mxu0 0.0
      %9109 = vmatpush2.msra.mxu0 0.0
      %9110 = vmatprep.subr.mxu0 0.0
      %9111 = vmatpush2.msra.mxu0 0.0
      %9112 = vmatprep.subr.mxu0 0.0
      %9113 = vmatpush2.msra.mxu0 0.0
      %9114 = vmatprep.mubr.f32.mxu0 0.0
      %9115 = vmatmul.mubr.f32.gmra.mxu0 %v9048
      %v9116 = vpop.f32.mrf.mxu0
      %v9117 = vadd.f32 0.0, %v9116
      %v9118 = vpop.f32.mrf.mxu0
      %9119 = vdwg.mxu0
      %v9121 = vsel %vm250, %v8747, 0
      %9123 = vmatprep.subr.mxu0 0.0
      %9124 = vmatpush1.msra.mxu0 0.0
      %9125 = vmatprep.subr.mxu0 0.0
      %9126 = vmatpush1.msra.mxu0 0.0
      %9127 = vmatprep.subr.mxu0 0.0
      %9128 = vmatpush1.msra.mxu0 0.0
      %9129 = vmatprep.subr.mxu0 0.0
      %9130 = vmatpush1.msra.mxu0 0.0
      %9131 = vmatprep.subr.mxu0 0.0
      %9132 = vmatpush1.msra.mxu0 0.0
      %9133 = vmatprep.subr.mxu0 0.0
      %9134 = vmatpush1.msra.mxu0 0.0
      %9135 = vmatprep.subr.mxu0 0.0
      %9136 = vmatpush1.msra.mxu0 0.0
      %9137 = vmatprep.subr.mxu0 0.0
      %9138 = vmatpush1.msra.mxu0 0.0
      %9139 = vmatprep.subr.mxu0 0.0
      %9140 = vmatpush1.msra.mxu0 0.0
      %9141 = vmatprep.subr.mxu0 0.0
      %9142 = vmatpush1.msra.mxu0 0.0
      %9143 = vmatprep.subr.mxu0 0.0
      %9144 = vmatpush1.msra.mxu0 0.0
      %9145 = vmatprep.subr.mxu0 0.0
      %9146 = vmatpush1.msra.mxu0 0.0
      %9147 = vmatprep.subr.mxu0 0.0
      %9148 = vmatpush1.msra.mxu0 0.0
      %9149 = vmatprep.subr.mxu0 0.0
      %9150 = vmatpush1.msra.mxu0 0.0
      %9151 = vmatprep.subr.mxu0 0.0
      %9152 = vmatpush1.msra.mxu0 0.0
      %9153 = vmatprep.subr.mxu0 0.0
      %9154 = vmatpush1.msra.mxu0 %v8756
      %9155 = vmatprep.subr.mxu0 0.0
      %9156 = vmatpush2.msra.mxu0 0.0
      %9157 = vmatprep.subr.mxu0 0.0
      %9158 = vmatpush2.msra.mxu0 0.0
      %9159 = vmatprep.subr.mxu0 0.0
      %9160 = vmatpush2.msra.mxu0 0.0
      %9161 = vmatprep.subr.mxu0 0.0
      %9162 = vmatpush2.msra.mxu0 0.0
      %9163 = vmatprep.subr.mxu0 0.0
      %9164 = vmatpush2.msra.mxu0 0.0
      %9165 = vmatprep.subr.mxu0 0.0
      %9166 = vmatpush2.msra.mxu0 0.0
      %9167 = vmatprep.subr.mxu0 0.0
      %9168 = vmatpush2.msra.mxu0 0.0
      %9169 = vmatprep.subr.mxu0 0.0
      %9170 = vmatpush2.msra.mxu0 0.0
      %9171 = vmatprep.subr.mxu0 0.0
      %9172 = vmatpush2.msra.mxu0 0.0
      %9173 = vmatprep.subr.mxu0 0.0
      %9174 = vmatpush2.msra.mxu0 0.0
      %9175 = vmatprep.subr.mxu0 0.0
      %9176 = vmatpush2.msra.mxu0 0.0
      %9177 = vmatprep.subr.mxu0 0.0
      %9178 = vmatpush2.msra.mxu0 0.0
      %9179 = vmatprep.subr.mxu0 0.0
      %9180 = vmatpush2.msra.mxu0 0.0
      %9181 = vmatprep.subr.mxu0 0.0
      %9182 = vmatpush2.msra.mxu0 0.0
      %9183 = vmatprep.subr.mxu0 0.0
      %9184 = vmatpush2.msra.mxu0 0.0
      %9185 = vmatprep.subr.mxu0 0.0
      %9186 = vmatpush2.msra.mxu0 0.0
      %9187 = vmatprep.mubr.f32.mxu0 0.0
      %9188 = vmatmul.mubr.f32.gmra.mxu0 %v9121
      %v9189 = vpop.f32.mrf.mxu0
      %v9190 = vadd.f32 0.0, %v9189
      %v9191 = vpop.f32.mrf.mxu0
      %9192 = vdwg.mxu0
      %v9194 = vsel %vm250, %v8748, 0
      %9196 = vmatprep.subr.mxu0 0.0
      %9197 = vmatpush1.msra.mxu0 0.0
      %9198 = vmatprep.subr.mxu0 0.0
      %9199 = vmatpush1.msra.mxu0 0.0
      %9200 = vmatprep.subr.mxu0 0.0
      %9201 = vmatpush1.msra.mxu0 0.0
      %9202 = vmatprep.subr.mxu0 0.0
      %9203 = vmatpush1.msra.mxu0 0.0
      %9204 = vmatprep.subr.mxu0 0.0
      %9205 = vmatpush1.msra.mxu0 0.0
      %9206 = vmatprep.subr.mxu0 0.0
      %9207 = vmatpush1.msra.mxu0 0.0
      %9208 = vmatprep.subr.mxu0 0.0
      %9209 = vmatpush1.msra.mxu0 0.0
      %9210 = vmatprep.subr.mxu0 0.0
      %9211 = vmatpush1.msra.mxu0 0.0
      %9212 = vmatprep.subr.mxu0 0.0
      %9213 = vmatpush1.msra.mxu0 0.0
      %9214 = vmatprep.subr.mxu0 0.0
      %9215 = vmatpush1.msra.mxu0 0.0
      %9216 = vmatprep.subr.mxu0 0.0
      %9217 = vmatpush1.msra.mxu0 0.0
      %9218 = vmatprep.subr.mxu0 0.0
      %9219 = vmatpush1.msra.mxu0 0.0
      %9220 = vmatprep.subr.mxu0 0.0
      %9221 = vmatpush1.msra.mxu0 0.0
      %9222 = vmatprep.subr.mxu0 0.0
      %9223 = vmatpush1.msra.mxu0 0.0
      %9224 = vmatprep.subr.mxu0 0.0
      %9225 = vmatpush1.msra.mxu0 0.0
      %9226 = vmatprep.subr.mxu0 0.0
      %9227 = vmatpush1.msra.mxu0 %v8756
      %9228 = vmatprep.subr.mxu0 0.0
      %9229 = vmatpush2.msra.mxu0 0.0
      %9230 = vmatprep.subr.mxu0 0.0
      %9231 = vmatpush2.msra.mxu0 0.0
      %9232 = vmatprep.subr.mxu0 0.0
      %9233 = vmatpush2.msra.mxu0 0.0
      %9234 = vmatprep.subr.mxu0 0.0
      %9235 = vmatpush2.msra.mxu0 0.0
      %9236 = vmatprep.subr.mxu0 0.0
      %9237 = vmatpush2.msra.mxu0 0.0
      %9238 = vmatprep.subr.mxu0 0.0
      %9239 = vmatpush2.msra.mxu0 0.0
      %9240 = vmatprep.subr.mxu0 0.0
      %9241 = vmatpush2.msra.mxu0 0.0
      %9242 = vmatprep.subr.mxu0 0.0
      %9243 = vmatpush2.msra.mxu0 0.0
      %9244 = vmatprep.subr.mxu0 0.0
      %9245 = vmatpush2.msra.mxu0 0.0
      %9246 = vmatprep.subr.mxu0 0.0
      %9247 = vmatpush2.msra.mxu0 0.0
      %9248 = vmatprep.subr.mxu0 0.0
      %9249 = vmatpush2.msra.mxu0 0.0
      %9250 = vmatprep.subr.mxu0 0.0
      %9251 = vmatpush2.msra.mxu0 0.0
      %9252 = vmatprep.subr.mxu0 0.0
      %9253 = vmatpush2.msra.mxu0 0.0
      %9254 = vmatprep.subr.mxu0 0.0
      %9255 = vmatpush2.msra.mxu0 0.0
      %9256 = vmatprep.subr.mxu0 0.0
      %9257 = vmatpush2.msra.mxu0 0.0
      %9258 = vmatprep.subr.mxu0 0.0
      %9259 = vmatpush2.msra.mxu0 0.0
      %9260 = vmatprep.mubr.f32.mxu0 0.0
      %9261 = vmatmul.mubr.f32.gmra.mxu0 %v9194
      %v9262 = vpop.f32.mrf.mxu0
      %v9263 = vadd.f32 0.0, %v9262
      %v9264 = vpop.f32.mrf.mxu0
      %9265 = vdwg.mxu0
      %v9267 = vsel %vm250, %v8749, 0
      %9269 = vmatprep.subr.mxu0 0.0
      %9270 = vmatpush1.msra.mxu0 0.0
      %9271 = vmatprep.subr.mxu0 0.0
      %9272 = vmatpush1.msra.mxu0 0.0
      %9273 = vmatprep.subr.mxu0 0.0
      %9274 = vmatpush1.msra.mxu0 0.0
      %9275 = vmatprep.subr.mxu0 0.0
      %9276 = vmatpush1.msra.mxu0 0.0
      %9277 = vmatprep.subr.mxu0 0.0
      %9278 = vmatpush1.msra.mxu0 0.0
      %9279 = vmatprep.subr.mxu0 0.0
      %9280 = vmatpush1.msra.mxu0 0.0
      %9281 = vmatprep.subr.mxu0 0.0
      %9282 = vmatpush1.msra.mxu0 0.0
      %9283 = vmatprep.subr.mxu0 0.0
      %9284 = vmatpush1.msra.mxu0 0.0
      %9285 = vmatprep.subr.mxu0 0.0
      %9286 = vmatpush1.msra.mxu0 0.0
      %9287 = vmatprep.subr.mxu0 0.0
      %9288 = vmatpush1.msra.mxu0 0.0
      %9289 = vmatprep.subr.mxu0 0.0
      %9290 = vmatpush1.msra.mxu0 0.0
      %9291 = vmatprep.subr.mxu0 0.0
      %9292 = vmatpush1.msra.mxu0 0.0
      %9293 = vmatprep.subr.mxu0 0.0
      %9294 = vmatpush1.msra.mxu0 0.0
      %9295 = vmatprep.subr.mxu0 0.0
      %9296 = vmatpush1.msra.mxu0 0.0
      %9297 = vmatprep.subr.mxu0 0.0
      %9298 = vmatpush1.msra.mxu0 0.0
      %9299 = vmatprep.subr.mxu0 0.0
      %9300 = vmatpush1.msra.mxu0 %v8756
      %9301 = vmatprep.subr.mxu0 0.0
      %9302 = vmatpush2.msra.mxu0 0.0
      %9303 = vmatprep.subr.mxu0 0.0
      %9304 = vmatpush2.msra.mxu0 0.0
      %9305 = vmatprep.subr.mxu0 0.0
      %9306 = vmatpush2.msra.mxu0 0.0
      %9307 = vmatprep.subr.mxu0 0.0
      %9308 = vmatpush2.msra.mxu0 0.0
      %9309 = vmatprep.subr.mxu0 0.0
      %9310 = vmatpush2.msra.mxu0 0.0
      %9311 = vmatprep.subr.mxu0 0.0
      %9312 = vmatpush2.msra.mxu0 0.0
      %9313 = vmatprep.subr.mxu0 0.0
      %9314 = vmatpush2.msra.mxu0 0.0
      %9315 = vmatprep.subr.mxu0 0.0
      %9316 = vmatpush2.msra.mxu0 0.0
      %9317 = vmatprep.subr.mxu0 0.0
      %9318 = vmatpush2.msra.mxu0 0.0
      %9319 = vmatprep.subr.mxu0 0.0
      %9320 = vmatpush2.msra.mxu0 0.0
      %9321 = vmatprep.subr.mxu0 0.0
      %9322 = vmatpush2.msra.mxu0 0.0
      %9323 = vmatprep.subr.mxu0 0.0
      %9324 = vmatpush2.msra.mxu0 0.0
      %9325 = vmatprep.subr.mxu0 0.0
      %9326 = vmatpush2.msra.mxu0 0.0
      %9327 = vmatprep.subr.mxu0 0.0
      %9328 = vmatpush2.msra.mxu0 0.0
      %9329 = vmatprep.subr.mxu0 0.0
      %9330 = vmatpush2.msra.mxu0 0.0
      %9331 = vmatprep.subr.mxu0 0.0
      %9332 = vmatpush2.msra.mxu0 0.0
      %9333 = vmatprep.mubr.f32.mxu0 0.0
      %9334 = vmatmul.mubr.f32.gmra.mxu0 %v9267
      %v9335 = vpop.f32.mrf.mxu0
      %v9336 = vadd.f32 0.0, %v9335
      %v9337 = vpop.f32.mrf.mxu0
      %9338 = vdwg.mxu0
      %v9339 = vadd.f32 %v8734, %v8825
      %v9340 = vadd.f32 %v8735, %v8898
      %v9341 = vadd.f32 %v8736, %v8971
      %v9342 = vadd.f32 %v8737, %v9044
      %v9343 = vadd.f32 %v8738, %v9117
      %v9344 = vadd.f32 %v8739, %v9190
      %v9345 = vadd.f32 %v8740, %v9263
      %v9346 = vadd.f32 %v8741, %v9336
      %s9347 = scalar_lea.vmem [#allocation2], 32
      %v9348 = vld [vmem:[%s9347] sm:$0xff]
      %v9349 = vld [vmem:[%s9347 + $0x10] sm:$0xff]
      %v9350 = vld [vmem:[%s9347 + $0x20] sm:$0xff]
      %v9351 = vld [vmem:[%s9347 + $0x30] sm:$0xff]
      %v9352 = vld [vmem:[%s9347 + $0x40] sm:$0xff]
      %v9353 = vld [vmem:[%s9347 + $0x50] sm:$0xff]
      %v9354 = vld [vmem:[%s9347 + $0x60] sm:$0xff]
      %v9355 = vld [vmem:[%s9347 + $0x70] sm:$0xff]
      %s9356 = scalar_lea.vmem %s3, 24
      %v9357 = vld [vmem:[%s9356] sm:$0xf]
      %v9359 = vsel %vm250, %v9348, 0
      %v9362 = vsel %vm254, %v9357, 0
      %9364 = vmatprep.subr.mxu0 0.0
      %9365 = vmatpush1.msra.mxu0 0.0
      %9366 = vmatprep.subr.mxu0 0.0
      %9367 = vmatpush1.msra.mxu0 0.0
      %9368 = vmatprep.subr.mxu0 0.0
      %9369 = vmatpush1.msra.mxu0 0.0
      %9370 = vmatprep.subr.mxu0 0.0
      %9371 = vmatpush1.msra.mxu0 0.0
      %9372 = vmatprep.subr.mxu0 0.0
      %9373 = vmatpush1.msra.mxu0 0.0
      %9374 = vmatprep.subr.mxu0 0.0
      %9375 = vmatpush1.msra.mxu0 0.0
      %9376 = vmatprep.subr.mxu0 0.0
      %9377 = vmatpush1.msra.mxu0 0.0
      %9378 = vmatprep.subr.mxu0 0.0
      %9379 = vmatpush1.msra.mxu0 0.0
      %9380 = vmatprep.subr.mxu0 0.0
      %9381 = vmatpush1.msra.mxu0 0.0
      %9382 = vmatprep.subr.mxu0 0.0
      %9383 = vmatpush1.msra.mxu0 0.0
      %9384 = vmatprep.subr.mxu0 0.0
      %9385 = vmatpush1.msra.mxu0 0.0
      %9386 = vmatprep.subr.mxu0 0.0
      %9387 = vmatpush1.msra.mxu0 0.0
      %9388 = vmatprep.subr.mxu0 0.0
      %9389 = vmatpush1.msra.mxu0 0.0
      %9390 = vmatprep.subr.mxu0 0.0
      %9391 = vmatpush1.msra.mxu0 0.0
      %9392 = vmatprep.subr.mxu0 0.0
      %9393 = vmatpush1.msra.mxu0 0.0
      %9394 = vmatprep.subr.mxu0 0.0
      %9395 = vmatpush1.msra.mxu0 %v9362
      %9396 = vmatprep.subr.mxu0 0.0
      %9397 = vmatpush2.msra.mxu0 0.0
      %9398 = vmatprep.subr.mxu0 0.0
      %9399 = vmatpush2.msra.mxu0 0.0
      %9400 = vmatprep.subr.mxu0 0.0
      %9401 = vmatpush2.msra.mxu0 0.0
      %9402 = vmatprep.subr.mxu0 0.0
      %9403 = vmatpush2.msra.mxu0 0.0
      %9404 = vmatprep.subr.mxu0 0.0
      %9405 = vmatpush2.msra.mxu0 0.0
      %9406 = vmatprep.subr.mxu0 0.0
      %9407 = vmatpush2.msra.mxu0 0.0
      %9408 = vmatprep.subr.mxu0 0.0
      %9409 = vmatpush2.msra.mxu0 0.0
      %9410 = vmatprep.subr.mxu0 0.0
      %9411 = vmatpush2.msra.mxu0 0.0
      %9412 = vmatprep.subr.mxu0 0.0
      %9413 = vmatpush2.msra.mxu0 0.0
      %9414 = vmatprep.subr.mxu0 0.0
      %9415 = vmatpush2.msra.mxu0 0.0
      %9416 = vmatprep.subr.mxu0 0.0
      %9417 = vmatpush2.msra.mxu0 0.0
      %9418 = vmatprep.subr.mxu0 0.0
      %9419 = vmatpush2.msra.mxu0 0.0
      %9420 = vmatprep.subr.mxu0 0.0
      %9421 = vmatpush2.msra.mxu0 0.0
      %9422 = vmatprep.subr.mxu0 0.0
      %9423 = vmatpush2.msra.mxu0 0.0
      %9424 = vmatprep.subr.mxu0 0.0
      %9425 = vmatpush2.msra.mxu0 0.0
      %9426 = vmatprep.subr.mxu0 0.0
      %9427 = vmatpush2.msra.mxu0 0.0
      %9428 = vmatprep.mubr.f32.mxu0 0.0
      %9429 = vmatmul.mubr.f32.gmra.mxu0 %v9359
      %v9430 = vpop.f32.mrf.mxu0
      %v9431 = vadd.f32 0.0, %v9430
      %v9432 = vpop.f32.mrf.mxu0
      %9433 = vdwg.mxu0
      %v9435 = vsel %vm250, %v9349, 0
      %9437 = vmatprep.subr.mxu0 0.0
      %9438 = vmatpush1.msra.mxu0 0.0
      %9439 = vmatprep.subr.mxu0 0.0
      %9440 = vmatpush1.msra.mxu0 0.0
      %9441 = vmatprep.subr.mxu0 0.0
      %9442 = vmatpush1.msra.mxu0 0.0
      %9443 = vmatprep.subr.mxu0 0.0
      %9444 = vmatpush1.msra.mxu0 0.0
      %9445 = vmatprep.subr.mxu0 0.0
      %9446 = vmatpush1.msra.mxu0 0.0
      %9447 = vmatprep.subr.mxu0 0.0
      %9448 = vmatpush1.msra.mxu0 0.0
      %9449 = vmatprep.subr.mxu0 0.0
      %9450 = vmatpush1.msra.mxu0 0.0
      %9451 = vmatprep.subr.mxu0 0.0
      %9452 = vmatpush1.msra.mxu0 0.0
      %9453 = vmatprep.subr.mxu0 0.0
      %9454 = vmatpush1.msra.mxu0 0.0
      %9455 = vmatprep.subr.mxu0 0.0
      %9456 = vmatpush1.msra.mxu0 0.0
      %9457 = vmatprep.subr.mxu0 0.0
      %9458 = vmatpush1.msra.mxu0 0.0
      %9459 = vmatprep.subr.mxu0 0.0
      %9460 = vmatpush1.msra.mxu0 0.0
      %9461 = vmatprep.subr.mxu0 0.0
      %9462 = vmatpush1.msra.mxu0 0.0
      %9463 = vmatprep.subr.mxu0 0.0
      %9464 = vmatpush1.msra.mxu0 0.0
      %9465 = vmatprep.subr.mxu0 0.0
      %9466 = vmatpush1.msra.mxu0 0.0
      %9467 = vmatprep.subr.mxu0 0.0
      %9468 = vmatpush1.msra.mxu0 %v9362
      %9469 = vmatprep.subr.mxu0 0.0
      %9470 = vmatpush2.msra.mxu0 0.0
      %9471 = vmatprep.subr.mxu0 0.0
      %9472 = vmatpush2.msra.mxu0 0.0
      %9473 = vmatprep.subr.mxu0 0.0
      %9474 = vmatpush2.msra.mxu0 0.0
      %9475 = vmatprep.subr.mxu0 0.0
      %9476 = vmatpush2.msra.mxu0 0.0
      %9477 = vmatprep.subr.mxu0 0.0
      %9478 = vmatpush2.msra.mxu0 0.0
      %9479 = vmatprep.subr.mxu0 0.0
      %9480 = vmatpush2.msra.mxu0 0.0
      %9481 = vmatprep.subr.mxu0 0.0
      %9482 = vmatpush2.msra.mxu0 0.0
      %9483 = vmatprep.subr.mxu0 0.0
      %9484 = vmatpush2.msra.mxu0 0.0
      %9485 = vmatprep.subr.mxu0 0.0
      %9486 = vmatpush2.msra.mxu0 0.0
      %9487 = vmatprep.subr.mxu0 0.0
      %9488 = vmatpush2.msra.mxu0 0.0
      %9489 = vmatprep.subr.mxu0 0.0
      %9490 = vmatpush2.msra.mxu0 0.0
      %9491 = vmatprep.subr.mxu0 0.0
      %9492 = vmatpush2.msra.mxu0 0.0
      %9493 = vmatprep.subr.mxu0 0.0
      %9494 = vmatpush2.msra.mxu0 0.0
      %9495 = vmatprep.subr.mxu0 0.0
      %9496 = vmatpush2.msra.mxu0 0.0
      %9497 = vmatprep.subr.mxu0 0.0
      %9498 = vmatpush2.msra.mxu0 0.0
      %9499 = vmatprep.subr.mxu0 0.0
      %9500 = vmatpush2.msra.mxu0 0.0
      %9501 = vmatprep.mubr.f32.mxu0 0.0
      %9502 = vmatmul.mubr.f32.gmra.mxu0 %v9435
      %v9503 = vpop.f32.mrf.mxu0
      %v9504 = vadd.f32 0.0, %v9503
      %v9505 = vpop.f32.mrf.mxu0
      %9506 = vdwg.mxu0
      %v9508 = vsel %vm250, %v9350, 0
      %9510 = vmatprep.subr.mxu0 0.0
      %9511 = vmatpush1.msra.mxu0 0.0
      %9512 = vmatprep.subr.mxu0 0.0
      %9513 = vmatpush1.msra.mxu0 0.0
      %9514 = vmatprep.subr.mxu0 0.0
      %9515 = vmatpush1.msra.mxu0 0.0
      %9516 = vmatprep.subr.mxu0 0.0
      %9517 = vmatpush1.msra.mxu0 0.0
      %9518 = vmatprep.subr.mxu0 0.0
      %9519 = vmatpush1.msra.mxu0 0.0
      %9520 = vmatprep.subr.mxu0 0.0
      %9521 = vmatpush1.msra.mxu0 0.0
      %9522 = vmatprep.subr.mxu0 0.0
      %9523 = vmatpush1.msra.mxu0 0.0
      %9524 = vmatprep.subr.mxu0 0.0
      %9525 = vmatpush1.msra.mxu0 0.0
      %9526 = vmatprep.subr.mxu0 0.0
      %9527 = vmatpush1.msra.mxu0 0.0
      %9528 = vmatprep.subr.mxu0 0.0
      %9529 = vmatpush1.msra.mxu0 0.0
      %9530 = vmatprep.subr.mxu0 0.0
      %9531 = vmatpush1.msra.mxu0 0.0
      %9532 = vmatprep.subr.mxu0 0.0
      %9533 = vmatpush1.msra.mxu0 0.0
      %9534 = vmatprep.subr.mxu0 0.0
      %9535 = vmatpush1.msra.mxu0 0.0
      %9536 = vmatprep.subr.mxu0 0.0
      %9537 = vmatpush1.msra.mxu0 0.0
      %9538 = vmatprep.subr.mxu0 0.0
      %9539 = vmatpush1.msra.mxu0 0.0
      %9540 = vmatprep.subr.mxu0 0.0
      %9541 = vmatpush1.msra.mxu0 %v9362
      %9542 = vmatprep.subr.mxu0 0.0
      %9543 = vmatpush2.msra.mxu0 0.0
      %9544 = vmatprep.subr.mxu0 0.0
      %9545 = vmatpush2.msra.mxu0 0.0
      %9546 = vmatprep.subr.mxu0 0.0
      %9547 = vmatpush2.msra.mxu0 0.0
      %9548 = vmatprep.subr.mxu0 0.0
      %9549 = vmatpush2.msra.mxu0 0.0
      %9550 = vmatprep.subr.mxu0 0.0
      %9551 = vmatpush2.msra.mxu0 0.0
      %9552 = vmatprep.subr.mxu0 0.0
      %9553 = vmatpush2.msra.mxu0 0.0
      %9554 = vmatprep.subr.mxu0 0.0
      %9555 = vmatpush2.msra.mxu0 0.0
      %9556 = vmatprep.subr.mxu0 0.0
      %9557 = vmatpush2.msra.mxu0 0.0
      %9558 = vmatprep.subr.mxu0 0.0
      %9559 = vmatpush2.msra.mxu0 0.0
      %9560 = vmatprep.subr.mxu0 0.0
      %9561 = vmatpush2.msra.mxu0 0.0
      %9562 = vmatprep.subr.mxu0 0.0
      %9563 = vmatpush2.msra.mxu0 0.0
      %9564 = vmatprep.subr.mxu0 0.0
      %9565 = vmatpush2.msra.mxu0 0.0
      %9566 = vmatprep.subr.mxu0 0.0
      %9567 = vmatpush2.msra.mxu0 0.0
      %9568 = vmatprep.subr.mxu0 0.0
      %9569 = vmatpush2.msra.mxu0 0.0
      %9570 = vmatprep.subr.mxu0 0.0
      %9571 = vmatpush2.msra.mxu0 0.0
      %9572 = vmatprep.subr.mxu0 0.0
      %9573 = vmatpush2.msra.mxu0 0.0
      %9574 = vmatprep.mubr.f32.mxu0 0.0
      %9575 = vmatmul.mubr.f32.gmra.mxu0 %v9508
      %v9576 = vpop.f32.mrf.mxu0
      %v9577 = vadd.f32 0.0, %v9576
      %v9578 = vpop.f32.mrf.mxu0
      %9579 = vdwg.mxu0
      %v9581 = vsel %vm250, %v9351, 0
      %9583 = vmatprep.subr.mxu0 0.0
      %9584 = vmatpush1.msra.mxu0 0.0
      %9585 = vmatprep.subr.mxu0 0.0
      %9586 = vmatpush1.msra.mxu0 0.0
      %9587 = vmatprep.subr.mxu0 0.0
      %9588 = vmatpush1.msra.mxu0 0.0
      %9589 = vmatprep.subr.mxu0 0.0
      %9590 = vmatpush1.msra.mxu0 0.0
      %9591 = vmatprep.subr.mxu0 0.0
      %9592 = vmatpush1.msra.mxu0 0.0
      %9593 = vmatprep.subr.mxu0 0.0
      %9594 = vmatpush1.msra.mxu0 0.0
      %9595 = vmatprep.subr.mxu0 0.0
      %9596 = vmatpush1.msra.mxu0 0.0
      %9597 = vmatprep.subr.mxu0 0.0
      %9598 = vmatpush1.msra.mxu0 0.0
      %9599 = vmatprep.subr.mxu0 0.0
      %9600 = vmatpush1.msra.mxu0 0.0
      %9601 = vmatprep.subr.mxu0 0.0
      %9602 = vmatpush1.msra.mxu0 0.0
      %9603 = vmatprep.subr.mxu0 0.0
      %9604 = vmatpush1.msra.mxu0 0.0
      %9605 = vmatprep.subr.mxu0 0.0
      %9606 = vmatpush1.msra.mxu0 0.0
      %9607 = vmatprep.subr.mxu0 0.0
      %9608 = vmatpush1.msra.mxu0 0.0
      %9609 = vmatprep.subr.mxu0 0.0
      %9610 = vmatpush1.msra.mxu0 0.0
      %9611 = vmatprep.subr.mxu0 0.0
      %9612 = vmatpush1.msra.mxu0 0.0
      %9613 = vmatprep.subr.mxu0 0.0
      %9614 = vmatpush1.msra.mxu0 %v9362
      %9615 = vmatprep.subr.mxu0 0.0
      %9616 = vmatpush2.msra.mxu0 0.0
      %9617 = vmatprep.subr.mxu0 0.0
      %9618 = vmatpush2.msra.mxu0 0.0
      %9619 = vmatprep.subr.mxu0 0.0
      %9620 = vmatpush2.msra.mxu0 0.0
      %9621 = vmatprep.subr.mxu0 0.0
      %9622 = vmatpush2.msra.mxu0 0.0
      %9623 = vmatprep.subr.mxu0 0.0
      %9624 = vmatpush2.msra.mxu0 0.0
      %9625 = vmatprep.subr.mxu0 0.0
      %9626 = vmatpush2.msra.mxu0 0.0
      %9627 = vmatprep.subr.mxu0 0.0
      %9628 = vmatpush2.msra.mxu0 0.0
      %9629 = vmatprep.subr.mxu0 0.0
      %9630 = vmatpush2.msra.mxu0 0.0
      %9631 = vmatprep.subr.mxu0 0.0
      %9632 = vmatpush2.msra.mxu0 0.0
      %9633 = vmatprep.subr.mxu0 0.0
      %9634 = vmatpush2.msra.mxu0 0.0
      %9635 = vmatprep.subr.mxu0 0.0
      %9636 = vmatpush2.msra.mxu0 0.0
      %9637 = vmatprep.subr.mxu0 0.0
      %9638 = vmatpush2.msra.mxu0 0.0
      %9639 = vmatprep.subr.mxu0 0.0
      %9640 = vmatpush2.msra.mxu0 0.0
      %9641 = vmatprep.subr.mxu0 0.0
      %9642 = vmatpush2.msra.mxu0 0.0
      %9643 = vmatprep.subr.mxu0 0.0
      %9644 = vmatpush2.msra.mxu0 0.0
      %9645 = vmatprep.subr.mxu0 0.0
      %9646 = vmatpush2.msra.mxu0 0.0
      %9647 = vmatprep.mubr.f32.mxu0 0.0
      %9648 = vmatmul.mubr.f32.gmra.mxu0 %v9581
      %v9649 = vpop.f32.mrf.mxu0
      %v9650 = vadd.f32 0.0, %v9649
      %v9651 = vpop.f32.mrf.mxu0
      %9652 = vdwg.mxu0
      %v9654 = vsel %vm250, %v9352, 0
      %9656 = vmatprep.subr.mxu0 0.0
      %9657 = vmatpush1.msra.mxu0 0.0
      %9658 = vmatprep.subr.mxu0 0.0
      %9659 = vmatpush1.msra.mxu0 0.0
      %9660 = vmatprep.subr.mxu0 0.0
      %9661 = vmatpush1.msra.mxu0 0.0
      %9662 = vmatprep.subr.mxu0 0.0
      %9663 = vmatpush1.msra.mxu0 0.0
      %9664 = vmatprep.subr.mxu0 0.0
      %9665 = vmatpush1.msra.mxu0 0.0
      %9666 = vmatprep.subr.mxu0 0.0
      %9667 = vmatpush1.msra.mxu0 0.0
      %9668 = vmatprep.subr.mxu0 0.0
      %9669 = vmatpush1.msra.mxu0 0.0
      %9670 = vmatprep.subr.mxu0 0.0
      %9671 = vmatpush1.msra.mxu0 0.0
      %9672 = vmatprep.subr.mxu0 0.0
      %9673 = vmatpush1.msra.mxu0 0.0
      %9674 = vmatprep.subr.mxu0 0.0
      %9675 = vmatpush1.msra.mxu0 0.0
      %9676 = vmatprep.subr.mxu0 0.0
      %9677 = vmatpush1.msra.mxu0 0.0
      %9678 = vmatprep.subr.mxu0 0.0
      %9679 = vmatpush1.msra.mxu0 0.0
      %9680 = vmatprep.subr.mxu0 0.0
      %9681 = vmatpush1.msra.mxu0 0.0
      %9682 = vmatprep.subr.mxu0 0.0
      %9683 = vmatpush1.msra.mxu0 0.0
      %9684 = vmatprep.subr.mxu0 0.0
      %9685 = vmatpush1.msra.mxu0 0.0
      %9686 = vmatprep.subr.mxu0 0.0
      %9687 = vmatpush1.msra.mxu0 %v9362
      %9688 = vmatprep.subr.mxu0 0.0
      %9689 = vmatpush2.msra.mxu0 0.0
      %9690 = vmatprep.subr.mxu0 0.0
      %9691 = vmatpush2.msra.mxu0 0.0
      %9692 = vmatprep.subr.mxu0 0.0
      %9693 = vmatpush2.msra.mxu0 0.0
      %9694 = vmatprep.subr.mxu0 0.0
      %9695 = vmatpush2.msra.mxu0 0.0
      %9696 = vmatprep.subr.mxu0 0.0
      %9697 = vmatpush2.msra.mxu0 0.0
      %9698 = vmatprep.subr.mxu0 0.0
      %9699 = vmatpush2.msra.mxu0 0.0
      %9700 = vmatprep.subr.mxu0 0.0
      %9701 = vmatpush2.msra.mxu0 0.0
      %9702 = vmatprep.subr.mxu0 0.0
      %9703 = vmatpush2.msra.mxu0 0.0
      %9704 = vmatprep.subr.mxu0 0.0
      %9705 = vmatpush2.msra.mxu0 0.0
      %9706 = vmatprep.subr.mxu0 0.0
      %9707 = vmatpush2.msra.mxu0 0.0
      %9708 = vmatprep.subr.mxu0 0.0
      %9709 = vmatpush2.msra.mxu0 0.0
      %9710 = vmatprep.subr.mxu0 0.0
      %9711 = vmatpush2.msra.mxu0 0.0
      %9712 = vmatprep.subr.mxu0 0.0
      %9713 = vmatpush2.msra.mxu0 0.0
      %9714 = vmatprep.subr.mxu0 0.0
      %9715 = vmatpush2.msra.mxu0 0.0
      %9716 = vmatprep.subr.mxu0 0.0
      %9717 = vmatpush2.msra.mxu0 0.0
      %9718 = vmatprep.subr.mxu0 0.0
      %9719 = vmatpush2.msra.mxu0 0.0
      %9720 = vmatprep.mubr.f32.mxu0 0.0
      %9721 = vmatmul.mubr.f32.gmra.mxu0 %v9654
      %v9722 = vpop.f32.mrf.mxu0
      %v9723 = vadd.f32 0.0, %v9722
      %v9724 = vpop.f32.mrf.mxu0
      %9725 = vdwg.mxu0
      %v9727 = vsel %vm250, %v9353, 0
      %9729 = vmatprep.subr.mxu0 0.0
      %9730 = vmatpush1.msra.mxu0 0.0
      %9731 = vmatprep.subr.mxu0 0.0
      %9732 = vmatpush1.msra.mxu0 0.0
      %9733 = vmatprep.subr.mxu0 0.0
      %9734 = vmatpush1.msra.mxu0 0.0
      %9735 = vmatprep.subr.mxu0 0.0
      %9736 = vmatpush1.msra.mxu0 0.0
      %9737 = vmatprep.subr.mxu0 0.0
      %9738 = vmatpush1.msra.mxu0 0.0
      %9739 = vmatprep.subr.mxu0 0.0
      %9740 = vmatpush1.msra.mxu0 0.0
      %9741 = vmatprep.subr.mxu0 0.0
      %9742 = vmatpush1.msra.mxu0 0.0
      %9743 = vmatprep.subr.mxu0 0.0
      %9744 = vmatpush1.msra.mxu0 0.0
      %9745 = vmatprep.subr.mxu0 0.0
      %9746 = vmatpush1.msra.mxu0 0.0
      %9747 = vmatprep.subr.mxu0 0.0
      %9748 = vmatpush1.msra.mxu0 0.0
      %9749 = vmatprep.subr.mxu0 0.0
      %9750 = vmatpush1.msra.mxu0 0.0
      %9751 = vmatprep.subr.mxu0 0.0
      %9752 = vmatpush1.msra.mxu0 0.0
      %9753 = vmatprep.subr.mxu0 0.0
      %9754 = vmatpush1.msra.mxu0 0.0
      %9755 = vmatprep.subr.mxu0 0.0
      %9756 = vmatpush1.msra.mxu0 0.0
      %9757 = vmatprep.subr.mxu0 0.0
      %9758 = vmatpush1.msra.mxu0 0.0
      %9759 = vmatprep.subr.mxu0 0.0
      %9760 = vmatpush1.msra.mxu0 %v9362
      %9761 = vmatprep.subr.mxu0 0.0
      %9762 = vmatpush2.msra.mxu0 0.0
      %9763 = vmatprep.subr.mxu0 0.0
      %9764 = vmatpush2.msra.mxu0 0.0
      %9765 = vmatprep.subr.mxu0 0.0
      %9766 = vmatpush2.msra.mxu0 0.0
      %9767 = vmatprep.subr.mxu0 0.0
      %9768 = vmatpush2.msra.mxu0 0.0
      %9769 = vmatprep.subr.mxu0 0.0
      %9770 = vmatpush2.msra.mxu0 0.0
      %9771 = vmatprep.subr.mxu0 0.0
      %9772 = vmatpush2.msra.mxu0 0.0
      %9773 = vmatprep.subr.mxu0 0.0
      %9774 = vmatpush2.msra.mxu0 0.0
      %9775 = vmatprep.subr.mxu0 0.0
      %9776 = vmatpush2.msra.mxu0 0.0
      %9777 = vmatprep.subr.mxu0 0.0
      %9778 = vmatpush2.msra.mxu0 0.0
      %9779 = vmatprep.subr.mxu0 0.0
      %9780 = vmatpush2.msra.mxu0 0.0
      %9781 = vmatprep.subr.mxu0 0.0
      %9782 = vmatpush2.msra.mxu0 0.0
      %9783 = vmatprep.subr.mxu0 0.0
      %9784 = vmatpush2.msra.mxu0 0.0
      %9785 = vmatprep.subr.mxu0 0.0
      %9786 = vmatpush2.msra.mxu0 0.0
      %9787 = vmatprep.subr.mxu0 0.0
      %9788 = vmatpush2.msra.mxu0 0.0
      %9789 = vmatprep.subr.mxu0 0.0
      %9790 = vmatpush2.msra.mxu0 0.0
      %9791 = vmatprep.subr.mxu0 0.0
      %9792 = vmatpush2.msra.mxu0 0.0
      %9793 = vmatprep.mubr.f32.mxu0 0.0
      %9794 = vmatmul.mubr.f32.gmra.mxu0 %v9727
      %v9795 = vpop.f32.mrf.mxu0
      %v9796 = vadd.f32 0.0, %v9795
      %v9797 = vpop.f32.mrf.mxu0
      %9798 = vdwg.mxu0
      %v9800 = vsel %vm250, %v9354, 0
      %9802 = vmatprep.subr.mxu0 0.0
      %9803 = vmatpush1.msra.mxu0 0.0
      %9804 = vmatprep.subr.mxu0 0.0
      %9805 = vmatpush1.msra.mxu0 0.0
      %9806 = vmatprep.subr.mxu0 0.0
      %9807 = vmatpush1.msra.mxu0 0.0
      %9808 = vmatprep.subr.mxu0 0.0
      %9809 = vmatpush1.msra.mxu0 0.0
      %9810 = vmatprep.subr.mxu0 0.0
      %9811 = vmatpush1.msra.mxu0 0.0
      %9812 = vmatprep.subr.mxu0 0.0
      %9813 = vmatpush1.msra.mxu0 0.0
      %9814 = vmatprep.subr.mxu0 0.0
      %9815 = vmatpush1.msra.mxu0 0.0
      %9816 = vmatprep.subr.mxu0 0.0
      %9817 = vmatpush1.msra.mxu0 0.0
      %9818 = vmatprep.subr.mxu0 0.0
      %9819 = vmatpush1.msra.mxu0 0.0
      %9820 = vmatprep.subr.mxu0 0.0
      %9821 = vmatpush1.msra.mxu0 0.0
      %9822 = vmatprep.subr.mxu0 0.0
      %9823 = vmatpush1.msra.mxu0 0.0
      %9824 = vmatprep.subr.mxu0 0.0
      %9825 = vmatpush1.msra.mxu0 0.0
      %9826 = vmatprep.subr.mxu0 0.0
      %9827 = vmatpush1.msra.mxu0 0.0
      %9828 = vmatprep.subr.mxu0 0.0
      %9829 = vmatpush1.msra.mxu0 0.0
      %9830 = vmatprep.subr.mxu0 0.0
      %9831 = vmatpush1.msra.mxu0 0.0
      %9832 = vmatprep.subr.mxu0 0.0
      %9833 = vmatpush1.msra.mxu0 %v9362
      %9834 = vmatprep.subr.mxu0 0.0
      %9835 = vmatpush2.msra.mxu0 0.0
      %9836 = vmatprep.subr.mxu0 0.0
      %9837 = vmatpush2.msra.mxu0 0.0
      %9838 = vmatprep.subr.mxu0 0.0
      %9839 = vmatpush2.msra.mxu0 0.0
      %9840 = vmatprep.subr.mxu0 0.0
      %9841 = vmatpush2.msra.mxu0 0.0
      %9842 = vmatprep.subr.mxu0 0.0
      %9843 = vmatpush2.msra.mxu0 0.0
      %9844 = vmatprep.subr.mxu0 0.0
      %9845 = vmatpush2.msra.mxu0 0.0
      %9846 = vmatprep.subr.mxu0 0.0
      %9847 = vmatpush2.msra.mxu0 0.0
      %9848 = vmatprep.subr.mxu0 0.0
      %9849 = vmatpush2.msra.mxu0 0.0
      %9850 = vmatprep.subr.mxu0 0.0
      %9851 = vmatpush2.msra.mxu0 0.0
      %9852 = vmatprep.subr.mxu0 0.0
      %9853 = vmatpush2.msra.mxu0 0.0
      %9854 = vmatprep.subr.mxu0 0.0
      %9855 = vmatpush2.msra.mxu0 0.0
      %9856 = vmatprep.subr.mxu0 0.0
      %9857 = vmatpush2.msra.mxu0 0.0
      %9858 = vmatprep.subr.mxu0 0.0
      %9859 = vmatpush2.msra.mxu0 0.0
      %9860 = vmatprep.subr.mxu0 0.0
      %9861 = vmatpush2.msra.mxu0 0.0
      %9862 = vmatprep.subr.mxu0 0.0
      %9863 = vmatpush2.msra.mxu0 0.0
      %9864 = vmatprep.subr.mxu0 0.0
      %9865 = vmatpush2.msra.mxu0 0.0
      %9866 = vmatprep.mubr.f32.mxu0 0.0
      %9867 = vmatmul.mubr.f32.gmra.mxu0 %v9800
      %v9868 = vpop.f32.mrf.mxu0
      %v9869 = vadd.f32 0.0, %v9868
      %v9870 = vpop.f32.mrf.mxu0
      %9871 = vdwg.mxu0
      %v9873 = vsel %vm250, %v9355, 0
      %9875 = vmatprep.subr.mxu0 0.0
      %9876 = vmatpush1.msra.mxu0 0.0
      %9877 = vmatprep.subr.mxu0 0.0
      %9878 = vmatpush1.msra.mxu0 0.0
      %9879 = vmatprep.subr.mxu0 0.0
      %9880 = vmatpush1.msra.mxu0 0.0
      %9881 = vmatprep.subr.mxu0 0.0
      %9882 = vmatpush1.msra.mxu0 0.0
      %9883 = vmatprep.subr.mxu0 0.0
      %9884 = vmatpush1.msra.mxu0 0.0
      %9885 = vmatprep.subr.mxu0 0.0
      %9886 = vmatpush1.msra.mxu0 0.0
      %9887 = vmatprep.subr.mxu0 0.0
      %9888 = vmatpush1.msra.mxu0 0.0
      %9889 = vmatprep.subr.mxu0 0.0
      %9890 = vmatpush1.msra.mxu0 0.0
      %9891 = vmatprep.subr.mxu0 0.0
      %9892 = vmatpush1.msra.mxu0 0.0
      %9893 = vmatprep.subr.mxu0 0.0
      %9894 = vmatpush1.msra.mxu0 0.0
      %9895 = vmatprep.subr.mxu0 0.0
      %9896 = vmatpush1.msra.mxu0 0.0
      %9897 = vmatprep.subr.mxu0 0.0
      %9898 = vmatpush1.msra.mxu0 0.0
      %9899 = vmatprep.subr.mxu0 0.0
      %9900 = vmatpush1.msra.mxu0 0.0
      %9901 = vmatprep.subr.mxu0 0.0
      %9902 = vmatpush1.msra.mxu0 0.0
      %9903 = vmatprep.subr.mxu0 0.0
      %9904 = vmatpush1.msra.mxu0 0.0
      %9905 = vmatprep.subr.mxu0 0.0
      %9906 = vmatpush1.msra.mxu0 %v9362
      %9907 = vmatprep.subr.mxu0 0.0
      %9908 = vmatpush2.msra.mxu0 0.0
      %9909 = vmatprep.subr.mxu0 0.0
      %9910 = vmatpush2.msra.mxu0 0.0
      %9911 = vmatprep.subr.mxu0 0.0
      %9912 = vmatpush2.msra.mxu0 0.0
      %9913 = vmatprep.subr.mxu0 0.0
      %9914 = vmatpush2.msra.mxu0 0.0
      %9915 = vmatprep.subr.mxu0 0.0
      %9916 = vmatpush2.msra.mxu0 0.0
      %9917 = vmatprep.subr.mxu0 0.0
      %9918 = vmatpush2.msra.mxu0 0.0
      %9919 = vmatprep.subr.mxu0 0.0
      %9920 = vmatpush2.msra.mxu0 0.0
      %9921 = vmatprep.subr.mxu0 0.0
      %9922 = vmatpush2.msra.mxu0 0.0
      %9923 = vmatprep.subr.mxu0 0.0
      %9924 = vmatpush2.msra.mxu0 0.0
      %9925 = vmatprep.subr.mxu0 0.0
      %9926 = vmatpush2.msra.mxu0 0.0
      %9927 = vmatprep.subr.mxu0 0.0
      %9928 = vmatpush2.msra.mxu0 0.0
      %9929 = vmatprep.subr.mxu0 0.0
      %9930 = vmatpush2.msra.mxu0 0.0
      %9931 = vmatprep.subr.mxu0 0.0
      %9932 = vmatpush2.msra.mxu0 0.0
      %9933 = vmatprep.subr.mxu0 0.0
      %9934 = vmatpush2.msra.mxu0 0.0
      %9935 = vmatprep.subr.mxu0 0.0
      %9936 = vmatpush2.msra.mxu0 0.0
      %9937 = vmatprep.subr.mxu0 0.0
      %9938 = vmatpush2.msra.mxu0 0.0
      %9939 = vmatprep.mubr.f32.mxu0 0.0
      %9940 = vmatmul.mubr.f32.gmra.mxu0 %v9873
      %v9941 = vpop.f32.mrf.mxu0
      %v9942 = vadd.f32 0.0, %v9941
      %v9943 = vpop.f32.mrf.mxu0
      %9944 = vdwg.mxu0
      %v9945 = vadd.f32 %v9339, %v9431
      %v9946 = vadd.f32 %v9340, %v9504
      %v9947 = vadd.f32 %v9341, %v9577
      %v9948 = vadd.f32 %v9342, %v9650
      %v9949 = vadd.f32 %v9343, %v9723
      %v9950 = vadd.f32 %v9344, %v9796
      %v9951 = vadd.f32 %v9345, %v9869
      %v9952 = vadd.f32 %v9346, %v9942
      %v9953 = vld [vmem:[%s9347 + $0x1] sm:$0xff]
      %v9954 = vld [vmem:[%s9347 + $0x11] sm:$0xff]
      %v9955 = vld [vmem:[%s9347 + $0x21] sm:$0xff]
      %v9956 = vld [vmem:[%s9347 + $0x31] sm:$0xff]
      %v9957 = vld [vmem:[%s9347 + $0x41] sm:$0xff]
      %v9958 = vld [vmem:[%s9347 + $0x51] sm:$0xff]
      %v9959 = vld [vmem:[%s9347 + $0x61] sm:$0xff]
      %v9960 = vld [vmem:[%s9347 + $0x71] sm:$0xff]
      %s9961 = scalar_lea.vmem %s3, 28
      %v9962 = vld [vmem:[%s9961] sm:$0xf]
      %v9964 = vsel %vm250, %v9953, 0
      %v9967 = vsel %vm254, %v9962, 0
      %9969 = vmatprep.subr.mxu0 0.0
      %9970 = vmatpush1.msra.mxu0 0.0
      %9971 = vmatprep.subr.mxu0 0.0
      %9972 = vmatpush1.msra.mxu0 0.0
      %9973 = vmatprep.subr.mxu0 0.0
      %9974 = vmatpush1.msra.mxu0 0.0
      %9975 = vmatprep.subr.mxu0 0.0
      %9976 = vmatpush1.msra.mxu0 0.0
      %9977 = vmatprep.subr.mxu0 0.0
      %9978 = vmatpush1.msra.mxu0 0.0
      %9979 = vmatprep.subr.mxu0 0.0
      %9980 = vmatpush1.msra.mxu0 0.0
      %9981 = vmatprep.subr.mxu0 0.0
      %9982 = vmatpush1.msra.mxu0 0.0
      %9983 = vmatprep.subr.mxu0 0.0
      %9984 = vmatpush1.msra.mxu0 0.0
      %9985 = vmatprep.subr.mxu0 0.0
      %9986 = vmatpush1.msra.mxu0 0.0
      %9987 = vmatprep.subr.mxu0 0.0
      %9988 = vmatpush1.msra.mxu0 0.0
      %9989 = vmatprep.subr.mxu0 0.0
      %9990 = vmatpush1.msra.mxu0 0.0
      %9991 = vmatprep.subr.mxu0 0.0
      %9992 = vmatpush1.msra.mxu0 0.0
      %9993 = vmatprep.subr.mxu0 0.0
      %9994 = vmatpush1.msra.mxu0 0.0
      %9995 = vmatprep.subr.mxu0 0.0
      %9996 = vmatpush1.msra.mxu0 0.0
      %9997 = vmatprep.subr.mxu0 0.0
      %9998 = vmatpush1.msra.mxu0 0.0
      %9999 = vmatprep.subr.mxu0 0.0
      %10000 = vmatpush1.msra.mxu0 %v9967
      %10001 = vmatprep.subr.mxu0 0.0
      %10002 = vmatpush2.msra.mxu0 0.0
      %10003 = vmatprep.subr.mxu0 0.0
      %10004 = vmatpush2.msra.mxu0 0.0
      %10005 = vmatprep.subr.mxu0 0.0
      %10006 = vmatpush2.msra.mxu0 0.0
      %10007 = vmatprep.subr.mxu0 0.0
      %10008 = vmatpush2.msra.mxu0 0.0
      %10009 = vmatprep.subr.mxu0 0.0
      %10010 = vmatpush2.msra.mxu0 0.0
      %10011 = vmatprep.subr.mxu0 0.0
      %10012 = vmatpush2.msra.mxu0 0.0
      %10013 = vmatprep.subr.mxu0 0.0
      %10014 = vmatpush2.msra.mxu0 0.0
      %10015 = vmatprep.subr.mxu0 0.0
      %10016 = vmatpush2.msra.mxu0 0.0
      %10017 = vmatprep.subr.mxu0 0.0
      %10018 = vmatpush2.msra.mxu0 0.0
      %10019 = vmatprep.subr.mxu0 0.0
      %10020 = vmatpush2.msra.mxu0 0.0
      %10021 = vmatprep.subr.mxu0 0.0
      %10022 = vmatpush2.msra.mxu0 0.0
      %10023 = vmatprep.subr.mxu0 0.0
      %10024 = vmatpush2.msra.mxu0 0.0
      %10025 = vmatprep.subr.mxu0 0.0
      %10026 = vmatpush2.msra.mxu0 0.0
      %10027 = vmatprep.subr.mxu0 0.0
      %10028 = vmatpush2.msra.mxu0 0.0
      %10029 = vmatprep.subr.mxu0 0.0
      %10030 = vmatpush2.msra.mxu0 0.0
      %10031 = vmatprep.subr.mxu0 0.0
      %10032 = vmatpush2.msra.mxu0 0.0
      %10033 = vmatprep.mubr.f32.mxu0 0.0
      %10034 = vmatmul.mubr.f32.gmra.mxu0 %v9964
      %v10035 = vpop.f32.mrf.mxu0
      %v10036 = vadd.f32 0.0, %v10035
      %v10037 = vpop.f32.mrf.mxu0
      %10038 = vdwg.mxu0
      %v10040 = vsel %vm250, %v9954, 0
      %10042 = vmatprep.subr.mxu0 0.0
      %10043 = vmatpush1.msra.mxu0 0.0
      %10044 = vmatprep.subr.mxu0 0.0
      %10045 = vmatpush1.msra.mxu0 0.0
      %10046 = vmatprep.subr.mxu0 0.0
      %10047 = vmatpush1.msra.mxu0 0.0
      %10048 = vmatprep.subr.mxu0 0.0
      %10049 = vmatpush1.msra.mxu0 0.0
      %10050 = vmatprep.subr.mxu0 0.0
      %10051 = vmatpush1.msra.mxu0 0.0
      %10052 = vmatprep.subr.mxu0 0.0
      %10053 = vmatpush1.msra.mxu0 0.0
      %10054 = vmatprep.subr.mxu0 0.0
      %10055 = vmatpush1.msra.mxu0 0.0
      %10056 = vmatprep.subr.mxu0 0.0
      %10057 = vmatpush1.msra.mxu0 0.0
      %10058 = vmatprep.subr.mxu0 0.0
      %10059 = vmatpush1.msra.mxu0 0.0
      %10060 = vmatprep.subr.mxu0 0.0
      %10061 = vmatpush1.msra.mxu0 0.0
      %10062 = vmatprep.subr.mxu0 0.0
      %10063 = vmatpush1.msra.mxu0 0.0
      %10064 = vmatprep.subr.mxu0 0.0
      %10065 = vmatpush1.msra.mxu0 0.0
      %10066 = vmatprep.subr.mxu0 0.0
      %10067 = vmatpush1.msra.mxu0 0.0
      %10068 = vmatprep.subr.mxu0 0.0
      %10069 = vmatpush1.msra.mxu0 0.0
      %10070 = vmatprep.subr.mxu0 0.0
      %10071 = vmatpush1.msra.mxu0 0.0
      %10072 = vmatprep.subr.mxu0 0.0
      %10073 = vmatpush1.msra.mxu0 %v9967
      %10074 = vmatprep.subr.mxu0 0.0
      %10075 = vmatpush2.msra.mxu0 0.0
      %10076 = vmatprep.subr.mxu0 0.0
      %10077 = vmatpush2.msra.mxu0 0.0
      %10078 = vmatprep.subr.mxu0 0.0
      %10079 = vmatpush2.msra.mxu0 0.0
      %10080 = vmatprep.subr.mxu0 0.0
      %10081 = vmatpush2.msra.mxu0 0.0
      %10082 = vmatprep.subr.mxu0 0.0
      %10083 = vmatpush2.msra.mxu0 0.0
      %10084 = vmatprep.subr.mxu0 0.0
      %10085 = vmatpush2.msra.mxu0 0.0
      %10086 = vmatprep.subr.mxu0 0.0
      %10087 = vmatpush2.msra.mxu0 0.0
      %10088 = vmatprep.subr.mxu0 0.0
      %10089 = vmatpush2.msra.mxu0 0.0
      %10090 = vmatprep.subr.mxu0 0.0
      %10091 = vmatpush2.msra.mxu0 0.0
      %10092 = vmatprep.subr.mxu0 0.0
      %10093 = vmatpush2.msra.mxu0 0.0
      %10094 = vmatprep.subr.mxu0 0.0
      %10095 = vmatpush2.msra.mxu0 0.0
      %10096 = vmatprep.subr.mxu0 0.0
      %10097 = vmatpush2.msra.mxu0 0.0
      %10098 = vmatprep.subr.mxu0 0.0
      %10099 = vmatpush2.msra.mxu0 0.0
      %10100 = vmatprep.subr.mxu0 0.0
      %10101 = vmatpush2.msra.mxu0 0.0
      %10102 = vmatprep.subr.mxu0 0.0
      %10103 = vmatpush2.msra.mxu0 0.0
      %10104 = vmatprep.subr.mxu0 0.0
      %10105 = vmatpush2.msra.mxu0 0.0
      %10106 = vmatprep.mubr.f32.mxu0 0.0
      %10107 = vmatmul.mubr.f32.gmra.mxu0 %v10040
      %v10108 = vpop.f32.mrf.mxu0
      %v10109 = vadd.f32 0.0, %v10108
      %v10110 = vpop.f32.mrf.mxu0
      %10111 = vdwg.mxu0
      %v10113 = vsel %vm250, %v9955, 0
      %10115 = vmatprep.subr.mxu0 0.0
      %10116 = vmatpush1.msra.mxu0 0.0
      %10117 = vmatprep.subr.mxu0 0.0
      %10118 = vmatpush1.msra.mxu0 0.0
      %10119 = vmatprep.subr.mxu0 0.0
      %10120 = vmatpush1.msra.mxu0 0.0
      %10121 = vmatprep.subr.mxu0 0.0
      %10122 = vmatpush1.msra.mxu0 0.0
      %10123 = vmatprep.subr.mxu0 0.0
      %10124 = vmatpush1.msra.mxu0 0.0
      %10125 = vmatprep.subr.mxu0 0.0
      %10126 = vmatpush1.msra.mxu0 0.0
      %10127 = vmatprep.subr.mxu0 0.0
      %10128 = vmatpush1.msra.mxu0 0.0
      %10129 = vmatprep.subr.mxu0 0.0
      %10130 = vmatpush1.msra.mxu0 0.0
      %10131 = vmatprep.subr.mxu0 0.0
      %10132 = vmatpush1.msra.mxu0 0.0
      %10133 = vmatprep.subr.mxu0 0.0
      %10134 = vmatpush1.msra.mxu0 0.0
      %10135 = vmatprep.subr.mxu0 0.0
      %10136 = vmatpush1.msra.mxu0 0.0
      %10137 = vmatprep.subr.mxu0 0.0
      %10138 = vmatpush1.msra.mxu0 0.0
      %10139 = vmatprep.subr.mxu0 0.0
      %10140 = vmatpush1.msra.mxu0 0.0
      %10141 = vmatprep.subr.mxu0 0.0
      %10142 = vmatpush1.msra.mxu0 0.0
      %10143 = vmatprep.subr.mxu0 0.0
      %10144 = vmatpush1.msra.mxu0 0.0
      %10145 = vmatprep.subr.mxu0 0.0
      %10146 = vmatpush1.msra.mxu0 %v9967
      %10147 = vmatprep.subr.mxu0 0.0
      %10148 = vmatpush2.msra.mxu0 0.0
      %10149 = vmatprep.subr.mxu0 0.0
      %10150 = vmatpush2.msra.mxu0 0.0
      %10151 = vmatprep.subr.mxu0 0.0
      %10152 = vmatpush2.msra.mxu0 0.0
      %10153 = vmatprep.subr.mxu0 0.0
      %10154 = vmatpush2.msra.mxu0 0.0
      %10155 = vmatprep.subr.mxu0 0.0
      %10156 = vmatpush2.msra.mxu0 0.0
      %10157 = vmatprep.subr.mxu0 0.0
      %10158 = vmatpush2.msra.mxu0 0.0
      %10159 = vmatprep.subr.mxu0 0.0
      %10160 = vmatpush2.msra.mxu0 0.0
      %10161 = vmatprep.subr.mxu0 0.0
      %10162 = vmatpush2.msra.mxu0 0.0
      %10163 = vmatprep.subr.mxu0 0.0
      %10164 = vmatpush2.msra.mxu0 0.0
      %10165 = vmatprep.subr.mxu0 0.0
      %10166 = vmatpush2.msra.mxu0 0.0
      %10167 = vmatprep.subr.mxu0 0.0
      %10168 = vmatpush2.msra.mxu0 0.0
      %10169 = vmatprep.subr.mxu0 0.0
      %10170 = vmatpush2.msra.mxu0 0.0
      %10171 = vmatprep.subr.mxu0 0.0
      %10172 = vmatpush2.msra.mxu0 0.0
      %10173 = vmatprep.subr.mxu0 0.0
      %10174 = vmatpush2.msra.mxu0 0.0
      %10175 = vmatprep.subr.mxu0 0.0
      %10176 = vmatpush2.msra.mxu0 0.0
      %10177 = vmatprep.subr.mxu0 0.0
      %10178 = vmatpush2.msra.mxu0 0.0
      %10179 = vmatprep.mubr.f32.mxu0 0.0
      %10180 = vmatmul.mubr.f32.gmra.mxu0 %v10113
      %v10181 = vpop.f32.mrf.mxu0
      %v10182 = vadd.f32 0.0, %v10181
      %v10183 = vpop.f32.mrf.mxu0
      %10184 = vdwg.mxu0
      %v10186 = vsel %vm250, %v9956, 0
      %10188 = vmatprep.subr.mxu0 0.0
      %10189 = vmatpush1.msra.mxu0 0.0
      %10190 = vmatprep.subr.mxu0 0.0
      %10191 = vmatpush1.msra.mxu0 0.0
      %10192 = vmatprep.subr.mxu0 0.0
      %10193 = vmatpush1.msra.mxu0 0.0
      %10194 = vmatprep.subr.mxu0 0.0
      %10195 = vmatpush1.msra.mxu0 0.0
      %10196 = vmatprep.subr.mxu0 0.0
      %10197 = vmatpush1.msra.mxu0 0.0
      %10198 = vmatprep.subr.mxu0 0.0
      %10199 = vmatpush1.msra.mxu0 0.0
      %10200 = vmatprep.subr.mxu0 0.0
      %10201 = vmatpush1.msra.mxu0 0.0
      %10202 = vmatprep.subr.mxu0 0.0
      %10203 = vmatpush1.msra.mxu0 0.0
      %10204 = vmatprep.subr.mxu0 0.0
      %10205 = vmatpush1.msra.mxu0 0.0
      %10206 = vmatprep.subr.mxu0 0.0
      %10207 = vmatpush1.msra.mxu0 0.0
      %10208 = vmatprep.subr.mxu0 0.0
      %10209 = vmatpush1.msra.mxu0 0.0
      %10210 = vmatprep.subr.mxu0 0.0
      %10211 = vmatpush1.msra.mxu0 0.0
      %10212 = vmatprep.subr.mxu0 0.0
      %10213 = vmatpush1.msra.mxu0 0.0
      %10214 = vmatprep.subr.mxu0 0.0
      %10215 = vmatpush1.msra.mxu0 0.0
      %10216 = vmatprep.subr.mxu0 0.0
      %10217 = vmatpush1.msra.mxu0 0.0
      %10218 = vmatprep.subr.mxu0 0.0
      %10219 = vmatpush1.msra.mxu0 %v9967
      %10220 = vmatprep.subr.mxu0 0.0
      %10221 = vmatpush2.msra.mxu0 0.0
      %10222 = vmatprep.subr.mxu0 0.0
      %10223 = vmatpush2.msra.mxu0 0.0
      %10224 = vmatprep.subr.mxu0 0.0
      %10225 = vmatpush2.msra.mxu0 0.0
      %10226 = vmatprep.subr.mxu0 0.0
      %10227 = vmatpush2.msra.mxu0 0.0
      %10228 = vmatprep.subr.mxu0 0.0
      %10229 = vmatpush2.msra.mxu0 0.0
      %10230 = vmatprep.subr.mxu0 0.0
      %10231 = vmatpush2.msra.mxu0 0.0
      %10232 = vmatprep.subr.mxu0 0.0
      %10233 = vmatpush2.msra.mxu0 0.0
      %10234 = vmatprep.subr.mxu0 0.0
      %10235 = vmatpush2.msra.mxu0 0.0
      %10236 = vmatprep.subr.mxu0 0.0
      %10237 = vmatpush2.msra.mxu0 0.0
      %10238 = vmatprep.subr.mxu0 0.0
      %10239 = vmatpush2.msra.mxu0 0.0
      %10240 = vmatprep.subr.mxu0 0.0
      %10241 = vmatpush2.msra.mxu0 0.0
      %10242 = vmatprep.subr.mxu0 0.0
      %10243 = vmatpush2.msra.mxu0 0.0
      %10244 = vmatprep.subr.mxu0 0.0
      %10245 = vmatpush2.msra.mxu0 0.0
      %10246 = vmatprep.subr.mxu0 0.0
      %10247 = vmatpush2.msra.mxu0 0.0
      %10248 = vmatprep.subr.mxu0 0.0
      %10249 = vmatpush2.msra.mxu0 0.0
      %10250 = vmatprep.subr.mxu0 0.0
      %10251 = vmatpush2.msra.mxu0 0.0
      %10252 = vmatprep.mubr.f32.mxu0 0.0
      %10253 = vmatmul.mubr.f32.gmra.mxu0 %v10186
      %v10254 = vpop.f32.mrf.mxu0
      %v10255 = vadd.f32 0.0, %v10254
      %v10256 = vpop.f32.mrf.mxu0
      %10257 = vdwg.mxu0
      %v10259 = vsel %vm250, %v9957, 0
      %10261 = vmatprep.subr.mxu0 0.0
      %10262 = vmatpush1.msra.mxu0 0.0
      %10263 = vmatprep.subr.mxu0 0.0
      %10264 = vmatpush1.msra.mxu0 0.0
      %10265 = vmatprep.subr.mxu0 0.0
      %10266 = vmatpush1.msra.mxu0 0.0
      %10267 = vmatprep.subr.mxu0 0.0
      %10268 = vmatpush1.msra.mxu0 0.0
      %10269 = vmatprep.subr.mxu0 0.0
      %10270 = vmatpush1.msra.mxu0 0.0
      %10271 = vmatprep.subr.mxu0 0.0
      %10272 = vmatpush1.msra.mxu0 0.0
      %10273 = vmatprep.subr.mxu0 0.0
      %10274 = vmatpush1.msra.mxu0 0.0
      %10275 = vmatprep.subr.mxu0 0.0
      %10276 = vmatpush1.msra.mxu0 0.0
      %10277 = vmatprep.subr.mxu0 0.0
      %10278 = vmatpush1.msra.mxu0 0.0
      %10279 = vmatprep.subr.mxu0 0.0
      %10280 = vmatpush1.msra.mxu0 0.0
      %10281 = vmatprep.subr.mxu0 0.0
      %10282 = vmatpush1.msra.mxu0 0.0
      %10283 = vmatprep.subr.mxu0 0.0
      %10284 = vmatpush1.msra.mxu0 0.0
      %10285 = vmatprep.subr.mxu0 0.0
      %10286 = vmatpush1.msra.mxu0 0.0
      %10287 = vmatprep.subr.mxu0 0.0
      %10288 = vmatpush1.msra.mxu0 0.0
      %10289 = vmatprep.subr.mxu0 0.0
      %10290 = vmatpush1.msra.mxu0 0.0
      %10291 = vmatprep.subr.mxu0 0.0
      %10292 = vmatpush1.msra.mxu0 %v9967
      %10293 = vmatprep.subr.mxu0 0.0
      %10294 = vmatpush2.msra.mxu0 0.0
      %10295 = vmatprep.subr.mxu0 0.0
      %10296 = vmatpush2.msra.mxu0 0.0
      %10297 = vmatprep.subr.mxu0 0.0
      %10298 = vmatpush2.msra.mxu0 0.0
      %10299 = vmatprep.subr.mxu0 0.0
      %10300 = vmatpush2.msra.mxu0 0.0
      %10301 = vmatprep.subr.mxu0 0.0
      %10302 = vmatpush2.msra.mxu0 0.0
      %10303 = vmatprep.subr.mxu0 0.0
      %10304 = vmatpush2.msra.mxu0 0.0
      %10305 = vmatprep.subr.mxu0 0.0
      %10306 = vmatpush2.msra.mxu0 0.0
      %10307 = vmatprep.subr.mxu0 0.0
      %10308 = vmatpush2.msra.mxu0 0.0
      %10309 = vmatprep.subr.mxu0 0.0
      %10310 = vmatpush2.msra.mxu0 0.0
      %10311 = vmatprep.subr.mxu0 0.0
      %10312 = vmatpush2.msra.mxu0 0.0
      %10313 = vmatprep.subr.mxu0 0.0
      %10314 = vmatpush2.msra.mxu0 0.0
      %10315 = vmatprep.subr.mxu0 0.0
      %10316 = vmatpush2.msra.mxu0 0.0
      %10317 = vmatprep.subr.mxu0 0.0
      %10318 = vmatpush2.msra.mxu0 0.0
      %10319 = vmatprep.subr.mxu0 0.0
      %10320 = vmatpush2.msra.mxu0 0.0
      %10321 = vmatprep.subr.mxu0 0.0
      %10322 = vmatpush2.msra.mxu0 0.0
      %10323 = vmatprep.subr.mxu0 0.0
      %10324 = vmatpush2.msra.mxu0 0.0
      %10325 = vmatprep.mubr.f32.mxu0 0.0
      %10326 = vmatmul.mubr.f32.gmra.mxu0 %v10259
      %v10327 = vpop.f32.mrf.mxu0
      %v10328 = vadd.f32 0.0, %v10327
      %v10329 = vpop.f32.mrf.mxu0
      %10330 = vdwg.mxu0
      %v10332 = vsel %vm250, %v9958, 0
      %10334 = vmatprep.subr.mxu0 0.0
      %10335 = vmatpush1.msra.mxu0 0.0
      %10336 = vmatprep.subr.mxu0 0.0
      %10337 = vmatpush1.msra.mxu0 0.0
      %10338 = vmatprep.subr.mxu0 0.0
      %10339 = vmatpush1.msra.mxu0 0.0
      %10340 = vmatprep.subr.mxu0 0.0
      %10341 = vmatpush1.msra.mxu0 0.0
      %10342 = vmatprep.subr.mxu0 0.0
      %10343 = vmatpush1.msra.mxu0 0.0
      %10344 = vmatprep.subr.mxu0 0.0
      %10345 = vmatpush1.msra.mxu0 0.0
      %10346 = vmatprep.subr.mxu0 0.0
      %10347 = vmatpush1.msra.mxu0 0.0
      %10348 = vmatprep.subr.mxu0 0.0
      %10349 = vmatpush1.msra.mxu0 0.0
      %10350 = vmatprep.subr.mxu0 0.0
      %10351 = vmatpush1.msra.mxu0 0.0
      %10352 = vmatprep.subr.mxu0 0.0
      %10353 = vmatpush1.msra.mxu0 0.0
      %10354 = vmatprep.subr.mxu0 0.0
      %10355 = vmatpush1.msra.mxu0 0.0
      %10356 = vmatprep.subr.mxu0 0.0
      %10357 = vmatpush1.msra.mxu0 0.0
      %10358 = vmatprep.subr.mxu0 0.0
      %10359 = vmatpush1.msra.mxu0 0.0
      %10360 = vmatprep.subr.mxu0 0.0
      %10361 = vmatpush1.msra.mxu0 0.0
      %10362 = vmatprep.subr.mxu0 0.0
      %10363 = vmatpush1.msra.mxu0 0.0
      %10364 = vmatprep.subr.mxu0 0.0
      %10365 = vmatpush1.msra.mxu0 %v9967
      %10366 = vmatprep.subr.mxu0 0.0
      %10367 = vmatpush2.msra.mxu0 0.0
      %10368 = vmatprep.subr.mxu0 0.0
      %10369 = vmatpush2.msra.mxu0 0.0
      %10370 = vmatprep.subr.mxu0 0.0
      %10371 = vmatpush2.msra.mxu0 0.0
      %10372 = vmatprep.subr.mxu0 0.0
      %10373 = vmatpush2.msra.mxu0 0.0
      %10374 = vmatprep.subr.mxu0 0.0
      %10375 = vmatpush2.msra.mxu0 0.0
      %10376 = vmatprep.subr.mxu0 0.0
      %10377 = vmatpush2.msra.mxu0 0.0
      %10378 = vmatprep.subr.mxu0 0.0
      %10379 = vmatpush2.msra.mxu0 0.0
      %10380 = vmatprep.subr.mxu0 0.0
      %10381 = vmatpush2.msra.mxu0 0.0
      %10382 = vmatprep.subr.mxu0 0.0
      %10383 = vmatpush2.msra.mxu0 0.0
      %10384 = vmatprep.subr.mxu0 0.0
      %10385 = vmatpush2.msra.mxu0 0.0
      %10386 = vmatprep.subr.mxu0 0.0
      %10387 = vmatpush2.msra.mxu0 0.0
      %10388 = vmatprep.subr.mxu0 0.0
      %10389 = vmatpush2.msra.mxu0 0.0
      %10390 = vmatprep.subr.mxu0 0.0
      %10391 = vmatpush2.msra.mxu0 0.0
      %10392 = vmatprep.subr.mxu0 0.0
      %10393 = vmatpush2.msra.mxu0 0.0
      %10394 = vmatprep.subr.mxu0 0.0
      %10395 = vmatpush2.msra.mxu0 0.0
      %10396 = vmatprep.subr.mxu0 0.0
      %10397 = vmatpush2.msra.mxu0 0.0
      %10398 = vmatprep.mubr.f32.mxu0 0.0
      %10399 = vmatmul.mubr.f32.gmra.mxu0 %v10332
      %v10400 = vpop.f32.mrf.mxu0
      %v10401 = vadd.f32 0.0, %v10400
      %v10402 = vpop.f32.mrf.mxu0
      %10403 = vdwg.mxu0
      %v10405 = vsel %vm250, %v9959, 0
      %10407 = vmatprep.subr.mxu0 0.0
      %10408 = vmatpush1.msra.mxu0 0.0
      %10409 = vmatprep.subr.mxu0 0.0
      %10410 = vmatpush1.msra.mxu0 0.0
      %10411 = vmatprep.subr.mxu0 0.0
      %10412 = vmatpush1.msra.mxu0 0.0
      %10413 = vmatprep.subr.mxu0 0.0
      %10414 = vmatpush1.msra.mxu0 0.0
      %10415 = vmatprep.subr.mxu0 0.0
      %10416 = vmatpush1.msra.mxu0 0.0
      %10417 = vmatprep.subr.mxu0 0.0
      %10418 = vmatpush1.msra.mxu0 0.0
      %10419 = vmatprep.subr.mxu0 0.0
      %10420 = vmatpush1.msra.mxu0 0.0
      %10421 = vmatprep.subr.mxu0 0.0
      %10422 = vmatpush1.msra.mxu0 0.0
      %10423 = vmatprep.subr.mxu0 0.0
      %10424 = vmatpush1.msra.mxu0 0.0
      %10425 = vmatprep.subr.mxu0 0.0
      %10426 = vmatpush1.msra.mxu0 0.0
      %10427 = vmatprep.subr.mxu0 0.0
      %10428 = vmatpush1.msra.mxu0 0.0
      %10429 = vmatprep.subr.mxu0 0.0
      %10430 = vmatpush1.msra.mxu0 0.0
      %10431 = vmatprep.subr.mxu0 0.0
      %10432 = vmatpush1.msra.mxu0 0.0
      %10433 = vmatprep.subr.mxu0 0.0
      %10434 = vmatpush1.msra.mxu0 0.0
      %10435 = vmatprep.subr.mxu0 0.0
      %10436 = vmatpush1.msra.mxu0 0.0
      %10437 = vmatprep.subr.mxu0 0.0
      %10438 = vmatpush1.msra.mxu0 %v9967
      %10439 = vmatprep.subr.mxu0 0.0
      %10440 = vmatpush2.msra.mxu0 0.0
      %10441 = vmatprep.subr.mxu0 0.0
      %10442 = vmatpush2.msra.mxu0 0.0
      %10443 = vmatprep.subr.mxu0 0.0
      %10444 = vmatpush2.msra.mxu0 0.0
      %10445 = vmatprep.subr.mxu0 0.0
      %10446 = vmatpush2.msra.mxu0 0.0
      %10447 = vmatprep.subr.mxu0 0.0
      %10448 = vmatpush2.msra.mxu0 0.0
      %10449 = vmatprep.subr.mxu0 0.0
      %10450 = vmatpush2.msra.mxu0 0.0
      %10451 = vmatprep.subr.mxu0 0.0
      %10452 = vmatpush2.msra.mxu0 0.0
      %10453 = vmatprep.subr.mxu0 0.0
      %10454 = vmatpush2.msra.mxu0 0.0
      %10455 = vmatprep.subr.mxu0 0.0
      %10456 = vmatpush2.msra.mxu0 0.0
      %10457 = vmatprep.subr.mxu0 0.0
      %10458 = vmatpush2.msra.mxu0 0.0
      %10459 = vmatprep.subr.mxu0 0.0
      %10460 = vmatpush2.msra.mxu0 0.0
      %10461 = vmatprep.subr.mxu0 0.0
      %10462 = vmatpush2.msra.mxu0 0.0
      %10463 = vmatprep.subr.mxu0 0.0
      %10464 = vmatpush2.msra.mxu0 0.0
      %10465 = vmatprep.subr.mxu0 0.0
      %10466 = vmatpush2.msra.mxu0 0.0
      %10467 = vmatprep.subr.mxu0 0.0
      %10468 = vmatpush2.msra.mxu0 0.0
      %10469 = vmatprep.subr.mxu0 0.0
      %10470 = vmatpush2.msra.mxu0 0.0
      %10471 = vmatprep.mubr.f32.mxu0 0.0
      %10472 = vmatmul.mubr.f32.gmra.mxu0 %v10405
      %v10473 = vpop.f32.mrf.mxu0
      %v10474 = vadd.f32 0.0, %v10473
      %v10475 = vpop.f32.mrf.mxu0
      %10476 = vdwg.mxu0
      %v10478 = vsel %vm250, %v9960, 0
      %10480 = vmatprep.subr.mxu0 0.0
      %10481 = vmatpush1.msra.mxu0 0.0
      %10482 = vmatprep.subr.mxu0 0.0
      %10483 = vmatpush1.msra.mxu0 0.0
      %10484 = vmatprep.subr.mxu0 0.0
      %10485 = vmatpush1.msra.mxu0 0.0
      %10486 = vmatprep.subr.mxu0 0.0
      %10487 = vmatpush1.msra.mxu0 0.0
      %10488 = vmatprep.subr.mxu0 0.0
      %10489 = vmatpush1.msra.mxu0 0.0
      %10490 = vmatprep.subr.mxu0 0.0
      %10491 = vmatpush1.msra.mxu0 0.0
      %10492 = vmatprep.subr.mxu0 0.0
      %10493 = vmatpush1.msra.mxu0 0.0
      %10494 = vmatprep.subr.mxu0 0.0
      %10495 = vmatpush1.msra.mxu0 0.0
      %10496 = vmatprep.subr.mxu0 0.0
      %10497 = vmatpush1.msra.mxu0 0.0
      %10498 = vmatprep.subr.mxu0 0.0
      %10499 = vmatpush1.msra.mxu0 0.0
      %10500 = vmatprep.subr.mxu0 0.0
      %10501 = vmatpush1.msra.mxu0 0.0
      %10502 = vmatprep.subr.mxu0 0.0
      %10503 = vmatpush1.msra.mxu0 0.0
      %10504 = vmatprep.subr.mxu0 0.0
      %10505 = vmatpush1.msra.mxu0 0.0
      %10506 = vmatprep.subr.mxu0 0.0
      %10507 = vmatpush1.msra.mxu0 0.0
      %10508 = vmatprep.subr.mxu0 0.0
      %10509 = vmatpush1.msra.mxu0 0.0
      %10510 = vmatprep.subr.mxu0 0.0
      %10511 = vmatpush1.msra.mxu0 %v9967
      %10512 = vmatprep.subr.mxu0 0.0
      %10513 = vmatpush2.msra.mxu0 0.0
      %10514 = vmatprep.subr.mxu0 0.0
      %10515 = vmatpush2.msra.mxu0 0.0
      %10516 = vmatprep.subr.mxu0 0.0
      %10517 = vmatpush2.msra.mxu0 0.0
      %10518 = vmatprep.subr.mxu0 0.0
      %10519 = vmatpush2.msra.mxu0 0.0
      %10520 = vmatprep.subr.mxu0 0.0
      %10521 = vmatpush2.msra.mxu0 0.0
      %10522 = vmatprep.subr.mxu0 0.0
      %10523 = vmatpush2.msra.mxu0 0.0
      %10524 = vmatprep.subr.mxu0 0.0
      %10525 = vmatpush2.msra.mxu0 0.0
      %10526 = vmatprep.subr.mxu0 0.0
      %10527 = vmatpush2.msra.mxu0 0.0
      %10528 = vmatprep.subr.mxu0 0.0
      %10529 = vmatpush2.msra.mxu0 0.0
      %10530 = vmatprep.subr.mxu0 0.0
      %10531 = vmatpush2.msra.mxu0 0.0
      %10532 = vmatprep.subr.mxu0 0.0
      %10533 = vmatpush2.msra.mxu0 0.0
      %10534 = vmatprep.subr.mxu0 0.0
      %10535 = vmatpush2.msra.mxu0 0.0
      %10536 = vmatprep.subr.mxu0 0.0
      %10537 = vmatpush2.msra.mxu0 0.0
      %10538 = vmatprep.subr.mxu0 0.0
      %10539 = vmatpush2.msra.mxu0 0.0
      %10540 = vmatprep.subr.mxu0 0.0
      %10541 = vmatpush2.msra.mxu0 0.0
      %10542 = vmatprep.subr.mxu0 0.0
      %10543 = vmatpush2.msra.mxu0 0.0
      %10544 = vmatprep.mubr.f32.mxu0 0.0
      %10545 = vmatmul.mubr.f32.gmra.mxu0 %v10478
      %v10546 = vpop.f32.mrf.mxu0
      %v10547 = vadd.f32 0.0, %v10546
      %v10548 = vpop.f32.mrf.mxu0
      %10549 = vdwg.mxu0
      %v10550 = vadd.f32 %v9945, %v10036
      %v10551 = vadd.f32 %v9946, %v10109
      %v10552 = vadd.f32 %v9947, %v10182
      %v10553 = vadd.f32 %v9948, %v10255
      %v10554 = vadd.f32 %v9949, %v10328
      %v10555 = vadd.f32 %v9950, %v10401
      %v10556 = vadd.f32 %v9951, %v10474
      %v10557 = vadd.f32 %v9952, %v10547
      %v10558 = vld [vmem:[%s9347 + $0x2] sm:$0xff]
      %v10559 = vld [vmem:[%s9347 + $0x12] sm:$0xff]
      %v10560 = vld [vmem:[%s9347 + $0x22] sm:$0xff]
      %v10561 = vld [vmem:[%s9347 + $0x32] sm:$0xff]
      %v10562 = vld [vmem:[%s9347 + $0x42] sm:$0xff]
      %v10563 = vld [vmem:[%s9347 + $0x52] sm:$0xff]
      %v10564 = vld [vmem:[%s9347 + $0x62] sm:$0xff]
      %v10565 = vld [vmem:[%s9347 + $0x72] sm:$0xff]
      %s10566 = scalar_lea.vmem %s3, 32
      %v10567 = vld [vmem:[%s10566] sm:$0xf]
      %v10569 = vsel %vm250, %v10558, 0
      %v10572 = vsel %vm254, %v10567, 0
      %10574 = vmatprep.subr.mxu0 0.0
      %10575 = vmatpush1.msra.mxu0 0.0
      %10576 = vmatprep.subr.mxu0 0.0
      %10577 = vmatpush1.msra.mxu0 0.0
      %10578 = vmatprep.subr.mxu0 0.0
      %10579 = vmatpush1.msra.mxu0 0.0
      %10580 = vmatprep.subr.mxu0 0.0
      %10581 = vmatpush1.msra.mxu0 0.0
      %10582 = vmatprep.subr.mxu0 0.0
      %10583 = vmatpush1.msra.mxu0 0.0
      %10584 = vmatprep.subr.mxu0 0.0
      %10585 = vmatpush1.msra.mxu0 0.0
      %10586 = vmatprep.subr.mxu0 0.0
      %10587 = vmatpush1.msra.mxu0 0.0
      %10588 = vmatprep.subr.mxu0 0.0
      %10589 = vmatpush1.msra.mxu0 0.0
      %10590 = vmatprep.subr.mxu0 0.0
      %10591 = vmatpush1.msra.mxu0 0.0
      %10592 = vmatprep.subr.mxu0 0.0
      %10593 = vmatpush1.msra.mxu0 0.0
      %10594 = vmatprep.subr.mxu0 0.0
      %10595 = vmatpush1.msra.mxu0 0.0
      %10596 = vmatprep.subr.mxu0 0.0
      %10597 = vmatpush1.msra.mxu0 0.0
      %10598 = vmatprep.subr.mxu0 0.0
      %10599 = vmatpush1.msra.mxu0 0.0
      %10600 = vmatprep.subr.mxu0 0.0
      %10601 = vmatpush1.msra.mxu0 0.0
      %10602 = vmatprep.subr.mxu0 0.0
      %10603 = vmatpush1.msra.mxu0 0.0
      %10604 = vmatprep.subr.mxu0 0.0
      %10605 = vmatpush1.msra.mxu0 %v10572
      %10606 = vmatprep.subr.mxu0 0.0
      %10607 = vmatpush2.msra.mxu0 0.0
      %10608 = vmatprep.subr.mxu0 0.0
      %10609 = vmatpush2.msra.mxu0 0.0
      %10610 = vmatprep.subr.mxu0 0.0
      %10611 = vmatpush2.msra.mxu0 0.0
      %10612 = vmatprep.subr.mxu0 0.0
      %10613 = vmatpush2.msra.mxu0 0.0
      %10614 = vmatprep.subr.mxu0 0.0
      %10615 = vmatpush2.msra.mxu0 0.0
      %10616 = vmatprep.subr.mxu0 0.0
      %10617 = vmatpush2.msra.mxu0 0.0
      %10618 = vmatprep.subr.mxu0 0.0
      %10619 = vmatpush2.msra.mxu0 0.0
      %10620 = vmatprep.subr.mxu0 0.0
      %10621 = vmatpush2.msra.mxu0 0.0
      %10622 = vmatprep.subr.mxu0 0.0
      %10623 = vmatpush2.msra.mxu0 0.0
      %10624 = vmatprep.subr.mxu0 0.0
      %10625 = vmatpush2.msra.mxu0 0.0
      %10626 = vmatprep.subr.mxu0 0.0
      %10627 = vmatpush2.msra.mxu0 0.0
      %10628 = vmatprep.subr.mxu0 0.0
      %10629 = vmatpush2.msra.mxu0 0.0
      %10630 = vmatprep.subr.mxu0 0.0
      %10631 = vmatpush2.msra.mxu0 0.0
      %10632 = vmatprep.subr.mxu0 0.0
      %10633 = vmatpush2.msra.mxu0 0.0
      %10634 = vmatprep.subr.mxu0 0.0
      %10635 = vmatpush2.msra.mxu0 0.0
      %10636 = vmatprep.subr.mxu0 0.0
      %10637 = vmatpush2.msra.mxu0 0.0
      %10638 = vmatprep.mubr.f32.mxu0 0.0
      %10639 = vmatmul.mubr.f32.gmra.mxu0 %v10569
      %v10640 = vpop.f32.mrf.mxu0
      %v10641 = vadd.f32 0.0, %v10640
      %v10642 = vpop.f32.mrf.mxu0
      %10643 = vdwg.mxu0
      %v10645 = vsel %vm250, %v10559, 0
      %10647 = vmatprep.subr.mxu0 0.0
      %10648 = vmatpush1.msra.mxu0 0.0
      %10649 = vmatprep.subr.mxu0 0.0
      %10650 = vmatpush1.msra.mxu0 0.0
      %10651 = vmatprep.subr.mxu0 0.0
      %10652 = vmatpush1.msra.mxu0 0.0
      %10653 = vmatprep.subr.mxu0 0.0
      %10654 = vmatpush1.msra.mxu0 0.0
      %10655 = vmatprep.subr.mxu0 0.0
      %10656 = vmatpush1.msra.mxu0 0.0
      %10657 = vmatprep.subr.mxu0 0.0
      %10658 = vmatpush1.msra.mxu0 0.0
      %10659 = vmatprep.subr.mxu0 0.0
      %10660 = vmatpush1.msra.mxu0 0.0
      %10661 = vmatprep.subr.mxu0 0.0
      %10662 = vmatpush1.msra.mxu0 0.0
      %10663 = vmatprep.subr.mxu0 0.0
      %10664 = vmatpush1.msra.mxu0 0.0
      %10665 = vmatprep.subr.mxu0 0.0
      %10666 = vmatpush1.msra.mxu0 0.0
      %10667 = vmatprep.subr.mxu0 0.0
      %10668 = vmatpush1.msra.mxu0 0.0
      %10669 = vmatprep.subr.mxu0 0.0
      %10670 = vmatpush1.msra.mxu0 0.0
      %10671 = vmatprep.subr.mxu0 0.0
      %10672 = vmatpush1.msra.mxu0 0.0
      %10673 = vmatprep.subr.mxu0 0.0
      %10674 = vmatpush1.msra.mxu0 0.0
      %10675 = vmatprep.subr.mxu0 0.0
      %10676 = vmatpush1.msra.mxu0 0.0
      %10677 = vmatprep.subr.mxu0 0.0
      %10678 = vmatpush1.msra.mxu0 %v10572
      %10679 = vmatprep.subr.mxu0 0.0
      %10680 = vmatpush2.msra.mxu0 0.0
      %10681 = vmatprep.subr.mxu0 0.0
      %10682 = vmatpush2.msra.mxu0 0.0
      %10683 = vmatprep.subr.mxu0 0.0
      %10684 = vmatpush2.msra.mxu0 0.0
      %10685 = vmatprep.subr.mxu0 0.0
      %10686 = vmatpush2.msra.mxu0 0.0
      %10687 = vmatprep.subr.mxu0 0.0
      %10688 = vmatpush2.msra.mxu0 0.0
      %10689 = vmatprep.subr.mxu0 0.0
      %10690 = vmatpush2.msra.mxu0 0.0
      %10691 = vmatprep.subr.mxu0 0.0
      %10692 = vmatpush2.msra.mxu0 0.0
      %10693 = vmatprep.subr.mxu0 0.0
      %10694 = vmatpush2.msra.mxu0 0.0
      %10695 = vmatprep.subr.mxu0 0.0
      %10696 = vmatpush2.msra.mxu0 0.0
      %10697 = vmatprep.subr.mxu0 0.0
      %10698 = vmatpush2.msra.mxu0 0.0
      %10699 = vmatprep.subr.mxu0 0.0
      %10700 = vmatpush2.msra.mxu0 0.0
      %10701 = vmatprep.subr.mxu0 0.0
      %10702 = vmatpush2.msra.mxu0 0.0
      %10703 = vmatprep.subr.mxu0 0.0
      %10704 = vmatpush2.msra.mxu0 0.0
      %10705 = vmatprep.subr.mxu0 0.0
      %10706 = vmatpush2.msra.mxu0 0.0
      %10707 = vmatprep.subr.mxu0 0.0
      %10708 = vmatpush2.msra.mxu0 0.0
      %10709 = vmatprep.subr.mxu0 0.0
      %10710 = vmatpush2.msra.mxu0 0.0
      %10711 = vmatprep.mubr.f32.mxu0 0.0
      %10712 = vmatmul.mubr.f32.gmra.mxu0 %v10645
      %v10713 = vpop.f32.mrf.mxu0
      %v10714 = vadd.f32 0.0, %v10713
      %v10715 = vpop.f32.mrf.mxu0
      %10716 = vdwg.mxu0
      %v10718 = vsel %vm250, %v10560, 0
      %10720 = vmatprep.subr.mxu0 0.0
      %10721 = vmatpush1.msra.mxu0 0.0
      %10722 = vmatprep.subr.mxu0 0.0
      %10723 = vmatpush1.msra.mxu0 0.0
      %10724 = vmatprep.subr.mxu0 0.0
      %10725 = vmatpush1.msra.mxu0 0.0
      %10726 = vmatprep.subr.mxu0 0.0
      %10727 = vmatpush1.msra.mxu0 0.0
      %10728 = vmatprep.subr.mxu0 0.0
      %10729 = vmatpush1.msra.mxu0 0.0
      %10730 = vmatprep.subr.mxu0 0.0
      %10731 = vmatpush1.msra.mxu0 0.0
      %10732 = vmatprep.subr.mxu0 0.0
      %10733 = vmatpush1.msra.mxu0 0.0
      %10734 = vmatprep.subr.mxu0 0.0
      %10735 = vmatpush1.msra.mxu0 0.0
      %10736 = vmatprep.subr.mxu0 0.0
      %10737 = vmatpush1.msra.mxu0 0.0
      %10738 = vmatprep.subr.mxu0 0.0
      %10739 = vmatpush1.msra.mxu0 0.0
      %10740 = vmatprep.subr.mxu0 0.0
      %10741 = vmatpush1.msra.mxu0 0.0
      %10742 = vmatprep.subr.mxu0 0.0
      %10743 = vmatpush1.msra.mxu0 0.0
      %10744 = vmatprep.subr.mxu0 0.0
      %10745 = vmatpush1.msra.mxu0 0.0
      %10746 = vmatprep.subr.mxu0 0.0
      %10747 = vmatpush1.msra.mxu0 0.0
      %10748 = vmatprep.subr.mxu0 0.0
      %10749 = vmatpush1.msra.mxu0 0.0
      %10750 = vmatprep.subr.mxu0 0.0
      %10751 = vmatpush1.msra.mxu0 %v10572
      %10752 = vmatprep.subr.mxu0 0.0
      %10753 = vmatpush2.msra.mxu0 0.0
      %10754 = vmatprep.subr.mxu0 0.0
      %10755 = vmatpush2.msra.mxu0 0.0
      %10756 = vmatprep.subr.mxu0 0.0
      %10757 = vmatpush2.msra.mxu0 0.0
      %10758 = vmatprep.subr.mxu0 0.0
      %10759 = vmatpush2.msra.mxu0 0.0
      %10760 = vmatprep.subr.mxu0 0.0
      %10761 = vmatpush2.msra.mxu0 0.0
      %10762 = vmatprep.subr.mxu0 0.0
      %10763 = vmatpush2.msra.mxu0 0.0
      %10764 = vmatprep.subr.mxu0 0.0
      %10765 = vmatpush2.msra.mxu0 0.0
      %10766 = vmatprep.subr.mxu0 0.0
      %10767 = vmatpush2.msra.mxu0 0.0
      %10768 = vmatprep.subr.mxu0 0.0
      %10769 = vmatpush2.msra.mxu0 0.0
      %10770 = vmatprep.subr.mxu0 0.0
      %10771 = vmatpush2.msra.mxu0 0.0
      %10772 = vmatprep.subr.mxu0 0.0
      %10773 = vmatpush2.msra.mxu0 0.0
      %10774 = vmatprep.subr.mxu0 0.0
      %10775 = vmatpush2.msra.mxu0 0.0
      %10776 = vmatprep.subr.mxu0 0.0
      %10777 = vmatpush2.msra.mxu0 0.0
      %10778 = vmatprep.subr.mxu0 0.0
      %10779 = vmatpush2.msra.mxu0 0.0
      %10780 = vmatprep.subr.mxu0 0.0
      %10781 = vmatpush2.msra.mxu0 0.0
      %10782 = vmatprep.subr.mxu0 0.0
      %10783 = vmatpush2.msra.mxu0 0.0
      %10784 = vmatprep.mubr.f32.mxu0 0.0
      %10785 = vmatmul.mubr.f32.gmra.mxu0 %v10718
      %v10786 = vpop.f32.mrf.mxu0
      %v10787 = vadd.f32 0.0, %v10786
      %v10788 = vpop.f32.mrf.mxu0
      %10789 = vdwg.mxu0
      %v10791 = vsel %vm250, %v10561, 0
      %10793 = vmatprep.subr.mxu0 0.0
      %10794 = vmatpush1.msra.mxu0 0.0
      %10795 = vmatprep.subr.mxu0 0.0
      %10796 = vmatpush1.msra.mxu0 0.0
      %10797 = vmatprep.subr.mxu0 0.0
      %10798 = vmatpush1.msra.mxu0 0.0
      %10799 = vmatprep.subr.mxu0 0.0
      %10800 = vmatpush1.msra.mxu0 0.0
      %10801 = vmatprep.subr.mxu0 0.0
      %10802 = vmatpush1.msra.mxu0 0.0
      %10803 = vmatprep.subr.mxu0 0.0
      %10804 = vmatpush1.msra.mxu0 0.0
      %10805 = vmatprep.subr.mxu0 0.0
      %10806 = vmatpush1.msra.mxu0 0.0
      %10807 = vmatprep.subr.mxu0 0.0
      %10808 = vmatpush1.msra.mxu0 0.0
      %10809 = vmatprep.subr.mxu0 0.0
      %10810 = vmatpush1.msra.mxu0 0.0
      %10811 = vmatprep.subr.mxu0 0.0
      %10812 = vmatpush1.msra.mxu0 0.0
      %10813 = vmatprep.subr.mxu0 0.0
      %10814 = vmatpush1.msra.mxu0 0.0
      %10815 = vmatprep.subr.mxu0 0.0
      %10816 = vmatpush1.msra.mxu0 0.0
      %10817 = vmatprep.subr.mxu0 0.0
      %10818 = vmatpush1.msra.mxu0 0.0
      %10819 = vmatprep.subr.mxu0 0.0
      %10820 = vmatpush1.msra.mxu0 0.0
      %10821 = vmatprep.subr.mxu0 0.0
      %10822 = vmatpush1.msra.mxu0 0.0
      %10823 = vmatprep.subr.mxu0 0.0
      %10824 = vmatpush1.msra.mxu0 %v10572
      %10825 = vmatprep.subr.mxu0 0.0
      %10826 = vmatpush2.msra.mxu0 0.0
      %10827 = vmatprep.subr.mxu0 0.0
      %10828 = vmatpush2.msra.mxu0 0.0
      %10829 = vmatprep.subr.mxu0 0.0
      %10830 = vmatpush2.msra.mxu0 0.0
      %10831 = vmatprep.subr.mxu0 0.0
      %10832 = vmatpush2.msra.mxu0 0.0
      %10833 = vmatprep.subr.mxu0 0.0
      %10834 = vmatpush2.msra.mxu0 0.0
      %10835 = vmatprep.subr.mxu0 0.0
      %10836 = vmatpush2.msra.mxu0 0.0
      %10837 = vmatprep.subr.mxu0 0.0
      %10838 = vmatpush2.msra.mxu0 0.0
      %10839 = vmatprep.subr.mxu0 0.0
      %10840 = vmatpush2.msra.mxu0 0.0
      %10841 = vmatprep.subr.mxu0 0.0
      %10842 = vmatpush2.msra.mxu0 0.0
      %10843 = vmatprep.subr.mxu0 0.0
      %10844 = vmatpush2.msra.mxu0 0.0
      %10845 = vmatprep.subr.mxu0 0.0
      %10846 = vmatpush2.msra.mxu0 0.0
      %10847 = vmatprep.subr.mxu0 0.0
      %10848 = vmatpush2.msra.mxu0 0.0
      %10849 = vmatprep.subr.mxu0 0.0
      %10850 = vmatpush2.msra.mxu0 0.0
      %10851 = vmatprep.subr.mxu0 0.0
      %10852 = vmatpush2.msra.mxu0 0.0
      %10853 = vmatprep.subr.mxu0 0.0
      %10854 = vmatpush2.msra.mxu0 0.0
      %10855 = vmatprep.subr.mxu0 0.0
      %10856 = vmatpush2.msra.mxu0 0.0
      %10857 = vmatprep.mubr.f32.mxu0 0.0
      %10858 = vmatmul.mubr.f32.gmra.mxu0 %v10791
      %v10859 = vpop.f32.mrf.mxu0
      %v10860 = vadd.f32 0.0, %v10859
      %v10861 = vpop.f32.mrf.mxu0
      %10862 = vdwg.mxu0
      %v10864 = vsel %vm250, %v10562, 0
      %10866 = vmatprep.subr.mxu0 0.0
      %10867 = vmatpush1.msra.mxu0 0.0
      %10868 = vmatprep.subr.mxu0 0.0
      %10869 = vmatpush1.msra.mxu0 0.0
      %10870 = vmatprep.subr.mxu0 0.0
      %10871 = vmatpush1.msra.mxu0 0.0
      %10872 = vmatprep.subr.mxu0 0.0
      %10873 = vmatpush1.msra.mxu0 0.0
      %10874 = vmatprep.subr.mxu0 0.0
      %10875 = vmatpush1.msra.mxu0 0.0
      %10876 = vmatprep.subr.mxu0 0.0
      %10877 = vmatpush1.msra.mxu0 0.0
      %10878 = vmatprep.subr.mxu0 0.0
      %10879 = vmatpush1.msra.mxu0 0.0
      %10880 = vmatprep.subr.mxu0 0.0
      %10881 = vmatpush1.msra.mxu0 0.0
      %10882 = vmatprep.subr.mxu0 0.0
      %10883 = vmatpush1.msra.mxu0 0.0
      %10884 = vmatprep.subr.mxu0 0.0
      %10885 = vmatpush1.msra.mxu0 0.0
      %10886 = vmatprep.subr.mxu0 0.0
      %10887 = vmatpush1.msra.mxu0 0.0
      %10888 = vmatprep.subr.mxu0 0.0
      %10889 = vmatpush1.msra.mxu0 0.0
      %10890 = vmatprep.subr.mxu0 0.0
      %10891 = vmatpush1.msra.mxu0 0.0
      %10892 = vmatprep.subr.mxu0 0.0
      %10893 = vmatpush1.msra.mxu0 0.0
      %10894 = vmatprep.subr.mxu0 0.0
      %10895 = vmatpush1.msra.mxu0 0.0
      %10896 = vmatprep.subr.mxu0 0.0
      %10897 = vmatpush1.msra.mxu0 %v10572
      %10898 = vmatprep.subr.mxu0 0.0
      %10899 = vmatpush2.msra.mxu0 0.0
      %10900 = vmatprep.subr.mxu0 0.0
      %10901 = vmatpush2.msra.mxu0 0.0
      %10902 = vmatprep.subr.mxu0 0.0
      %10903 = vmatpush2.msra.mxu0 0.0
      %10904 = vmatprep.subr.mxu0 0.0
      %10905 = vmatpush2.msra.mxu0 0.0
      %10906 = vmatprep.subr.mxu0 0.0
      %10907 = vmatpush2.msra.mxu0 0.0
      %10908 = vmatprep.subr.mxu0 0.0
      %10909 = vmatpush2.msra.mxu0 0.0
      %10910 = vmatprep.subr.mxu0 0.0
      %10911 = vmatpush2.msra.mxu0 0.0
      %10912 = vmatprep.subr.mxu0 0.0
      %10913 = vmatpush2.msra.mxu0 0.0
      %10914 = vmatprep.subr.mxu0 0.0
      %10915 = vmatpush2.msra.mxu0 0.0
      %10916 = vmatprep.subr.mxu0 0.0
      %10917 = vmatpush2.msra.mxu0 0.0
      %10918 = vmatprep.subr.mxu0 0.0
      %10919 = vmatpush2.msra.mxu0 0.0
      %10920 = vmatprep.subr.mxu0 0.0
      %10921 = vmatpush2.msra.mxu0 0.0
      %10922 = vmatprep.subr.mxu0 0.0
      %10923 = vmatpush2.msra.mxu0 0.0
      %10924 = vmatprep.subr.mxu0 0.0
      %10925 = vmatpush2.msra.mxu0 0.0
      %10926 = vmatprep.subr.mxu0 0.0
      %10927 = vmatpush2.msra.mxu0 0.0
      %10928 = vmatprep.subr.mxu0 0.0
      %10929 = vmatpush2.msra.mxu0 0.0
      %10930 = vmatprep.mubr.f32.mxu0 0.0
      %10931 = vmatmul.mubr.f32.gmra.mxu0 %v10864
      %v10932 = vpop.f32.mrf.mxu0
      %v10933 = vadd.f32 0.0, %v10932
      %v10934 = vpop.f32.mrf.mxu0
      %10935 = vdwg.mxu0
      %v10937 = vsel %vm250, %v10563, 0
      %10939 = vmatprep.subr.mxu0 0.0
      %10940 = vmatpush1.msra.mxu0 0.0
      %10941 = vmatprep.subr.mxu0 0.0
      %10942 = vmatpush1.msra.mxu0 0.0
      %10943 = vmatprep.subr.mxu0 0.0
      %10944 = vmatpush1.msra.mxu0 0.0
      %10945 = vmatprep.subr.mxu0 0.0
      %10946 = vmatpush1.msra.mxu0 0.0
      %10947 = vmatprep.subr.mxu0 0.0
      %10948 = vmatpush1.msra.mxu0 0.0
      %10949 = vmatprep.subr.mxu0 0.0
      %10950 = vmatpush1.msra.mxu0 0.0
      %10951 = vmatprep.subr.mxu0 0.0
      %10952 = vmatpush1.msra.mxu0 0.0
      %10953 = vmatprep.subr.mxu0 0.0
      %10954 = vmatpush1.msra.mxu0 0.0
      %10955 = vmatprep.subr.mxu0 0.0
      %10956 = vmatpush1.msra.mxu0 0.0
      %10957 = vmatprep.subr.mxu0 0.0
      %10958 = vmatpush1.msra.mxu0 0.0
      %10959 = vmatprep.subr.mxu0 0.0
      %10960 = vmatpush1.msra.mxu0 0.0
      %10961 = vmatprep.subr.mxu0 0.0
      %10962 = vmatpush1.msra.mxu0 0.0
      %10963 = vmatprep.subr.mxu0 0.0
      %10964 = vmatpush1.msra.mxu0 0.0
      %10965 = vmatprep.subr.mxu0 0.0
      %10966 = vmatpush1.msra.mxu0 0.0
      %10967 = vmatprep.subr.mxu0 0.0
      %10968 = vmatpush1.msra.mxu0 0.0
      %10969 = vmatprep.subr.mxu0 0.0
      %10970 = vmatpush1.msra.mxu0 %v10572
      %10971 = vmatprep.subr.mxu0 0.0
      %10972 = vmatpush2.msra.mxu0 0.0
      %10973 = vmatprep.subr.mxu0 0.0
      %10974 = vmatpush2.msra.mxu0 0.0
      %10975 = vmatprep.subr.mxu0 0.0
      %10976 = vmatpush2.msra.mxu0 0.0
      %10977 = vmatprep.subr.mxu0 0.0
      %10978 = vmatpush2.msra.mxu0 0.0
      %10979 = vmatprep.subr.mxu0 0.0
      %10980 = vmatpush2.msra.mxu0 0.0
      %10981 = vmatprep.subr.mxu0 0.0
      %10982 = vmatpush2.msra.mxu0 0.0
      %10983 = vmatprep.subr.mxu0 0.0
      %10984 = vmatpush2.msra.mxu0 0.0
      %10985 = vmatprep.subr.mxu0 0.0
      %10986 = vmatpush2.msra.mxu0 0.0
      %10987 = vmatprep.subr.mxu0 0.0
      %10988 = vmatpush2.msra.mxu0 0.0
      %10989 = vmatprep.subr.mxu0 0.0
      %10990 = vmatpush2.msra.mxu0 0.0
      %10991 = vmatprep.subr.mxu0 0.0
      %10992 = vmatpush2.msra.mxu0 0.0
      %10993 = vmatprep.subr.mxu0 0.0
      %10994 = vmatpush2.msra.mxu0 0.0
      %10995 = vmatprep.subr.mxu0 0.0
      %10996 = vmatpush2.msra.mxu0 0.0
      %10997 = vmatprep.subr.mxu0 0.0
      %10998 = vmatpush2.msra.mxu0 0.0
      %10999 = vmatprep.subr.mxu0 0.0
      %11000 = vmatpush2.msra.mxu0 0.0
      %11001 = vmatprep.subr.mxu0 0.0
      %11002 = vmatpush2.msra.mxu0 0.0
      %11003 = vmatprep.mubr.f32.mxu0 0.0
      %11004 = vmatmul.mubr.f32.gmra.mxu0 %v10937
      %v11005 = vpop.f32.mrf.mxu0
      %v11006 = vadd.f32 0.0, %v11005
      %v11007 = vpop.f32.mrf.mxu0
      %11008 = vdwg.mxu0
      %v11010 = vsel %vm250, %v10564, 0
      %11012 = vmatprep.subr.mxu0 0.0
      %11013 = vmatpush1.msra.mxu0 0.0
      %11014 = vmatprep.subr.mxu0 0.0
      %11015 = vmatpush1.msra.mxu0 0.0
      %11016 = vmatprep.subr.mxu0 0.0
      %11017 = vmatpush1.msra.mxu0 0.0
      %11018 = vmatprep.subr.mxu0 0.0
      %11019 = vmatpush1.msra.mxu0 0.0
      %11020 = vmatprep.subr.mxu0 0.0
      %11021 = vmatpush1.msra.mxu0 0.0
      %11022 = vmatprep.subr.mxu0 0.0
      %11023 = vmatpush1.msra.mxu0 0.0
      %11024 = vmatprep.subr.mxu0 0.0
      %11025 = vmatpush1.msra.mxu0 0.0
      %11026 = vmatprep.subr.mxu0 0.0
      %11027 = vmatpush1.msra.mxu0 0.0
      %11028 = vmatprep.subr.mxu0 0.0
      %11029 = vmatpush1.msra.mxu0 0.0
      %11030 = vmatprep.subr.mxu0 0.0
      %11031 = vmatpush1.msra.mxu0 0.0
      %11032 = vmatprep.subr.mxu0 0.0
      %11033 = vmatpush1.msra.mxu0 0.0
      %11034 = vmatprep.subr.mxu0 0.0
      %11035 = vmatpush1.msra.mxu0 0.0
      %11036 = vmatprep.subr.mxu0 0.0
      %11037 = vmatpush1.msra.mxu0 0.0
      %11038 = vmatprep.subr.mxu0 0.0
      %11039 = vmatpush1.msra.mxu0 0.0
      %11040 = vmatprep.subr.mxu0 0.0
      %11041 = vmatpush1.msra.mxu0 0.0
      %11042 = vmatprep.subr.mxu0 0.0
      %11043 = vmatpush1.msra.mxu0 %v10572
      %11044 = vmatprep.subr.mxu0 0.0
      %11045 = vmatpush2.msra.mxu0 0.0
      %11046 = vmatprep.subr.mxu0 0.0
      %11047 = vmatpush2.msra.mxu0 0.0
      %11048 = vmatprep.subr.mxu0 0.0
      %11049 = vmatpush2.msra.mxu0 0.0
      %11050 = vmatprep.subr.mxu0 0.0
      %11051 = vmatpush2.msra.mxu0 0.0
      %11052 = vmatprep.subr.mxu0 0.0
      %11053 = vmatpush2.msra.mxu0 0.0
      %11054 = vmatprep.subr.mxu0 0.0
      %11055 = vmatpush2.msra.mxu0 0.0
      %11056 = vmatprep.subr.mxu0 0.0
      %11057 = vmatpush2.msra.mxu0 0.0
      %11058 = vmatprep.subr.mxu0 0.0
      %11059 = vmatpush2.msra.mxu0 0.0
      %11060 = vmatprep.subr.mxu0 0.0
      %11061 = vmatpush2.msra.mxu0 0.0
      %11062 = vmatprep.subr.mxu0 0.0
      %11063 = vmatpush2.msra.mxu0 0.0
      %11064 = vmatprep.subr.mxu0 0.0
      %11065 = vmatpush2.msra.mxu0 0.0
      %11066 = vmatprep.subr.mxu0 0.0
      %11067 = vmatpush2.msra.mxu0 0.0
      %11068 = vmatprep.subr.mxu0 0.0
      %11069 = vmatpush2.msra.mxu0 0.0
      %11070 = vmatprep.subr.mxu0 0.0
      %11071 = vmatpush2.msra.mxu0 0.0
      %11072 = vmatprep.subr.mxu0 0.0
      %11073 = vmatpush2.msra.mxu0 0.0
      %11074 = vmatprep.subr.mxu0 0.0
      %11075 = vmatpush2.msra.mxu0 0.0
      %11076 = vmatprep.mubr.f32.mxu0 0.0
      %11077 = vmatmul.mubr.f32.gmra.mxu0 %v11010
      %v11078 = vpop.f32.mrf.mxu0
      %v11079 = vadd.f32 0.0, %v11078
      %v11080 = vpop.f32.mrf.mxu0
      %11081 = vdwg.mxu0
      %v11083 = vsel %vm250, %v10565, 0
      %11085 = vmatprep.subr.mxu0 0.0
      %11086 = vmatpush1.msra.mxu0 0.0
      %11087 = vmatprep.subr.mxu0 0.0
      %11088 = vmatpush1.msra.mxu0 0.0
      %11089 = vmatprep.subr.mxu0 0.0
      %11090 = vmatpush1.msra.mxu0 0.0
      %11091 = vmatprep.subr.mxu0 0.0
      %11092 = vmatpush1.msra.mxu0 0.0
      %11093 = vmatprep.subr.mxu0 0.0
      %11094 = vmatpush1.msra.mxu0 0.0
      %11095 = vmatprep.subr.mxu0 0.0
      %11096 = vmatpush1.msra.mxu0 0.0
      %11097 = vmatprep.subr.mxu0 0.0
      %11098 = vmatpush1.msra.mxu0 0.0
      %11099 = vmatprep.subr.mxu0 0.0
      %11100 = vmatpush1.msra.mxu0 0.0
      %11101 = vmatprep.subr.mxu0 0.0
      %11102 = vmatpush1.msra.mxu0 0.0
      %11103 = vmatprep.subr.mxu0 0.0
      %11104 = vmatpush1.msra.mxu0 0.0
      %11105 = vmatprep.subr.mxu0 0.0
      %11106 = vmatpush1.msra.mxu0 0.0
      %11107 = vmatprep.subr.mxu0 0.0
      %11108 = vmatpush1.msra.mxu0 0.0
      %11109 = vmatprep.subr.mxu0 0.0
      %11110 = vmatpush1.msra.mxu0 0.0
      %11111 = vmatprep.subr.mxu0 0.0
      %11112 = vmatpush1.msra.mxu0 0.0
      %11113 = vmatprep.subr.mxu0 0.0
      %11114 = vmatpush1.msra.mxu0 0.0
      %11115 = vmatprep.subr.mxu0 0.0
      %11116 = vmatpush1.msra.mxu0 %v10572
      %11117 = vmatprep.subr.mxu0 0.0
      %11118 = vmatpush2.msra.mxu0 0.0
      %11119 = vmatprep.subr.mxu0 0.0
      %11120 = vmatpush2.msra.mxu0 0.0
      %11121 = vmatprep.subr.mxu0 0.0
      %11122 = vmatpush2.msra.mxu0 0.0
      %11123 = vmatprep.subr.mxu0 0.0
      %11124 = vmatpush2.msra.mxu0 0.0
      %11125 = vmatprep.subr.mxu0 0.0
      %11126 = vmatpush2.msra.mxu0 0.0
      %11127 = vmatprep.subr.mxu0 0.0
      %11128 = vmatpush2.msra.mxu0 0.0
      %11129 = vmatprep.subr.mxu0 0.0
      %11130 = vmatpush2.msra.mxu0 0.0
      %11131 = vmatprep.subr.mxu0 0.0
      %11132 = vmatpush2.msra.mxu0 0.0
      %11133 = vmatprep.subr.mxu0 0.0
      %11134 = vmatpush2.msra.mxu0 0.0
      %11135 = vmatprep.subr.mxu0 0.0
      %11136 = vmatpush2.msra.mxu0 0.0
      %11137 = vmatprep.subr.mxu0 0.0
      %11138 = vmatpush2.msra.mxu0 0.0
      %11139 = vmatprep.subr.mxu0 0.0
      %11140 = vmatpush2.msra.mxu0 0.0
      %11141 = vmatprep.subr.mxu0 0.0
      %11142 = vmatpush2.msra.mxu0 0.0
      %11143 = vmatprep.subr.mxu0 0.0
      %11144 = vmatpush2.msra.mxu0 0.0
      %11145 = vmatprep.subr.mxu0 0.0
      %11146 = vmatpush2.msra.mxu0 0.0
      %11147 = vmatprep.subr.mxu0 0.0
      %11148 = vmatpush2.msra.mxu0 0.0
      %11149 = vmatprep.mubr.f32.mxu0 0.0
      %11150 = vmatmul.mubr.f32.gmra.mxu0 %v11083
      %v11151 = vpop.f32.mrf.mxu0
      %v11152 = vadd.f32 0.0, %v11151
      %v11153 = vpop.f32.mrf.mxu0
      %11154 = vdwg.mxu0
      %v11155 = vadd.f32 %v10550, %v10641
      %v11156 = vadd.f32 %v10551, %v10714
      %v11157 = vadd.f32 %v10552, %v10787
      %v11158 = vadd.f32 %v10553, %v10860
      %v11159 = vadd.f32 %v10554, %v10933
      %v11160 = vadd.f32 %v10555, %v11006
      %v11161 = vadd.f32 %v10556, %v11079
      %v11162 = vadd.f32 %v10557, %v11152
      %v11163 = vld [vmem:[%s4] sm:$0x1]
      %v11165 = vlaneseq
      %v11166 = vshrl.u32 %v11165, 7
      %v11167 = vsub.s32 0, %v11166
      %v11168 = vrot.slane %v11163, %v11167
      %v11170 = vadd.f32 %v11155, %v11168
      %v11171 = vadd.f32 %v11156, %v11168
      %v11172 = vadd.f32 %v11157, %v11168
      %v11173 = vadd.f32 %v11158, %v11168
      %v11174 = vadd.f32 %v11159, %v11168
      %v11175 = vadd.f32 %v11160, %v11168
      %v11176 = vadd.f32 %v11161, %v11168
      %v11177 = vadd.f32 %v11162, %v11168
      %vm11178 = vcmp.ge.f32.partialorder %v11170, 0.0
      %vm11179 = vcmp.ge.f32.partialorder %v11171, 0.0
      %vm11180 = vcmp.ge.f32.partialorder %v11172, 0.0
      %vm11181 = vcmp.ge.f32.partialorder %v11173, 0.0
      %vm11182 = vcmp.ge.f32.partialorder %v11174, 0.0
      %vm11183 = vcmp.ge.f32.partialorder %v11175, 0.0
      %vm11184 = vcmp.ge.f32.partialorder %v11176, 0.0
      %vm11185 = vcmp.ge.f32.partialorder %v11177, 0.0
      %v11186 = vmul.f32 %v11170, 0.01
      %v11187 = vmul.f32 %v11171, 0.01
      %v11188 = vmul.f32 %v11172, 0.01
      %v11189 = vmul.f32 %v11173, 0.01
      %v11190 = vmul.f32 %v11174, 0.01
      %v11191 = vmul.f32 %v11175, 0.01
      %v11192 = vmul.f32 %v11176, 0.01
      %v11193 = vmul.f32 %v11177, 0.01
      %v11194 = vsel %vm11178, %v11170, %v11186
      %v11195 = vsel %vm11179, %v11171, %v11187
      %v11196 = vsel %vm11180, %v11172, %v11188
      %v11197 = vsel %vm11181, %v11173, %v11189
      %v11198 = vsel %vm11182, %v11174, %v11190
      %v11199 = vsel %vm11183, %v11175, %v11191
      %v11200 = vsel %vm11184, %v11176, %v11192
      %v11201 = vsel %vm11185, %v11177, %v11193
      %vm11202 = vcmask 64512
      %11203 = vst.msk [vmem:[%s229] sm:$0xff] %vm11202, %v11194
      %11204 = vst.msk [vmem:[%s229 + $0x8] sm:$0xff] %vm11202, %v11195
      %11205 = vst.msk [vmem:[%s229 + $0x10] sm:$0xff] %vm11202, %v11196
      %11206 = vst.msk [vmem:[%s229 + $0x18] sm:$0xff] %vm11202, %v11197
      %11207 = vst.msk [vmem:[%s229 + $0x20] sm:$0xff] %vm11202, %v11198
      %11208 = vst.msk [vmem:[%s229 + $0x28] sm:$0xff] %vm11202, %v11199
      %11209 = vst.msk [vmem:[%s229 + $0x30] sm:$0xff] %vm11202, %v11200
      %11210 = vst.msk [vmem:[%s229 + $0x38] sm:$0xff] %vm11202, %v11201
      %p11211 = scmp.lt.s32.totalorder %s16, 1
      %s11212 = scalar_select %p11211, %s16, 1
      %s11213 = smul.addr %s11212, 8
      %s11214 = smul.addr %s11213, 8
      %s11215 = scalar_lea.vmem %s5, %s11214
      // Predicated region
      $region41: #{downsampling_forward.1} parent=39 // pred_check
        %p11216 = pneg %p144
      $region42: #{downsampling_forward.1} parent=39 // pred_check_branch
        %11218 = sbr.rel (%p11216) target = $region44
      $region43: #{downsampling_forward.1} parent=39 // pred_region
        _
      $region44: #{downsampling_forward.1} parent=39 // pred_fallthru
        _
    $region40: #{downsampling_forward.1} parent=5 // pred_fallthru
      _
    %p11219 = scmp.le.s32.totalorder 2, %s11
    // Predicated region
    $region45: #{downsampling_forward.1} parent=5 // pred_check
      %p11220 = pneg %p11219
    $region46: #{downsampling_forward.1} parent=5 // pred_check_branch
      %11222 = sbr.rel (%p11220) target = $region48
    $region47: #{downsampling_forward.1} parent=5 // pred_region
      %s11223 = ssub.s32 %s11, 2
      // Predicated region
      $region49: #{downsampling_forward.1} parent=47 // pred_check
        %p11224 = pneg %p150
      $region50: #{downsampling_forward.1} parent=47 // pred_check_branch
        %11226 = sbr.rel (%p11224) target = $region52
      $region51: #{downsampling_forward.1} parent=47 // pred_region
        %p11227 = scmp.lt.s32.totalorder %s17, 1
        %s11228 = scalar_select %p11227, %s17, 1
        %s11229 = smul.addr %s11228, 8
        %s11230 = smul.addr %s11229, 8
        %s11231 = scalar_lea.vmem %s5, %s11230
      $region52: #{downsampling_forward.1} parent=47 // pred_fallthru
        _
    $region48: #{downsampling_forward.1} parent=5 // pred_fallthru
      _
  $region6: #{downsampling_forward.1} parent=0 // loop_footer
    %s15 = sadd.s32 1, %s11
  $region7: #{downsampling_forward.1} parent=0 // loop_footer_branch
    %10 = sbr.rel target = $region3
  $region8: #{downsampling_forward.1} parent=0 // loop_exit
    _

</llo_original>
